<compile_context>
chip_gen: v7x
topology: tpu7x:2x2x1
jax: 0.10.0
libtpu: 0.0.40
codegen_flags: <defaults>
</compile_context>

<pallas_src>
import functools
import math

import jax
import jax.numpy as jnp
from jax.experimental import pallas as pl
from jax.experimental.pallas import tpu as pltpu


# ----------------------------------------------------------------------------
# helpers
# ----------------------------------------------------------------------------
def _round_up(x, m):
    return ((x + m - 1) // m) * m


def _row_block(M, tm=256):
    """Pick (padded_M, block_rows): multiple of 8, prefer >=2 grid steps for dual-TC."""
    Mp = _round_up(M, 8)
    if Mp <= 8:
        return Mp, Mp
    bm = min(tm, Mp)
    while Mp % bm:
        bm -= 8
    if Mp // bm < 2:
        half = Mp // 2
        bm = half if half % 8 == 0 else 8
    return Mp, bm


def _row_call(kernel, x2d, weight_args, n_out, out_dtype=jnp.bfloat16, tm=256):
    """Run `kernel(x_tile, *weights, out_tile)` tiled over rows of x2d; weights broadcast."""
    M, K = x2d.shape
    Mp, bm = _row_block(M, tm)
    xp = x2d if Mp == M else jnp.pad(x2d, ((0, Mp - M), (0, 0)))
    in_specs = [pl.BlockSpec((bm, K), lambda i: (i, 0))]
    for a in weight_args:
        r, c = a.shape
        in_specs.append(pl.BlockSpec((r, c), lambda i: (0, 0)))
    out = pl.pallas_call(
        kernel,
        out_shape=jax.ShapeDtypeStruct((Mp, n_out), out_dtype),
        grid=(Mp // bm,),
        in_specs=in_specs,
        out_specs=pl.BlockSpec((bm, n_out), lambda i: (i, 0)),
        compiler_params=pltpu.CompilerParams(dimension_semantics=("parallel",)),
    )(xp, *weight_args)
    return out if Mp == M else out[:M]


# ----------------------------------------------------------------------------
# Pallas kernels
# ----------------------------------------------------------------------------
def _linear_kernel(x_ref, w_ref, b_ref, o_ref, *, act):
    y = jnp.dot(x_ref[...], w_ref[...], preferred_element_type=jnp.float32) + b_ref[...]
    if act == "relu":
        y = jnp.maximum(y, 0.0)
    elif act == "silu":
        y = y * jax.nn.sigmoid(y)
    o_ref[...] = y.astype(o_ref.dtype)


def _adapter_kernel(x_ref, w1_ref, b1_ref, g_ref, be_ref, w3_ref, b3_ref, o_ref, *, eps):
    # fused: x @ W1 + b1 -> LayerNorm -> @ W3 + b3 -> SiLU
    x = x_ref[...]                                                        # bf16 (bm, K)
    h = jnp.dot(x, w1_ref[...], preferred_element_type=jnp.float32) + b1_ref[...]
    mu = jnp.mean(h, axis=-1, keepdims=True)
    hc = h - mu
    var = jnp.mean(hc * hc, axis=-1, keepdims=True)
    hn = (hc * jax.lax.rsqrt(var + eps)) * g_ref[...] + be_ref[...]
    y = jnp.dot(hn.astype(jnp.bfloat16), w3_ref[...],
                preferred_element_type=jnp.float32) + b3_ref[...]
    y = y * jax.nn.sigmoid(y)                                             # SiLU
    o_ref[...] = y.astype(o_ref.dtype)


def _attention_block(xq, xk, xv, wq_ref, wk_ref, wv_ref, bq_ref, bk_ref, bv_ref,
                     wo_ref, bo_ref, g_ref, b_ref, heads, dk, dv, scale, eps):
    """QKV proj + per-head softmax attention + out proj + residual + LayerNorm (f32 out)."""
    bf16 = jnp.bfloat16
    q = (jnp.dot(xq, wq_ref[...], preferred_element_type=jnp.float32) + bq_ref[...]).astype(bf16)
    k = (jnp.dot(xk, wk_ref[...], preferred_element_type=jnp.float32) + bk_ref[...]).astype(bf16)
    v = (jnp.dot(xv, wv_ref[...], preferred_element_type=jnp.float32) + bv_ref[...]).astype(bf16)

    ctx_heads = []
    for h in range(heads):                                                # small static loop
        qh = q[:, h * dk:(h + 1) * dk]
        kh = k[:, h * dk:(h + 1) * dk]
        vh = v[:, h * dv:(h + 1) * dv]
        s = jax.lax.dot_general(qh, kh, (((1,), (1,)), ((), ())),
                                preferred_element_type=jnp.float32) * scale
        m = jnp.max(s, axis=-1, keepdims=True)
        p = jnp.exp(s - m)
        l = jnp.sum(p, axis=-1, keepdims=True)
        p = p * pl.reciprocal(l, approx=True)
        ctx_heads.append(jnp.dot(p.astype(bf16), vh, preferred_element_type=jnp.float32))
    ctx = jnp.concatenate(ctx_heads, axis=-1).astype(bf16)                # (Lq, H*dv)

    attn = jnp.dot(ctx, wo_ref[...], preferred_element_type=jnp.float32) + bo_ref[...]
    r = xq.astype(jnp.float32) + attn                                     # residual
    mu = jnp.mean(r, axis=-1, keepdims=True)
    rc = r - mu
    var = jnp.mean(rc * rc, axis=-1, keepdims=True)
    return (rc * jax.lax.rsqrt(var + eps)) * g_ref[...] + b_ref[...]      # f32 (Lq, dm)


def _enc_layer_kernel(x_ref,
                      wq_ref, wk_ref, wv_ref, bq_ref, bk_ref, bv_ref,
                      wo_ref, bo_ref, g1_ref, b1_ref,
                      wf1_ref, bf1_ref, wf2_ref, bf2_ref, g2_ref, b2_ref,
                      o_ref, *, heads, dk, dv, scale, eps):
    # One full transformer encoder layer, fused (per batch element).
    x = x_ref[0]                                                          # (L, dm) bf16
    h1 = _attention_block(x, x, x, wq_ref, wk_ref, wv_ref, bq_ref, bk_ref, bv_ref,
                          wo_ref, bo_ref, g1_ref, b1_ref, heads, dk, dv, scale, eps)
    h1b = h1.astype(jnp.bfloat16)
    f = jnp.dot(h1b, wf1_ref[...], preferred_element_type=jnp.float32) + bf1_ref[...]
    f = jnp.maximum(f, 0.0).astype(jnp.bfloat16)
    y = jnp.dot(f, wf2_ref[...], preferred_element_type=jnp.float32) + bf2_ref[...]
    r = h1 + y
    mu = jnp.mean(r, axis=-1, keepdims=True)
    rc = r - mu
    var = jnp.mean(rc * rc, axis=-1, keepdims=True)
    o_ref[0] = ((rc * jax.lax.rsqrt(var + eps)) * g2_ref[...] + b2_ref[...]).astype(o_ref.dtype)


def _mha_ln_kernel(xq_ref, xk_ref, xv_ref,
                   wq_ref, wk_ref, wv_ref, bq_ref, bk_ref, bv_ref,
                   wo_ref, bo_ref, g_ref, b_ref, o_ref,
                   *, heads, dk, dv, scale, eps):
    out = _attention_block(xq_ref[0], xk_ref[0], xv_ref[0],
                           wq_ref, wk_ref, wv_ref, bq_ref, bk_ref, bv_ref,
                           wo_ref, bo_ref, g_ref, b_ref, heads, dk, dv, scale, eps)
    o_ref[0] = out.astype(o_ref.dtype)


def _head_kernel(enc_ref, face_ref, voice_ref, cross_ref,
                 wfc_ref, bfc_ref, wfc4_ref, bfc4_ref, o_ref):
    # fused heads: enc@Wfc + bfc + 0.1*( (face+voice+cross)@Wfc4 + 3*bfc4 )
    enc = enc_ref[...]
    rest = (face_ref[...].astype(jnp.float32) + voice_ref[...].astype(jnp.float32)
            + cross_ref[...].astype(jnp.float32)).astype(jnp.bfloat16)
    main = jnp.dot(enc, wfc_ref[...], preferred_element_type=jnp.float32) + bfc_ref[...]
    aux = jnp.dot(rest, wfc4_ref[...], preferred_element_type=jnp.float32) + 3.0 * bfc4_ref[...]
    o_ref[...] = (main + 0.1 * aux).astype(o_ref.dtype)


# ----------------------------------------------------------------------------
# kernel wrappers
# ----------------------------------------------------------------------------
def linear(x2d, w, b, act="none"):
    return _row_call(functools.partial(_linear_kernel, act=act), x2d, (w, b), w.shape[1])


def adapter_path(x2d, w1, b1, g, be, w3, b3):
    # TODO(synk): at production sizes (spatial=224, hidden=1000) the fc1 weight (~96 MiB bf16)
    # no longer fits VMEM; this call would need a K/N-tiled grid with an f32 accumulator.
    return _row_call(functools.partial(_adapter_kernel, eps=1e-5),
                     x2d, (w1, b1, g, be, w3, b3), w3.shape[1])


def _full2d(shape):
    return pl.BlockSpec(shape, lambda i: (0, 0))


def enc_layer(lp, x, cfg):
    # x: (B, L, dm) bf16 -> (B, L, dm) bf16, one fused kernel per batch element.
    B, L, dm = x.shape
    H, dk, dv, dff = cfg["n_heads"], cfg["d_k"], cfg["d_v"], cfg["d_ff"]
    kernel = functools.partial(_enc_layer_kernel, heads=H, dk=dk, dv=dv,
                               scale=1.0 / math.sqrt(dk), eps=1e-5)
    a = lp["attn"]
    return pl.pallas_call(
        kernel,
        out_shape=jax.ShapeDtypeStruct((B, L, dm), jnp.bfloat16),
        grid=(B,),
        in_specs=[
            pl.BlockSpec((1, L, dm), lambda i: (i, 0, 0)),
            _full2d((dm, H * dk)), _full2d((dm, H * dk)), _full2d((dm, H * dv)),
            _full2d((1, H * dk)), _full2d((1, H * dk)), _full2d((1, H * dv)),
            _full2d((H * dv, dm)), _full2d((1, dm)),
            _full2d((1, dm)), _full2d((1, dm)),
            _full2d((dm, dff)), _full2d((1, dff)),
            _full2d((dff, dm)), _full2d((1, dm)),
            _full2d((1, dm)), _full2d((1, dm)),
        ],
        out_specs=pl.BlockSpec((1, L, dm), lambda i: (i, 0, 0)),
        compiler_params=pltpu.CompilerParams(dimension_semantics=("parallel",)),
    )(x,
      a["wq"]["w"], a["wk"]["w"], a["wv"]["w"],
      a["wq"]["b"], a["wk"]["b"], a["wv"]["b"],
      a["wo"]["w"], a["wo"]["b"], lp["ln1_g"], lp["ln1_b"],
      lp["ff1"]["w"], lp["ff1"]["b"], lp["ff2"]["w"], lp["ff2"]["b"],
      lp["ln2_g"], lp["ln2_b"])


def mha_ln(p, ln_g, ln_b, xq, xk, xv, cfg):
    B, Lq, dm = xq.shape
    Lk = xk.shape[1]
    H, dk, dv = cfg["n_heads"], cfg["d_k"], cfg["d_v"]
    kernel = functools.partial(_mha_ln_kernel, heads=H, dk=dk, dv=dv,
                               scale=1.0 / math.sqrt(dk), eps=1e-5)
    return pl.pallas_call(
        kernel,
        out_shape=jax.ShapeDtypeStruct((B, Lq, dm), jnp.bfloat16),
        grid=(B,),
        in_specs=[
            pl.BlockSpec((1, Lq, dm), lambda i: (i, 0, 0)),
            pl.BlockSpec((1, Lk, dm), lambda i: (i, 0, 0)),
            pl.BlockSpec((1, Lk, dm), lambda i: (i, 0, 0)),
            _full2d((dm, H * dk)), _full2d((dm, H * dk)), _full2d((dm, H * dv)),
            _full2d((1, H * dk)), _full2d((1, H * dk)), _full2d((1, H * dv)),
            _full2d((H * dv, dm)), _full2d((1, dm)),
            _full2d((1, dm)), _full2d((1, dm)),
        ],
        out_specs=pl.BlockSpec((1, Lq, dm), lambda i: (i, 0, 0)),
        compiler_params=pltpu.CompilerParams(dimension_semantics=("parallel",)),
    )(xq, xk, xv,
      p["wq"]["w"], p["wk"]["w"], p["wv"]["w"],
      p["wq"]["b"], p["wk"]["b"], p["wv"]["b"],
      p["wo"]["w"], p["wo"]["b"], ln_g, ln_b)


def head_combine(enc, face, voice, cross, wfc, bfc, wfc4, bfc4):
    B, flat = enc.shape
    n_out = wfc.shape[1]
    xspec = pl.BlockSpec((B, flat), lambda i: (0, 0))
    return pl.pallas_call(
        _head_kernel,
        out_shape=jax.ShapeDtypeStruct((B, n_out), jnp.float32),
        grid=(1,),
        in_specs=[xspec, xspec, xspec, xspec,
                  pl.BlockSpec((flat, n_out), lambda i: (0, 0)),
                  pl.BlockSpec((1, n_out), lambda i: (0, 0)),
                  pl.BlockSpec((flat, n_out), lambda i: (0, 0)),
                  pl.BlockSpec((1, n_out), lambda i: (0, 0))],
        out_specs=pl.BlockSpec((B, n_out), lambda i: (0, 0)),
    )(enc, face, voice, cross, wfc, bfc, wfc4, bfc4)


# ----------------------------------------------------------------------------
# parameter init (deterministic, synthetic; weights bf16, biases / LN params f32)
# ----------------------------------------------------------------------------
class KeyGen:
    def __init__(self, seed):
        self._key = jax.random.PRNGKey(seed)

    def __call__(self):
        self._key, sub = jax.random.split(self._key)
        return sub


def dense_init(kg, d_in, d_out):
    w = (jax.random.normal(kg(), (d_in, d_out), jnp.float32) / math.sqrt(d_in)).astype(jnp.bfloat16)
    b = jnp.zeros((1, d_out), jnp.float32)
    return {"w": w, "b": b}


def ln_init(n):
    return jnp.ones((1, n), jnp.float32), jnp.zeros((1, n), jnp.float32)


def mha_init(kg, d_model, n_heads, d_k, d_v):
    return {
        "wq": dense_init(kg, d_model, n_heads * d_k),
        "wk": dense_init(kg, d_model, n_heads * d_k),
        "wv": dense_init(kg, d_model, n_heads * d_v),
        "wo": dense_init(kg, n_heads * d_v, d_model),
    }


def encoder_init(kg, d_feature, cfg):
    layers = []
    for _ in range(cfg["e_layer"]):
        g1, b1 = ln_init(cfg["d_model"])
        g2, b2 = ln_init(cfg["d_model"])
        layers.append({
            "attn": mha_init(kg, cfg["d_model"], cfg["n_heads"], cfg["d_k"], cfg["d_v"]),
            "ln1_g": g1, "ln1_b": b1,
            "ff1": dense_init(kg, cfg["d_model"], cfg["d_ff"]),
            "ff2": dense_init(kg, cfg["d_ff"], cfg["d_model"]),
            "ln2_g": g2, "ln2_b": b2,
        })
    return {"embed": dense_init(kg, d_feature, cfg["d_model"]), "layers": layers}


def cross_init(kg, cfg):
    g, b = ln_init(cfg["d_model"])
    return {"attn": mha_init(kg, cfg["d_model"], cfg["n_heads"], cfg["d_k"], cfg["d_v"]),
            "ln_g": g, "ln_b": b}


def depformer_init(cfg, seed=42):
    kg = KeyGen(seed)
    hid, spatial, d_adapt = cfg["hidden"], cfg["spatial"], cfg["d_adapt"]
    flat = cfg["seq"] * cfg["d_model"]
    ln_g, ln_b = ln_init(hid)
    return {
        "fc1": dense_init(kg, spatial * spatial, hid),
        "fc2": dense_init(kg, hid, hid),
        "fc3": dense_init(kg, hid, d_adapt),
        "LN_g": ln_g, "LN_b": ln_b,
        "encoder": encoder_init(kg, 2 * d_adapt, cfg),
        "encoder_fv": encoder_init(kg, d_adapt, cfg),
        "cross": cross_init(kg, cfg),
        "fc": dense_init(kg, flat, 2),
        "fc4": dense_init(kg, flat, 2),
        # self.projection is defined in the PyTorch module but unused in forward(); omitted.
    }


# ----------------------------------------------------------------------------
# model application
# ----------------------------------------------------------------------------
def encoder_apply(p, x, cfg, index=None):
    # TODO(synk): original Encoder (stacked/distilling encoder returning `index`, `M_out`)
    # is not in the provided source; implemented as a post-LN transformer encoder.
    B, L, df = x.shape
    dm = cfg["d_model"]
    h = linear(x.reshape(B * L, df), p["embed"]["w"], p["embed"]["b"]).reshape(B, L, dm)
    for lp in p["layers"]:
        h = enc_layer(lp, h, cfg)
    return h, index, h


def cross_apply(p, q_in, k_in, v_in, cfg):
    # TODO(synk): CrossAttention internals not provided; MHA(Q=face, K=voice, V=fused) + residual LN.
    return mha_ln(p["attn"], p["ln_g"], p["ln_b"], q_in, k_in, v_in, cfg)


def depformer_forward(params, cfg, face, voice, label):
    # face: (B, H, W, T)  voice: (B, T, hidden)  label: unused (as in PyTorch forward)
    del label
    B = face.shape[0]

    # ---- Adapter (fully fused per path) ----
    face_t = jnp.transpose(face, (0, 3, 1, 2))                 # == .permute(0,3,1,2)
    T = face_t.shape[1]
    face_flat = face_t.reshape(B * T, -1).astype(jnp.bfloat16)
    voice_flat = voice.reshape(B * voice.shape[1], -1).astype(jnp.bfloat16)

    face_data = adapter_path(face_flat, params["fc1"]["w"], params["fc1"]["b"],
                             params["LN_g"], params["LN_b"],
                             params["fc3"]["w"], params["fc3"]["b"]).reshape(B, T, -1)
    voice_data = adapter_path(voice_flat, params["fc2"]["w"], params["fc2"]["b"],
                              params["LN_g"], params["LN_b"],
                              params["fc3"]["w"], params["fc3"]["b"]).reshape(B, T, -1)

    # ---- encoders ----
    enc_x = jnp.concatenate([face_data, voice_data], axis=2)
    enc_outputs, index, _m = encoder_apply(params["encoder"], enc_x, cfg)

    # batch the two encoder_fv passes (same weights) along the batch axis
    fv = jnp.concatenate([face_data, voice_data], axis=0)      # (2B, T, d_adapt)
    enc_fv, _i, _f = encoder_apply(params["encoder_fv"], fv, cfg, index)
    enc_face, enc_voice = enc_fv[:B], enc_fv[B:]

    # ---- cross attention ----
    cross_out = cross_apply(params["cross"], enc_face, enc_voice, enc_outputs, cfg)

    # ---- fused classification heads ----
    flat = cfg["seq"] * cfg["d_model"]
    return head_combine(enc_outputs.reshape(B, flat), enc_face.reshape(B, flat),
                        enc_voice.reshape(B, flat), cross_out.reshape(B, flat),
                        params["fc"]["w"], params["fc"]["b"],
                        params["fc4"]["w"], params["fc4"]["b"])


# ----------------------------------------------------------------------------
# main
# ----------------------------------------------------------------------------
if __name__ == "__main__":
    # Small shapes consistent with the module structure (scaled-down analogue of
    # d_model=224, d_ff=32, n_heads=8, d_k=d_v=64, hidden=1000, spatial=224, d_adapt=128),
    # chosen so all feature dims are multiples of 128 (lane-dense tiles).
    cfg = {
        "d_model": 128, "d_ff": 256, "n_heads": 4, "d_k": 32, "d_v": 32,
        "e_layer": 2, "seq": 8, "hidden": 256, "spatial": 16, "d_adapt": 128,
    }
    B, T, S = 2, cfg["seq"], cfg["spatial"]

    params = depformer_init(cfg, seed=42)

    key = jax.random.PRNGKey(0)
    kf, kv, kl = jax.random.split(key, 3)
    face = jax.random.normal(kf, (B, S, S, T), jnp.float32)        # (B, H, W, T)
    voice = jax.random.normal(kv, (B, T, cfg["hidden"]), jnp.float32)
    label = jax.random.randint(kl, (B,), 0, 2)

    fwd = jax.jit(lambda p, f, v, l: depformer_forward(p, cfg, f, v, l))
    out = fwd(params, face, voice, label)
    out = jax.block_until_ready(out)
    assert out.shape == (B, 2), out.shape
    print("KERNEL_OK")
</pallas_src>

<mosaic_0001>
module attributes {stable_mosaic.version = 11 : i64} {
  func.func @_adapter_kernel(%arg0: i32, %arg1: memref<8x256xbf16, #tpu.memory_space<vmem>>, %arg2: memref<256x256xbf16, #tpu.memory_space<vmem>>, %arg3: memref<1x256xf32, #tpu.memory_space<vmem>>, %arg4: memref<1x256xf32, #tpu.memory_space<vmem>>, %arg5: memref<1x256xf32, #tpu.memory_space<vmem>>, %arg6: memref<256x128xbf16, #tpu.memory_space<vmem>>, %arg7: memref<1x128xf32, #tpu.memory_space<vmem>>, %arg8: memref<8x128xbf16, #tpu.memory_space<vmem>>) attributes {dimension_semantics = [#tpu.dimension_semantics<parallel>], iteration_bounds = array<i64: 2>, scalar_prefetch = 0 : i64, scratch_operands = 0 : i64, tpu.core_type = #tpu.core_type<tc>, window_params = [{transform_indices = @transform_0, window_bounds = array<i64: 8, 256>}, {pipeline_mode = #tpu.pipeline_mode<synchronous>, transform_indices = @transform_1, window_bounds = array<i64: 256, 256>}, {pipeline_mode = #tpu.pipeline_mode<synchronous>, transform_indices = @transform_2, window_bounds = array<i64: 1, 256>}, {pipeline_mode = #tpu.pipeline_mode<synchronous>, transform_indices = @transform_3, window_bounds = array<i64: 1, 256>}, {pipeline_mode = #tpu.pipeline_mode<synchronous>, transform_indices = @transform_4, window_bounds = array<i64: 1, 256>}, {pipeline_mode = #tpu.pipeline_mode<synchronous>, transform_indices = @transform_5, window_bounds = array<i64: 256, 128>}, {pipeline_mode = #tpu.pipeline_mode<synchronous>, transform_indices = @transform_6, window_bounds = array<i64: 1, 128>}, {transform_indices = @transform_7, window_bounds = array<i64: 8, 128>}]} {
    %c0 = arith.constant 0 : index
    %c0_0 = arith.constant 0 : index
    %0 = vector.load %arg1[%c0, %c0_0] : memref<8x256xbf16, #tpu.memory_space<vmem>>, vector<8x256xbf16>
    %c0_1 = arith.constant 0 : index
    %c0_2 = arith.constant 0 : index
    %1 = vector.load %arg2[%c0_1, %c0_2] : memref<256x256xbf16, #tpu.memory_space<vmem>>, vector<256x256xbf16>
    %cst = arith.constant dense<0.000000e+00> : vector<8x256xf32>
    %2 = tpu.matmul %0, %1, %cst {dimension_numbers = #tpu.dot_dimension_numbers<[1], [0], [0], [1], [0, 0, 1, 1], [], []>} : vector<8x256xbf16>, vector<256x256xbf16>, vector<8x256xf32> -> vector<8x256xf32>
    %c0_3 = arith.constant 0 : index
    %c0_4 = arith.constant 0 : index
    %3 = vector.load %arg3[%c0_3, %c0_4] : memref<1x256xf32, #tpu.memory_space<vmem>>, vector<1x256xf32>
    %4 = vector.broadcast %3 : vector<1x256xf32> to vector<8x256xf32>
    %5 = arith.addf %2, %4 : vector<8x256xf32>
    %cst_5 = arith.constant dense<0.000000e+00> : vector<8xf32>
    %6 = vector.multi_reduction <add>, %5, %cst_5 [1] : vector<8x256xf32> to vector<8xf32>
    %7 = vector.shape_cast %6 : vector<8xf32> to vector<8x1xf32>
    %cst_6 = arith.constant 2.560000e+02 : f32
    %8 = vector.broadcast %cst_6 : f32 to vector<8x1xf32>
    %9 = arith.divf %7, %8 : vector<8x1xf32>
    %10 = vector.broadcast %9 : vector<8x1xf32> to vector<8x256xf32>
    %11 = arith.subf %5, %10 : vector<8x256xf32>
    %12 = arith.mulf %11, %11 : vector<8x256xf32>
    %cst_7 = arith.constant dense<0.000000e+00> : vector<8xf32>
    %13 = vector.multi_reduction <add>, %12, %cst_7 [1] : vector<8x256xf32> to vector<8xf32>
    %14 = vector.shape_cast %13 : vector<8xf32> to vector<8x1xf32>
    %cst_8 = arith.constant 2.560000e+02 : f32
    %15 = vector.broadcast %cst_8 : f32 to vector<8x1xf32>
    %16 = arith.divf %14, %15 : vector<8x1xf32>
    %cst_9 = arith.constant 9.99999974E-6 : f32
    %17 = vector.broadcast %cst_9 : f32 to vector<8x1xf32>
    %18 = arith.addf %16, %17 : vector<8x1xf32>
    %19 = math.rsqrt %18 : vector<8x1xf32>
    %20 = vector.broadcast %19 : vector<8x1xf32> to vector<8x256xf32>
    %21 = arith.mulf %11, %20 : vector<8x256xf32>
    %c0_10 = arith.constant 0 : index
    %c0_11 = arith.constant 0 : index
    %22 = vector.load %arg4[%c0_10, %c0_11] : memref<1x256xf32, #tpu.memory_space<vmem>>, vector<1x256xf32>
    %23 = vector.broadcast %22 : vector<1x256xf32> to vector<8x256xf32>
    %24 = arith.mulf %21, %23 : vector<8x256xf32>
    %c0_12 = arith.constant 0 : index
    %c0_13 = arith.constant 0 : index
    %25 = vector.load %arg5[%c0_12, %c0_13] : memref<1x256xf32, #tpu.memory_space<vmem>>, vector<1x256xf32>
    %26 = vector.broadcast %25 : vector<1x256xf32> to vector<8x256xf32>
    %27 = arith.addf %24, %26 : vector<8x256xf32>
    %28 = arith.truncf %27 : vector<8x256xf32> to vector<8x256xbf16>
    %c0_14 = arith.constant 0 : index
    %c0_15 = arith.constant 0 : index
    %29 = vector.load %arg6[%c0_14, %c0_15] : memref<256x128xbf16, #tpu.memory_space<vmem>>, vector<256x128xbf16>
    %cst_16 = arith.constant dense<0.000000e+00> : vector<8x128xf32>
    %30 = tpu.matmul %28, %29, %cst_16 {dimension_numbers = #tpu.dot_dimension_numbers<[1], [0], [0], [1], [0, 0, 1, 1], [], []>} : vector<8x256xbf16>, vector<256x128xbf16>, vector<8x128xf32> -> vector<8x128xf32>
    %c0_17 = arith.constant 0 : index
    %c0_18 = arith.constant 0 : index
    %31 = vector.load %arg7[%c0_17, %c0_18] : memref<1x128xf32, #tpu.memory_space<vmem>>, vector<1x128xf32>
    %32 = vector.broadcast %31 : vector<1x128xf32> to vector<8x128xf32>
    %33 = arith.addf %30, %32 : vector<8x128xf32>
    %34 = arith.negf %33 : vector<8x128xf32>
    %35 = math.exp %34 : vector<8x128xf32>
    %cst_19 = arith.constant 1.000000e+00 : f32
    %36 = vector.broadcast %cst_19 : f32 to vector<8x128xf32>
    %37 = arith.addf %36, %35 : vector<8x128xf32>
    %38 = arith.divf %36, %37 : vector<8x128xf32>
    %39 = arith.mulf %33, %38 : vector<8x128xf32>
    %40 = arith.truncf %39 : vector<8x128xf32> to vector<8x128xbf16>
    %c0_20 = arith.constant 0 : index
    %c0_21 = arith.constant 0 : index
    %41 = vector.load %arg8[%c0_20, %c0_21] : memref<8x128xbf16, #tpu.memory_space<vmem>>, vector<8x128xbf16>
    tpu.vector_store %arg8[%c0_20, %c0_21], %40 {strides = array<i32>} : memref<8x128xbf16, #tpu.memory_space<vmem>>, vector<8x128xbf16>,
    return
  }
  func.func @transform_0(%arg0: i32) -> (i32, i32) {
    %c0_i32 = arith.constant 0 : i32
    %c0_i32_0 = arith.constant 0 : i32
    return %arg0, %c0_i32 : i32, i32
  }
  func.func @transform_1(%arg0: i32) -> (i32, i32) {
    %c0_i32 = arith.constant 0 : i32
    %c0_i32_0 = arith.constant 0 : i32
    %c0_i32_1 = arith.constant 0 : i32
    return %c0_i32, %c0_i32_0 : i32, i32
  }
  func.func @transform_2(%arg0: i32) -> (i32, i32) {
    %c0_i32 = arith.constant 0 : i32
    %c0_i32_0 = arith.constant 0 : i32
    %c0_i32_1 = arith.constant 0 : i32
    return %c0_i32, %c0_i32_0 : i32, i32
  }
  func.func @transform_3(%arg0: i32) -> (i32, i32) {
    %c0_i32 = arith.constant 0 : i32
    %c0_i32_0 = arith.constant 0 : i32
    %c0_i32_1 = arith.constant 0 : i32
    return %c0_i32, %c0_i32_0 : i32, i32
  }
  func.func @transform_4(%arg0: i32) -> (i32, i32) {
    %c0_i32 = arith.constant 0 : i32
    %c0_i32_0 = arith.constant 0 : i32
    %c0_i32_1 = arith.constant 0 : i32
    return %c0_i32, %c0_i32_0 : i32, i32
  }
  func.func @transform_5(%arg0: i32) -> (i32, i32) {
    %c0_i32 = arith.constant 0 : i32
    %c0_i32_0 = arith.constant 0 : i32
    %c0_i32_1 = arith.constant 0 : i32
    return %c0_i32, %c0_i32_0 : i32, i32
  }
  func.func @transform_6(%arg0: i32) -> (i32, i32) {
    %c0_i32 = arith.constant 0 : i32
    %c0_i32_0 = arith.constant 0 : i32
    %c0_i32_1 = arith.constant 0 : i32
    return %c0_i32, %c0_i32_0 : i32, i32
  }
  func.func @transform_7(%arg0: i32) -> (i32, i32) {
    %c0_i32 = arith.constant 0 : i32
    %c0_i32_0 = arith.constant 0 : i32
    return %arg0, %c0_i32 : i32, i32
  }
}

module attributes {stable_mosaic.version = 11 : i64} {
  func.func @_adapter_kernel(%arg0: i32, %arg1: memref<8x256xbf16, #tpu.memory_space<vmem>>, %arg2: memref<256x256xbf16, #tpu.memory_space<vmem>>, %arg3: memref<1x256xf32, #tpu.memory_space<vmem>>, %arg4: memref<1x256xf32, #tpu.memory_space<vmem>>, %arg5: memref<1x256xf32, #tpu.memory_space<vmem>>, %arg6: memref<256x128xbf16, #tpu.memory_space<vmem>>, %arg7: memref<1x128xf32, #tpu.memory_space<vmem>>, %arg8: memref<8x128xbf16, #tpu.memory_space<vmem>>) attributes {dimension_semantics = [#tpu.dimension_semantics<parallel>], iteration_bounds = array<i64: 2>, scalar_prefetch = 0 : i64, scratch_operands = 0 : i64, tpu.core_type = #tpu.core_type<tc>, window_params = [{transform_indices = @transform_0, window_bounds = array<i64: 8, 256>}, {pipeline_mode = #tpu.pipeline_mode<synchronous>, transform_indices = @transform_1, window_bounds = array<i64: 256, 256>}, {pipeline_mode = #tpu.pipeline_mode<synchronous>, transform_indices = @transform_2, window_bounds = array<i64: 1, 256>}, {pipeline_mode = #tpu.pipeline_mode<synchronous>, transform_indices = @transform_3, window_bounds = array<i64: 1, 256>}, {pipeline_mode = #tpu.pipeline_mode<synchronous>, transform_indices = @transform_4, window_bounds = array<i64: 1, 256>}, {pipeline_mode = #tpu.pipeline_mode<synchronous>, transform_indices = @transform_5, window_bounds = array<i64: 256, 128>}, {pipeline_mode = #tpu.pipeline_mode<synchronous>, transform_indices = @transform_6, window_bounds = array<i64: 1, 128>}, {transform_indices = @transform_7, window_bounds = array<i64: 8, 128>}]} {
    %c0 = arith.constant 0 : index
    %c0_0 = arith.constant 0 : index
    %0 = vector.load %arg1[%c0, %c0_0] : memref<8x256xbf16, #tpu.memory_space<vmem>>, vector<8x256xbf16>
    %c0_1 = arith.constant 0 : index
    %c0_2 = arith.constant 0 : index
    %1 = vector.load %arg2[%c0_1, %c0_2] : memref<256x256xbf16, #tpu.memory_space<vmem>>, vector<256x256xbf16>
    %cst = arith.constant dense<0.000000e+00> : vector<8x256xf32>
    %2 = tpu.matmul %0, %1, %cst {dimension_numbers = #tpu.dot_dimension_numbers<[1], [0], [0], [1], [0, 0, 1, 1], [], []>} : vector<8x256xbf16>, vector<256x256xbf16>, vector<8x256xf32> -> vector<8x256xf32>
    %c0_3 = arith.constant 0 : index
    %c0_4 = arith.constant 0 : index
    %3 = vector.load %arg3[%c0_3, %c0_4] : memref<1x256xf32, #tpu.memory_space<vmem>>, vector<1x256xf32>
    %4 = vector.broadcast %3 : vector<1x256xf32> to vector<8x256xf32>
    %5 = arith.addf %2, %4 : vector<8x256xf32>
    %cst_5 = arith.constant dense<0.000000e+00> : vector<8xf32>
    %6 = vector.multi_reduction <add>, %5, %cst_5 [1] : vector<8x256xf32> to vector<8xf32>
    %7 = vector.shape_cast %6 : vector<8xf32> to vector<8x1xf32>
    %cst_6 = arith.constant 2.560000e+02 : f32
    %8 = vector.broadcast %cst_6 : f32 to vector<8x1xf32>
    %9 = arith.divf %7, %8 : vector<8x1xf32>
    %10 = vector.broadcast %9 : vector<8x1xf32> to vector<8x256xf32>
    %11 = arith.subf %5, %10 : vector<8x256xf32>
    %12 = arith.mulf %11, %11 : vector<8x256xf32>
    %cst_7 = arith.constant dense<0.000000e+00> : vector<8xf32>
    %13 = vector.multi_reduction <add>, %12, %cst_7 [1] : vector<8x256xf32> to vector<8xf32>
    %14 = vector.shape_cast %13 : vector<8xf32> to vector<8x1xf32>
    %cst_8 = arith.constant 2.560000e+02 : f32
    %15 = vector.broadcast %cst_8 : f32 to vector<8x1xf32>
    %16 = arith.divf %14, %15 : vector<8x1xf32>
    %cst_9 = arith.constant 9.99999974E-6 : f32
    %17 = vector.broadcast %cst_9 : f32 to vector<8x1xf32>
    %18 = arith.addf %16, %17 : vector<8x1xf32>
    %19 = math.rsqrt %18 : vector<8x1xf32>
    %20 = vector.broadcast %19 : vector<8x1xf32> to vector<8x256xf32>
    %21 = arith.mulf %11, %20 : vector<8x256xf32>
    %c0_10 = arith.constant 0 : index
    %c0_11 = arith.constant 0 : index
    %22 = vector.load %arg4[%c0_10, %c0_11] : memref<1x256xf32, #tpu.memory_space<vmem>>, vector<1x256xf32>
    %23 = vector.broadcast %22 : vector<1x256xf32> to vector<8x256xf32>
    %24 = arith.mulf %21, %23 : vector<8x256xf32>
    %c0_12 = arith.constant 0 : index
    %c0_13 = arith.constant 0 : index
    %25 = vector.load %arg5[%c0_12, %c0_13] : memref<1x256xf32, #tpu.memory_space<vmem>>, vector<1x256xf32>
    %26 = vector.broadcast %25 : vector<1x256xf32> to vector<8x256xf32>
    %27 = arith.addf %24, %26 : vector<8x256xf32>
    %28 = arith.truncf %27 : vector<8x256xf32> to vector<8x256xbf16>
    %c0_14 = arith.constant 0 : index
    %c0_15 = arith.constant 0 : index
    %29 = vector.load %arg6[%c0_14, %c0_15] : memref<256x128xbf16, #tpu.memory_space<vmem>>, vector<256x128xbf16>
    %cst_16 = arith.constant dense<0.000000e+00> : vector<8x128xf32>
    %30 = tpu.matmul %28, %29, %cst_16 {dimension_numbers = #tpu.dot_dimension_numbers<[1], [0], [0], [1], [0, 0, 1, 1], [], []>} : vector<8x256xbf16>, vector<256x128xbf16>, vector<8x128xf32> -> vector<8x128xf32>
    %c0_17 = arith.constant 0 : index
    %c0_18 = arith.constant 0 : index
    %31 = vector.load %arg7[%c0_17, %c0_18] : memref<1x128xf32, #tpu.memory_space<vmem>>, vector<1x128xf32>
    %32 = vector.broadcast %31 : vector<1x128xf32> to vector<8x128xf32>
    %33 = arith.addf %30, %32 : vector<8x128xf32>
    %34 = arith.negf %33 : vector<8x128xf32>
    %35 = math.exp %34 : vector<8x128xf32>
    %cst_19 = arith.constant 1.000000e+00 : f32
    %36 = vector.broadcast %cst_19 : f32 to vector<8x128xf32>
    %37 = arith.addf %36, %35 : vector<8x128xf32>
    %38 = arith.divf %36, %37 : vector<8x128xf32>
    %39 = arith.mulf %33, %38 : vector<8x128xf32>
    %40 = arith.truncf %39 : vector<8x128xf32> to vector<8x128xbf16>
    %c0_20 = arith.constant 0 : index
    %c0_21 = arith.constant 0 : index
    %41 = vector.load %arg8[%c0_20, %c0_21] : memref<8x128xbf16, #tpu.memory_space<vmem>>, vector<8x128xbf16>
    tpu.vector_store %arg8[%c0_20, %c0_21], %40 {strides = array<i32>} : memref<8x128xbf16, #tpu.memory_space<vmem>>, vector<8x128xbf16>,
    return
  }
  func.func @transform_0(%arg0: i32) -> (i32, i32) {
    %c0_i32 = arith.constant 0 : i32
    %c0_i32_0 = arith.constant 0 : i32
    return %arg0, %c0_i32 : i32, i32
  }
  func.func @transform_1(%arg0: i32) -> (i32, i32) {
    %c0_i32 = arith.constant 0 : i32
    %c0_i32_0 = arith.constant 0 : i32
    %c0_i32_1 = arith.constant 0 : i32
    return %c0_i32, %c0_i32_0 : i32, i32
  }
  func.func @transform_2(%arg0: i32) -> (i32, i32) {
    %c0_i32 = arith.constant 0 : i32
    %c0_i32_0 = arith.constant 0 : i32
    %c0_i32_1 = arith.constant 0 : i32
    return %c0_i32, %c0_i32_0 : i32, i32
  }
  func.func @transform_3(%arg0: i32) -> (i32, i32) {
    %c0_i32 = arith.constant 0 : i32
    %c0_i32_0 = arith.constant 0 : i32
    %c0_i32_1 = arith.constant 0 : i32
    return %c0_i32, %c0_i32_0 : i32, i32
  }
  func.func @transform_4(%arg0: i32) -> (i32, i32) {
    %c0_i32 = arith.constant 0 : i32
    %c0_i32_0 = arith.constant 0 : i32
    %c0_i32_1 = arith.constant 0 : i32
    return %c0_i32, %c0_i32_0 : i32, i32
  }
  func.func @transform_5(%arg0: i32) -> (i32, i32) {
    %c0_i32 = arith.constant 0 : i32
    %c0_i32_0 = arith.constant 0 : i32
    %c0_i32_1 = arith.constant 0 : i32
    return %c0_i32, %c0_i32_0 : i32, i32
  }
  func.func @transform_6(%arg0: i32) -> (i32, i32) {
    %c0_i32 = arith.constant 0 : i32
    %c0_i32_0 = arith.constant 0 : i32
    %c0_i32_1 = arith.constant 0 : i32
    return %c0_i32, %c0_i32_0 : i32, i32
  }
  func.func @transform_7(%arg0: i32) -> (i32, i32) {
    %c0_i32 = arith.constant 0 : i32
    %c0_i32_0 = arith.constant 0 : i32
    return %arg0, %c0_i32 : i32, i32
  }
}

module attributes {stable_mosaic.version = 11 : i64} {
  func.func @_linear_kernel(%arg0: i32, %arg1: memref<16x128xbf16, #tpu.memory_space<vmem>>, %arg2: memref<128x128xbf16, #tpu.memory_space<vmem>>, %arg3: memref<1x128xf32, #tpu.memory_space<vmem>>, %arg4: memref<16x128xbf16, #tpu.memory_space<vmem>>) attributes {dimension_semantics = [#tpu.dimension_semantics<parallel>], iteration_bounds = array<i64: 2>, scalar_prefetch = 0 : i64, scratch_operands = 0 : i64, tpu.core_type = #tpu.core_type<tc>, window_params = [{transform_indices = @transform_0, window_bounds = array<i64: 16, 128>}, {pipeline_mode = #tpu.pipeline_mode<synchronous>, transform_indices = @transform_1, window_bounds = array<i64: 128, 128>}, {pipeline_mode = #tpu.pipeline_mode<synchronous>, transform_indices = @transform_2, window_bounds = array<i64: 1, 128>}, {transform_indices = @transform_3, window_bounds = array<i64: 16, 128>}]} {
    %c0 = arith.constant 0 : index
    %c0_0 = arith.constant 0 : index
    %0 = vector.load %arg1[%c0, %c0_0] : memref<16x128xbf16, #tpu.memory_space<vmem>>, vector<16x128xbf16>
    %c0_1 = arith.constant 0 : index
    %c0_2 = arith.constant 0 : index
    %1 = vector.load %arg2[%c0_1, %c0_2] : memref<128x128xbf16, #tpu.memory_space<vmem>>, vector<128x128xbf16>
    %cst = arith.constant dense<0.000000e+00> : vector<16x128xf32>
    %2 = tpu.matmul %0, %1, %cst {dimension_numbers = #tpu.dot_dimension_numbers<[1], [0], [0], [1], [0, 0, 1, 1], [], []>} : vector<16x128xbf16>, vector<128x128xbf16>, vector<16x128xf32> -> vector<16x128xf32>
    %c0_3 = arith.constant 0 : index
    %c0_4 = arith.constant 0 : index
    %3 = vector.load %arg3[%c0_3, %c0_4] : memref<1x128xf32, #tpu.memory_space<vmem>>, vector<1x128xf32>
    %4 = vector.broadcast %3 : vector<1x128xf32> to vector<16x128xf32>
    %5 = arith.addf %2, %4 : vector<16x128xf32>
    %6 = arith.truncf %5 : vector<16x128xf32> to vector<16x128xbf16>
    %c0_5 = arith.constant 0 : index
    %c0_6 = arith.constant 0 : index
    %7 = vector.load %arg4[%c0_5, %c0_6] : memref<16x128xbf16, #tpu.memory_space<vmem>>, vector<16x128xbf16>
    tpu.vector_store %arg4[%c0_5, %c0_6], %6 {strides = array<i32>} : memref<16x128xbf16, #tpu.memory_space<vmem>>, vector<16x128xbf16>,
    return
  }
  func.func @transform_0(%arg0: i32) -> (i32, i32) {
    %c0_i32 = arith.constant 0 : i32
    %c0_i32_0 = arith.constant 0 : i32
    return %arg0, %c0_i32 : i32, i32
  }
  func.func @transform_1(%arg0: i32) -> (i32, i32) {
    %c0_i32 = arith.constant 0 : i32
    %c0_i32_0 = arith.constant 0 : i32
    %c0_i32_1 = arith.constant 0 : i32
    return %c0_i32, %c0_i32_0 : i32, i32
  }
  func.func @transform_2(%arg0: i32) -> (i32, i32) {
    %c0_i32 = arith.constant 0 : i32
    %c0_i32_0 = arith.constant 0 : i32
    %c0_i32_1 = arith.constant 0 : i32
    return %c0_i32, %c0_i32_0 : i32, i32
  }
  func.func @transform_3(%arg0: i32) -> (i32, i32) {
    %c0_i32 = arith.constant 0 : i32
    %c0_i32_0 = arith.constant 0 : i32
    return %arg0, %c0_i32 : i32, i32
  }
}

module attributes {stable_mosaic.version = 11 : i64} {
  func.func @_enc_layer_kernel(%arg0: i32, %arg1: memref<1x8x128xbf16, #tpu.memory_space<vmem>>, %arg2: memref<128x128xbf16, #tpu.memory_space<vmem>>, %arg3: memref<128x128xbf16, #tpu.memory_space<vmem>>, %arg4: memref<128x128xbf16, #tpu.memory_space<vmem>>, %arg5: memref<1x128xf32, #tpu.memory_space<vmem>>, %arg6: memref<1x128xf32, #tpu.memory_space<vmem>>, %arg7: memref<1x128xf32, #tpu.memory_space<vmem>>, %arg8: memref<128x128xbf16, #tpu.memory_space<vmem>>, %arg9: memref<1x128xf32, #tpu.memory_space<vmem>>, %arg10: memref<1x128xf32, #tpu.memory_space<vmem>>, %arg11: memref<1x128xf32, #tpu.memory_space<vmem>>, %arg12: memref<128x256xbf16, #tpu.memory_space<vmem>>, %arg13: memref<1x256xf32, #tpu.memory_space<vmem>>, %arg14: memref<256x128xbf16, #tpu.memory_space<vmem>>, %arg15: memref<1x128xf32, #tpu.memory_space<vmem>>, %arg16: memref<1x128xf32, #tpu.memory_space<vmem>>, %arg17: memref<1x128xf32, #tpu.memory_space<vmem>>, %arg18: memref<1x8x128xbf16, #tpu.memory_space<vmem>>) attributes {dimension_semantics = [#tpu.dimension_semantics<parallel>], iteration_bounds = array<i64: 4>, scalar_prefetch = 0 : i64, scratch_operands = 0 : i64, tpu.core_type = #tpu.core_type<tc>, window_params = [{transform_indices = @transform_0, window_bounds = array<i64: 1, 8, 128>}, {pipeline_mode = #tpu.pipeline_mode<synchronous>, transform_indices = @transform_1, window_bounds = array<i64: 128, 128>}, {pipeline_mode = #tpu.pipeline_mode<synchronous>, transform_indices = @transform_2, window_bounds = array<i64: 128, 128>}, {pipeline_mode = #tpu.pipeline_mode<synchronous>, transform_indices = @transform_3, window_bounds = array<i64: 128, 128>}, {pipeline_mode = #tpu.pipeline_mode<synchronous>, transform_indices = @transform_4, window_bounds = array<i64: 1, 128>}, {pipeline_mode = #tpu.pipeline_mode<synchronous>, transform_indices = @transform_5, window_bounds = array<i64: 1, 128>}, {pipeline_mode = #tpu.pipeline_mode<synchronous>, transform_indices = @transform_6, window_bounds = array<i64: 1, 128>}, {pipeline_mode = #tpu.pipeline_mode<synchronous>, transform_indices = @transform_7, window_bounds = array<i64: 128, 128>}, {pipeline_mode = #tpu.pipeline_mode<synchronous>, transform_indices = @transform_8, window_bounds = array<i64: 1, 128>}, {pipeline_mode = #tpu.pipeline_mode<synchronous>, transform_indices = @transform_9, window_bounds = array<i64: 1, 128>}, {pipeline_mode = #tpu.pipeline_mode<synchronous>, transform_indices = @transform_10, window_bounds = array<i64: 1, 128>}, {pipeline_mode = #tpu.pipeline_mode<synchronous>, transform_indices = @transform_11, window_bounds = array<i64: 128, 256>}, {pipeline_mode = #tpu.pipeline_mode<synchronous>, transform_indices = @transform_12, window_bounds = array<i64: 1, 256>}, {pipeline_mode = #tpu.pipeline_mode<synchronous>, transform_indices = @transform_13, window_bounds = array<i64: 256, 128>}, {pipeline_mode = #tpu.pipeline_mode<synchronous>, transform_indices = @transform_14, window_bounds = array<i64: 1, 128>}, {pipeline_mode = #tpu.pipeline_mode<synchronous>, transform_indices = @transform_15, window_bounds = array<i64: 1, 128>}, {pipeline_mode = #tpu.pipeline_mode<synchronous>, transform_indices = @transform_16, window_bounds = array<i64: 1, 128>}, {transform_indices = @transform_17, window_bounds = array<i64: 1, 8, 128>}]} {
    %c0 = arith.constant 0 : index
    %c0_0 = arith.constant 0 : index
    %c0_1 = arith.constant 0 : index
    %0 = vector.load %arg1[%c0, %c0_0, %c0_1] : memref<1x8x128xbf16, #tpu.memory_space<vmem>>, vector<1x8x128xbf16>
    %1 = vector.shape_cast %0 : vector<1x8x128xbf16> to vector<8x128xbf16>
    %c0_2 = arith.constant 0 : index
    %c0_3 = arith.constant 0 : index
    %2 = vector.load %arg2[%c0_2, %c0_3] : memref<128x128xbf16, #tpu.memory_space<vmem>>, vector<128x128xbf16>
    %cst = arith.constant dense<0.000000e+00> : vector<8x128xf32>
    %3 = tpu.matmul %1, %2, %cst {dimension_numbers = #tpu.dot_dimension_numbers<[1], [0], [0], [1], [0, 0, 1, 1], [], []>} : vector<8x128xbf16>, vector<128x128xbf16>, vector<8x128xf32> -> vector<8x128xf32>
    %c0_4 = arith.constant 0 : index
    %c0_5 = arith.constant 0 : index
    %4 = vector.load %arg5[%c0_4, %c0_5] : memref<1x128xf32, #tpu.memory_space<vmem>>, vector<1x128xf32>
    %5 = vector.broadcast %4 : vector<1x128xf32> to vector<8x128xf32>
    %6 = arith.addf %3, %5 : vector<8x128xf32>
    %7 = arith.truncf %6 : vector<8x128xf32> to vector<8x128xbf16>
    %c0_6 = arith.constant 0 : index
    %c0_7 = arith.constant 0 : index
    %8 = vector.load %arg3[%c0_6, %c0_7] : memref<128x128xbf16, #tpu.memory_space<vmem>>, vector<128x128xbf16>
    %cst_8 = arith.constant dense<0.000000e+00> : vector<8x128xf32>
    %9 = tpu.matmul %1, %8, %cst_8 {dimension_numbers = #tpu.dot_dimension_numbers<[1], [0], [0], [1], [0, 0, 1, 1], [], []>} : vector<8x128xbf16>, vector<128x128xbf16>, vector<8x128xf32> -> vector<8x128xf32>
    %c0_9 = arith.constant 0 : index
    %c0_10 = arith.constant 0 : index
    %10 = vector.load %arg6[%c0_9, %c0_10] : memref<1x128xf32, #tpu.memory_space<vmem>>, vector<1x128xf32>
    %11 = vector.broadcast %10 : vector<1x128xf32> to vector<8x128xf32>
    %12 = arith.addf %9, %11 : vector<8x128xf32>
    %13 = arith.truncf %12 : vector<8x128xf32> to vector<8x128xbf16>
    %c0_11 = arith.constant 0 : index
    %c0_12 = arith.constant 0 : index
    %14 = vector.load %arg4[%c0_11, %c0_12] : memref<128x128xbf16, #tpu.memory_space<vmem>>, vector<128x128xbf16>
    %cst_13 = arith.constant dense<0.000000e+00> : vector<8x128xf32>
    %15 = tpu.matmul %1, %14, %cst_13 {dimension_numbers = #tpu.dot_dimension_numbers<[1], [0], [0], [1], [0, 0, 1, 1], [], []>} : vector<8x128xbf16>, vector<128x128xbf16>, vector<8x128xf32> -> vector<8x128xf32>
    %c0_14 = arith.constant 0 : index
    %c0_15 = arith.constant 0 : index
    %16 = vector.load %arg7[%c0_14, %c0_15] : memref<1x128xf32, #tpu.memory_space<vmem>>, vector<1x128xf32>
    %17 = vector.broadcast %16 : vector<1x128xf32> to vector<8x128xf32>
    %18 = arith.addf %15, %17 : vector<8x128xf32>
    %19 = arith.truncf %18 : vector<8x128xf32> to vector<8x128xbf16>
    %20 = vector.extract_strided_slice %7 {offsets = [0, 0], sizes = [8, 32], strides = [1, 1]} : vector<8x128xbf16> to vector<8x32xbf16>
    %21 = vector.extract_strided_slice %13 {offsets = [0, 0], sizes = [8, 32], strides = [1, 1]} : vector<8x128xbf16> to vector<8x32xbf16>
    %22 = vector.extract_strided_slice %19 {offsets = [0, 0], sizes = [8, 32], strides = [1, 1]} : vector<8x128xbf16> to vector<8x32xbf16>
    %cst_16 = arith.constant dense<0.000000e+00> : vector<8x8xf32>
    %23 = tpu.matmul %20, %21, %cst_16 {dimension_numbers = #tpu.dot_dimension_numbers<[1], [1], [0], [0], [0, 0, 1, 0], [], []>} : vector<8x32xbf16>, vector<8x32xbf16>, vector<8x8xf32> -> vector<8x8xf32>
    %cst_17 = arith.constant 0.176776692 : f32
    %24 = vector.broadcast %cst_17 : f32 to vector<8x8xf32>
    %25 = arith.mulf %23, %24 : vector<8x8xf32>
    %cst_18 = arith.constant dense<0xFF800000> : vector<8xf32>
    %26 = vector.multi_reduction <maximumf>, %25, %cst_18 [1] : vector<8x8xf32> to vector<8xf32>
    %27 = vector.shape_cast %26 : vector<8xf32> to vector<8x1xf32>
    %28 = vector.broadcast %27 : vector<8x1xf32> to vector<8x8xf32>
    %29 = arith.subf %25, %28 : vector<8x8xf32>
    %30 = math.exp %29 : vector<8x8xf32>
    %cst_19 = arith.constant dense<0.000000e+00> : vector<8xf32>
    %31 = vector.multi_reduction <add>, %30, %cst_19 [1] : vector<8x8xf32> to vector<8xf32>
    %32 = vector.shape_cast %31 : vector<8xf32> to vector<8x1xf32>
    %33 = tpu.reciprocal %32 {approx = true} : vector<8x1xf32> -> vector<8x1xf32>
    %34 = vector.broadcast %33 : vector<8x1xf32> to vector<8x8xf32>
    %35 = arith.mulf %30, %34 : vector<8x8xf32>
    %36 = arith.truncf %35 : vector<8x8xf32> to vector<8x8xbf16>
    %cst_20 = arith.constant dense<0.000000e+00> : vector<8x32xf32>
    %37 = tpu.matmul %36, %22, %cst_20 {dimension_numbers = #tpu.dot_dimension_numbers<[1], [0], [0], [1], [0, 0, 1, 1], [], []>} : vector<8x8xbf16>, vector<8x32xbf16>, vector<8x32xf32> -> vector<8x32xf32>
    %38 = vector.extract_strided_slice %7 {offsets = [0, 32], sizes = [8, 32], strides = [1, 1]} : vector<8x128xbf16> to vector<8x32xbf16>
    %39 = vector.extract_strided_slice %13 {offsets = [0, 32], sizes = [8, 32], strides = [1, 1]} : vector<8x128xbf16> to vector<8x32xbf16>
    %40 = vector.extract_strided_slice %19 {offsets = [0, 32], sizes = [8, 32], strides = [1, 1]} : vector<8x128xbf16> to vector<8x32xbf16>
    %cst_21 = arith.constant dense<0.000000e+00> : vector<8x8xf32>
    %41 = tpu.matmul %38, %39, %cst_21 {dimension_numbers = #tpu.dot_dimension_numbers<[1], [1], [0], [0], [0, 0, 1, 0], [], []>} : vector<8x32xbf16>, vector<8x32xbf16>, vector<8x8xf32> -> vector<8x8xf32>
    %cst_22 = arith.constant 0.176776692 : f32
    %42 = vector.broadcast %cst_22 : f32 to vector<8x8xf32>
    %43 = arith.mulf %41, %42 : vector<8x8xf32>
    %cst_23 = arith.constant dense<0xFF800000> : vector<8xf32>
    %44 = vector.multi_reduction <maximumf>, %43, %cst_23 [1] : vector<8x8xf32> to vector<8xf32>
    %45 = vector.shape_cast %44 : vector<8xf32> to vector<8x1xf32>
    %46 = vector.broadcast %45 : vector<8x1xf32> to vector<8x8xf32>
    %47 = arith.subf %43, %46 : vector<8x8xf32>
    %48 = math.exp %47 : vector<8x8xf32>
    %cst_24 = arith.constant dense<0.000000e+00> : vector<8xf32>
    %49 = vector.multi_reduction <add>, %48, %cst_24 [1] : vector<8x8xf32> to vector<8xf32>
    %50 = vector.shape_cast %49 : vector<8xf32> to vector<8x1xf32>
    %51 = tpu.reciprocal %50 {approx = true} : vector<8x1xf32> -> vector<8x1xf32>
    %52 = vector.broadcast %51 : vector<8x1xf32> to vector<8x8xf32>
    %53 = arith.mulf %48, %52 : vector<8x8xf32>
    %54 = arith.truncf %53 : vector<8x8xf32> to vector<8x8xbf16>
    %cst_25 = arith.constant dense<0.000000e+00> : vector<8x32xf32>
    %55 = tpu.matmul %54, %40, %cst_25 {dimension_numbers = #tpu.dot_dimension_numbers<[1], [0], [0], [1], [0, 0, 1, 1], [], []>} : vector<8x8xbf16>, vector<8x32xbf16>, vector<8x32xf32> -> vector<8x32xf32>
    %56 = vector.extract_strided_slice %7 {offsets = [0, 64], sizes = [8, 32], strides = [1, 1]} : vector<8x128xbf16> to vector<8x32xbf16>
    %57 = vector.extract_strided_slice %13 {offsets = [0, 64], sizes = [8, 32], strides = [1, 1]} : vector<8x128xbf16> to vector<8x32xbf16>
    %58 = vector.extract_strided_slice %19 {offsets = [0, 64], sizes = [8, 32], strides = [1, 1]} : vector<8x128xbf16> to vector<8x32xbf16>
    %cst_26 = arith.constant dense<0.000000e+00> : vector<8x8xf32>
    %59 = tpu.matmul %56, %57, %cst_26 {dimension_numbers = #tpu.dot_dimension_numbers<[1], [1], [0], [0], [0, 0, 1, 0], [], []>} : vector<8x32xbf16>, vector<8x32xbf16>, vector<8x8xf32> -> vector<8x8xf32>
    %cst_27 = arith.constant 0.176776692 : f32
    %60 = vector.broadcast %cst_27 : f32 to vector<8x8xf32>
    %61 = arith.mulf %59, %60 : vector<8x8xf32>
    %cst_28 = arith.constant dense<0xFF800000> : vector<8xf32>
    %62 = vector.multi_reduction <maximumf>, %61, %cst_28 [1] : vector<8x8xf32> to vector<8xf32>
    %63 = vector.shape_cast %62 : vector<8xf32> to vector<8x1xf32>
    %64 = vector.broadcast %63 : vector<8x1xf32> to vector<8x8xf32>
    %65 = arith.subf %61, %64 : vector<8x8xf32>
    %66 = math.exp %65 : vector<8x8xf32>
    %cst_29 = arith.constant dense<0.000000e+00> : vector<8xf32>
    %67 = vector.multi_reduction <add>, %66, %cst_29 [1] : vector<8x8xf32> to vector<8xf32>
    %68 = vector.shape_cast %67 : vector<8xf32> to vector<8x1xf32>
    %69 = tpu.reciprocal %68 {approx = true} : vector<8x1xf32> -> vector<8x1xf32>
    %70 = vector.broadcast %69 : vector<8x1xf32> to vector<8x8xf32>
    %71 = arith.mulf %66, %70 : vector<8x8xf32>
    %72 = arith.truncf %71 : vector<8x8xf32> to vector<8x8xbf16>
    %cst_30 = arith.constant dense<0.000000e+00> : vector<8x32xf32>
    %73 = tpu.matmul %72, %58, %cst_30 {dimension_numbers = #tpu.dot_dimension_numbers<[1], [0], [0], [1], [0, 0, 1, 1], [], []>} : vector<8x8xbf16>, vector<8x32xbf16>, vector<8x32xf32> -> vector<8x32xf32>
    %74 = vector.extract_strided_slice %7 {offsets = [0, 96], sizes = [8, 32], strides = [1, 1]} : vector<8x128xbf16> to vector<8x32xbf16>
    %75 = vector.extract_strided_slice %13 {offsets = [0, 96], sizes = [8, 32], strides = [1, 1]} : vector<8x128xbf16> to vector<8x32xbf16>
    %76 = vector.extract_strided_slice %19 {offsets = [0, 96], sizes = [8, 32], strides = [1, 1]} : vector<8x128xbf16> to vector<8x32xbf16>
    %cst_31 = arith.constant dense<0.000000e+00> : vector<8x8xf32>
    %77 = tpu.matmul %74, %75, %cst_31 {dimension_numbers = #tpu.dot_dimension_numbers<[1], [1], [0], [0], [0, 0, 1, 0], [], []>} : vector<8x32xbf16>, vector<8x32xbf16>, vector<8x8xf32> -> vector<8x8xf32>
    %cst_32 = arith.constant 0.176776692 : f32
    %78 = vector.broadcast %cst_32 : f32 to vector<8x8xf32>
    %79 = arith.mulf %77, %78 : vector<8x8xf32>
    %cst_33 = arith.constant dense<0xFF800000> : vector<8xf32>
    %80 = vector.multi_reduction <maximumf>, %79, %cst_33 [1] : vector<8x8xf32> to vector<8xf32>
    %81 = vector.shape_cast %80 : vector<8xf32> to vector<8x1xf32>
    %82 = vector.broadcast %81 : vector<8x1xf32> to vector<8x8xf32>
    %83 = arith.subf %79, %82 : vector<8x8xf32>
    %84 = math.exp %83 : vector<8x8xf32>
    %cst_34 = arith.constant dense<0.000000e+00> : vector<8xf32>
    %85 = vector.multi_reduction <add>, %84, %cst_34 [1] : vector<8x8xf32> to vector<8xf32>
    %86 = vector.shape_cast %85 : vector<8xf32> to vector<8x1xf32>
    %87 = tpu.reciprocal %86 {approx = true} : vector<8x1xf32> -> vector<8x1xf32>
    %88 = vector.broadcast %87 : vector<8x1xf32> to vector<8x8xf32>
    %89 = arith.mulf %84, %88 : vector<8x8xf32>
    %90 = arith.truncf %89 : vector<8x8xf32> to vector<8x8xbf16>
    %cst_35 = arith.constant dense<0.000000e+00> : vector<8x32xf32>
    %91 = tpu.matmul %90, %76, %cst_35 {dimension_numbers = #tpu.dot_dimension_numbers<[1], [0], [0], [1], [0, 0, 1, 1], [], []>} : vector<8x8xbf16>, vector<8x32xbf16>, vector<8x32xf32> -> vector<8x32xf32>
    %92 = tpu.concatenate %37, %55, %73, %91 in 1 : vector<8x32xf32>, vector<8x32xf32>, vector<8x32xf32>, vector<8x32xf32> -> vector<8x128xf32>
    %93 = arith.truncf %92 : vector<8x128xf32> to vector<8x128xbf16>
    %c0_36 = arith.constant 0 : index
    %c0_37 = arith.constant 0 : index
    %94 = vector.load %arg8[%c0_36, %c0_37] : memref<128x128xbf16, #tpu.memory_space<vmem>>, vector<128x128xbf16>
    %cst_38 = arith.constant dense<0.000000e+00> : vector<8x128xf32>
    %95 = tpu.matmul %93, %94, %cst_38 {dimension_numbers = #tpu.dot_dimension_numbers<[1], [0], [0], [1], [0, 0, 1, 1], [], []>} : vector<8x128xbf16>, vector<128x128xbf16>, vector<8x128xf32> -> vector<8x128xf32>
    %c0_39 = arith.constant 0 : index
    %c0_40 = arith.constant 0 : index
    %96 = vector.load %arg9[%c0_39, %c0_40] : memref<1x128xf32, #tpu.memory_space<vmem>>, vector<1x128xf32>
    %97 = vector.broadcast %96 : vector<1x128xf32> to vector<8x128xf32>
    %98 = arith.addf %95, %97 : vector<8x128xf32>
    %99 = arith.extf %1 : vector<8x128xbf16> to vector<8x128xf32>
    %100 = arith.addf %99, %98 : vector<8x128xf32>
    %cst_41 = arith.constant dense<0.000000e+00> : vector<8xf32>
    %101 = vector.multi_reduction <add>, %100, %cst_41 [1] : vector<8x128xf32> to vector<8xf32>
    %102 = vector.shape_cast %101 : vector<8xf32> to vector<8x1xf32>
    %cst_42 = arith.constant 1.280000e+02 : f32
    %103 = vector.broadcast %cst_42 : f32 to vector<8x1xf32>
    %104 = arith.divf %102, %103 : vector<8x1xf32>
    %105 = vector.broadcast %104 : vector<8x1xf32> to vector<8x128xf32>
    %106 = arith.subf %100, %105 : vector<8x128xf32>
    %107 = arith.mulf %106, %106 : vector<8x128xf32>
    %cst_43 = arith.constant dense<0.000000e+00> : vector<8xf32>
    %108 = vector.multi_reduction <add>, %107, %cst_43 [1] : vector<8x128xf32> to vector<8xf32>
    %109 = vector.shape_cast %108 : vector<8xf32> to vector<8x1xf32>
    %cst_44 = arith.constant 1.280000e+02 : f32
    %110 = vector.broadcast %cst_44 : f32 to vector<8x1xf32>
    %111 = arith.divf %109, %110 : vector<8x1xf32>
    %cst_45 = arith.constant 9.99999974E-6 : f32
    %112 = vector.broadcast %cst_45 : f32 to vector<8x1xf32>
    %113 = arith.addf %111, %112 : vector<8x1xf32>
    %114 = math.rsqrt %113 : vector<8x1xf32>
    %115 = vector.broadcast %114 : vector<8x1xf32> to vector<8x128xf32>
    %116 = arith.mulf %106, %115 : vector<8x128xf32>
    %c0_46 = arith.constant 0 : index
    %c0_47 = arith.constant 0 : index
    %117 = vector.load %arg10[%c0_46, %c0_47] : memref<1x128xf32, #tpu.memory_space<vmem>>, vector<1x128xf32>
    %118 = vector.broadcast %117 : vector<1x128xf32> to vector<8x128xf32>
    %119 = arith.mulf %116, %118 : vector<8x128xf32>
    %c0_48 = arith.constant 0 : index
    %c0_49 = arith.constant 0 : index
    %120 = vector.load %arg11[%c0_48, %c0_49] : memref<1x128xf32, #tpu.memory_space<vmem>>, vector<1x128xf32>
    %121 = vector.broadcast %120 : vector<1x128xf32> to vector<8x128xf32>
    %122 = arith.addf %119, %121 : vector<8x128xf32>
    %123 = arith.truncf %122 : vector<8x128xf32> to vector<8x128xbf16>
    %c0_50 = arith.constant 0 : index
    %c0_51 = arith.constant 0 : index
    %124 = vector.load %arg12[%c0_50, %c0_51] : memref<128x256xbf16, #tpu.memory_space<vmem>>, vector<128x256xbf16>
    %cst_52 = arith.constant dense<0.000000e+00> : vector<8x256xf32>
    %125 = tpu.matmul %123, %124, %cst_52 {dimension_numbers = #tpu.dot_dimension_numbers<[1], [0], [0], [1], [0, 0, 1, 1], [], []>} : vector<8x128xbf16>, vector<128x256xbf16>, vector<8x256xf32> -> vector<8x256xf32>
    %c0_53 = arith.constant 0 : index
    %c0_54 = arith.constant 0 : index
    %126 = vector.load %arg13[%c0_53, %c0_54] : memref<1x256xf32, #tpu.memory_space<vmem>>, vector<1x256xf32>
    %127 = vector.broadcast %126 : vector<1x256xf32> to vector<8x256xf32>
    %128 = arith.addf %125, %127 : vector<8x256xf32>
    %cst_55 = arith.constant 0.000000e+00 : f32
    %129 = vector.broadcast %cst_55 : f32 to vector<8x256xf32>
    %130 = arith.maximumf %128, %129 : vector<8x256xf32>
    %131 = arith.truncf %130 : vector<8x256xf32> to vector<8x256xbf16>
    %c0_56 = arith.constant 0 : index
    %c0_57 = arith.constant 0 : index
    %132 = vector.load %arg14[%c0_56, %c0_57] : memref<256x128xbf16, #tpu.memory_space<vmem>>, vector<256x128xbf16>
    %cst_58 = arith.constant dense<0.000000e+00> : vector<8x128xf32>
    %133 = tpu.matmul %131, %132, %cst_58 {dimension_numbers = #tpu.dot_dimension_numbers<[1], [0], [0], [1], [0, 0, 1, 1], [], []>} : vector<8x256xbf16>, vector<256x128xbf16>, vector<8x128xf32> -> vector<8x128xf32>
    %c0_59 = arith.constant 0 : index
    %c0_60 = arith.constant 0 : index
    %134 = vector.load %arg15[%c0_59, %c0_60] : memref<1x128xf32, #tpu.memory_space<vmem>>, vector<1x128xf32>
    %135 = vector.broadcast %134 : vector<1x128xf32> to vector<8x128xf32>
    %136 = arith.addf %133, %135 : vector<8x128xf32>
    %137 = arith.addf %122, %136 : vector<8x128xf32>
    %cst_61 = arith.constant dense<0.000000e+00> : vector<8xf32>
    %138 = vector.multi_reduction <add>, %137, %cst_61 [1] : vector<8x128xf32> to vector<8xf32>
    %139 = vector.shape_cast %138 : vector<8xf32> to vector<8x1xf32>
    %cst_62 = arith.constant 1.280000e+02 : f32
    %140 = vector.broadcast %cst_62 : f32 to vector<8x1xf32>
    %141 = arith.divf %139, %140 : vector<8x1xf32>
    %142 = vector.broadcast %141 : vector<8x1xf32> to vector<8x128xf32>
    %143 = arith.subf %137, %142 : vector<8x128xf32>
    %144 = arith.mulf %143, %143 : vector<8x128xf32>
    %cst_63 = arith.constant dense<0.000000e+00> : vector<8xf32>
    %145 = vector.multi_reduction <add>, %144, %cst_63 [1] : vector<8x128xf32> to vector<8xf32>
    %146 = vector.shape_cast %145 : vector<8xf32> to vector<8x1xf32>
    %cst_64 = arith.constant 1.280000e+02 : f32
    %147 = vector.broadcast %cst_64 : f32 to vector<8x1xf32>
    %148 = arith.divf %146, %147 : vector<8x1xf32>
    %cst_65 = arith.constant 9.99999974E-6 : f32
    %149 = vector.broadcast %cst_65 : f32 to vector<8x1xf32>
    %150 = arith.addf %148, %149 : vector<8x1xf32>
    %151 = math.rsqrt %150 : vector<8x1xf32>
    %152 = vector.broadcast %151 : vector<8x1xf32> to vector<8x128xf32>
    %153 = arith.mulf %143, %152 : vector<8x128xf32>
    %c0_66 = arith.constant 0 : index
    %c0_67 = arith.constant 0 : index
    %154 = vector.load %arg16[%c0_66, %c0_67] : memref<1x128xf32, #tpu.memory_space<vmem>>, vector<1x128xf32>
    %155 = vector.broadcast %154 : vector<1x128xf32> to vector<8x128xf32>
    %156 = arith.mulf %153, %155 : vector<8x128xf32>
    %c0_68 = arith.constant 0 : index
    %c0_69 = arith.constant 0 : index
    %157 = vector.load %arg17[%c0_68, %c0_69] : memref<1x128xf32, #tpu.memory_space<vmem>>, vector<1x128xf32>
    %158 = vector.broadcast %157 : vector<1x128xf32> to vector<8x128xf32>
    %159 = arith.addf %156, %158 : vector<8x128xf32>
    %160 = arith.truncf %159 : vector<8x128xf32> to vector<8x128xbf16>
    %c0_70 = arith.constant 0 : index
    %c0_71 = arith.constant 0 : index
    %c0_72 = arith.constant 0 : index
    %161 = vector.load %arg18[%c0_70, %c0_71, %c0_72] : memref<1x8x128xbf16, #tpu.memory_space<vmem>>, vector<1x8x128xbf16>
    %162 = vector.shape_cast %161 : vector<1x8x128xbf16> to vector<8x128xbf16>
    %163 = vector.shape_cast %160 : vector<8x128xbf16> to vector<1x8x128xbf16>
    tpu.vector_store %arg18[%c0_70, %c0_71, %c0_72], %163 {strides = array<i32>} : memref<1x8x128xbf16, #tpu.memory_space<vmem>>, vector<1x8x128xbf16>,
    return
  }
  func.func @transform_0(%arg0: i32) -> (i32, i32, i32) {
    %c0_i32 = arith.constant 0 : i32
    %c0_i32_0 = arith.constant 0 : i32
    %c0_i32_1 = arith.constant 0 : i32
    return %arg0, %c0_i32, %c0_i32_0 : i32, i32, i32
  }
  func.func @transform_1(%arg0: i32) -> (i32, i32) {
    %c0_i32 = arith.constant 0 : i32
    %c0_i32_0 = arith.constant 0 : i32
    %c0_i32_1 = arith.constant 0 : i32
    return %c0_i32, %c0_i32_0 : i32, i32
  }
  func.func @transform_2(%arg0: i32) -> (i32, i32) {
    %c0_i32 = arith.constant 0 : i32
    %c0_i32_0 = arith.constant 0 : i32
    %c0_i32_1 = arith.constant 0 : i32
    return %c0_i32, %c0_i32_0 : i32, i32
  }
  func.func @transform_3(%arg0: i32) -> (i32, i32) {
    %c0_i32 = arith.constant 0 : i32
    %c0_i32_0 = arith.constant 0 : i32
    %c0_i32_1 = arith.constant 0 : i32
    return %c0_i32, %c0_i32_0 : i32, i32
  }
  func.func @transform_4(%arg0: i32) -> (i32, i32) {
    %c0_i32 = arith.constant 0 : i32
    %c0_i32_0 = arith.constant 0 : i32
    %c0_i32_1 = arith.constant 0 : i32
    return %c0_i32, %c0_i32_0 : i32, i32
  }
  func.func @transform_5(%arg0: i32) -> (i32, i32) {
    %c0_i32 = arith.constant 0 : i32
    %c0_i32_0 = arith.constant 0 : i32
    %c0_i32_1 = arith.constant 0 : i32
    return %c0_i32, %c0_i32_0 : i32, i32
  }
  func.func @transform_6(%arg0: i32) -> (i32, i32) {
    %c0_i32 = arith.constant 0 : i32
    %c0_i32_0 = arith.constant 0 : i32
    %c0_i32_1 = arith.constant 0 : i32
    return %c0_i32, %c0_i32_0 : i32, i32
  }
  func.func @transform_7(%arg0: i32) -> (i32, i32) {
    %c0_i32 = arith.constant 0 : i32
    %c0_i32_0 = arith.constant 0 : i32
    %c0_i32_1 = arith.constant 0 : i32
    return %c0_i32, %c0_i32_0 : i32, i32
  }
  func.func @transform_8(%arg0: i32) -> (i32, i32) {
    %c0_i32 = arith.constant 0 : i32
    %c0_i32_0 = arith.constant 0 : i32
    %c0_i32_1 = arith.constant 0 : i32
    return %c0_i32, %c0_i32_0 : i32, i32
  }
  func.func @transform_9(%arg0: i32) -> (i32, i32) {
    %c0_i32 = arith.constant 0 : i32
    %c0_i32_0 = arith.constant 0 : i32
    %c0_i32_1 = arith.constant 0 : i32
    return %c0_i32, %c0_i32_0 : i32, i32
  }
  func.func @transform_10(%arg0: i32) -> (i32, i32) {
    %c0_i32 = arith.constant 0 : i32
    %c0_i32_0 = arith.constant 0 : i32
    %c0_i32_1 = arith.constant 0 : i32
    return %c0_i32, %c0_i32_0 : i32, i32
  }
  func.func @transform_11(%arg0: i32) -> (i32, i32) {
    %c0_i32 = arith.constant 0 : i32
    %c0_i32_0 = arith.constant 0 : i32
    %c0_i32_1 = arith.constant 0 : i32
    return %c0_i32, %c0_i32_0 : i32, i32
  }
  func.func @transform_12(%arg0: i32) -> (i32, i32) {
    %c0_i32 = arith.constant 0 : i32
    %c0_i32_0 = arith.constant 0 : i32
    %c0_i32_1 = arith.constant 0 : i32
    return %c0_i32, %c0_i32_0 : i32, i32
  }
  func.func @transform_13(%arg0: i32) -> (i32, i32) {
    %c0_i32 = arith.constant 0 : i32
    %c0_i32_0 = arith.constant 0 : i32
    %c0_i32_1 = arith.constant 0 : i32
    return %c0_i32, %c0_i32_0 : i32, i32
  }
  func.func @transform_14(%arg0: i32) -> (i32, i32) {
    %c0_i32 = arith.constant 0 : i32
    %c0_i32_0 = arith.constant 0 : i32
    %c0_i32_1 = arith.constant 0 : i32
    return %c0_i32, %c0_i32_0 : i32, i32
  }
  func.func @transform_15(%arg0: i32) -> (i32, i32) {
    %c0_i32 = arith.constant 0 : i32
    %c0_i32_0 = arith.constant 0 : i32
    %c0_i32_1 = arith.constant 0 : i32
    return %c0_i32, %c0_i32_0 : i32, i32
  }
  func.func @transform_16(%arg0: i32) -> (i32, i32) {
    %c0_i32 = arith.constant 0 : i32
    %c0_i32_0 = arith.constant 0 : i32
    %c0_i32_1 = arith.constant 0 : i32
    return %c0_i32, %c0_i32_0 : i32, i32
  }
  func.func @transform_17(%arg0: i32) -> (i32, i32, i32) {
    %c0_i32 = arith.constant 0 : i32
    %c0_i32_0 = arith.constant 0 : i32
    %c0_i32_1 = arith.constant 0 : i32
    return %arg0, %c0_i32, %c0_i32_0 : i32, i32, i32
  }
}

module attributes {stable_mosaic.version = 11 : i64} {
  func.func @_linear_kernel(%arg0: i32, %arg1: memref<8x256xbf16, #tpu.memory_space<vmem>>, %arg2: memref<256x128xbf16, #tpu.memory_space<vmem>>, %arg3: memref<1x128xf32, #tpu.memory_space<vmem>>, %arg4: memref<8x128xbf16, #tpu.memory_space<vmem>>) attributes {dimension_semantics = [#tpu.dimension_semantics<parallel>], iteration_bounds = array<i64: 2>, scalar_prefetch = 0 : i64, scratch_operands = 0 : i64, tpu.core_type = #tpu.core_type<tc>, window_params = [{transform_indices = @transform_0, window_bounds = array<i64: 8, 256>}, {pipeline_mode = #tpu.pipeline_mode<synchronous>, transform_indices = @transform_1, window_bounds = array<i64: 256, 128>}, {pipeline_mode = #tpu.pipeline_mode<synchronous>, transform_indices = @transform_2, window_bounds = array<i64: 1, 128>}, {transform_indices = @transform_3, window_bounds = array<i64: 8, 128>}]} {
    %c0 = arith.constant 0 : index
    %c0_0 = arith.constant 0 : index
    %0 = vector.load %arg1[%c0, %c0_0] : memref<8x256xbf16, #tpu.memory_space<vmem>>, vector<8x256xbf16>
    %c0_1 = arith.constant 0 : index
    %c0_2 = arith.constant 0 : index
    %1 = vector.load %arg2[%c0_1, %c0_2] : memref<256x128xbf16, #tpu.memory_space<vmem>>, vector<256x128xbf16>
    %cst = arith.constant dense<0.000000e+00> : vector<8x128xf32>
    %2 = tpu.matmul %0, %1, %cst {dimension_numbers = #tpu.dot_dimension_numbers<[1], [0], [0], [1], [0, 0, 1, 1], [], []>} : vector<8x256xbf16>, vector<256x128xbf16>, vector<8x128xf32> -> vector<8x128xf32>
    %c0_3 = arith.constant 0 : index
    %c0_4 = arith.constant 0 : index
    %3 = vector.load %arg3[%c0_3, %c0_4] : memref<1x128xf32, #tpu.memory_space<vmem>>, vector<1x128xf32>
    %4 = vector.broadcast %3 : vector<1x128xf32> to vector<8x128xf32>
    %5 = arith.addf %2, %4 : vector<8x128xf32>
    %6 = arith.truncf %5 : vector<8x128xf32> to vector<8x128xbf16>
    %c0_5 = arith.constant 0 : index
    %c0_6 = arith.constant 0 : index
    %7 = vector.load %arg4[%c0_5, %c0_6] : memref<8x128xbf16, #tpu.memory_space<vmem>>, vector<8x128xbf16>
    tpu.vector_store %arg4[%c0_5, %c0_6], %6 {strides = array<i32>} : memref<8x128xbf16, #tpu.memory_space<vmem>>, vector<8x128xbf16>,
    return
  }
  func.func @transform_0(%arg0: i32) -> (i32, i32) {
    %c0_i32 = arith.constant 0 : i32
    %c0_i32_0 = arith.constant 0 : i32
    return %arg0, %c0_i32 : i32, i32
  }
  func.func @transform_1(%arg0: i32) -> (i32, i32) {
    %c0_i32 = arith.constant 0 : i32
    %c0_i32_0 = arith.constant 0 : i32
    %c0_i32_1 = arith.constant 0 : i32
    return %c0_i32, %c0_i32_0 : i32, i32
  }
  func.func @transform_2(%arg0: i32) -> (i32, i32) {
    %c0_i32 = arith.constant 0 : i32
    %c0_i32_0 = arith.constant 0 : i32
    %c0_i32_1 = arith.constant 0 : i32
    return %c0_i32, %c0_i32_0 : i32, i32
  }
  func.func @transform_3(%arg0: i32) -> (i32, i32) {
    %c0_i32 = arith.constant 0 : i32
    %c0_i32_0 = arith.constant 0 : i32
    return %arg0, %c0_i32 : i32, i32
  }
}

module attributes {stable_mosaic.version = 11 : i64} {
  func.func @_enc_layer_kernel(%arg0: i32, %arg1: memref<1x8x128xbf16, #tpu.memory_space<vmem>>, %arg2: memref<128x128xbf16, #tpu.memory_space<vmem>>, %arg3: memref<128x128xbf16, #tpu.memory_space<vmem>>, %arg4: memref<128x128xbf16, #tpu.memory_space<vmem>>, %arg5: memref<1x128xf32, #tpu.memory_space<vmem>>, %arg6: memref<1x128xf32, #tpu.memory_space<vmem>>, %arg7: memref<1x128xf32, #tpu.memory_space<vmem>>, %arg8: memref<128x128xbf16, #tpu.memory_space<vmem>>, %arg9: memref<1x128xf32, #tpu.memory_space<vmem>>, %arg10: memref<1x128xf32, #tpu.memory_space<vmem>>, %arg11: memref<1x128xf32, #tpu.memory_space<vmem>>, %arg12: memref<128x256xbf16, #tpu.memory_space<vmem>>, %arg13: memref<1x256xf32, #tpu.memory_space<vmem>>, %arg14: memref<256x128xbf16, #tpu.memory_space<vmem>>, %arg15: memref<1x128xf32, #tpu.memory_space<vmem>>, %arg16: memref<1x128xf32, #tpu.memory_space<vmem>>, %arg17: memref<1x128xf32, #tpu.memory_space<vmem>>, %arg18: memref<1x8x128xbf16, #tpu.memory_space<vmem>>) attributes {dimension_semantics = [#tpu.dimension_semantics<parallel>], iteration_bounds = array<i64: 2>, scalar_prefetch = 0 : i64, scratch_operands = 0 : i64, tpu.core_type = #tpu.core_type<tc>, window_params = [{transform_indices = @transform_0, window_bounds = array<i64: 1, 8, 128>}, {pipeline_mode = #tpu.pipeline_mode<synchronous>, transform_indices = @transform_1, window_bounds = array<i64: 128, 128>}, {pipeline_mode = #tpu.pipeline_mode<synchronous>, transform_indices = @transform_2, window_bounds = array<i64: 128, 128>}, {pipeline_mode = #tpu.pipeline_mode<synchronous>, transform_indices = @transform_3, window_bounds = array<i64: 128, 128>}, {pipeline_mode = #tpu.pipeline_mode<synchronous>, transform_indices = @transform_4, window_bounds = array<i64: 1, 128>}, {pipeline_mode = #tpu.pipeline_mode<synchronous>, transform_indices = @transform_5, window_bounds = array<i64: 1, 128>}, {pipeline_mode = #tpu.pipeline_mode<synchronous>, transform_indices = @transform_6, window_bounds = array<i64: 1, 128>}, {pipeline_mode = #tpu.pipeline_mode<synchronous>, transform_indices = @transform_7, window_bounds = array<i64: 128, 128>}, {pipeline_mode = #tpu.pipeline_mode<synchronous>, transform_indices = @transform_8, window_bounds = array<i64: 1, 128>}, {pipeline_mode = #tpu.pipeline_mode<synchronous>, transform_indices = @transform_9, window_bounds = array<i64: 1, 128>}, {pipeline_mode = #tpu.pipeline_mode<synchronous>, transform_indices = @transform_10, window_bounds = array<i64: 1, 128>}, {pipeline_mode = #tpu.pipeline_mode<synchronous>, transform_indices = @transform_11, window_bounds = array<i64: 128, 256>}, {pipeline_mode = #tpu.pipeline_mode<synchronous>, transform_indices = @transform_12, window_bounds = array<i64: 1, 256>}, {pipeline_mode = #tpu.pipeline_mode<synchronous>, transform_indices = @transform_13, window_bounds = array<i64: 256, 128>}, {pipeline_mode = #tpu.pipeline_mode<synchronous>, transform_indices = @transform_14, window_bounds = array<i64: 1, 128>}, {pipeline_mode = #tpu.pipeline_mode<synchronous>, transform_indices = @transform_15, window_bounds = array<i64: 1, 128>}, {pipeline_mode = #tpu.pipeline_mode<synchronous>, transform_indices = @transform_16, window_bounds = array<i64: 1, 128>}, {transform_indices = @transform_17, window_bounds = array<i64: 1, 8, 128>}]} {
    %c0 = arith.constant 0 : index
    %c0_0 = arith.constant 0 : index
    %c0_1 = arith.constant 0 : index
    %0 = vector.load %arg1[%c0, %c0_0, %c0_1] : memref<1x8x128xbf16, #tpu.memory_space<vmem>>, vector<1x8x128xbf16>
    %1 = vector.shape_cast %0 : vector<1x8x128xbf16> to vector<8x128xbf16>
    %c0_2 = arith.constant 0 : index
    %c0_3 = arith.constant 0 : index
    %2 = vector.load %arg2[%c0_2, %c0_3] : memref<128x128xbf16, #tpu.memory_space<vmem>>, vector<128x128xbf16>
    %cst = arith.constant dense<0.000000e+00> : vector<8x128xf32>
    %3 = tpu.matmul %1, %2, %cst {dimension_numbers = #tpu.dot_dimension_numbers<[1], [0], [0], [1], [0, 0, 1, 1], [], []>} : vector<8x128xbf16>, vector<128x128xbf16>, vector<8x128xf32> -> vector<8x128xf32>
    %c0_4 = arith.constant 0 : index
    %c0_5 = arith.constant 0 : index
    %4 = vector.load %arg5[%c0_4, %c0_5] : memref<1x128xf32, #tpu.memory_space<vmem>>, vector<1x128xf32>
    %5 = vector.broadcast %4 : vector<1x128xf32> to vector<8x128xf32>
    %6 = arith.addf %3, %5 : vector<8x128xf32>
    %7 = arith.truncf %6 : vector<8x128xf32> to vector<8x128xbf16>
    %c0_6 = arith.constant 0 : index
    %c0_7 = arith.constant 0 : index
    %8 = vector.load %arg3[%c0_6, %c0_7] : memref<128x128xbf16, #tpu.memory_space<vmem>>, vector<128x128xbf16>
    %cst_8 = arith.constant dense<0.000000e+00> : vector<8x128xf32>
    %9 = tpu.matmul %1, %8, %cst_8 {dimension_numbers = #tpu.dot_dimension_numbers<[1], [0], [0], [1], [0, 0, 1, 1], [], []>} : vector<8x128xbf16>, vector<128x128xbf16>, vector<8x128xf32> -> vector<8x128xf32>
    %c0_9 = arith.constant 0 : index
    %c0_10 = arith.constant 0 : index
    %10 = vector.load %arg6[%c0_9, %c0_10] : memref<1x128xf32, #tpu.memory_space<vmem>>, vector<1x128xf32>
    %11 = vector.broadcast %10 : vector<1x128xf32> to vector<8x128xf32>
    %12 = arith.addf %9, %11 : vector<8x128xf32>
    %13 = arith.truncf %12 : vector<8x128xf32> to vector<8x128xbf16>
    %c0_11 = arith.constant 0 : index
    %c0_12 = arith.constant 0 : index
    %14 = vector.load %arg4[%c0_11, %c0_12] : memref<128x128xbf16, #tpu.memory_space<vmem>>, vector<128x128xbf16>
    %cst_13 = arith.constant dense<0.000000e+00> : vector<8x128xf32>
    %15 = tpu.matmul %1, %14, %cst_13 {dimension_numbers = #tpu.dot_dimension_numbers<[1], [0], [0], [1], [0, 0, 1, 1], [], []>} : vector<8x128xbf16>, vector<128x128xbf16>, vector<8x128xf32> -> vector<8x128xf32>
    %c0_14 = arith.constant 0 : index
    %c0_15 = arith.constant 0 : index
    %16 = vector.load %arg7[%c0_14, %c0_15] : memref<1x128xf32, #tpu.memory_space<vmem>>, vector<1x128xf32>
    %17 = vector.broadcast %16 : vector<1x128xf32> to vector<8x128xf32>
    %18 = arith.addf %15, %17 : vector<8x128xf32>
    %19 = arith.truncf %18 : vector<8x128xf32> to vector<8x128xbf16>
    %20 = vector.extract_strided_slice %7 {offsets = [0, 0], sizes = [8, 32], strides = [1, 1]} : vector<8x128xbf16> to vector<8x32xbf16>
    %21 = vector.extract_strided_slice %13 {offsets = [0, 0], sizes = [8, 32], strides = [1, 1]} : vector<8x128xbf16> to vector<8x32xbf16>
    %22 = vector.extract_strided_slice %19 {offsets = [0, 0], sizes = [8, 32], strides = [1, 1]} : vector<8x128xbf16> to vector<8x32xbf16>
    %cst_16 = arith.constant dense<0.000000e+00> : vector<8x8xf32>
    %23 = tpu.matmul %20, %21, %cst_16 {dimension_numbers = #tpu.dot_dimension_numbers<[1], [1], [0], [0], [0, 0, 1, 0], [], []>} : vector<8x32xbf16>, vector<8x32xbf16>, vector<8x8xf32> -> vector<8x8xf32>
    %cst_17 = arith.constant 0.176776692 : f32
    %24 = vector.broadcast %cst_17 : f32 to vector<8x8xf32>
    %25 = arith.mulf %23, %24 : vector<8x8xf32>
    %cst_18 = arith.constant dense<0xFF800000> : vector<8xf32>
    %26 = vector.multi_reduction <maximumf>, %25, %cst_18 [1] : vector<8x8xf32> to vector<8xf32>
    %27 = vector.shape_cast %26 : vector<8xf32> to vector<8x1xf32>
    %28 = vector.broadcast %27 : vector<8x1xf32> to vector<8x8xf32>
    %29 = arith.subf %25, %28 : vector<8x8xf32>
    %30 = math.exp %29 : vector<8x8xf32>
    %cst_19 = arith.constant dense<0.000000e+00> : vector<8xf32>
    %31 = vector.multi_reduction <add>, %30, %cst_19 [1] : vector<8x8xf32> to vector<8xf32>
    %32 = vector.shape_cast %31 : vector<8xf32> to vector<8x1xf32>
    %33 = tpu.reciprocal %32 {approx = true} : vector<8x1xf32> -> vector<8x1xf32>
    %34 = vector.broadcast %33 : vector<8x1xf32> to vector<8x8xf32>
    %35 = arith.mulf %30, %34 : vector<8x8xf32>
    %36 = arith.truncf %35 : vector<8x8xf32> to vector<8x8xbf16>
    %cst_20 = arith.constant dense<0.000000e+00> : vector<8x32xf32>
    %37 = tpu.matmul %36, %22, %cst_20 {dimension_numbers = #tpu.dot_dimension_numbers<[1], [0], [0], [1], [0, 0, 1, 1], [], []>} : vector<8x8xbf16>, vector<8x32xbf16>, vector<8x32xf32> -> vector<8x32xf32>
    %38 = vector.extract_strided_slice %7 {offsets = [0, 32], sizes = [8, 32], strides = [1, 1]} : vector<8x128xbf16> to vector<8x32xbf16>
    %39 = vector.extract_strided_slice %13 {offsets = [0, 32], sizes = [8, 32], strides = [1, 1]} : vector<8x128xbf16> to vector<8x32xbf16>
    %40 = vector.extract_strided_slice %19 {offsets = [0, 32], sizes = [8, 32], strides = [1, 1]} : vector<8x128xbf16> to vector<8x32xbf16>
    %cst_21 = arith.constant dense<0.000000e+00> : vector<8x8xf32>
    %41 = tpu.matmul %38, %39, %cst_21 {dimension_numbers = #tpu.dot_dimension_numbers<[1], [1], [0], [0], [0, 0, 1, 0], [], []>} : vector<8x32xbf16>, vector<8x32xbf16>, vector<8x8xf32> -> vector<8x8xf32>
    %cst_22 = arith.constant 0.176776692 : f32
    %42 = vector.broadcast %cst_22 : f32 to vector<8x8xf32>
    %43 = arith.mulf %41, %42 : vector<8x8xf32>
    %cst_23 = arith.constant dense<0xFF800000> : vector<8xf32>
    %44 = vector.multi_reduction <maximumf>, %43, %cst_23 [1] : vector<8x8xf32> to vector<8xf32>
    %45 = vector.shape_cast %44 : vector<8xf32> to vector<8x1xf32>
    %46 = vector.broadcast %45 : vector<8x1xf32> to vector<8x8xf32>
    %47 = arith.subf %43, %46 : vector<8x8xf32>
    %48 = math.exp %47 : vector<8x8xf32>
    %cst_24 = arith.constant dense<0.000000e+00> : vector<8xf32>
    %49 = vector.multi_reduction <add>, %48, %cst_24 [1] : vector<8x8xf32> to vector<8xf32>
    %50 = vector.shape_cast %49 : vector<8xf32> to vector<8x1xf32>
    %51 = tpu.reciprocal %50 {approx = true} : vector<8x1xf32> -> vector<8x1xf32>
    %52 = vector.broadcast %51 : vector<8x1xf32> to vector<8x8xf32>
    %53 = arith.mulf %48, %52 : vector<8x8xf32>
    %54 = arith.truncf %53 : vector<8x8xf32> to vector<8x8xbf16>
    %cst_25 = arith.constant dense<0.000000e+00> : vector<8x32xf32>
    %55 = tpu.matmul %54, %40, %cst_25 {dimension_numbers = #tpu.dot_dimension_numbers<[1], [0], [0], [1], [0, 0, 1, 1], [], []>} : vector<8x8xbf16>, vector<8x32xbf16>, vector<8x32xf32> -> vector<8x32xf32>
    %56 = vector.extract_strided_slice %7 {offsets = [0, 64], sizes = [8, 32], strides = [1, 1]} : vector<8x128xbf16> to vector<8x32xbf16>
    %57 = vector.extract_strided_slice %13 {offsets = [0, 64], sizes = [8, 32], strides = [1, 1]} : vector<8x128xbf16> to vector<8x32xbf16>
    %58 = vector.extract_strided_slice %19 {offsets = [0, 64], sizes = [8, 32], strides = [1, 1]} : vector<8x128xbf16> to vector<8x32xbf16>
    %cst_26 = arith.constant dense<0.000000e+00> : vector<8x8xf32>
    %59 = tpu.matmul %56, %57, %cst_26 {dimension_numbers = #tpu.dot_dimension_numbers<[1], [1], [0], [0], [0, 0, 1, 0], [], []>} : vector<8x32xbf16>, vector<8x32xbf16>, vector<8x8xf32> -> vector<8x8xf32>
    %cst_27 = arith.constant 0.176776692 : f32
    %60 = vector.broadcast %cst_27 : f32 to vector<8x8xf32>
    %61 = arith.mulf %59, %60 : vector<8x8xf32>
    %cst_28 = arith.constant dense<0xFF800000> : vector<8xf32>
    %62 = vector.multi_reduction <maximumf>, %61, %cst_28 [1] : vector<8x8xf32> to vector<8xf32>
    %63 = vector.shape_cast %62 : vector<8xf32> to vector<8x1xf32>
    %64 = vector.broadcast %63 : vector<8x1xf32> to vector<8x8xf32>
    %65 = arith.subf %61, %64 : vector<8x8xf32>
    %66 = math.exp %65 : vector<8x8xf32>
    %cst_29 = arith.constant dense<0.000000e+00> : vector<8xf32>
    %67 = vector.multi_reduction <add>, %66, %cst_29 [1] : vector<8x8xf32> to vector<8xf32>
    %68 = vector.shape_cast %67 : vector<8xf32> to vector<8x1xf32>
    %69 = tpu.reciprocal %68 {approx = true} : vector<8x1xf32> -> vector<8x1xf32>
    %70 = vector.broadcast %69 : vector<8x1xf32> to vector<8x8xf32>
    %71 = arith.mulf %66, %70 : vector<8x8xf32>
    %72 = arith.truncf %71 : vector<8x8xf32> to vector<8x8xbf16>
    %cst_30 = arith.constant dense<0.000000e+00> : vector<8x32xf32>
    %73 = tpu.matmul %72, %58, %cst_30 {dimension_numbers = #tpu.dot_dimension_numbers<[1], [0], [0], [1], [0, 0, 1, 1], [], []>} : vector<8x8xbf16>, vector<8x32xbf16>, vector<8x32xf32> -> vector<8x32xf32>
    %74 = vector.extract_strided_slice %7 {offsets = [0, 96], sizes = [8, 32], strides = [1, 1]} : vector<8x128xbf16> to vector<8x32xbf16>
    %75 = vector.extract_strided_slice %13 {offsets = [0, 96], sizes = [8, 32], strides = [1, 1]} : vector<8x128xbf16> to vector<8x32xbf16>
    %76 = vector.extract_strided_slice %19 {offsets = [0, 96], sizes = [8, 32], strides = [1, 1]} : vector<8x128xbf16> to vector<8x32xbf16>
    %cst_31 = arith.constant dense<0.000000e+00> : vector<8x8xf32>
    %77 = tpu.matmul %74, %75, %cst_31 {dimension_numbers = #tpu.dot_dimension_numbers<[1], [1], [0], [0], [0, 0, 1, 0], [], []>} : vector<8x32xbf16>, vector<8x32xbf16>, vector<8x8xf32> -> vector<8x8xf32>
    %cst_32 = arith.constant 0.176776692 : f32
    %78 = vector.broadcast %cst_32 : f32 to vector<8x8xf32>
    %79 = arith.mulf %77, %78 : vector<8x8xf32>
    %cst_33 = arith.constant dense<0xFF800000> : vector<8xf32>
    %80 = vector.multi_reduction <maximumf>, %79, %cst_33 [1] : vector<8x8xf32> to vector<8xf32>
    %81 = vector.shape_cast %80 : vector<8xf32> to vector<8x1xf32>
    %82 = vector.broadcast %81 : vector<8x1xf32> to vector<8x8xf32>
    %83 = arith.subf %79, %82 : vector<8x8xf32>
    %84 = math.exp %83 : vector<8x8xf32>
    %cst_34 = arith.constant dense<0.000000e+00> : vector<8xf32>
    %85 = vector.multi_reduction <add>, %84, %cst_34 [1] : vector<8x8xf32> to vector<8xf32>
    %86 = vector.shape_cast %85 : vector<8xf32> to vector<8x1xf32>
    %87 = tpu.reciprocal %86 {approx = true} : vector<8x1xf32> -> vector<8x1xf32>
    %88 = vector.broadcast %87 : vector<8x1xf32> to vector<8x8xf32>
    %89 = arith.mulf %84, %88 : vector<8x8xf32>
    %90 = arith.truncf %89 : vector<8x8xf32> to vector<8x8xbf16>
    %cst_35 = arith.constant dense<0.000000e+00> : vector<8x32xf32>
    %91 = tpu.matmul %90, %76, %cst_35 {dimension_numbers = #tpu.dot_dimension_numbers<[1], [0], [0], [1], [0, 0, 1, 1], [], []>} : vector<8x8xbf16>, vector<8x32xbf16>, vector<8x32xf32> -> vector<8x32xf32>
    %92 = tpu.concatenate %37, %55, %73, %91 in 1 : vector<8x32xf32>, vector<8x32xf32>, vector<8x32xf32>, vector<8x32xf32> -> vector<8x128xf32>
    %93 = arith.truncf %92 : vector<8x128xf32> to vector<8x128xbf16>
    %c0_36 = arith.constant 0 : index
    %c0_37 = arith.constant 0 : index
    %94 = vector.load %arg8[%c0_36, %c0_37] : memref<128x128xbf16, #tpu.memory_space<vmem>>, vector<128x128xbf16>
    %cst_38 = arith.constant dense<0.000000e+00> : vector<8x128xf32>
    %95 = tpu.matmul %93, %94, %cst_38 {dimension_numbers = #tpu.dot_dimension_numbers<[1], [0], [0], [1], [0, 0, 1, 1], [], []>} : vector<8x128xbf16>, vector<128x128xbf16>, vector<8x128xf32> -> vector<8x128xf32>
    %c0_39 = arith.constant 0 : index
    %c0_40 = arith.constant 0 : index
    %96 = vector.load %arg9[%c0_39, %c0_40] : memref<1x128xf32, #tpu.memory_space<vmem>>, vector<1x128xf32>
    %97 = vector.broadcast %96 : vector<1x128xf32> to vector<8x128xf32>
    %98 = arith.addf %95, %97 : vector<8x128xf32>
    %99 = arith.extf %1 : vector<8x128xbf16> to vector<8x128xf32>
    %100 = arith.addf %99, %98 : vector<8x128xf32>
    %cst_41 = arith.constant dense<0.000000e+00> : vector<8xf32>
    %101 = vector.multi_reduction <add>, %100, %cst_41 [1] : vector<8x128xf32> to vector<8xf32>
    %102 = vector.shape_cast %101 : vector<8xf32> to vector<8x1xf32>
    %cst_42 = arith.constant 1.280000e+02 : f32
    %103 = vector.broadcast %cst_42 : f32 to vector<8x1xf32>
    %104 = arith.divf %102, %103 : vector<8x1xf32>
    %105 = vector.broadcast %104 : vector<8x1xf32> to vector<8x128xf32>
    %106 = arith.subf %100, %105 : vector<8x128xf32>
    %107 = arith.mulf %106, %106 : vector<8x128xf32>
    %cst_43 = arith.constant dense<0.000000e+00> : vector<8xf32>
    %108 = vector.multi_reduction <add>, %107, %cst_43 [1] : vector<8x128xf32> to vector<8xf32>
    %109 = vector.shape_cast %108 : vector<8xf32> to vector<8x1xf32>
    %cst_44 = arith.constant 1.280000e+02 : f32
    %110 = vector.broadcast %cst_44 : f32 to vector<8x1xf32>
    %111 = arith.divf %109, %110 : vector<8x1xf32>
    %cst_45 = arith.constant 9.99999974E-6 : f32
    %112 = vector.broadcast %cst_45 : f32 to vector<8x1xf32>
    %113 = arith.addf %111, %112 : vector<8x1xf32>
    %114 = math.rsqrt %113 : vector<8x1xf32>
    %115 = vector.broadcast %114 : vector<8x1xf32> to vector<8x128xf32>
    %116 = arith.mulf %106, %115 : vector<8x128xf32>
    %c0_46 = arith.constant 0 : index
    %c0_47 = arith.constant 0 : index
    %117 = vector.load %arg10[%c0_46, %c0_47] : memref<1x128xf32, #tpu.memory_space<vmem>>, vector<1x128xf32>
    %118 = vector.broadcast %117 : vector<1x128xf32> to vector<8x128xf32>
    %119 = arith.mulf %116, %118 : vector<8x128xf32>
    %c0_48 = arith.constant 0 : index
    %c0_49 = arith.constant 0 : index
    %120 = vector.load %arg11[%c0_48, %c0_49] : memref<1x128xf32, #tpu.memory_space<vmem>>, vector<1x128xf32>
    %121 = vector.broadcast %120 : vector<1x128xf32> to vector<8x128xf32>
    %122 = arith.addf %119, %121 : vector<8x128xf32>
    %123 = arith.truncf %122 : vector<8x128xf32> to vector<8x128xbf16>
    %c0_50 = arith.constant 0 : index
    %c0_51 = arith.constant 0 : index
    %124 = vector.load %arg12[%c0_50, %c0_51] : memref<128x256xbf16, #tpu.memory_space<vmem>>, vector<128x256xbf16>
    %cst_52 = arith.constant dense<0.000000e+00> : vector<8x256xf32>
    %125 = tpu.matmul %123, %124, %cst_52 {dimension_numbers = #tpu.dot_dimension_numbers<[1], [0], [0], [1], [0, 0, 1, 1], [], []>} : vector<8x128xbf16>, vector<128x256xbf16>, vector<8x256xf32> -> vector<8x256xf32>
    %c0_53 = arith.constant 0 : index
    %c0_54 = arith.constant 0 : index
    %126 = vector.load %arg13[%c0_53, %c0_54] : memref<1x256xf32, #tpu.memory_space<vmem>>, vector<1x256xf32>
    %127 = vector.broadcast %126 : vector<1x256xf32> to vector<8x256xf32>
    %128 = arith.addf %125, %127 : vector<8x256xf32>
    %cst_55 = arith.constant 0.000000e+00 : f32
    %129 = vector.broadcast %cst_55 : f32 to vector<8x256xf32>
    %130 = arith.maximumf %128, %129 : vector<8x256xf32>
    %131 = arith.truncf %130 : vector<8x256xf32> to vector<8x256xbf16>
    %c0_56 = arith.constant 0 : index
    %c0_57 = arith.constant 0 : index
    %132 = vector.load %arg14[%c0_56, %c0_57] : memref<256x128xbf16, #tpu.memory_space<vmem>>, vector<256x128xbf16>
    %cst_58 = arith.constant dense<0.000000e+00> : vector<8x128xf32>
    %133 = tpu.matmul %131, %132, %cst_58 {dimension_numbers = #tpu.dot_dimension_numbers<[1], [0], [0], [1], [0, 0, 1, 1], [], []>} : vector<8x256xbf16>, vector<256x128xbf16>, vector<8x128xf32> -> vector<8x128xf32>
    %c0_59 = arith.constant 0 : index
    %c0_60 = arith.constant 0 : index
    %134 = vector.load %arg15[%c0_59, %c0_60] : memref<1x128xf32, #tpu.memory_space<vmem>>, vector<1x128xf32>
    %135 = vector.broadcast %134 : vector<1x128xf32> to vector<8x128xf32>
    %136 = arith.addf %133, %135 : vector<8x128xf32>
    %137 = arith.addf %122, %136 : vector<8x128xf32>
    %cst_61 = arith.constant dense<0.000000e+00> : vector<8xf32>
    %138 = vector.multi_reduction <add>, %137, %cst_61 [1] : vector<8x128xf32> to vector<8xf32>
    %139 = vector.shape_cast %138 : vector<8xf32> to vector<8x1xf32>
    %cst_62 = arith.constant 1.280000e+02 : f32
    %140 = vector.broadcast %cst_62 : f32 to vector<8x1xf32>
    %141 = arith.divf %139, %140 : vector<8x1xf32>
    %142 = vector.broadcast %141 : vector<8x1xf32> to vector<8x128xf32>
    %143 = arith.subf %137, %142 : vector<8x128xf32>
    %144 = arith.mulf %143, %143 : vector<8x128xf32>
    %cst_63 = arith.constant dense<0.000000e+00> : vector<8xf32>
    %145 = vector.multi_reduction <add>, %144, %cst_63 [1] : vector<8x128xf32> to vector<8xf32>
    %146 = vector.shape_cast %145 : vector<8xf32> to vector<8x1xf32>
    %cst_64 = arith.constant 1.280000e+02 : f32
    %147 = vector.broadcast %cst_64 : f32 to vector<8x1xf32>
    %148 = arith.divf %146, %147 : vector<8x1xf32>
    %cst_65 = arith.constant 9.99999974E-6 : f32
    %149 = vector.broadcast %cst_65 : f32 to vector<8x1xf32>
    %150 = arith.addf %148, %149 : vector<8x1xf32>
    %151 = math.rsqrt %150 : vector<8x1xf32>
    %152 = vector.broadcast %151 : vector<8x1xf32> to vector<8x128xf32>
    %153 = arith.mulf %143, %152 : vector<8x128xf32>
    %c0_66 = arith.constant 0 : index
    %c0_67 = arith.constant 0 : index
    %154 = vector.load %arg16[%c0_66, %c0_67] : memref<1x128xf32, #tpu.memory_space<vmem>>, vector<1x128xf32>
    %155 = vector.broadcast %154 : vector<1x128xf32> to vector<8x128xf32>
    %156 = arith.mulf %153, %155 : vector<8x128xf32>
    %c0_68 = arith.constant 0 : index
    %c0_69 = arith.constant 0 : index
    %157 = vector.load %arg17[%c0_68, %c0_69] : memref<1x128xf32, #tpu.memory_space<vmem>>, vector<1x128xf32>
    %158 = vector.broadcast %157 : vector<1x128xf32> to vector<8x128xf32>
    %159 = arith.addf %156, %158 : vector<8x128xf32>
    %160 = arith.truncf %159 : vector<8x128xf32> to vector<8x128xbf16>
    %c0_70 = arith.constant 0 : index
    %c0_71 = arith.constant 0 : index
    %c0_72 = arith.constant 0 : index
    %161 = vector.load %arg18[%c0_70, %c0_71, %c0_72] : memref<1x8x128xbf16, #tpu.memory_space<vmem>>, vector<1x8x128xbf16>
    %162 = vector.shape_cast %161 : vector<1x8x128xbf16> to vector<8x128xbf16>
    %163 = vector.shape_cast %160 : vector<8x128xbf16> to vector<1x8x128xbf16>
    tpu.vector_store %arg18[%c0_70, %c0_71, %c0_72], %163 {strides = array<i32>} : memref<1x8x128xbf16, #tpu.memory_space<vmem>>, vector<1x8x128xbf16>,
    return
  }
  func.func @transform_0(%arg0: i32) -> (i32, i32, i32) {
    %c0_i32 = arith.constant 0 : i32
    %c0_i32_0 = arith.constant 0 : i32
    %c0_i32_1 = arith.constant 0 : i32
    return %arg0, %c0_i32, %c0_i32_0 : i32, i32, i32
  }
  func.func @transform_1(%arg0: i32) -> (i32, i32) {
    %c0_i32 = arith.constant 0 : i32
    %c0_i32_0 = arith.constant 0 : i32
    %c0_i32_1 = arith.constant 0 : i32
    return %c0_i32, %c0_i32_0 : i32, i32
  }
  func.func @transform_2(%arg0: i32) -> (i32, i32) {
    %c0_i32 = arith.constant 0 : i32
    %c0_i32_0 = arith.constant 0 : i32
    %c0_i32_1 = arith.constant 0 : i32
    return %c0_i32, %c0_i32_0 : i32, i32
  }
  func.func @transform_3(%arg0: i32) -> (i32, i32) {
    %c0_i32 = arith.constant 0 : i32
    %c0_i32_0 = arith.constant 0 : i32
    %c0_i32_1 = arith.constant 0 : i32
    return %c0_i32, %c0_i32_0 : i32, i32
  }
  func.func @transform_4(%arg0: i32) -> (i32, i32) {
    %c0_i32 = arith.constant 0 : i32
    %c0_i32_0 = arith.constant 0 : i32
    %c0_i32_1 = arith.constant 0 : i32
    return %c0_i32, %c0_i32_0 : i32, i32
  }
  func.func @transform_5(%arg0: i32) -> (i32, i32) {
    %c0_i32 = arith.constant 0 : i32
    %c0_i32_0 = arith.constant 0 : i32
    %c0_i32_1 = arith.constant 0 : i32
    return %c0_i32, %c0_i32_0 : i32, i32
  }
  func.func @transform_6(%arg0: i32) -> (i32, i32) {
    %c0_i32 = arith.constant 0 : i32
    %c0_i32_0 = arith.constant 0 : i32
    %c0_i32_1 = arith.constant 0 : i32
    return %c0_i32, %c0_i32_0 : i32, i32
  }
  func.func @transform_7(%arg0: i32) -> (i32, i32) {
    %c0_i32 = arith.constant 0 : i32
    %c0_i32_0 = arith.constant 0 : i32
    %c0_i32_1 = arith.constant 0 : i32
    return %c0_i32, %c0_i32_0 : i32, i32
  }
  func.func @transform_8(%arg0: i32) -> (i32, i32) {
    %c0_i32 = arith.constant 0 : i32
    %c0_i32_0 = arith.constant 0 : i32
    %c0_i32_1 = arith.constant 0 : i32
    return %c0_i32, %c0_i32_0 : i32, i32
  }
  func.func @transform_9(%arg0: i32) -> (i32, i32) {
    %c0_i32 = arith.constant 0 : i32
    %c0_i32_0 = arith.constant 0 : i32
    %c0_i32_1 = arith.constant 0 : i32
    return %c0_i32, %c0_i32_0 : i32, i32
  }
  func.func @transform_10(%arg0: i32) -> (i32, i32) {
    %c0_i32 = arith.constant 0 : i32
    %c0_i32_0 = arith.constant 0 : i32
    %c0_i32_1 = arith.constant 0 : i32
    return %c0_i32, %c0_i32_0 : i32, i32
  }
  func.func @transform_11(%arg0: i32) -> (i32, i32) {
    %c0_i32 = arith.constant 0 : i32
    %c0_i32_0 = arith.constant 0 : i32
    %c0_i32_1 = arith.constant 0 : i32
    return %c0_i32, %c0_i32_0 : i32, i32
  }
  func.func @transform_12(%arg0: i32) -> (i32, i32) {
    %c0_i32 = arith.constant 0 : i32
    %c0_i32_0 = arith.constant 0 : i32
    %c0_i32_1 = arith.constant 0 : i32
    return %c0_i32, %c0_i32_0 : i32, i32
  }
  func.func @transform_13(%arg0: i32) -> (i32, i32) {
    %c0_i32 = arith.constant 0 : i32
    %c0_i32_0 = arith.constant 0 : i32
    %c0_i32_1 = arith.constant 0 : i32
    return %c0_i32, %c0_i32_0 : i32, i32
  }
  func.func @transform_14(%arg0: i32) -> (i32, i32) {
    %c0_i32 = arith.constant 0 : i32
    %c0_i32_0 = arith.constant 0 : i32
    %c0_i32_1 = arith.constant 0 : i32
    return %c0_i32, %c0_i32_0 : i32, i32
  }
  func.func @transform_15(%arg0: i32) -> (i32, i32) {
    %c0_i32 = arith.constant 0 : i32
    %c0_i32_0 = arith.constant 0 : i32
    %c0_i32_1 = arith.constant 0 : i32
    return %c0_i32, %c0_i32_0 : i32, i32
  }
  func.func @transform_16(%arg0: i32) -> (i32, i32) {
    %c0_i32 = arith.constant 0 : i32
    %c0_i32_0 = arith.constant 0 : i32
    %c0_i32_1 = arith.constant 0 : i32
    return %c0_i32, %c0_i32_0 : i32, i32
  }
  func.func @transform_17(%arg0: i32) -> (i32, i32, i32) {
    %c0_i32 = arith.constant 0 : i32
    %c0_i32_0 = arith.constant 0 : i32
    %c0_i32_1 = arith.constant 0 : i32
    return %arg0, %c0_i32, %c0_i32_0 : i32, i32, i32
  }
}

module attributes {stable_mosaic.version = 11 : i64} {
  func.func @_mha_ln_kernel(%arg0: i32, %arg1: memref<1x8x128xbf16, #tpu.memory_space<vmem>>, %arg2: memref<1x8x128xbf16, #tpu.memory_space<vmem>>, %arg3: memref<1x8x128xbf16, #tpu.memory_space<vmem>>, %arg4: memref<128x128xbf16, #tpu.memory_space<vmem>>, %arg5: memref<128x128xbf16, #tpu.memory_space<vmem>>, %arg6: memref<128x128xbf16, #tpu.memory_space<vmem>>, %arg7: memref<1x128xf32, #tpu.memory_space<vmem>>, %arg8: memref<1x128xf32, #tpu.memory_space<vmem>>, %arg9: memref<1x128xf32, #tpu.memory_space<vmem>>, %arg10: memref<128x128xbf16, #tpu.memory_space<vmem>>, %arg11: memref<1x128xf32, #tpu.memory_space<vmem>>, %arg12: memref<1x128xf32, #tpu.memory_space<vmem>>, %arg13: memref<1x128xf32, #tpu.memory_space<vmem>>, %arg14: memref<1x8x128xbf16, #tpu.memory_space<vmem>>) attributes {dimension_semantics = [#tpu.dimension_semantics<parallel>], iteration_bounds = array<i64: 2>, scalar_prefetch = 0 : i64, scratch_operands = 0 : i64, tpu.core_type = #tpu.core_type<tc>, window_params = [{transform_indices = @transform_0, window_bounds = array<i64: 1, 8, 128>}, {transform_indices = @transform_1, window_bounds = array<i64: 1, 8, 128>}, {transform_indices = @transform_2, window_bounds = array<i64: 1, 8, 128>}, {pipeline_mode = #tpu.pipeline_mode<synchronous>, transform_indices = @transform_3, window_bounds = array<i64: 128, 128>}, {pipeline_mode = #tpu.pipeline_mode<synchronous>, transform_indices = @transform_4, window_bounds = array<i64: 128, 128>}, {pipeline_mode = #tpu.pipeline_mode<synchronous>, transform_indices = @transform_5, window_bounds = array<i64: 128, 128>}, {pipeline_mode = #tpu.pipeline_mode<synchronous>, transform_indices = @transform_6, window_bounds = array<i64: 1, 128>}, {pipeline_mode = #tpu.pipeline_mode<synchronous>, transform_indices = @transform_7, window_bounds = array<i64: 1, 128>}, {pipeline_mode = #tpu.pipeline_mode<synchronous>, transform_indices = @transform_8, window_bounds = array<i64: 1, 128>}, {pipeline_mode = #tpu.pipeline_mode<synchronous>, transform_indices = @transform_9, window_bounds = array<i64: 128, 128>}, {pipeline_mode = #tpu.pipeline_mode<synchronous>, transform_indices = @transform_10, window_bounds = array<i64: 1, 128>}, {pipeline_mode = #tpu.pipeline_mode<synchronous>, transform_indices = @transform_11, window_bounds = array<i64: 1, 128>}, {pipeline_mode = #tpu.pipeline_mode<synchronous>, transform_indices = @transform_12, window_bounds = array<i64: 1, 128>}, {transform_indices = @transform_13, window_bounds = array<i64: 1, 8, 128>}]} {
    %c0 = arith.constant 0 : index
    %c0_0 = arith.constant 0 : index
    %c0_1 = arith.constant 0 : index
    %0 = vector.load %arg1[%c0, %c0_0, %c0_1] : memref<1x8x128xbf16, #tpu.memory_space<vmem>>, vector<1x8x128xbf16>
    %1 = vector.shape_cast %0 : vector<1x8x128xbf16> to vector<8x128xbf16>
    %c0_2 = arith.constant 0 : index
    %c0_3 = arith.constant 0 : index
    %c0_4 = arith.constant 0 : index
    %2 = vector.load %arg2[%c0_2, %c0_3, %c0_4] : memref<1x8x128xbf16, #tpu.memory_space<vmem>>, vector<1x8x128xbf16>
    %3 = vector.shape_cast %2 : vector<1x8x128xbf16> to vector<8x128xbf16>
    %c0_5 = arith.constant 0 : index
    %c0_6 = arith.constant 0 : index
    %c0_7 = arith.constant 0 : index
    %4 = vector.load %arg3[%c0_5, %c0_6, %c0_7] : memref<1x8x128xbf16, #tpu.memory_space<vmem>>, vector<1x8x128xbf16>
    %5 = vector.shape_cast %4 : vector<1x8x128xbf16> to vector<8x128xbf16>
    %c0_8 = arith.constant 0 : index
    %c0_9 = arith.constant 0 : index
    %6 = vector.load %arg4[%c0_8, %c0_9] : memref<128x128xbf16, #tpu.memory_space<vmem>>, vector<128x128xbf16>
    %cst = arith.constant dense<0.000000e+00> : vector<8x128xf32>
    %7 = tpu.matmul %1, %6, %cst {dimension_numbers = #tpu.dot_dimension_numbers<[1], [0], [0], [1], [0, 0, 1, 1], [], []>} : vector<8x128xbf16>, vector<128x128xbf16>, vector<8x128xf32> -> vector<8x128xf32>
    %c0_10 = arith.constant 0 : index
    %c0_11 = arith.constant 0 : index
    %8 = vector.load %arg7[%c0_10, %c0_11] : memref<1x128xf32, #tpu.memory_space<vmem>>, vector<1x128xf32>
    %9 = vector.broadcast %8 : vector<1x128xf32> to vector<8x128xf32>
    %10 = arith.addf %7, %9 : vector<8x128xf32>
    %11 = arith.truncf %10 : vector<8x128xf32> to vector<8x128xbf16>
    %c0_12 = arith.constant 0 : index
    %c0_13 = arith.constant 0 : index
    %12 = vector.load %arg5[%c0_12, %c0_13] : memref<128x128xbf16, #tpu.memory_space<vmem>>, vector<128x128xbf16>
    %cst_14 = arith.constant dense<0.000000e+00> : vector<8x128xf32>
    %13 = tpu.matmul %3, %12, %cst_14 {dimension_numbers = #tpu.dot_dimension_numbers<[1], [0], [0], [1], [0, 0, 1, 1], [], []>} : vector<8x128xbf16>, vector<128x128xbf16>, vector<8x128xf32> -> vector<8x128xf32>
    %c0_15 = arith.constant 0 : index
    %c0_16 = arith.constant 0 : index
    %14 = vector.load %arg8[%c0_15, %c0_16] : memref<1x128xf32, #tpu.memory_space<vmem>>, vector<1x128xf32>
    %15 = vector.broadcast %14 : vector<1x128xf32> to vector<8x128xf32>
    %16 = arith.addf %13, %15 : vector<8x128xf32>
    %17 = arith.truncf %16 : vector<8x128xf32> to vector<8x128xbf16>
    %c0_17 = arith.constant 0 : index
    %c0_18 = arith.constant 0 : index
    %18 = vector.load %arg6[%c0_17, %c0_18] : memref<128x128xbf16, #tpu.memory_space<vmem>>, vector<128x128xbf16>
    %cst_19 = arith.constant dense<0.000000e+00> : vector<8x128xf32>
    %19 = tpu.matmul %5, %18, %cst_19 {dimension_numbers = #tpu.dot_dimension_numbers<[1], [0], [0], [1], [0, 0, 1, 1], [], []>} : vector<8x128xbf16>, vector<128x128xbf16>, vector<8x128xf32> -> vector<8x128xf32>
    %c0_20 = arith.constant 0 : index
    %c0_21 = arith.constant 0 : index
    %20 = vector.load %arg9[%c0_20, %c0_21] : memref<1x128xf32, #tpu.memory_space<vmem>>, vector<1x128xf32>
    %21 = vector.broadcast %20 : vector<1x128xf32> to vector<8x128xf32>
    %22 = arith.addf %19, %21 : vector<8x128xf32>
    %23 = arith.truncf %22 : vector<8x128xf32> to vector<8x128xbf16>
    %24 = vector.extract_strided_slice %11 {offsets = [0, 0], sizes = [8, 32], strides = [1, 1]} : vector<8x128xbf16> to vector<8x32xbf16>
    %25 = vector.extract_strided_slice %17 {offsets = [0, 0], sizes = [8, 32], strides = [1, 1]} : vector<8x128xbf16> to vector<8x32xbf16>
    %26 = vector.extract_strided_slice %23 {offsets = [0, 0], sizes = [8, 32], strides = [1, 1]} : vector<8x128xbf16> to vector<8x32xbf16>
    %cst_22 = arith.constant dense<0.000000e+00> : vector<8x8xf32>
    %27 = tpu.matmul %24, %25, %cst_22 {dimension_numbers = #tpu.dot_dimension_numbers<[1], [1], [0], [0], [0, 0, 1, 0], [], []>} : vector<8x32xbf16>, vector<8x32xbf16>, vector<8x8xf32> -> vector<8x8xf32>
    %cst_23 = arith.constant 0.176776692 : f32
    %28 = vector.broadcast %cst_23 : f32 to vector<8x8xf32>
    %29 = arith.mulf %27, %28 : vector<8x8xf32>
    %cst_24 = arith.constant dense<0xFF800000> : vector<8xf32>
    %30 = vector.multi_reduction <maximumf>, %29, %cst_24 [1] : vector<8x8xf32> to vector<8xf32>
    %31 = vector.shape_cast %30 : vector<8xf32> to vector<8x1xf32>
    %32 = vector.broadcast %31 : vector<8x1xf32> to vector<8x8xf32>
    %33 = arith.subf %29, %32 : vector<8x8xf32>
    %34 = math.exp %33 : vector<8x8xf32>
    %cst_25 = arith.constant dense<0.000000e+00> : vector<8xf32>
    %35 = vector.multi_reduction <add>, %34, %cst_25 [1] : vector<8x8xf32> to vector<8xf32>
    %36 = vector.shape_cast %35 : vector<8xf32> to vector<8x1xf32>
    %37 = tpu.reciprocal %36 {approx = true} : vector<8x1xf32> -> vector<8x1xf32>
    %38 = vector.broadcast %37 : vector<8x1xf32> to vector<8x8xf32>
    %39 = arith.mulf %34, %38 : vector<8x8xf32>
    %40 = arith.truncf %39 : vector<8x8xf32> to vector<8x8xbf16>
    %cst_26 = arith.constant dense<0.000000e+00> : vector<8x32xf32>
    %41 = tpu.matmul %40, %26, %cst_26 {dimension_numbers = #tpu.dot_dimension_numbers<[1], [0], [0], [1], [0, 0, 1, 1], [], []>} : vector<8x8xbf16>, vector<8x32xbf16>, vector<8x32xf32> -> vector<8x32xf32>
    %42 = vector.extract_strided_slice %11 {offsets = [0, 32], sizes = [8, 32], strides = [1, 1]} : vector<8x128xbf16> to vector<8x32xbf16>
    %43 = vector.extract_strided_slice %17 {offsets = [0, 32], sizes = [8, 32], strides = [1, 1]} : vector<8x128xbf16> to vector<8x32xbf16>
    %44 = vector.extract_strided_slice %23 {offsets = [0, 32], sizes = [8, 32], strides = [1, 1]} : vector<8x128xbf16> to vector<8x32xbf16>
    %cst_27 = arith.constant dense<0.000000e+00> : vector<8x8xf32>
    %45 = tpu.matmul %42, %43, %cst_27 {dimension_numbers = #tpu.dot_dimension_numbers<[1], [1], [0], [0], [0, 0, 1, 0], [], []>} : vector<8x32xbf16>, vector<8x32xbf16>, vector<8x8xf32> -> vector<8x8xf32>
    %cst_28 = arith.constant 0.176776692 : f32
    %46 = vector.broadcast %cst_28 : f32 to vector<8x8xf32>
    %47 = arith.mulf %45, %46 : vector<8x8xf32>
    %cst_29 = arith.constant dense<0xFF800000> : vector<8xf32>
    %48 = vector.multi_reduction <maximumf>, %47, %cst_29 [1] : vector<8x8xf32> to vector<8xf32>
    %49 = vector.shape_cast %48 : vector<8xf32> to vector<8x1xf32>
    %50 = vector.broadcast %49 : vector<8x1xf32> to vector<8x8xf32>
    %51 = arith.subf %47, %50 : vector<8x8xf32>
    %52 = math.exp %51 : vector<8x8xf32>
    %cst_30 = arith.constant dense<0.000000e+00> : vector<8xf32>
    %53 = vector.multi_reduction <add>, %52, %cst_30 [1] : vector<8x8xf32> to vector<8xf32>
    %54 = vector.shape_cast %53 : vector<8xf32> to vector<8x1xf32>
    %55 = tpu.reciprocal %54 {approx = true} : vector<8x1xf32> -> vector<8x1xf32>
    %56 = vector.broadcast %55 : vector<8x1xf32> to vector<8x8xf32>
    %57 = arith.mulf %52, %56 : vector<8x8xf32>
    %58 = arith.truncf %57 : vector<8x8xf32> to vector<8x8xbf16>
    %cst_31 = arith.constant dense<0.000000e+00> : vector<8x32xf32>
    %59 = tpu.matmul %58, %44, %cst_31 {dimension_numbers = #tpu.dot_dimension_numbers<[1], [0], [0], [1], [0, 0, 1, 1], [], []>} : vector<8x8xbf16>, vector<8x32xbf16>, vector<8x32xf32> -> vector<8x32xf32>
    %60 = vector.extract_strided_slice %11 {offsets = [0, 64], sizes = [8, 32], strides = [1, 1]} : vector<8x128xbf16> to vector<8x32xbf16>
    %61 = vector.extract_strided_slice %17 {offsets = [0, 64], sizes = [8, 32], strides = [1, 1]} : vector<8x128xbf16> to vector<8x32xbf16>
    %62 = vector.extract_strided_slice %23 {offsets = [0, 64], sizes = [8, 32], strides = [1, 1]} : vector<8x128xbf16> to vector<8x32xbf16>
    %cst_32 = arith.constant dense<0.000000e+00> : vector<8x8xf32>
    %63 = tpu.matmul %60, %61, %cst_32 {dimension_numbers = #tpu.dot_dimension_numbers<[1], [1], [0], [0], [0, 0, 1, 0], [], []>} : vector<8x32xbf16>, vector<8x32xbf16>, vector<8x8xf32> -> vector<8x8xf32>
    %cst_33 = arith.constant 0.176776692 : f32
    %64 = vector.broadcast %cst_33 : f32 to vector<8x8xf32>
    %65 = arith.mulf %63, %64 : vector<8x8xf32>
    %cst_34 = arith.constant dense<0xFF800000> : vector<8xf32>
    %66 = vector.multi_reduction <maximumf>, %65, %cst_34 [1] : vector<8x8xf32> to vector<8xf32>
    %67 = vector.shape_cast %66 : vector<8xf32> to vector<8x1xf32>
    %68 = vector.broadcast %67 : vector<8x1xf32> to vector<8x8xf32>
    %69 = arith.subf %65, %68 : vector<8x8xf32>
    %70 = math.exp %69 : vector<8x8xf32>
    %cst_35 = arith.constant dense<0.000000e+00> : vector<8xf32>
    %71 = vector.multi_reduction <add>, %70, %cst_35 [1] : vector<8x8xf32> to vector<8xf32>
    %72 = vector.shape_cast %71 : vector<8xf32> to vector<8x1xf32>
    %73 = tpu.reciprocal %72 {approx = true} : vector<8x1xf32> -> vector<8x1xf32>
    %74 = vector.broadcast %73 : vector<8x1xf32> to vector<8x8xf32>
    %75 = arith.mulf %70, %74 : vector<8x8xf32>
    %76 = arith.truncf %75 : vector<8x8xf32> to vector<8x8xbf16>
    %cst_36 = arith.constant dense<0.000000e+00> : vector<8x32xf32>
    %77 = tpu.matmul %76, %62, %cst_36 {dimension_numbers = #tpu.dot_dimension_numbers<[1], [0], [0], [1], [0, 0, 1, 1], [], []>} : vector<8x8xbf16>, vector<8x32xbf16>, vector<8x32xf32> -> vector<8x32xf32>
    %78 = vector.extract_strided_slice %11 {offsets = [0, 96], sizes = [8, 32], strides = [1, 1]} : vector<8x128xbf16> to vector<8x32xbf16>
    %79 = vector.extract_strided_slice %17 {offsets = [0, 96], sizes = [8, 32], strides = [1, 1]} : vector<8x128xbf16> to vector<8x32xbf16>
    %80 = vector.extract_strided_slice %23 {offsets = [0, 96], sizes = [8, 32], strides = [1, 1]} : vector<8x128xbf16> to vector<8x32xbf16>
    %cst_37 = arith.constant dense<0.000000e+00> : vector<8x8xf32>
    %81 = tpu.matmul %78, %79, %cst_37 {dimension_numbers = #tpu.dot_dimension_numbers<[1], [1], [0], [0], [0, 0, 1, 0], [], []>} : vector<8x32xbf16>, vector<8x32xbf16>, vector<8x8xf32> -> vector<8x8xf32>
    %cst_38 = arith.constant 0.176776692 : f32
    %82 = vector.broadcast %cst_38 : f32 to vector<8x8xf32>
    %83 = arith.mulf %81, %82 : vector<8x8xf32>
    %cst_39 = arith.constant dense<0xFF800000> : vector<8xf32>
    %84 = vector.multi_reduction <maximumf>, %83, %cst_39 [1] : vector<8x8xf32> to vector<8xf32>
    %85 = vector.shape_cast %84 : vector<8xf32> to vector<8x1xf32>
    %86 = vector.broadcast %85 : vector<8x1xf32> to vector<8x8xf32>
    %87 = arith.subf %83, %86 : vector<8x8xf32>
    %88 = math.exp %87 : vector<8x8xf32>
    %cst_40 = arith.constant dense<0.000000e+00> : vector<8xf32>
    %89 = vector.multi_reduction <add>, %88, %cst_40 [1] : vector<8x8xf32> to vector<8xf32>
    %90 = vector.shape_cast %89 : vector<8xf32> to vector<8x1xf32>
    %91 = tpu.reciprocal %90 {approx = true} : vector<8x1xf32> -> vector<8x1xf32>
    %92 = vector.broadcast %91 : vector<8x1xf32> to vector<8x8xf32>
    %93 = arith.mulf %88, %92 : vector<8x8xf32>
    %94 = arith.truncf %93 : vector<8x8xf32> to vector<8x8xbf16>
    %cst_41 = arith.constant dense<0.000000e+00> : vector<8x32xf32>
    %95 = tpu.matmul %94, %80, %cst_41 {dimension_numbers = #tpu.dot_dimension_numbers<[1], [0], [0], [1], [0, 0, 1, 1], [], []>} : vector<8x8xbf16>, vector<8x32xbf16>, vector<8x32xf32> -> vector<8x32xf32>
    %96 = tpu.concatenate %41, %59, %77, %95 in 1 : vector<8x32xf32>, vector<8x32xf32>, vector<8x32xf32>, vector<8x32xf32> -> vector<8x128xf32>
    %97 = arith.truncf %96 : vector<8x128xf32> to vector<8x128xbf16>
    %c0_42 = arith.constant 0 : index
    %c0_43 = arith.constant 0 : index
    %98 = vector.load %arg10[%c0_42, %c0_43] : memref<128x128xbf16, #tpu.memory_space<vmem>>, vector<128x128xbf16>
    %cst_44 = arith.constant dense<0.000000e+00> : vector<8x128xf32>
    %99 = tpu.matmul %97, %98, %cst_44 {dimension_numbers = #tpu.dot_dimension_numbers<[1], [0], [0], [1], [0, 0, 1, 1], [], []>} : vector<8x128xbf16>, vector<128x128xbf16>, vector<8x128xf32> -> vector<8x128xf32>
    %c0_45 = arith.constant 0 : index
    %c0_46 = arith.constant 0 : index
    %100 = vector.load %arg11[%c0_45, %c0_46] : memref<1x128xf32, #tpu.memory_space<vmem>>, vector<1x128xf32>
    %101 = vector.broadcast %100 : vector<1x128xf32> to vector<8x128xf32>
    %102 = arith.addf %99, %101 : vector<8x128xf32>
    %103 = arith.extf %1 : vector<8x128xbf16> to vector<8x128xf32>
    %104 = arith.addf %103, %102 : vector<8x128xf32>
    %cst_47 = arith.constant dense<0.000000e+00> : vector<8xf32>
    %105 = vector.multi_reduction <add>, %104, %cst_47 [1] : vector<8x128xf32> to vector<8xf32>
    %106 = vector.shape_cast %105 : vector<8xf32> to vector<8x1xf32>
    %cst_48 = arith.constant 1.280000e+02 : f32
    %107 = vector.broadcast %cst_48 : f32 to vector<8x1xf32>
    %108 = arith.divf %106, %107 : vector<8x1xf32>
    %109 = vector.broadcast %108 : vector<8x1xf32> to vector<8x128xf32>
    %110 = arith.subf %104, %109 : vector<8x128xf32>
    %111 = arith.mulf %110, %110 : vector<8x128xf32>
    %cst_49 = arith.constant dense<0.000000e+00> : vector<8xf32>
    %112 = vector.multi_reduction <add>, %111, %cst_49 [1] : vector<8x128xf32> to vector<8xf32>
    %113 = vector.shape_cast %112 : vector<8xf32> to vector<8x1xf32>
    %cst_50 = arith.constant 1.280000e+02 : f32
    %114 = vector.broadcast %cst_50 : f32 to vector<8x1xf32>
    %115 = arith.divf %113, %114 : vector<8x1xf32>
    %cst_51 = arith.constant 9.99999974E-6 : f32
    %116 = vector.broadcast %cst_51 : f32 to vector<8x1xf32>
    %117 = arith.addf %115, %116 : vector<8x1xf32>
    %118 = math.rsqrt %117 : vector<8x1xf32>
    %119 = vector.broadcast %118 : vector<8x1xf32> to vector<8x128xf32>
    %120 = arith.mulf %110, %119 : vector<8x128xf32>
    %c0_52 = arith.constant 0 : index
    %c0_53 = arith.constant 0 : index
    %121 = vector.load %arg12[%c0_52, %c0_53] : memref<1x128xf32, #tpu.memory_space<vmem>>, vector<1x128xf32>
    %122 = vector.broadcast %121 : vector<1x128xf32> to vector<8x128xf32>
    %123 = arith.mulf %120, %122 : vector<8x128xf32>
    %c0_54 = arith.constant 0 : index
    %c0_55 = arith.constant 0 : index
    %124 = vector.load %arg13[%c0_54, %c0_55] : memref<1x128xf32, #tpu.memory_space<vmem>>, vector<1x128xf32>
    %125 = vector.broadcast %124 : vector<1x128xf32> to vector<8x128xf32>
    %126 = arith.addf %123, %125 : vector<8x128xf32>
    %127 = arith.truncf %126 : vector<8x128xf32> to vector<8x128xbf16>
    %c0_56 = arith.constant 0 : index
    %c0_57 = arith.constant 0 : index
    %c0_58 = arith.constant 0 : index
    %128 = vector.load %arg14[%c0_56, %c0_57, %c0_58] : memref<1x8x128xbf16, #tpu.memory_space<vmem>>, vector<1x8x128xbf16>
    %129 = vector.shape_cast %128 : vector<1x8x128xbf16> to vector<8x128xbf16>
    %130 = vector.shape_cast %127 : vector<8x128xbf16> to vector<1x8x128xbf16>
    tpu.vector_store %arg14[%c0_56, %c0_57, %c0_58], %130 {strides = array<i32>} : memref<1x8x128xbf16, #tpu.memory_space<vmem>>, vector<1x8x128xbf16>,
    return
  }
  func.func @transform_0(%arg0: i32) -> (i32, i32, i32) {
    %c0_i32 = arith.constant 0 : i32
    %c0_i32_0 = arith.constant 0 : i32
    %c0_i32_1 = arith.constant 0 : i32
    return %arg0, %c0_i32, %c0_i32_0 : i32, i32, i32
  }
  func.func @transform_1(%arg0: i32) -> (i32, i32, i32) {
    %c0_i32 = arith.constant 0 : i32
    %c0_i32_0 = arith.constant 0 : i32
    %c0_i32_1 = arith.constant 0 : i32
    return %arg0, %c0_i32, %c0_i32_0 : i32, i32, i32
  }
  func.func @transform_2(%arg0: i32) -> (i32, i32, i32) {
    %c0_i32 = arith.constant 0 : i32
    %c0_i32_0 = arith.constant 0 : i32
    %c0_i32_1 = arith.constant 0 : i32
    return %arg0, %c0_i32, %c0_i32_0 : i32, i32, i32
  }
  func.func @transform_3(%arg0: i32) -> (i32, i32) {
    %c0_i32 = arith.constant 0 : i32
    %c0_i32_0 = arith.constant 0 : i32
    %c0_i32_1 = arith.constant 0 : i32
    return %c0_i32, %c0_i32_0 : i32, i32
  }
  func.func @transform_4(%arg0: i32) -> (i32, i32) {
    %c0_i32 = arith.constant 0 : i32
    %c0_i32_0 = arith.constant 0 : i32
    %c0_i32_1 = arith.constant 0 : i32
    return %c0_i32, %c0_i32_0 : i32, i32
  }
  func.func @transform_5(%arg0: i32) -> (i32, i32) {
    %c0_i32 = arith.constant 0 : i32
    %c0_i32_0 = arith.constant 0 : i32
    %c0_i32_1 = arith.constant 0 : i32
    return %c0_i32, %c0_i32_0 : i32, i32
  }
  func.func @transform_6(%arg0: i32) -> (i32, i32) {
    %c0_i32 = arith.constant 0 : i32
    %c0_i32_0 = arith.constant 0 : i32
    %c0_i32_1 = arith.constant 0 : i32
    return %c0_i32, %c0_i32_0 : i32, i32
  }
  func.func @transform_7(%arg0: i32) -> (i32, i32) {
    %c0_i32 = arith.constant 0 : i32
    %c0_i32_0 = arith.constant 0 : i32
    %c0_i32_1 = arith.constant 0 : i32
    return %c0_i32, %c0_i32_0 : i32, i32
  }
  func.func @transform_8(%arg0: i32) -> (i32, i32) {
    %c0_i32 = arith.constant 0 : i32
    %c0_i32_0 = arith.constant 0 : i32
    %c0_i32_1 = arith.constant 0 : i32
    return %c0_i32, %c0_i32_0 : i32, i32
  }
  func.func @transform_9(%arg0: i32) -> (i32, i32) {
    %c0_i32 = arith.constant 0 : i32
    %c0_i32_0 = arith.constant 0 : i32
    %c0_i32_1 = arith.constant 0 : i32
    return %c0_i32, %c0_i32_0 : i32, i32
  }
  func.func @transform_10(%arg0: i32) -> (i32, i32) {
    %c0_i32 = arith.constant 0 : i32
    %c0_i32_0 = arith.constant 0 : i32
    %c0_i32_1 = arith.constant 0 : i32
    return %c0_i32, %c0_i32_0 : i32, i32
  }
  func.func @transform_11(%arg0: i32) -> (i32, i32) {
    %c0_i32 = arith.constant 0 : i32
    %c0_i32_0 = arith.constant 0 : i32
    %c0_i32_1 = arith.constant 0 : i32
    return %c0_i32, %c0_i32_0 : i32, i32
  }
  func.func @transform_12(%arg0: i32) -> (i32, i32) {
    %c0_i32 = arith.constant 0 : i32
    %c0_i32_0 = arith.constant 0 : i32
    %c0_i32_1 = arith.constant 0 : i32
    return %c0_i32, %c0_i32_0 : i32, i32
  }
  func.func @transform_13(%arg0: i32) -> (i32, i32, i32) {
    %c0_i32 = arith.constant 0 : i32
    %c0_i32_0 = arith.constant 0 : i32
    %c0_i32_1 = arith.constant 0 : i32
    return %arg0, %c0_i32, %c0_i32_0 : i32, i32, i32
  }
}

module attributes {stable_mosaic.version = 11 : i64} {
  func.func @_head_kernel(%arg0: i32, %arg1: memref<2x1024xbf16, #tpu.memory_space<vmem>>, %arg2: memref<2x1024xbf16, #tpu.memory_space<vmem>>, %arg3: memref<2x1024xbf16, #tpu.memory_space<vmem>>, %arg4: memref<2x1024xbf16, #tpu.memory_space<vmem>>, %arg5: memref<1024x2xbf16, #tpu.memory_space<vmem>>, %arg6: memref<1x2xf32, #tpu.memory_space<vmem>>, %arg7: memref<1024x2xbf16, #tpu.memory_space<vmem>>, %arg8: memref<1x2xf32, #tpu.memory_space<vmem>>, %arg9: memref<2x2xf32, #tpu.memory_space<vmem>>) attributes {dimension_semantics = [#tpu.dimension_semantics<arbitrary>], iteration_bounds = array<i64: 1>, scalar_prefetch = 0 : i64, scratch_operands = 0 : i64, tpu.core_type = #tpu.core_type<tc>, window_params = [{pipeline_mode = #tpu.pipeline_mode<synchronous>, transform_indices = @transform_0, window_bounds = array<i64: 2, 1024>}, {pipeline_mode = #tpu.pipeline_mode<synchronous>, transform_indices = @transform_1, window_bounds = array<i64: 2, 1024>}, {pipeline_mode = #tpu.pipeline_mode<synchronous>, transform_indices = @transform_2, window_bounds = array<i64: 2, 1024>}, {pipeline_mode = #tpu.pipeline_mode<synchronous>, transform_indices = @transform_3, window_bounds = array<i64: 2, 1024>}, {pipeline_mode = #tpu.pipeline_mode<synchronous>, transform_indices = @transform_4, window_bounds = array<i64: 1024, 2>}, {pipeline_mode = #tpu.pipeline_mode<synchronous>, transform_indices = @transform_5, window_bounds = array<i64: 1, 2>}, {pipeline_mode = #tpu.pipeline_mode<synchronous>, transform_indices = @transform_6, window_bounds = array<i64: 1024, 2>}, {pipeline_mode = #tpu.pipeline_mode<synchronous>, transform_indices = @transform_7, window_bounds = array<i64: 1, 2>}, {pipeline_mode = #tpu.pipeline_mode<synchronous>, transform_indices = @transform_8, window_bounds = array<i64: 2, 2>}]} {
    %c0 = arith.constant 0 : index
    %c0_0 = arith.constant 0 : index
    %0 = vector.load %arg1[%c0, %c0_0] : memref<2x1024xbf16, #tpu.memory_space<vmem>>, vector<2x1024xbf16>
    %c0_1 = arith.constant 0 : index
    %c0_2 = arith.constant 0 : index
    %1 = vector.load %arg2[%c0_1, %c0_2] : memref<2x1024xbf16, #tpu.memory_space<vmem>>, vector<2x1024xbf16>
    %2 = arith.extf %1 : vector<2x1024xbf16> to vector<2x1024xf32>
    %c0_3 = arith.constant 0 : index
    %c0_4 = arith.constant 0 : index
    %3 = vector.load %arg3[%c0_3, %c0_4] : memref<2x1024xbf16, #tpu.memory_space<vmem>>, vector<2x1024xbf16>
    %4 = arith.extf %3 : vector<2x1024xbf16> to vector<2x1024xf32>
    %5 = arith.addf %2, %4 : vector<2x1024xf32>
    %c0_5 = arith.constant 0 : index
    %c0_6 = arith.constant 0 : index
    %6 = vector.load %arg4[%c0_5, %c0_6] : memref<2x1024xbf16, #tpu.memory_space<vmem>>, vector<2x1024xbf16>
    %7 = arith.extf %6 : vector<2x1024xbf16> to vector<2x1024xf32>
    %8 = arith.addf %5, %7 : vector<2x1024xf32>
    %9 = arith.truncf %8 : vector<2x1024xf32> to vector<2x1024xbf16>
    %c0_7 = arith.constant 0 : index
    %c0_8 = arith.constant 0 : index
    %10 = vector.load %arg5[%c0_7, %c0_8] : memref<1024x2xbf16, #tpu.memory_space<vmem>>, vector<1024x2xbf16>
    %cst = arith.constant dense<0.000000e+00> : vector<2x2xf32>
    %11 = tpu.matmul %0, %10, %cst {dimension_numbers = #tpu.dot_dimension_numbers<[1], [0], [0], [1], [0, 0, 1, 1], [], []>} : vector<2x1024xbf16>, vector<1024x2xbf16>, vector<2x2xf32> -> vector<2x2xf32>
    %c0_9 = arith.constant 0 : index
    %c0_10 = arith.constant 0 : index
    %12 = vector.load %arg6[%c0_9, %c0_10] : memref<1x2xf32, #tpu.memory_space<vmem>>, vector<1x2xf32>
    %13 = vector.broadcast %12 : vector<1x2xf32> to vector<2x2xf32>
    %14 = arith.addf %11, %13 : vector<2x2xf32>
    %c0_11 = arith.constant 0 : index
    %c0_12 = arith.constant 0 : index
    %15 = vector.load %arg7[%c0_11, %c0_12] : memref<1024x2xbf16, #tpu.memory_space<vmem>>, vector<1024x2xbf16>
    %cst_13 = arith.constant dense<0.000000e+00> : vector<2x2xf32>
    %16 = tpu.matmul %9, %15, %cst_13 {dimension_numbers = #tpu.dot_dimension_numbers<[1], [0], [0], [1], [0, 0, 1, 1], [], []>} : vector<2x1024xbf16>, vector<1024x2xbf16>, vector<2x2xf32> -> vector<2x2xf32>
    %c0_14 = arith.constant 0 : index
    %c0_15 = arith.constant 0 : index
    %17 = vector.load %arg8[%c0_14, %c0_15] : memref<1x2xf32, #tpu.memory_space<vmem>>, vector<1x2xf32>
    %cst_16 = arith.constant 3.000000e+00 : f32
    %18 = vector.broadcast %cst_16 : f32 to vector<1x2xf32>
    %19 = arith.mulf %18, %17 : vector<1x2xf32>
    %20 = vector.broadcast %19 : vector<1x2xf32> to vector<2x2xf32>
    %21 = arith.addf %16, %20 : vector<2x2xf32>
    %cst_17 = arith.constant 1.000000e-01 : f32
    %22 = vector.broadcast %cst_17 : f32 to vector<2x2xf32>
    %23 = arith.mulf %22, %21 : vector<2x2xf32>
    %24 = arith.addf %14, %23 : vector<2x2xf32>
    %c0_18 = arith.constant 0 : index
    %c0_19 = arith.constant 0 : index
    %25 = vector.load %arg9[%c0_18, %c0_19] : memref<2x2xf32, #tpu.memory_space<vmem>>, vector<2x2xf32>
    tpu.vector_store %arg9[%c0_18, %c0_19], %24 {strides = array<i32>} : memref<2x2xf32, #tpu.memory_space<vmem>>, vector<2x2xf32>,
    return
  }
  func.func @transform_0(%arg0: i32) -> (i32, i32) {
    %c0_i32 = arith.constant 0 : i32
    %c0_i32_0 = arith.constant 0 : i32
    %c0_i32_1 = arith.constant 0 : i32
    return %c0_i32, %c0_i32_0 : i32, i32
  }
  func.func @transform_1(%arg0: i32) -> (i32, i32) {
    %c0_i32 = arith.constant 0 : i32
    %c0_i32_0 = arith.constant 0 : i32
    %c0_i32_1 = arith.constant 0 : i32
    return %c0_i32, %c0_i32_0 : i32, i32
  }
  func.func @transform_2(%arg0: i32) -> (i32, i32) {
    %c0_i32 = arith.constant 0 : i32
    %c0_i32_0 = arith.constant 0 : i32
    %c0_i32_1 = arith.constant 0 : i32
    return %c0_i32, %c0_i32_0 : i32, i32
  }
  func.func @transform_3(%arg0: i32) -> (i32, i32) {
    %c0_i32 = arith.constant 0 : i32
    %c0_i32_0 = arith.constant 0 : i32
    %c0_i32_1 = arith.constant 0 : i32
    return %c0_i32, %c0_i32_0 : i32, i32
  }
  func.func @transform_4(%arg0: i32) -> (i32, i32) {
    %c0_i32 = arith.constant 0 : i32
    %c0_i32_0 = arith.constant 0 : i32
    %c0_i32_1 = arith.constant 0 : i32
    return %c0_i32, %c0_i32_0 : i32, i32
  }
  func.func @transform_5(%arg0: i32) -> (i32, i32) {
    %c0_i32 = arith.constant 0 : i32
    %c0_i32_0 = arith.constant 0 : i32
    %c0_i32_1 = arith.constant 0 : i32
    return %c0_i32, %c0_i32_0 : i32, i32
  }
  func.func @transform_6(%arg0: i32) -> (i32, i32) {
    %c0_i32 = arith.constant 0 : i32
    %c0_i32_0 = arith.constant 0 : i32
    %c0_i32_1 = arith.constant 0 : i32
    return %c0_i32, %c0_i32_0 : i32, i32
  }
  func.func @transform_7(%arg0: i32) -> (i32, i32) {
    %c0_i32 = arith.constant 0 : i32
    %c0_i32_0 = arith.constant 0 : i32
    %c0_i32_1 = arith.constant 0 : i32
    return %c0_i32, %c0_i32_0 : i32, i32
  }
  func.func @transform_8(%arg0: i32) -> (i32, i32) {
    %c0_i32 = arith.constant 0 : i32
    %c0_i32_0 = arith.constant 0 : i32
    %c0_i32_1 = arith.constant 0 : i32
    return %c0_i32, %c0_i32_0 : i32, i32
  }
}

</mosaic_0001>

<llo_original>
// kernel: _lambda_.15
$region0: #{_lambda_.15}
  #allocation0 [shape = 'u32[]', space=smem, size = 0x4, offset = 0x4, fixed_abs, tag = 'smem constant byte address 0x4 - core index']
  #allocation1 [shape = 'u32[144,128]{1,0:T(1,128)}', space=vmem, size = 0x12000, scoped, tag = 'internal scratch']
  %s0 = inlined_call_operand.vmem [shape: bf16[32,128], index: 0, kind: input, shape index: {}]
  %s1 = inlined_call_operand.vmem [shape: bf16[128,128], index: 1, kind: input, shape index: {}]
  %s2 = inlined_call_operand.vmem [shape: f32[1,128], index: 2, kind: input, shape index: {}]
  %s3 = inlined_call_operand.vmem [shape: bf16[32,128], index: 3, kind: output, shape index: {}]
  %s4 = sld [smem:[#allocation0]]
  $region45: #{_lambda_.15} parent=0
    _
  %s6 = ssub.s32 1, %s4
  %s7 = scalar_select 0, %s6, %s4
  loop: start=0, step=1, limit=4
  $region2: #{_lambda_.15} parent=0 // loop_pre_header
    _
  $region3: #{_lambda_.15} parent=0 // loop_header
    %s9 = sphi 0, %s13
    %p10 = scmp.ge.s32.totalorder %s9, 4
    %s19 = sphi 0, %s21
    %s22 = sphi 0, %s19
    %s23 = sphi 0, %s22
    %s39 = sphi 0, %s23
    %s43 = sphi 0, %s43
    %s45 = sphi 0, %s43
    %s46 = sphi 0, %s45
    %s60 = sphi 0, %s46
    %s64 = sphi 0, %s64
    %s66 = sphi 0, %s64
    %s67 = sphi 0, %s66
    %s81 = sphi 0, %s67
    %s87 = sphi 0, %s89
    %s90 = sphi 0, %s87
    %s91 = sphi 0, %s90
    %s107 = sphi 0, %s91
  $region4: #{_lambda_.15} parent=0 // loop_header_branch
    %12 = sbr.rel (%p10) target = $region8
  $region5: #{_lambda_.15} parent=0 // loop_body
    %s14 = ssub.s32 %s9, 1
    %s15 = ssub.s32 %s9, 2
    %s16 = sadd.s32 %s9, 1
    %s17 = ssub.s32 %s9, %s16
    %p18 = scmp.eq.s32.totalorder %s17, 0
    %s20 = sadd.s32 %s19, 1
    %s21 = scalar_select %p18, %s19, %s20
    %p24 = pneg %p18
    %p25 = scmp.eq.s32.totalorder %s9, 1
    %p26 = por %p24, %p25
    %p27 = scmp.ne.s32.totalorder %s19, %s22
    %p28 = scmp.eq.s32.totalorder %s9, 0
    %p29 = por %p27, %p28
    %p30 = scmp.ne.s32.totalorder %s19, %s22
    %p31 = scmp.eq.s32.totalorder %s14, 1
    %p32 = por %p30, %p31
    %p33 = scmp.ne.s32.totalorder %s22, %s23
    %p34 = scmp.eq.s32.totalorder %s14, 0
    %p35 = por %p33, %p34
    %p36 = scmp.ne.s32.totalorder %s22, %s23
    %p37 = scmp.eq.s32.totalorder %s15, 1
    %p38 = por %p36, %p37
    %p40 = scmp.ne.s32.totalorder %s23, %s39
    %p41 = scmp.eq.s32.totalorder %s15, 0
    %p42 = por %p40, %p41
    %s44 = sadd.s32 %s43, 1
    %p47 = scmp.eq.s32.totalorder %s9, 1
    %p48 = scmp.ne.s32.totalorder %s43, %s45
    %p49 = scmp.eq.s32.totalorder %s9, 0
    %p50 = por %p48, %p49
    %p51 = scmp.ne.s32.totalorder %s43, %s45
    %p52 = scmp.eq.s32.totalorder %s14, 1
    %p53 = por %p51, %p52
    %p54 = scmp.ne.s32.totalorder %s45, %s46
    %p55 = scmp.eq.s32.totalorder %s14, 0
    %p56 = por %p54, %p55
    %p57 = scmp.ne.s32.totalorder %s45, %s46
    %p58 = scmp.eq.s32.totalorder %s15, 1
    %p59 = por %p57, %p58
    %p61 = scmp.ne.s32.totalorder %s46, %s60
    %p62 = scmp.eq.s32.totalorder %s15, 0
    %p63 = por %p61, %p62
    %s65 = sadd.s32 %s64, 1
    %p68 = scmp.eq.s32.totalorder %s9, 1
    %p69 = scmp.ne.s32.totalorder %s64, %s66
    %p70 = scmp.eq.s32.totalorder %s9, 0
    %p71 = por %p69, %p70
    %p72 = scmp.ne.s32.totalorder %s64, %s66
    %p73 = scmp.eq.s32.totalorder %s14, 1
    %p74 = por %p72, %p73
    %p75 = scmp.ne.s32.totalorder %s66, %s67
    %p76 = scmp.eq.s32.totalorder %s14, 0
    %p77 = por %p75, %p76
    %p78 = scmp.ne.s32.totalorder %s66, %s67
    %p79 = scmp.eq.s32.totalorder %s15, 1
    %p80 = por %p78, %p79
    %p82 = scmp.ne.s32.totalorder %s67, %s81
    %p83 = scmp.eq.s32.totalorder %s15, 0
    %p84 = por %p82, %p83
    %s85 = ssub.s32 %s9, %s16
    %p86 = scmp.eq.s32.totalorder %s85, 0
    %s88 = sadd.s32 %s87, 1
    %s89 = scalar_select %p86, %s87, %s88
    %p92 = pneg %p86
    %p93 = scmp.eq.s32.totalorder %s9, 1
    %p94 = por %p92, %p93
    %p95 = scmp.ne.s32.totalorder %s87, %s90
    %p96 = scmp.eq.s32.totalorder %s9, 0
    %p97 = por %p95, %p96
    %p98 = scmp.ne.s32.totalorder %s87, %s90
    %p99 = scmp.eq.s32.totalorder %s14, 1
    %p100 = por %p98, %p99
    %p101 = scmp.ne.s32.totalorder %s90, %s91
    %p102 = scmp.eq.s32.totalorder %s14, 0
    %p103 = por %p101, %p102
    %p104 = scmp.ne.s32.totalorder %s90, %s91
    %p105 = scmp.eq.s32.totalorder %s15, 1
    %p106 = por %p104, %p105
    %p108 = scmp.ne.s32.totalorder %s91, %s107
    %p109 = scmp.eq.s32.totalorder %s15, 0
    %p110 = por %p108, %p109
    %p111 = scmp.le.s32.totalorder 1, %s9
    %p112 = scmp.lt.s32.totalorder %s9, 3
    %p113 = pnand %p111, %p112
    %p114 = pneg %p113
    // Predicated region
    $region9: #{_lambda_.15} parent=5 // pred_check
      _
    $region10: #{_lambda_.15} parent=5 // pred_check_branch
      %116 = sbr.rel (%p113) target = $region12
    $region11: #{_lambda_.15} parent=5 // pred_region
      %s117 = ssub.s32 %s9, 1
      // Predicated region
      $region13: #{_lambda_.15} parent=11 // pred_check
        %p118 = pneg %p56
      $region14: #{_lambda_.15} parent=11 // pred_check_branch
        %120 = sbr.rel (%p118) target = $region16
      $region15: #{_lambda_.15} parent=11 // pred_region
        _
      $region16: #{_lambda_.15} parent=11 // pred_fallthru
        _
      // Predicated region
      $region17: #{_lambda_.15} parent=11 // pred_check
        %p121 = pneg %p77
      $region18: #{_lambda_.15} parent=11 // pred_check_branch
        %123 = sbr.rel (%p121) target = $region20
      $region19: #{_lambda_.15} parent=11 // pred_region
        _
      $region20: #{_lambda_.15} parent=11 // pred_fallthru
        _
    $region12: #{_lambda_.15} parent=5 // pred_fallthru
      _
    %p124 = scmp.lt.s32.totalorder %s9, 2
    // Predicated region
    $region21: #{_lambda_.15} parent=5 // pred_check
      %p125 = pneg %p124
    $region22: #{_lambda_.15} parent=5 // pred_check_branch
      %127 = sbr.rel (%p125) target = $region24
    $region23: #{_lambda_.15} parent=5 // pred_region
      // Predicated region
      $region25: #{_lambda_.15} parent=23 // pred_check
        %p128 = pneg %p29
      $region26: #{_lambda_.15} parent=23 // pred_check_branch
        %130 = sbr.rel (%p128) target = $region28
      $region27: #{_lambda_.15} parent=23 // pred_region
        %s131 = smul.u32 2, %s9
        %p132 = scmp.lt.s32.totalorder %s131, 3
        %s133 = scalar_select %p132, %s131, 3
        %s134 = smul.addr %s133, 4
        %s135 = scalar_lea.vmem %s0, %s134
        %s136 = smul.u32 2, %s9
      $region28: #{_lambda_.15} parent=23 // pred_fallthru
        _
    $region24: #{_lambda_.15} parent=5 // pred_fallthru
      _
    %p137 = scmp.le.s32.totalorder 1, %s9
    %p138 = scmp.lt.s32.totalorder %s9, 3
    %p139 = pnand %p137, %p138
    %p140 = pneg %p139
    // Predicated region
    $region29: #{_lambda_.15} parent=5 // pred_check
      _
    $region30: #{_lambda_.15} parent=5 // pred_check_branch
      %142 = sbr.rel (%p139) target = $region32
    $region31: #{_lambda_.15} parent=5 // pred_region
      %s143 = ssub.s32 %s9, 1
      %s144 = smul.u32 2, %s14
      %p145 = scmp.lt.s32.totalorder %s144, 3
      %s146 = scalar_select %p145, %s144, 3
      %s147 = smul.addr %s146, 4
      %s148 = scalar_lea.vmem %s0, %s147
      %p149 = pneg %p35
      %p150 = pneg %p32
      %p151 = pneg %p56
      %p152 = pneg %p53
      %p153 = pneg %p77
      %p154 = pneg %p74
      %p155 = pneg %p103
      %p156 = pneg %p100
      %s157 = smul.u32 2, %s14
      %p158 = scmp.lt.s32.totalorder %s157, 3
      %s159 = scalar_select %p158, %s157, 3
      %s160 = smul.addr %s159, 4
      %s161 = scalar_lea.vmem %s3, %s160
      %s162 = smul.u32 2, %s14
      %p163 = scmp.lt.s32.totalorder %s162, 3
      %s164 = scalar_select %p163, %s162, 3
      %s165 = smul.addr %s164, 4
      %s166 = scalar_lea.vmem %s0, %s165
      %s167 = smul.u32 2, %s14
      %s168 = smul.u32 2, %s14
      %p169 = scmp.lt.s32.totalorder %s168, 3
      %s170 = scalar_select %p169, %s168, 3
      %s171 = smul.addr %s170, 4
      %s172 = scalar_lea.vmem %s3, %s171
      %s173 = smul.u32 2, %s14
      %v175 = vld [vmem:[%s166] sm:$0xf]
      %v176 = vld [vmem:[%s166 + $0x4] sm:$0xf]
      %v177 = vld [vmem:[%s1] sm:$0xf]
      %v178 = vld [vmem:[%s1 + $0x4] sm:$0xf]
      %v179 = vld [vmem:[%s1 + $0x8] sm:$0xf]
      %v180 = vld [vmem:[%s1 + $0xc] sm:$0xf]
      %v181 = vld [vmem:[%s1 + $0x10] sm:$0xf]
      %v182 = vld [vmem:[%s1 + $0x14] sm:$0xf]
      %v183 = vld [vmem:[%s1 + $0x18] sm:$0xf]
      %v184 = vld [vmem:[%s1 + $0x1c] sm:$0xf]
      %v185 = vld [vmem:[%s1 + $0x20] sm:$0xf]
      %v186 = vld [vmem:[%s1 + $0x24] sm:$0xf]
      %v187 = vld [vmem:[%s1 + $0x28] sm:$0xf]
      %v188 = vld [vmem:[%s1 + $0x2c] sm:$0xf]
      %v189 = vld [vmem:[%s1 + $0x30] sm:$0xf]
      %v190 = vld [vmem:[%s1 + $0x34] sm:$0xf]
      %v191 = vld [vmem:[%s1 + $0x38] sm:$0xf]
      %v192 = vld [vmem:[%s1 + $0x3c] sm:$0xf]
      %v193 = vld [vmem:[%s2] sm:$0x1]
      %v195 = vlaneseq
      %v196 = vshrl.u32 %v195, 7
      %v197 = vsub.s32 0, %v196
      %v198 = vrot.slane %v193, %v197
      %v202 = vunpack.c.l.b16 %v175
      %v203 = vunpack.c.l.b16 %v176
      %v204 = vpack.c.b16 %v203, %v202
      %v222 = vunpack.c.l.b16 %v177
      %v223 = vunpack.c.l.b16 %v178
      %v224 = vunpack.c.l.b16 %v179
      %v225 = vunpack.c.l.b16 %v180
      %v226 = vunpack.c.l.b16 %v181
      %v227 = vunpack.c.l.b16 %v182
      %v228 = vunpack.c.l.b16 %v183
      %v229 = vunpack.c.l.b16 %v184
      %v230 = vunpack.c.l.b16 %v185
      %v231 = vunpack.c.l.b16 %v186
      %v232 = vunpack.c.l.b16 %v187
      %v233 = vunpack.c.l.b16 %v188
      %v234 = vunpack.c.l.b16 %v189
      %v235 = vunpack.c.l.b16 %v190
      %v236 = vunpack.c.l.b16 %v191
      %v237 = vunpack.c.l.b16 %v192
      %v238 = vpack.c.b16 %v223, %v222
      %v239 = vpack.c.b16 %v225, %v224
      %v240 = vpack.c.b16 %v227, %v226
      %v241 = vpack.c.b16 %v229, %v228
      %v242 = vpack.c.b16 %v231, %v230
      %v243 = vpack.c.b16 %v233, %v232
      %v244 = vpack.c.b16 %v235, %v234
      %v245 = vpack.c.b16 %v237, %v236
      %254 = vmatprep.subr.bf16.mxu0 0
      %255 = vmatpush1.bf16.msra.mxu0 %v238
      %256 = vmatprep.subr.bf16.mxu0 0
      %257 = vmatpush1.bf16.msra.mxu0 %v239
      %258 = vmatprep.subr.bf16.mxu0 0
      %259 = vmatpush1.bf16.msra.mxu0 %v240
      %260 = vmatprep.subr.bf16.mxu0 0
      %261 = vmatpush1.bf16.msra.mxu0 %v241
      %262 = vmatprep.subr.bf16.mxu0 0
      %263 = vmatpush1.bf16.msra.mxu0 %v242
      %264 = vmatprep.subr.bf16.mxu0 0
      %265 = vmatpush1.bf16.msra.mxu0 %v243
      %266 = vmatprep.subr.bf16.mxu0 0
      %267 = vmatpush1.bf16.msra.mxu0 %v244
      %268 = vmatprep.subr.bf16.mxu0 0
      %269 = vmatpush1.bf16.msra.mxu0 %v245
      %270 = vmatprep.subr.bf16.mxu0 0
      %271 = vmatpush1.bf16.msra.mxu0 0
      %272 = vmatprep.subr.bf16.mxu0 0
      %273 = vmatpush1.bf16.msra.mxu0 0
      %274 = vmatprep.subr.bf16.mxu0 0
      %275 = vmatpush1.bf16.msra.mxu0 0
      %276 = vmatprep.subr.bf16.mxu0 0
      %277 = vmatpush1.bf16.msra.mxu0 0
      %278 = vmatprep.subr.bf16.mxu0 0
      %279 = vmatpush1.bf16.msra.mxu0 0
      %280 = vmatprep.subr.bf16.mxu0 0
      %281 = vmatpush1.bf16.msra.mxu0 0
      %282 = vmatprep.subr.bf16.mxu0 0
      %283 = vmatpush1.bf16.msra.mxu0 0
      %284 = vmatprep.subr.bf16.mxu0 0
      %285 = vmatpush1.bf16.msra.mxu0 0
      %286 = vmatprep.mubr.bf16.mxu0 0
      %287 = vmatmul.mubr.bf16.gmra.mrb[0].mxu0 %v204
      %v288 = vpop.f32.mrb[0].mxu0
      %v289 = vadd.f32 %v198, %v288
      %v290 = vpop.f32.mrb[0].mxu0
      %v291 = vpop.f32.mrb[0].mxu0
      %v292 = vadd.f32 %v198, %v291
      %v293 = vpop.f32.mrb[0].mxu0
      %294 = vdwg.mxu0
      %v295 = vpack.c.bf16 %v292, %v289
      %v297 = vunpack.c.l.b16 %v295
      %v298 = vunpack.c.h.b16 %v295
      %v299 = vpack.c.b16 %v297, %v297
      %v300 = vpack.c.b16 %v298, %v298
      %303 = vst [vmem:[%s172] sm:$0xf] %v299
      %304 = vst [vmem:[%s172 + $0x4] sm:$0xf] %v300
      %s305 = smul.u32 2, %s14
      %p306 = scmp.lt.s32.totalorder %s305, 3
      %s307 = scalar_select %p306, %s305, 3
      %s308 = smul.addr %s307, 4
      %s309 = scalar_lea.vmem %s3, %s308
      // Predicated region
      $region33: #{_lambda_.15} parent=31 // pred_check
        %p310 = pneg %p100
      $region34: #{_lambda_.15} parent=31 // pred_check_branch
        %312 = sbr.rel (%p310) target = $region36
      $region35: #{_lambda_.15} parent=31 // pred_region
        %s313 = smul.u32 2, %s14
      $region36: #{_lambda_.15} parent=31 // pred_fallthru
        _
    $region32: #{_lambda_.15} parent=5 // pred_fallthru
      _
    %p314 = scmp.le.s32.totalorder 2, %s9
    // Predicated region
    $region37: #{_lambda_.15} parent=5 // pred_check
      %p315 = pneg %p314
    $region38: #{_lambda_.15} parent=5 // pred_check_branch
      %317 = sbr.rel (%p315) target = $region40
    $region39: #{_lambda_.15} parent=5 // pred_region
      %s318 = ssub.s32 %s9, 2
      // Predicated region
      $region41: #{_lambda_.15} parent=39 // pred_check
        %p319 = pneg %p106
      $region42: #{_lambda_.15} parent=39 // pred_check_branch
        %321 = sbr.rel (%p319) target = $region44
      $region43: #{_lambda_.15} parent=39 // pred_region
        %s322 = smul.u32 2, %s15
        %p323 = scmp.lt.s32.totalorder %s322, 3
        %s324 = scalar_select %p323, %s322, 3
        %s325 = smul.addr %s324, 4
        %s326 = scalar_lea.vmem %s3, %s325
      $region44: #{_lambda_.15} parent=39 // pred_fallthru
        _
    $region40: #{_lambda_.15} parent=5 // pred_fallthru
      _
  $region6: #{_lambda_.15} parent=0 // loop_footer
    %s13 = sadd.s32 1, %s9
  $region7: #{_lambda_.15} parent=0 // loop_footer_branch
    %8 = sbr.rel target = $region3
  $region8: #{_lambda_.15} parent=0 // loop_exit
    _

// kernel: _lambda_.11
$region0: #{_lambda_.11}
  #allocation0 [shape = 'u32[]', space=smem, size = 0x4, offset = 0x4, fixed_abs, tag = 'smem constant byte address 0x4 - core index']
  #allocation1 [shape = 'u32[144,128]{1,0:T(1,128)}', space=vmem, size = 0x12000, scoped, tag = 'internal scratch']
  %s0 = inlined_call_operand.vmem [shape: bf16[16,256], index: 0, kind: input, shape index: {}]
  %s1 = inlined_call_operand.hbm [shape: bf16[256,256], index: 1, kind: input, shape index: {}]
  %s2 = inlined_call_operand.vmem [shape: f32[1,256], index: 2, kind: input, shape index: {}]
  %s3 = inlined_call_operand.vmem [shape: f32[1,256], index: 3, kind: input, shape index: {}]
  %s4 = inlined_call_operand.vmem [shape: f32[1,256], index: 4, kind: input, shape index: {}]
  %s5 = inlined_call_operand.vmem [shape: bf16[256,128], index: 5, kind: input, shape index: {}]
  %s6 = inlined_call_operand.vmem [shape: f32[1,128], index: 6, kind: input, shape index: {}]
  %s7 = inlined_call_operand.vmem [shape: bf16[16,128], index: 7, kind: output, shape index: {}]
  %s8 = sld [smem:[#allocation0]]
  $region65: #{_lambda_.11} parent=0
    _
  %s10 = ssub.s32 1, %s8
  %s11 = scalar_select 0, %s10, %s8
  $region1: #{_lambda_.11} parent=0
    #allocation2 [shape = 'u8[131072]{0}', space=vmem, size = 0x20000, scoped, tag = 'input window, operand 1, single buffered']
    #allocation3 [shape = 's32[2]{0}', space=sflag, size = 0x8, scoped, tag = 'scoped memory for _lambda_.11']
    %12 = vsyncpa [#allocation3], 0
    loop: start=0, step=1, limit=4
    $region2: #{_lambda_.11} parent=1 // loop_pre_header
      _
    $region3: #{_lambda_.11} parent=1 // loop_header
      %s14 = sphi 0, %s18
      %p15 = scmp.ge.s32.totalorder %s14, 4
      %s24 = sphi 0, %s26
      %s27 = sphi 0, %s24
      %s28 = sphi 0, %s27
      %s44 = sphi 0, %s28
      %s48 = sphi 0, %s48
      %s50 = sphi 0, %s48
      %s51 = sphi 0, %s50
      %s65 = sphi 0, %s51
      %s69 = sphi 0, %s69
      %s71 = sphi 0, %s69
      %s72 = sphi 0, %s71
      %s86 = sphi 0, %s72
      %s90 = sphi 0, %s90
      %s92 = sphi 0, %s90
      %s93 = sphi 0, %s92
      %s107 = sphi 0, %s93
      %s111 = sphi 0, %s111
      %s113 = sphi 0, %s111
      %s114 = sphi 0, %s113
      %s128 = sphi 0, %s114
      %s132 = sphi 0, %s132
      %s134 = sphi 0, %s132
      %s135 = sphi 0, %s134
      %s149 = sphi 0, %s135
      %s153 = sphi 0, %s153
      %s155 = sphi 0, %s153
      %s156 = sphi 0, %s155
      %s170 = sphi 0, %s156
      %s176 = sphi 0, %s178
      %s179 = sphi 0, %s176
      %s180 = sphi 0, %s179
      %s196 = sphi 0, %s180
    $region4: #{_lambda_.11} parent=1 // loop_header_branch
      %17 = sbr.rel (%p15) target = $region8
    $region5: #{_lambda_.11} parent=1 // loop_body
      %s19 = ssub.s32 %s14, 1
      %s20 = ssub.s32 %s14, 2
      %s21 = sadd.s32 %s14, 1
      %s22 = ssub.s32 %s14, %s21
      %p23 = scmp.eq.s32.totalorder %s22, 0
      %s25 = sadd.s32 %s24, 1
      %s26 = scalar_select %p23, %s24, %s25
      %p29 = pneg %p23
      %p30 = scmp.eq.s32.totalorder %s14, 1
      %p31 = por %p29, %p30
      %p32 = scmp.ne.s32.totalorder %s24, %s27
      %p33 = scmp.eq.s32.totalorder %s14, 0
      %p34 = por %p32, %p33
      %p35 = scmp.ne.s32.totalorder %s24, %s27
      %p36 = scmp.eq.s32.totalorder %s19, 1
      %p37 = por %p35, %p36
      %p38 = scmp.ne.s32.totalorder %s27, %s28
      %p39 = scmp.eq.s32.totalorder %s19, 0
      %p40 = por %p38, %p39
      %p41 = scmp.ne.s32.totalorder %s27, %s28
      %p42 = scmp.eq.s32.totalorder %s20, 1
      %p43 = por %p41, %p42
      %p45 = scmp.ne.s32.totalorder %s28, %s44
      %p46 = scmp.eq.s32.totalorder %s20, 0
      %p47 = por %p45, %p46
      %s49 = sadd.s32 %s48, 1
      %p52 = scmp.eq.s32.totalorder %s14, 1
      %p53 = scmp.ne.s32.totalorder %s48, %s50
      %p54 = scmp.eq.s32.totalorder %s14, 0
      %p55 = por %p53, %p54
      %p56 = scmp.ne.s32.totalorder %s48, %s50
      %p57 = scmp.eq.s32.totalorder %s19, 1
      %p58 = por %p56, %p57
      %p59 = scmp.ne.s32.totalorder %s50, %s51
      %p60 = scmp.eq.s32.totalorder %s19, 0
      %p61 = por %p59, %p60
      %p62 = scmp.ne.s32.totalorder %s50, %s51
      %p63 = scmp.eq.s32.totalorder %s20, 1
      %p64 = por %p62, %p63
      %p66 = scmp.ne.s32.totalorder %s51, %s65
      %p67 = scmp.eq.s32.totalorder %s20, 0
      %p68 = por %p66, %p67
      %s70 = sadd.s32 %s69, 1
      %p73 = scmp.eq.s32.totalorder %s14, 1
      %p74 = scmp.ne.s32.totalorder %s69, %s71
      %p75 = scmp.eq.s32.totalorder %s14, 0
      %p76 = por %p74, %p75
      %p77 = scmp.ne.s32.totalorder %s69, %s71
      %p78 = scmp.eq.s32.totalorder %s19, 1
      %p79 = por %p77, %p78
      %p80 = scmp.ne.s32.totalorder %s71, %s72
      %p81 = scmp.eq.s32.totalorder %s19, 0
      %p82 = por %p80, %p81
      %p83 = scmp.ne.s32.totalorder %s71, %s72
      %p84 = scmp.eq.s32.totalorder %s20, 1
      %p85 = por %p83, %p84
      %p87 = scmp.ne.s32.totalorder %s72, %s86
      %p88 = scmp.eq.s32.totalorder %s20, 0
      %p89 = por %p87, %p88
      %s91 = sadd.s32 %s90, 1
      %p94 = scmp.eq.s32.totalorder %s14, 1
      %p95 = scmp.ne.s32.totalorder %s90, %s92
      %p96 = scmp.eq.s32.totalorder %s14, 0
      %p97 = por %p95, %p96
      %p98 = scmp.ne.s32.totalorder %s90, %s92
      %p99 = scmp.eq.s32.totalorder %s19, 1
      %p100 = por %p98, %p99
      %p101 = scmp.ne.s32.totalorder %s92, %s93
      %p102 = scmp.eq.s32.totalorder %s19, 0
      %p103 = por %p101, %p102
      %p104 = scmp.ne.s32.totalorder %s92, %s93
      %p105 = scmp.eq.s32.totalorder %s20, 1
      %p106 = por %p104, %p105
      %p108 = scmp.ne.s32.totalorder %s93, %s107
      %p109 = scmp.eq.s32.totalorder %s20, 0
      %p110 = por %p108, %p109
      %s112 = sadd.s32 %s111, 1
      %p115 = scmp.eq.s32.totalorder %s14, 1
      %p116 = scmp.ne.s32.totalorder %s111, %s113
      %p117 = scmp.eq.s32.totalorder %s14, 0
      %p118 = por %p116, %p117
      %p119 = scmp.ne.s32.totalorder %s111, %s113
      %p120 = scmp.eq.s32.totalorder %s19, 1
      %p121 = por %p119, %p120
      %p122 = scmp.ne.s32.totalorder %s113, %s114
      %p123 = scmp.eq.s32.totalorder %s19, 0
      %p124 = por %p122, %p123
      %p125 = scmp.ne.s32.totalorder %s113, %s114
      %p126 = scmp.eq.s32.totalorder %s20, 1
      %p127 = por %p125, %p126
      %p129 = scmp.ne.s32.totalorder %s114, %s128
      %p130 = scmp.eq.s32.totalorder %s20, 0
      %p131 = por %p129, %p130
      %s133 = sadd.s32 %s132, 1
      %p136 = scmp.eq.s32.totalorder %s14, 1
      %p137 = scmp.ne.s32.totalorder %s132, %s134
      %p138 = scmp.eq.s32.totalorder %s14, 0
      %p139 = por %p137, %p138
      %p140 = scmp.ne.s32.totalorder %s132, %s134
      %p141 = scmp.eq.s32.totalorder %s19, 1
      %p142 = por %p140, %p141
      %p143 = scmp.ne.s32.totalorder %s134, %s135
      %p144 = scmp.eq.s32.totalorder %s19, 0
      %p145 = por %p143, %p144
      %p146 = scmp.ne.s32.totalorder %s134, %s135
      %p147 = scmp.eq.s32.totalorder %s20, 1
      %p148 = por %p146, %p147
      %p150 = scmp.ne.s32.totalorder %s135, %s149
      %p151 = scmp.eq.s32.totalorder %s20, 0
      %p152 = por %p150, %p151
      %s154 = sadd.s32 %s153, 1
      %p157 = scmp.eq.s32.totalorder %s14, 1
      %p158 = scmp.ne.s32.totalorder %s153, %s155
      %p159 = scmp.eq.s32.totalorder %s14, 0
      %p160 = por %p158, %p159
      %p161 = scmp.ne.s32.totalorder %s153, %s155
      %p162 = scmp.eq.s32.totalorder %s19, 1
      %p163 = por %p161, %p162
      %p164 = scmp.ne.s32.totalorder %s155, %s156
      %p165 = scmp.eq.s32.totalorder %s19, 0
      %p166 = por %p164, %p165
      %p167 = scmp.ne.s32.totalorder %s155, %s156
      %p168 = scmp.eq.s32.totalorder %s20, 1
      %p169 = por %p167, %p168
      %p171 = scmp.ne.s32.totalorder %s156, %s170
      %p172 = scmp.eq.s32.totalorder %s20, 0
      %p173 = por %p171, %p172
      %s174 = ssub.s32 %s14, %s21
      %p175 = scmp.eq.s32.totalorder %s174, 0
      %s177 = sadd.s32 %s176, 1
      %s178 = scalar_select %p175, %s176, %s177
      %p181 = pneg %p175
      %p182 = scmp.eq.s32.totalorder %s14, 1
      %p183 = por %p181, %p182
      %p184 = scmp.ne.s32.totalorder %s176, %s179
      %p185 = scmp.eq.s32.totalorder %s14, 0
      %p186 = por %p184, %p185
      %p187 = scmp.ne.s32.totalorder %s176, %s179
      %p188 = scmp.eq.s32.totalorder %s19, 1
      %p189 = por %p187, %p188
      %p190 = scmp.ne.s32.totalorder %s179, %s180
      %p191 = scmp.eq.s32.totalorder %s19, 0
      %p192 = por %p190, %p191
      %p193 = scmp.ne.s32.totalorder %s179, %s180
      %p194 = scmp.eq.s32.totalorder %s20, 1
      %p195 = por %p193, %p194
      %p197 = scmp.ne.s32.totalorder %s180, %s196
      %p198 = scmp.eq.s32.totalorder %s20, 0
      %p199 = por %p197, %p198
      %p200 = scmp.le.s32.totalorder 1, %s14
      %p201 = scmp.lt.s32.totalorder %s14, 3
      %p202 = pnand %p200, %p201
      %p203 = pneg %p202
      // Predicated region
      $region9: #{_lambda_.11} parent=5 // pred_check
        _
      $region10: #{_lambda_.11} parent=5 // pred_check_branch
        %205 = sbr.rel (%p202) target = $region12
      $region11: #{_lambda_.11} parent=5 // pred_region
        %s206 = ssub.s32 %s14, 1
        // Predicated region
        $region13: #{_lambda_.11} parent=11 // pred_check
          %p207 = pneg %p61
        $region14: #{_lambda_.11} parent=11 // pred_check_branch
          %209 = sbr.rel (%p207) target = $region16
        $region15: #{_lambda_.11} parent=11 // pred_region
          %s211 = ssub.s32 4096, 4096
          %212 = vsyncadd [#allocation3], %s211
          %s213 = sshll.u32 [#allocation2], 4
          %s214 = int_to_ptr.vmem [resolvable:$true] %s213
          %219 = dma.hbm_to_vmem [thread:$0]  %s1, 4096, %s214, [#allocation3], 128, 128, 8
        $region16: #{_lambda_.11} parent=11 // pred_fallthru
          _
        // Predicated region
        $region17: #{_lambda_.11} parent=11 // pred_check
          %p220 = pneg %p82
        $region18: #{_lambda_.11} parent=11 // pred_check_branch
          %222 = sbr.rel (%p220) target = $region20
        $region19: #{_lambda_.11} parent=11 // pred_region
          _
        $region20: #{_lambda_.11} parent=11 // pred_fallthru
          _
        // Predicated region
        $region21: #{_lambda_.11} parent=11 // pred_check
          %p223 = pneg %p103
        $region22: #{_lambda_.11} parent=11 // pred_check_branch
          %225 = sbr.rel (%p223) target = $region24
        $region23: #{_lambda_.11} parent=11 // pred_region
          _
        $region24: #{_lambda_.11} parent=11 // pred_fallthru
          _
        // Predicated region
        $region25: #{_lambda_.11} parent=11 // pred_check
          %p226 = pneg %p124
        $region26: #{_lambda_.11} parent=11 // pred_check_branch
          %228 = sbr.rel (%p226) target = $region28
        $region27: #{_lambda_.11} parent=11 // pred_region
          _
        $region28: #{_lambda_.11} parent=11 // pred_fallthru
          _
        // Predicated region
        $region29: #{_lambda_.11} parent=11 // pred_check
          %p229 = pneg %p145
        $region30: #{_lambda_.11} parent=11 // pred_check_branch
          %231 = sbr.rel (%p229) target = $region32
        $region31: #{_lambda_.11} parent=11 // pred_region
          _
        $region32: #{_lambda_.11} parent=11 // pred_fallthru
          _
        // Predicated region
        $region33: #{_lambda_.11} parent=11 // pred_check
          %p232 = pneg %p166
        $region34: #{_lambda_.11} parent=11 // pred_check_branch
          %234 = sbr.rel (%p232) target = $region36
        $region35: #{_lambda_.11} parent=11 // pred_region
          _
        $region36: #{_lambda_.11} parent=11 // pred_fallthru
          _
      $region12: #{_lambda_.11} parent=5 // pred_fallthru
        _
      %p235 = scmp.lt.s32.totalorder %s14, 2
      // Predicated region
      $region37: #{_lambda_.11} parent=5 // pred_check
        %p236 = pneg %p235
      $region38: #{_lambda_.11} parent=5 // pred_check_branch
        %238 = sbr.rel (%p236) target = $region40
      $region39: #{_lambda_.11} parent=5 // pred_region
        // Predicated region
        $region41: #{_lambda_.11} parent=39 // pred_check
          %p239 = pneg %p34
        $region42: #{_lambda_.11} parent=39 // pred_check_branch
          %241 = sbr.rel (%p239) target = $region44
        $region43: #{_lambda_.11} parent=39 // pred_region
          %p242 = scmp.lt.s32.totalorder %s14, 1
          %s243 = scalar_select %p242, %s14, 1
          %s244 = smul.addr %s243, 2
          %s245 = smul.addr %s244, 4
          %s246 = scalar_lea.vmem %s0, %s245
        $region44: #{_lambda_.11} parent=39 // pred_fallthru
          _
      $region40: #{_lambda_.11} parent=5 // pred_fallthru
        _
      %p247 = scmp.le.s32.totalorder 1, %s14
      %p248 = scmp.lt.s32.totalorder %s14, 3
      %p249 = pnand %p247, %p248
      %p250 = pneg %p249
      // Predicated region
      $region45: #{_lambda_.11} parent=5 // pred_check
        _
      $region46: #{_lambda_.11} parent=5 // pred_check_branch
        %252 = sbr.rel (%p249) target = $region48
      $region47: #{_lambda_.11} parent=5 // pred_region
        %s253 = ssub.s32 %s14, 1
        // Predicated region
        $region49: #{_lambda_.11} parent=47 // pred_check
          %p254 = pneg %p61
        $region50: #{_lambda_.11} parent=47 // pred_check_branch
          %256 = sbr.rel (%p254) target = $region52
        $region51: #{_lambda_.11} parent=47 // pred_region
          %257 = dma.done [#allocation3], 4096
        $region52: #{_lambda_.11} parent=47 // pred_fallthru
          _
        %p258 = scmp.lt.s32.totalorder %s19, 1
        %s259 = scalar_select %p258, %s19, 1
        %s260 = smul.addr %s259, 2
        %s261 = smul.addr %s260, 4
        %s262 = scalar_lea.vmem %s0, %s261
        %p263 = pneg %p40
        %p264 = pneg %p37
        %p265 = pneg %p61
        %p266 = pneg %p58
        %p267 = pneg %p82
        %p268 = pneg %p79
        %p269 = pneg %p103
        %p270 = pneg %p100
        %p271 = pneg %p124
        %p272 = pneg %p121
        %p273 = pneg %p145
        %p274 = pneg %p142
        %p275 = pneg %p166
        %p276 = pneg %p163
        %p277 = pneg %p192
        %p278 = pneg %p189
        %p279 = scmp.lt.s32.totalorder %s19, 1
        %s280 = scalar_select %p279, %s19, 1
        %s281 = smul.addr %s280, 4
        %s282 = scalar_lea.vmem %s7, %s281
        %p283 = scmp.lt.s32.totalorder %s19, 1
        %s284 = scalar_select %p283, %s19, 1
        %s285 = smul.addr %s284, 2
        %s286 = smul.addr %s285, 4
        %s287 = scalar_lea.vmem %s0, %s286
        %p288 = scmp.lt.s32.totalorder %s19, 1
        %s289 = scalar_select %p288, %s19, 1
        %s290 = smul.addr %s289, 4
        %s291 = scalar_lea.vmem %s7, %s290
        %v293 = vld [vmem:[%s287] sm:$0xff]
        %v294 = vld [vmem:[#allocation2] sm:$0xff]
        %v295 = vld [vmem:[#allocation2 + $0x8] sm:$0xff]
        %v296 = vld [vmem:[#allocation2 + $0x10] sm:$0xff]
        %v297 = vld [vmem:[#allocation2 + $0x18] sm:$0xff]
        %v298 = vld [vmem:[#allocation2 + $0x20] sm:$0xff]
        %v299 = vld [vmem:[#allocation2 + $0x28] sm:$0xff]
        %v300 = vld [vmem:[#allocation2 + $0x30] sm:$0xff]
        %v301 = vld [vmem:[#allocation2 + $0x38] sm:$0xff]
        %v302 = vld [vmem:[#allocation2 + $0x40] sm:$0xff]
        %v303 = vld [vmem:[#allocation2 + $0x48] sm:$0xff]
        %v304 = vld [vmem:[#allocation2 + $0x50] sm:$0xff]
        %v305 = vld [vmem:[#allocation2 + $0x58] sm:$0xff]
        %v306 = vld [vmem:[#allocation2 + $0x60] sm:$0xff]
        %v307 = vld [vmem:[#allocation2 + $0x68] sm:$0xff]
        %v308 = vld [vmem:[#allocation2 + $0x70] sm:$0xff]
        %v309 = vld [vmem:[#allocation2 + $0x78] sm:$0xff]
        %v310 = vld [vmem:[#allocation2 + $0x80] sm:$0xff]
        %v311 = vld [vmem:[#allocation2 + $0x88] sm:$0xff]
        %v312 = vld [vmem:[#allocation2 + $0x90] sm:$0xff]
        %v313 = vld [vmem:[#allocation2 + $0x98] sm:$0xff]
        %v314 = vld [vmem:[#allocation2 + $0xa0] sm:$0xff]
        %v315 = vld [vmem:[#allocation2 + $0xa8] sm:$0xff]
        %v316 = vld [vmem:[#allocation2 + $0xb0] sm:$0xff]
        %v317 = vld [vmem:[#allocation2 + $0xb8] sm:$0xff]
        %v318 = vld [vmem:[#allocation2 + $0xc0] sm:$0xff]
        %v319 = vld [vmem:[#allocation2 + $0xc8] sm:$0xff]
        %v320 = vld [vmem:[#allocation2 + $0xd0] sm:$0xff]
        %v321 = vld [vmem:[#allocation2 + $0xd8] sm:$0xff]
        %v322 = vld [vmem:[#allocation2 + $0xe0] sm:$0xff]
        %v323 = vld [vmem:[#allocation2 + $0xe8] sm:$0xff]
        %v324 = vld [vmem:[#allocation2 + $0xf0] sm:$0xff]
        %v325 = vld [vmem:[#allocation2 + $0xf8] sm:$0xff]
        %v326 = vld [vmem:[%s2] sm:$0x3]
        %v328 = vlaneseq
        %v329 = vshrl.u32 %v328, 7
        %v330 = vsub.s32 0, %v329
        %v331 = vrot.slane %v326, %v330
        %v332 = vlaneseq
        %v333 = vshrl.u32 %v332, 7
        %v334 = vsub.s32 1, %v333
        %v335 = vrot.slane %v326, %v334
        %v339 = vunpack.c.l.b16 %v293
        %v340 = vunpack.c.h.b16 %v293
        %v341 = vpack.c.b16 %v339, %v339
        %v342 = vpack.c.b16 %v340, %v340
        %v377 = vunpack.c.l.b16 %v294
        %v378 = vunpack.c.h.b16 %v294
        %v379 = vunpack.c.l.b16 %v295
        %v380 = vunpack.c.h.b16 %v295
        %v381 = vunpack.c.l.b16 %v296
        %v382 = vunpack.c.h.b16 %v296
        %v383 = vunpack.c.l.b16 %v297
        %v384 = vunpack.c.h.b16 %v297
        %v385 = vunpack.c.l.b16 %v298
        %v386 = vunpack.c.h.b16 %v298
        %v387 = vunpack.c.l.b16 %v299
        %v388 = vunpack.c.h.b16 %v299
        %v389 = vunpack.c.l.b16 %v300
        %v390 = vunpack.c.h.b16 %v300
        %v391 = vunpack.c.l.b16 %v301
        %v392 = vunpack.c.h.b16 %v301
        %v393 = vunpack.c.l.b16 %v302
        %v394 = vunpack.c.h.b16 %v302
        %v395 = vunpack.c.l.b16 %v303
        %v396 = vunpack.c.h.b16 %v303
        %v397 = vunpack.c.l.b16 %v304
        %v398 = vunpack.c.h.b16 %v304
        %v399 = vunpack.c.l.b16 %v305
        %v400 = vunpack.c.h.b16 %v305
        %v401 = vunpack.c.l.b16 %v306
        %v402 = vunpack.c.h.b16 %v306
        %v403 = vunpack.c.l.b16 %v307
        %v404 = vunpack.c.h.b16 %v307
        %v405 = vunpack.c.l.b16 %v308
        %v406 = vunpack.c.h.b16 %v308
        %v407 = vunpack.c.l.b16 %v309
        %v408 = vunpack.c.h.b16 %v309
        %v409 = vunpack.c.l.b16 %v310
        %v410 = vunpack.c.h.b16 %v310
        %v411 = vunpack.c.l.b16 %v311
        %v412 = vunpack.c.h.b16 %v311
        %v413 = vunpack.c.l.b16 %v312
        %v414 = vunpack.c.h.b16 %v312
        %v415 = vunpack.c.l.b16 %v313
        %v416 = vunpack.c.h.b16 %v313
        %v417 = vunpack.c.l.b16 %v314
        %v418 = vunpack.c.h.b16 %v314
        %v419 = vunpack.c.l.b16 %v315
        %v420 = vunpack.c.h.b16 %v315
        %v421 = vunpack.c.l.b16 %v316
        %v422 = vunpack.c.h.b16 %v316
        %v423 = vunpack.c.l.b16 %v317
        %v424 = vunpack.c.h.b16 %v317
        %v425 = vunpack.c.l.b16 %v318
        %v426 = vunpack.c.h.b16 %v318
        %v427 = vunpack.c.l.b16 %v319
        %v428 = vunpack.c.h.b16 %v319
        %v429 = vunpack.c.l.b16 %v320
        %v430 = vunpack.c.h.b16 %v320
        %v431 = vunpack.c.l.b16 %v321
        %v432 = vunpack.c.h.b16 %v321
        %v433 = vunpack.c.l.b16 %v322
        %v434 = vunpack.c.h.b16 %v322
        %v435 = vunpack.c.l.b16 %v323
        %v436 = vunpack.c.h.b16 %v323
        %v437 = vunpack.c.l.b16 %v324
        %v438 = vunpack.c.h.b16 %v324
        %v439 = vunpack.c.l.b16 %v325
        %v440 = vunpack.c.h.b16 %v325
        %v441 = vpack.c.b16 %v379, %v377
        %v442 = vpack.c.b16 %v380, %v378
        %v443 = vpack.c.b16 %v383, %v381
        %v444 = vpack.c.b16 %v384, %v382
        %v445 = vpack.c.b16 %v387, %v385
        %v446 = vpack.c.b16 %v388, %v386
        %v447 = vpack.c.b16 %v391, %v389
        %v448 = vpack.c.b16 %v392, %v390
        %v449 = vpack.c.b16 %v395, %v393
        %v450 = vpack.c.b16 %v396, %v394
        %v451 = vpack.c.b16 %v399, %v397
        %v452 = vpack.c.b16 %v400, %v398
        %v453 = vpack.c.b16 %v403, %v401
        %v454 = vpack.c.b16 %v404, %v402
        %v455 = vpack.c.b16 %v407, %v405
        %v456 = vpack.c.b16 %v408, %v406
        %v457 = vpack.c.b16 %v411, %v409
        %v458 = vpack.c.b16 %v412, %v410
        %v459 = vpack.c.b16 %v415, %v413
        %v460 = vpack.c.b16 %v416, %v414
        %v461 = vpack.c.b16 %v419, %v417
        %v462 = vpack.c.b16 %v420, %v418
        %v463 = vpack.c.b16 %v423, %v421
        %v464 = vpack.c.b16 %v424, %v422
        %v465 = vpack.c.b16 %v427, %v425
        %v466 = vpack.c.b16 %v428, %v426
        %v467 = vpack.c.b16 %v431, %v429
        %v468 = vpack.c.b16 %v432, %v430
        %v469 = vpack.c.b16 %v435, %v433
        %v470 = vpack.c.b16 %v436, %v434
        %v471 = vpack.c.b16 %v439, %v437
        %v472 = vpack.c.b16 %v440, %v438
        %505 = vmatprep.subr.bf16.mxu0 %v442
        %506 = vmatpush1.bf16.msra.mxu0 %v441
        %507 = vmatprep.subr.bf16.mxu0 %v444
        %508 = vmatpush1.bf16.msra.mxu0 %v443
        %509 = vmatprep.subr.bf16.mxu0 %v446
        %510 = vmatpush1.bf16.msra.mxu0 %v445
        %511 = vmatprep.subr.bf16.mxu0 %v448
        %512 = vmatpush1.bf16.msra.mxu0 %v447
        %513 = vmatprep.subr.bf16.mxu0 %v450
        %514 = vmatpush1.bf16.msra.mxu0 %v449
        %515 = vmatprep.subr.bf16.mxu0 %v452
        %516 = vmatpush1.bf16.msra.mxu0 %v451
        %517 = vmatprep.subr.bf16.mxu0 %v454
        %518 = vmatpush1.bf16.msra.mxu0 %v453
        %519 = vmatprep.subr.bf16.mxu0 %v456
        %520 = vmatpush1.bf16.msra.mxu0 %v455
        %521 = vmatprep.subr.bf16.mxu0 %v458
        %522 = vmatpush1.bf16.msra.mxu0 %v457
        %523 = vmatprep.subr.bf16.mxu0 %v460
        %524 = vmatpush1.bf16.msra.mxu0 %v459
        %525 = vmatprep.subr.bf16.mxu0 %v462
        %526 = vmatpush1.bf16.msra.mxu0 %v461
        %527 = vmatprep.subr.bf16.mxu0 %v464
        %528 = vmatpush1.bf16.msra.mxu0 %v463
        %529 = vmatprep.subr.bf16.mxu0 %v466
        %530 = vmatpush1.bf16.msra.mxu0 %v465
        %531 = vmatprep.subr.bf16.mxu0 %v468
        %532 = vmatpush1.bf16.msra.mxu0 %v467
        %533 = vmatprep.subr.bf16.mxu0 %v470
        %534 = vmatpush1.bf16.msra.mxu0 %v469
        %535 = vmatprep.subr.bf16.mxu0 %v472
        %536 = vmatpush1.bf16.msra.mxu0 %v471
        %537 = vmatprep.mubr.bf16.mxu0 %v342
        %538 = vmatmul.mubr.bf16.gmra.mrb[0].mxu0 %v341
        %v539 = vpop.f32.mrb[0].mxu0
        %v540 = vadd.f32 %v331, %v539
        %v541 = vpop.f32.mrb[0].mxu0
        %v542 = vadd.f32 %v335, %v541
        %v543 = vpop.f32.mrb[0].mxu0
        %v544 = vpop.f32.mrb[0].mxu0
        %545 = vdwg.mxu0
        %v546 = vadd.f32 %v540, %v542
        %547 = vadd.xlane.f32.xlu0 %v546
        %v548 = vpop.xlane.xlu0 %547
        %v549 = vrcp.pop 256.0
        %v550 = vmul.f32 %v548, %v549
        %v551 = vsub.f32 %v540, %v550
        %v552 = vsub.f32 %v542, %v550
        %v553 = vmul.f32 %v551, %v551
        %v554 = vmul.f32 %v552, %v552
        %v555 = vadd.f32 %v553, %v554
        %556 = vadd.xlane.f32.xlu0 %v555
        %v557 = vpop.xlane.xlu0 %556
        %v558 = vmul.f32 %v557, %v549
        %v559 = vadd.f32 %v558, 1e-05
        %v560 = vrsqrt.pop %v559
        %v561 = vmul.f32 %v551, %v560
        %v562 = vmul.f32 %v552, %v560
        %v563 = vld [vmem:[%s3] sm:$0x3]
        %v565 = vlaneseq
        %v566 = vshrl.u32 %v565, 7
        %v567 = vsub.s32 0, %v566
        %v568 = vrot.slane %v563, %v567
        %v569 = vlaneseq
        %v570 = vshrl.u32 %v569, 7
        %v571 = vsub.s32 1, %v570
        %v572 = vrot.slane %v563, %v571
        %v575 = vmul.f32 %v561, %v568
        %v576 = vmul.f32 %v562, %v572
        %v577 = vld [vmem:[%s4] sm:$0x3]
        %v579 = vlaneseq
        %v580 = vshrl.u32 %v579, 7
        %v581 = vsub.s32 0, %v580
        %v582 = vrot.slane %v577, %v581
        %v583 = vlaneseq
        %v584 = vshrl.u32 %v583, 7
        %v585 = vsub.s32 1, %v584
        %v586 = vrot.slane %v577, %v585
        %v589 = vadd.f32 %v575, %v582
        %v590 = vadd.f32 %v576, %v586
        %v591 = vpack.c.bf16 %v589, %v589
        %v592 = vpack.c.bf16 %v590, %v590
        %v593 = vld [vmem:[%s5] sm:$0xf]
        %v594 = vld [vmem:[%s5 + $0x4] sm:$0xf]
        %v595 = vld [vmem:[%s5 + $0x8] sm:$0xf]
        %v596 = vld [vmem:[%s5 + $0xc] sm:$0xf]
        %v597 = vld [vmem:[%s5 + $0x10] sm:$0xf]
        %v598 = vld [vmem:[%s5 + $0x14] sm:$0xf]
        %v599 = vld [vmem:[%s5 + $0x18] sm:$0xf]
        %v600 = vld [vmem:[%s5 + $0x1c] sm:$0xf]
        %v601 = vld [vmem:[%s5 + $0x20] sm:$0xf]
        %v602 = vld [vmem:[%s5 + $0x24] sm:$0xf]
        %v603 = vld [vmem:[%s5 + $0x28] sm:$0xf]
        %v604 = vld [vmem:[%s5 + $0x2c] sm:$0xf]
        %v605 = vld [vmem:[%s5 + $0x30] sm:$0xf]
        %v606 = vld [vmem:[%s5 + $0x34] sm:$0xf]
        %v607 = vld [vmem:[%s5 + $0x38] sm:$0xf]
        %v608 = vld [vmem:[%s5 + $0x3c] sm:$0xf]
        %v609 = vld [vmem:[%s5 + $0x40] sm:$0xf]
        %v610 = vld [vmem:[%s5 + $0x44] sm:$0xf]
        %v611 = vld [vmem:[%s5 + $0x48] sm:$0xf]
        %v612 = vld [vmem:[%s5 + $0x4c] sm:$0xf]
        %v613 = vld [vmem:[%s5 + $0x50] sm:$0xf]
        %v614 = vld [vmem:[%s5 + $0x54] sm:$0xf]
        %v615 = vld [vmem:[%s5 + $0x58] sm:$0xf]
        %v616 = vld [vmem:[%s5 + $0x5c] sm:$0xf]
        %v617 = vld [vmem:[%s5 + $0x60] sm:$0xf]
        %v618 = vld [vmem:[%s5 + $0x64] sm:$0xf]
        %v619 = vld [vmem:[%s5 + $0x68] sm:$0xf]
        %v620 = vld [vmem:[%s5 + $0x6c] sm:$0xf]
        %v621 = vld [vmem:[%s5 + $0x70] sm:$0xf]
        %v622 = vld [vmem:[%s5 + $0x74] sm:$0xf]
        %v623 = vld [vmem:[%s5 + $0x78] sm:$0xf]
        %v624 = vld [vmem:[%s5 + $0x7c] sm:$0xf]
        %v625 = vld [vmem:[%s6] sm:$0x1]
        %v627 = vlaneseq
        %v628 = vshrl.u32 %v627, 7
        %v629 = vsub.s32 0, %v628
        %v630 = vrot.slane %v625, %v629
        %v664 = vunpack.c.l.b16 %v593
        %v665 = vunpack.c.l.b16 %v594
        %v666 = vunpack.c.l.b16 %v595
        %v667 = vunpack.c.l.b16 %v596
        %v668 = vunpack.c.l.b16 %v597
        %v669 = vunpack.c.l.b16 %v598
        %v670 = vunpack.c.l.b16 %v599
        %v671 = vunpack.c.l.b16 %v600
        %v672 = vunpack.c.l.b16 %v601
        %v673 = vunpack.c.l.b16 %v602
        %v674 = vunpack.c.l.b16 %v603
        %v675 = vunpack.c.l.b16 %v604
        %v676 = vunpack.c.l.b16 %v605
        %v677 = vunpack.c.l.b16 %v606
        %v678 = vunpack.c.l.b16 %v607
        %v679 = vunpack.c.l.b16 %v608
        %v680 = vunpack.c.l.b16 %v609
        %v681 = vunpack.c.l.b16 %v610
        %v682 = vunpack.c.l.b16 %v611
        %v683 = vunpack.c.l.b16 %v612
        %v684 = vunpack.c.l.b16 %v613
        %v685 = vunpack.c.l.b16 %v614
        %v686 = vunpack.c.l.b16 %v615
        %v687 = vunpack.c.l.b16 %v616
        %v688 = vunpack.c.l.b16 %v617
        %v689 = vunpack.c.l.b16 %v618
        %v690 = vunpack.c.l.b16 %v619
        %v691 = vunpack.c.l.b16 %v620
        %v692 = vunpack.c.l.b16 %v621
        %v693 = vunpack.c.l.b16 %v622
        %v694 = vunpack.c.l.b16 %v623
        %v695 = vunpack.c.l.b16 %v624
        %v696 = vpack.c.b16 %v665, %v664
        %v697 = vpack.c.b16 %v667, %v666
        %v698 = vpack.c.b16 %v669, %v668
        %v699 = vpack.c.b16 %v671, %v670
        %v700 = vpack.c.b16 %v673, %v672
        %v701 = vpack.c.b16 %v675, %v674
        %v702 = vpack.c.b16 %v677, %v676
        %v703 = vpack.c.b16 %v679, %v678
        %v704 = vpack.c.b16 %v681, %v680
        %v705 = vpack.c.b16 %v683, %v682
        %v706 = vpack.c.b16 %v685, %v684
        %v707 = vpack.c.b16 %v687, %v686
        %v708 = vpack.c.b16 %v689, %v688
        %v709 = vpack.c.b16 %v691, %v690
        %v710 = vpack.c.b16 %v693, %v692
        %v711 = vpack.c.b16 %v695, %v694
        %728 = vmatprep.subr.bf16.mxu0 0
        %729 = vmatpush1.bf16.msra.mxu0 %v696
        %730 = vmatprep.subr.bf16.mxu0 0
        %731 = vmatpush1.bf16.msra.mxu0 %v697
        %732 = vmatprep.subr.bf16.mxu0 0
        %733 = vmatpush1.bf16.msra.mxu0 %v698
        %734 = vmatprep.subr.bf16.mxu0 0
        %735 = vmatpush1.bf16.msra.mxu0 %v699
        %736 = vmatprep.subr.bf16.mxu0 0
        %737 = vmatpush1.bf16.msra.mxu0 %v700
        %738 = vmatprep.subr.bf16.mxu0 0
        %739 = vmatpush1.bf16.msra.mxu0 %v701
        %740 = vmatprep.subr.bf16.mxu0 0
        %741 = vmatpush1.bf16.msra.mxu0 %v702
        %742 = vmatprep.subr.bf16.mxu0 0
        %743 = vmatpush1.bf16.msra.mxu0 %v703
        %744 = vmatprep.subr.bf16.mxu0 0
        %745 = vmatpush1.bf16.msra.mxu0 %v704
        %746 = vmatprep.subr.bf16.mxu0 0
        %747 = vmatpush1.bf16.msra.mxu0 %v705
        %748 = vmatprep.subr.bf16.mxu0 0
        %749 = vmatpush1.bf16.msra.mxu0 %v706
        %750 = vmatprep.subr.bf16.mxu0 0
        %751 = vmatpush1.bf16.msra.mxu0 %v707
        %752 = vmatprep.subr.bf16.mxu0 0
        %753 = vmatpush1.bf16.msra.mxu0 %v708
        %754 = vmatprep.subr.bf16.mxu0 0
        %755 = vmatpush1.bf16.msra.mxu0 %v709
        %756 = vmatprep.subr.bf16.mxu0 0
        %757 = vmatpush1.bf16.msra.mxu0 %v710
        %758 = vmatprep.subr.bf16.mxu0 0
        %759 = vmatpush1.bf16.msra.mxu0 %v711
        %760 = vmatprep.mubr.bf16.mxu0 %v592
        %761 = vmatmul.mubr.bf16.gmra.mrb[0].mxu0 %v591
        %v762 = vpop.f32.mrb[0].mxu0
        %v763 = vadd.f32 %v630, %v762
        %v764 = vpop.f32.mrb[0].mxu0
        %v765 = vpop.f32.mrb[0].mxu0
        %v766 = vpop.f32.mrb[0].mxu0
        %767 = vdwg.mxu0
        %v768 = vxor.u32 %v763, 2147483648
        %v769 = vmul.f32 %v768, 1.442695
        %v770 = vpow.pop %v769
        %v771 = vadd.f32 %v770, 1.0
        %v772 = vrcp.pop %v771
        %v773 = vmul.f32 1.0, %v772
        %v774 = vmul.f32 %v763, %v773
        %v775 = vpack.c.bf16 %v774, %v774
        %776 = vst [vmem:[%s291] sm:$0xf] %v775
        %p777 = scmp.lt.s32.totalorder %s19, 1
        %s778 = scalar_select %p777, %s19, 1
        %s779 = smul.addr %s778, 4
        %s780 = scalar_lea.vmem %s7, %s779
        // Predicated region
        $region53: #{_lambda_.11} parent=47 // pred_check
          %p781 = pneg %p189
        $region54: #{_lambda_.11} parent=47 // pred_check_branch
          %783 = sbr.rel (%p781) target = $region56
        $region55: #{_lambda_.11} parent=47 // pred_region
          _
        $region56: #{_lambda_.11} parent=47 // pred_fallthru
          _
      $region48: #{_lambda_.11} parent=5 // pred_fallthru
        _
      %p784 = scmp.le.s32.totalorder 2, %s14
      // Predicated region
      $region57: #{_lambda_.11} parent=5 // pred_check
        %p785 = pneg %p784
      $region58: #{_lambda_.11} parent=5 // pred_check_branch
        %787 = sbr.rel (%p785) target = $region60
      $region59: #{_lambda_.11} parent=5 // pred_region
        %s788 = ssub.s32 %s14, 2
        // Predicated region
        $region61: #{_lambda_.11} parent=59 // pred_check
          %p789 = pneg %p195
        $region62: #{_lambda_.11} parent=59 // pred_check_branch
          %791 = sbr.rel (%p789) target = $region64
        $region63: #{_lambda_.11} parent=59 // pred_region
          %p792 = scmp.lt.s32.totalorder %s20, 1
          %s793 = scalar_select %p792, %s20, 1
          %s794 = smul.addr %s793, 4
          %s795 = scalar_lea.vmem %s7, %s794
        $region64: #{_lambda_.11} parent=59 // pred_fallthru
          _
      $region60: #{_lambda_.11} parent=5 // pred_fallthru
        _
    $region6: #{_lambda_.11} parent=1 // loop_footer
      %s18 = sadd.s32 1, %s14
    $region7: #{_lambda_.11} parent=1 // loop_footer_branch
      %13 = sbr.rel target = $region3
    $region8: #{_lambda_.11} parent=1 // loop_exit
      _
    %796 = vsyncpa [#allocation3], 1
    %s797 = scalar_lea.sflag [#allocation3], 1
    %798 = vsyncpa %s797, 1

// kernel: _lambda_.10
$region0: #{_lambda_.10}
  #allocation0 [shape = 'u32[]', space=smem, size = 0x4, offset = 0x4, fixed_abs, tag = 'smem constant byte address 0x4 - core index']
  #allocation1 [shape = 'u32[144,128]{1,0:T(1,128)}', space=vmem, size = 0x12000, scoped, tag = 'internal scratch']
  %s0 = inlined_call_operand.vmem [shape: bf16[16,256], index: 0, kind: input, shape index: {}]
  %s1 = inlined_call_operand.vmem [shape: bf16[256,256], index: 1, kind: input, shape index: {}]
  %s2 = inlined_call_operand.vmem [shape: f32[1,256], index: 2, kind: input, shape index: {}]
  %s3 = inlined_call_operand.vmem [shape: f32[1,256], index: 3, kind: input, shape index: {}]
  %s4 = inlined_call_operand.vmem [shape: f32[1,256], index: 4, kind: input, shape index: {}]
  %s5 = inlined_call_operand.vmem [shape: bf16[256,128], index: 5, kind: input, shape index: {}]
  %s6 = inlined_call_operand.vmem [shape: f32[1,128], index: 6, kind: input, shape index: {}]
  %s7 = inlined_call_operand.vmem [shape: bf16[16,128], index: 7, kind: output, shape index: {}]
  %s8 = sld [smem:[#allocation0]]
  $region61: #{_lambda_.10} parent=0
    _
  %s10 = ssub.s32 1, %s8
  %s11 = scalar_select 0, %s10, %s8
  loop: start=0, step=1, limit=4
  $region2: #{_lambda_.10} parent=0 // loop_pre_header
    _
  $region3: #{_lambda_.10} parent=0 // loop_header
    %s13 = sphi 0, %s17
    %p14 = scmp.ge.s32.totalorder %s13, 4
    %s23 = sphi 0, %s25
    %s26 = sphi 0, %s23
    %s27 = sphi 0, %s26
    %s43 = sphi 0, %s27
    %s47 = sphi 0, %s47
    %s49 = sphi 0, %s47
    %s50 = sphi 0, %s49
    %s64 = sphi 0, %s50
    %s68 = sphi 0, %s68
    %s70 = sphi 0, %s68
    %s71 = sphi 0, %s70
    %s85 = sphi 0, %s71
    %s89 = sphi 0, %s89
    %s91 = sphi 0, %s89
    %s92 = sphi 0, %s91
    %s106 = sphi 0, %s92
    %s110 = sphi 0, %s110
    %s112 = sphi 0, %s110
    %s113 = sphi 0, %s112
    %s127 = sphi 0, %s113
    %s131 = sphi 0, %s131
    %s133 = sphi 0, %s131
    %s134 = sphi 0, %s133
    %s148 = sphi 0, %s134
    %s152 = sphi 0, %s152
    %s154 = sphi 0, %s152
    %s155 = sphi 0, %s154
    %s169 = sphi 0, %s155
    %s175 = sphi 0, %s177
    %s178 = sphi 0, %s175
    %s179 = sphi 0, %s178
    %s195 = sphi 0, %s179
  $region4: #{_lambda_.10} parent=0 // loop_header_branch
    %16 = sbr.rel (%p14) target = $region8
  $region5: #{_lambda_.10} parent=0 // loop_body
    %s18 = ssub.s32 %s13, 1
    %s19 = ssub.s32 %s13, 2
    %s20 = sadd.s32 %s13, 1
    %s21 = ssub.s32 %s13, %s20
    %p22 = scmp.eq.s32.totalorder %s21, 0
    %s24 = sadd.s32 %s23, 1
    %s25 = scalar_select %p22, %s23, %s24
    %p28 = pneg %p22
    %p29 = scmp.eq.s32.totalorder %s13, 1
    %p30 = por %p28, %p29
    %p31 = scmp.ne.s32.totalorder %s23, %s26
    %p32 = scmp.eq.s32.totalorder %s13, 0
    %p33 = por %p31, %p32
    %p34 = scmp.ne.s32.totalorder %s23, %s26
    %p35 = scmp.eq.s32.totalorder %s18, 1
    %p36 = por %p34, %p35
    %p37 = scmp.ne.s32.totalorder %s26, %s27
    %p38 = scmp.eq.s32.totalorder %s18, 0
    %p39 = por %p37, %p38
    %p40 = scmp.ne.s32.totalorder %s26, %s27
    %p41 = scmp.eq.s32.totalorder %s19, 1
    %p42 = por %p40, %p41
    %p44 = scmp.ne.s32.totalorder %s27, %s43
    %p45 = scmp.eq.s32.totalorder %s19, 0
    %p46 = por %p44, %p45
    %s48 = sadd.s32 %s47, 1
    %p51 = scmp.eq.s32.totalorder %s13, 1
    %p52 = scmp.ne.s32.totalorder %s47, %s49
    %p53 = scmp.eq.s32.totalorder %s13, 0
    %p54 = por %p52, %p53
    %p55 = scmp.ne.s32.totalorder %s47, %s49
    %p56 = scmp.eq.s32.totalorder %s18, 1
    %p57 = por %p55, %p56
    %p58 = scmp.ne.s32.totalorder %s49, %s50
    %p59 = scmp.eq.s32.totalorder %s18, 0
    %p60 = por %p58, %p59
    %p61 = scmp.ne.s32.totalorder %s49, %s50
    %p62 = scmp.eq.s32.totalorder %s19, 1
    %p63 = por %p61, %p62
    %p65 = scmp.ne.s32.totalorder %s50, %s64
    %p66 = scmp.eq.s32.totalorder %s19, 0
    %p67 = por %p65, %p66
    %s69 = sadd.s32 %s68, 1
    %p72 = scmp.eq.s32.totalorder %s13, 1
    %p73 = scmp.ne.s32.totalorder %s68, %s70
    %p74 = scmp.eq.s32.totalorder %s13, 0
    %p75 = por %p73, %p74
    %p76 = scmp.ne.s32.totalorder %s68, %s70
    %p77 = scmp.eq.s32.totalorder %s18, 1
    %p78 = por %p76, %p77
    %p79 = scmp.ne.s32.totalorder %s70, %s71
    %p80 = scmp.eq.s32.totalorder %s18, 0
    %p81 = por %p79, %p80
    %p82 = scmp.ne.s32.totalorder %s70, %s71
    %p83 = scmp.eq.s32.totalorder %s19, 1
    %p84 = por %p82, %p83
    %p86 = scmp.ne.s32.totalorder %s71, %s85
    %p87 = scmp.eq.s32.totalorder %s19, 0
    %p88 = por %p86, %p87
    %s90 = sadd.s32 %s89, 1
    %p93 = scmp.eq.s32.totalorder %s13, 1
    %p94 = scmp.ne.s32.totalorder %s89, %s91
    %p95 = scmp.eq.s32.totalorder %s13, 0
    %p96 = por %p94, %p95
    %p97 = scmp.ne.s32.totalorder %s89, %s91
    %p98 = scmp.eq.s32.totalorder %s18, 1
    %p99 = por %p97, %p98
    %p100 = scmp.ne.s32.totalorder %s91, %s92
    %p101 = scmp.eq.s32.totalorder %s18, 0
    %p102 = por %p100, %p101
    %p103 = scmp.ne.s32.totalorder %s91, %s92
    %p104 = scmp.eq.s32.totalorder %s19, 1
    %p105 = por %p103, %p104
    %p107 = scmp.ne.s32.totalorder %s92, %s106
    %p108 = scmp.eq.s32.totalorder %s19, 0
    %p109 = por %p107, %p108
    %s111 = sadd.s32 %s110, 1
    %p114 = scmp.eq.s32.totalorder %s13, 1
    %p115 = scmp.ne.s32.totalorder %s110, %s112
    %p116 = scmp.eq.s32.totalorder %s13, 0
    %p117 = por %p115, %p116
    %p118 = scmp.ne.s32.totalorder %s110, %s112
    %p119 = scmp.eq.s32.totalorder %s18, 1
    %p120 = por %p118, %p119
    %p121 = scmp.ne.s32.totalorder %s112, %s113
    %p122 = scmp.eq.s32.totalorder %s18, 0
    %p123 = por %p121, %p122
    %p124 = scmp.ne.s32.totalorder %s112, %s113
    %p125 = scmp.eq.s32.totalorder %s19, 1
    %p126 = por %p124, %p125
    %p128 = scmp.ne.s32.totalorder %s113, %s127
    %p129 = scmp.eq.s32.totalorder %s19, 0
    %p130 = por %p128, %p129
    %s132 = sadd.s32 %s131, 1
    %p135 = scmp.eq.s32.totalorder %s13, 1
    %p136 = scmp.ne.s32.totalorder %s131, %s133
    %p137 = scmp.eq.s32.totalorder %s13, 0
    %p138 = por %p136, %p137
    %p139 = scmp.ne.s32.totalorder %s131, %s133
    %p140 = scmp.eq.s32.totalorder %s18, 1
    %p141 = por %p139, %p140
    %p142 = scmp.ne.s32.totalorder %s133, %s134
    %p143 = scmp.eq.s32.totalorder %s18, 0
    %p144 = por %p142, %p143
    %p145 = scmp.ne.s32.totalorder %s133, %s134
    %p146 = scmp.eq.s32.totalorder %s19, 1
    %p147 = por %p145, %p146
    %p149 = scmp.ne.s32.totalorder %s134, %s148
    %p150 = scmp.eq.s32.totalorder %s19, 0
    %p151 = por %p149, %p150
    %s153 = sadd.s32 %s152, 1
    %p156 = scmp.eq.s32.totalorder %s13, 1
    %p157 = scmp.ne.s32.totalorder %s152, %s154
    %p158 = scmp.eq.s32.totalorder %s13, 0
    %p159 = por %p157, %p158
    %p160 = scmp.ne.s32.totalorder %s152, %s154
    %p161 = scmp.eq.s32.totalorder %s18, 1
    %p162 = por %p160, %p161
    %p163 = scmp.ne.s32.totalorder %s154, %s155
    %p164 = scmp.eq.s32.totalorder %s18, 0
    %p165 = por %p163, %p164
    %p166 = scmp.ne.s32.totalorder %s154, %s155
    %p167 = scmp.eq.s32.totalorder %s19, 1
    %p168 = por %p166, %p167
    %p170 = scmp.ne.s32.totalorder %s155, %s169
    %p171 = scmp.eq.s32.totalorder %s19, 0
    %p172 = por %p170, %p171
    %s173 = ssub.s32 %s13, %s20
    %p174 = scmp.eq.s32.totalorder %s173, 0
    %s176 = sadd.s32 %s175, 1
    %s177 = scalar_select %p174, %s175, %s176
    %p180 = pneg %p174
    %p181 = scmp.eq.s32.totalorder %s13, 1
    %p182 = por %p180, %p181
    %p183 = scmp.ne.s32.totalorder %s175, %s178
    %p184 = scmp.eq.s32.totalorder %s13, 0
    %p185 = por %p183, %p184
    %p186 = scmp.ne.s32.totalorder %s175, %s178
    %p187 = scmp.eq.s32.totalorder %s18, 1
    %p188 = por %p186, %p187
    %p189 = scmp.ne.s32.totalorder %s178, %s179
    %p190 = scmp.eq.s32.totalorder %s18, 0
    %p191 = por %p189, %p190
    %p192 = scmp.ne.s32.totalorder %s178, %s179
    %p193 = scmp.eq.s32.totalorder %s19, 1
    %p194 = por %p192, %p193
    %p196 = scmp.ne.s32.totalorder %s179, %s195
    %p197 = scmp.eq.s32.totalorder %s19, 0
    %p198 = por %p196, %p197
    %p199 = scmp.le.s32.totalorder 1, %s13
    %p200 = scmp.lt.s32.totalorder %s13, 3
    %p201 = pnand %p199, %p200
    %p202 = pneg %p201
    // Predicated region
    $region9: #{_lambda_.10} parent=5 // pred_check
      _
    $region10: #{_lambda_.10} parent=5 // pred_check_branch
      %204 = sbr.rel (%p201) target = $region12
    $region11: #{_lambda_.10} parent=5 // pred_region
      %s205 = ssub.s32 %s13, 1
      // Predicated region
      $region13: #{_lambda_.10} parent=11 // pred_check
        %p206 = pneg %p60
      $region14: #{_lambda_.10} parent=11 // pred_check_branch
        %208 = sbr.rel (%p206) target = $region16
      $region15: #{_lambda_.10} parent=11 // pred_region
        _
      $region16: #{_lambda_.10} parent=11 // pred_fallthru
        _
      // Predicated region
      $region17: #{_lambda_.10} parent=11 // pred_check
        %p209 = pneg %p81
      $region18: #{_lambda_.10} parent=11 // pred_check_branch
        %211 = sbr.rel (%p209) target = $region20
      $region19: #{_lambda_.10} parent=11 // pred_region
        _
      $region20: #{_lambda_.10} parent=11 // pred_fallthru
        _
      // Predicated region
      $region21: #{_lambda_.10} parent=11 // pred_check
        %p212 = pneg %p102
      $region22: #{_lambda_.10} parent=11 // pred_check_branch
        %214 = sbr.rel (%p212) target = $region24
      $region23: #{_lambda_.10} parent=11 // pred_region
        _
      $region24: #{_lambda_.10} parent=11 // pred_fallthru
        _
      // Predicated region
      $region25: #{_lambda_.10} parent=11 // pred_check
        %p215 = pneg %p123
      $region26: #{_lambda_.10} parent=11 // pred_check_branch
        %217 = sbr.rel (%p215) target = $region28
      $region27: #{_lambda_.10} parent=11 // pred_region
        _
      $region28: #{_lambda_.10} parent=11 // pred_fallthru
        _
      // Predicated region
      $region29: #{_lambda_.10} parent=11 // pred_check
        %p218 = pneg %p144
      $region30: #{_lambda_.10} parent=11 // pred_check_branch
        %220 = sbr.rel (%p218) target = $region32
      $region31: #{_lambda_.10} parent=11 // pred_region
        _
      $region32: #{_lambda_.10} parent=11 // pred_fallthru
        _
      // Predicated region
      $region33: #{_lambda_.10} parent=11 // pred_check
        %p221 = pneg %p165
      $region34: #{_lambda_.10} parent=11 // pred_check_branch
        %223 = sbr.rel (%p221) target = $region36
      $region35: #{_lambda_.10} parent=11 // pred_region
        _
      $region36: #{_lambda_.10} parent=11 // pred_fallthru
        _
    $region12: #{_lambda_.10} parent=5 // pred_fallthru
      _
    %p224 = scmp.lt.s32.totalorder %s13, 2
    // Predicated region
    $region37: #{_lambda_.10} parent=5 // pred_check
      %p225 = pneg %p224
    $region38: #{_lambda_.10} parent=5 // pred_check_branch
      %227 = sbr.rel (%p225) target = $region40
    $region39: #{_lambda_.10} parent=5 // pred_region
      // Predicated region
      $region41: #{_lambda_.10} parent=39 // pred_check
        %p228 = pneg %p33
      $region42: #{_lambda_.10} parent=39 // pred_check_branch
        %230 = sbr.rel (%p228) target = $region44
      $region43: #{_lambda_.10} parent=39 // pred_region
        %p231 = scmp.lt.s32.totalorder %s13, 1
        %s232 = scalar_select %p231, %s13, 1
        %s233 = smul.addr %s232, 2
        %s234 = smul.addr %s233, 4
        %s235 = scalar_lea.vmem %s0, %s234
      $region44: #{_lambda_.10} parent=39 // pred_fallthru
        _
    $region40: #{_lambda_.10} parent=5 // pred_fallthru
      _
    %p236 = scmp.le.s32.totalorder 1, %s13
    %p237 = scmp.lt.s32.totalorder %s13, 3
    %p238 = pnand %p236, %p237
    %p239 = pneg %p238
    // Predicated region
    $region45: #{_lambda_.10} parent=5 // pred_check
      _
    $region46: #{_lambda_.10} parent=5 // pred_check_branch
      %241 = sbr.rel (%p238) target = $region48
    $region47: #{_lambda_.10} parent=5 // pred_region
      %s242 = ssub.s32 %s13, 1
      %p243 = scmp.lt.s32.totalorder %s18, 1
      %s244 = scalar_select %p243, %s18, 1
      %s245 = smul.addr %s244, 2
      %s246 = smul.addr %s245, 4
      %s247 = scalar_lea.vmem %s0, %s246
      %p248 = pneg %p39
      %p249 = pneg %p36
      %p250 = pneg %p60
      %p251 = pneg %p57
      %p252 = pneg %p81
      %p253 = pneg %p78
      %p254 = pneg %p102
      %p255 = pneg %p99
      %p256 = pneg %p123
      %p257 = pneg %p120
      %p258 = pneg %p144
      %p259 = pneg %p141
      %p260 = pneg %p165
      %p261 = pneg %p162
      %p262 = pneg %p191
      %p263 = pneg %p188
      %p264 = scmp.lt.s32.totalorder %s18, 1
      %s265 = scalar_select %p264, %s18, 1
      %s266 = smul.addr %s265, 4
      %s267 = scalar_lea.vmem %s7, %s266
      %p268 = scmp.lt.s32.totalorder %s18, 1
      %s269 = scalar_select %p268, %s18, 1
      %s270 = smul.addr %s269, 2
      %s271 = smul.addr %s270, 4
      %s272 = scalar_lea.vmem %s0, %s271
      %p273 = scmp.lt.s32.totalorder %s18, 1
      %s274 = scalar_select %p273, %s18, 1
      %s275 = smul.addr %s274, 4
      %s276 = scalar_lea.vmem %s7, %s275
      %v278 = vld [vmem:[%s272] sm:$0xff]
      %v279 = vld [vmem:[%s1] sm:$0xff]
      %v280 = vld [vmem:[%s1 + $0x8] sm:$0xff]
      %v281 = vld [vmem:[%s1 + $0x10] sm:$0xff]
      %v282 = vld [vmem:[%s1 + $0x18] sm:$0xff]
      %v283 = vld [vmem:[%s1 + $0x20] sm:$0xff]
      %v284 = vld [vmem:[%s1 + $0x28] sm:$0xff]
      %v285 = vld [vmem:[%s1 + $0x30] sm:$0xff]
      %v286 = vld [vmem:[%s1 + $0x38] sm:$0xff]
      %v287 = vld [vmem:[%s1 + $0x40] sm:$0xff]
      %v288 = vld [vmem:[%s1 + $0x48] sm:$0xff]
      %v289 = vld [vmem:[%s1 + $0x50] sm:$0xff]
      %v290 = vld [vmem:[%s1 + $0x58] sm:$0xff]
      %v291 = vld [vmem:[%s1 + $0x60] sm:$0xff]
      %v292 = vld [vmem:[%s1 + $0x68] sm:$0xff]
      %v293 = vld [vmem:[%s1 + $0x70] sm:$0xff]
      %v294 = vld [vmem:[%s1 + $0x78] sm:$0xff]
      %v295 = vld [vmem:[%s1 + $0x80] sm:$0xff]
      %v296 = vld [vmem:[%s1 + $0x88] sm:$0xff]
      %v297 = vld [vmem:[%s1 + $0x90] sm:$0xff]
      %v298 = vld [vmem:[%s1 + $0x98] sm:$0xff]
      %v299 = vld [vmem:[%s1 + $0xa0] sm:$0xff]
      %v300 = vld [vmem:[%s1 + $0xa8] sm:$0xff]
      %v301 = vld [vmem:[%s1 + $0xb0] sm:$0xff]
      %v302 = vld [vmem:[%s1 + $0xb8] sm:$0xff]
      %v303 = vld [vmem:[%s1 + $0xc0] sm:$0xff]
      %v304 = vld [vmem:[%s1 + $0xc8] sm:$0xff]
      %v305 = vld [vmem:[%s1 + $0xd0] sm:$0xff]
      %v306 = vld [vmem:[%s1 + $0xd8] sm:$0xff]
      %v307 = vld [vmem:[%s1 + $0xe0] sm:$0xff]
      %v308 = vld [vmem:[%s1 + $0xe8] sm:$0xff]
      %v309 = vld [vmem:[%s1 + $0xf0] sm:$0xff]
      %v310 = vld [vmem:[%s1 + $0xf8] sm:$0xff]
      %v311 = vld [vmem:[%s2] sm:$0x3]
      %v313 = vlaneseq
      %v314 = vshrl.u32 %v313, 7
      %v315 = vsub.s32 0, %v314
      %v316 = vrot.slane %v311, %v315
      %v317 = vlaneseq
      %v318 = vshrl.u32 %v317, 7
      %v319 = vsub.s32 1, %v318
      %v320 = vrot.slane %v311, %v319
      %v324 = vunpack.c.l.b16 %v278
      %v325 = vunpack.c.h.b16 %v278
      %v326 = vpack.c.b16 %v324, %v324
      %v327 = vpack.c.b16 %v325, %v325
      %v362 = vunpack.c.l.b16 %v279
      %v363 = vunpack.c.h.b16 %v279
      %v364 = vunpack.c.l.b16 %v280
      %v365 = vunpack.c.h.b16 %v280
      %v366 = vunpack.c.l.b16 %v281
      %v367 = vunpack.c.h.b16 %v281
      %v368 = vunpack.c.l.b16 %v282
      %v369 = vunpack.c.h.b16 %v282
      %v370 = vunpack.c.l.b16 %v283
      %v371 = vunpack.c.h.b16 %v283
      %v372 = vunpack.c.l.b16 %v284
      %v373 = vunpack.c.h.b16 %v284
      %v374 = vunpack.c.l.b16 %v285
      %v375 = vunpack.c.h.b16 %v285
      %v376 = vunpack.c.l.b16 %v286
      %v377 = vunpack.c.h.b16 %v286
      %v378 = vunpack.c.l.b16 %v287
      %v379 = vunpack.c.h.b16 %v287
      %v380 = vunpack.c.l.b16 %v288
      %v381 = vunpack.c.h.b16 %v288
      %v382 = vunpack.c.l.b16 %v289
      %v383 = vunpack.c.h.b16 %v289
      %v384 = vunpack.c.l.b16 %v290
      %v385 = vunpack.c.h.b16 %v290
      %v386 = vunpack.c.l.b16 %v291
      %v387 = vunpack.c.h.b16 %v291
      %v388 = vunpack.c.l.b16 %v292
      %v389 = vunpack.c.h.b16 %v292
      %v390 = vunpack.c.l.b16 %v293
      %v391 = vunpack.c.h.b16 %v293
      %v392 = vunpack.c.l.b16 %v294
      %v393 = vunpack.c.h.b16 %v294
      %v394 = vunpack.c.l.b16 %v295
      %v395 = vunpack.c.h.b16 %v295
      %v396 = vunpack.c.l.b16 %v296
      %v397 = vunpack.c.h.b16 %v296
      %v398 = vunpack.c.l.b16 %v297
      %v399 = vunpack.c.h.b16 %v297
      %v400 = vunpack.c.l.b16 %v298
      %v401 = vunpack.c.h.b16 %v298
      %v402 = vunpack.c.l.b16 %v299
      %v403 = vunpack.c.h.b16 %v299
      %v404 = vunpack.c.l.b16 %v300
      %v405 = vunpack.c.h.b16 %v300
      %v406 = vunpack.c.l.b16 %v301
      %v407 = vunpack.c.h.b16 %v301
      %v408 = vunpack.c.l.b16 %v302
      %v409 = vunpack.c.h.b16 %v302
      %v410 = vunpack.c.l.b16 %v303
      %v411 = vunpack.c.h.b16 %v303
      %v412 = vunpack.c.l.b16 %v304
      %v413 = vunpack.c.h.b16 %v304
      %v414 = vunpack.c.l.b16 %v305
      %v415 = vunpack.c.h.b16 %v305
      %v416 = vunpack.c.l.b16 %v306
      %v417 = vunpack.c.h.b16 %v306
      %v418 = vunpack.c.l.b16 %v307
      %v419 = vunpack.c.h.b16 %v307
      %v420 = vunpack.c.l.b16 %v308
      %v421 = vunpack.c.h.b16 %v308
      %v422 = vunpack.c.l.b16 %v309
      %v423 = vunpack.c.h.b16 %v309
      %v424 = vunpack.c.l.b16 %v310
      %v425 = vunpack.c.h.b16 %v310
      %v426 = vpack.c.b16 %v364, %v362
      %v427 = vpack.c.b16 %v365, %v363
      %v428 = vpack.c.b16 %v368, %v366
      %v429 = vpack.c.b16 %v369, %v367
      %v430 = vpack.c.b16 %v372, %v370
      %v431 = vpack.c.b16 %v373, %v371
      %v432 = vpack.c.b16 %v376, %v374
      %v433 = vpack.c.b16 %v377, %v375
      %v434 = vpack.c.b16 %v380, %v378
      %v435 = vpack.c.b16 %v381, %v379
      %v436 = vpack.c.b16 %v384, %v382
      %v437 = vpack.c.b16 %v385, %v383
      %v438 = vpack.c.b16 %v388, %v386
      %v439 = vpack.c.b16 %v389, %v387
      %v440 = vpack.c.b16 %v392, %v390
      %v441 = vpack.c.b16 %v393, %v391
      %v442 = vpack.c.b16 %v396, %v394
      %v443 = vpack.c.b16 %v397, %v395
      %v444 = vpack.c.b16 %v400, %v398
      %v445 = vpack.c.b16 %v401, %v399
      %v446 = vpack.c.b16 %v404, %v402
      %v447 = vpack.c.b16 %v405, %v403
      %v448 = vpack.c.b16 %v408, %v406
      %v449 = vpack.c.b16 %v409, %v407
      %v450 = vpack.c.b16 %v412, %v410
      %v451 = vpack.c.b16 %v413, %v411
      %v452 = vpack.c.b16 %v416, %v414
      %v453 = vpack.c.b16 %v417, %v415
      %v454 = vpack.c.b16 %v420, %v418
      %v455 = vpack.c.b16 %v421, %v419
      %v456 = vpack.c.b16 %v424, %v422
      %v457 = vpack.c.b16 %v425, %v423
      %490 = vmatprep.subr.bf16.mxu0 %v427
      %491 = vmatpush1.bf16.msra.mxu0 %v426
      %492 = vmatprep.subr.bf16.mxu0 %v429
      %493 = vmatpush1.bf16.msra.mxu0 %v428
      %494 = vmatprep.subr.bf16.mxu0 %v431
      %495 = vmatpush1.bf16.msra.mxu0 %v430
      %496 = vmatprep.subr.bf16.mxu0 %v433
      %497 = vmatpush1.bf16.msra.mxu0 %v432
      %498 = vmatprep.subr.bf16.mxu0 %v435
      %499 = vmatpush1.bf16.msra.mxu0 %v434
      %500 = vmatprep.subr.bf16.mxu0 %v437
      %501 = vmatpush1.bf16.msra.mxu0 %v436
      %502 = vmatprep.subr.bf16.mxu0 %v439
      %503 = vmatpush1.bf16.msra.mxu0 %v438
      %504 = vmatprep.subr.bf16.mxu0 %v441
      %505 = vmatpush1.bf16.msra.mxu0 %v440
      %506 = vmatprep.subr.bf16.mxu0 %v443
      %507 = vmatpush1.bf16.msra.mxu0 %v442
      %508 = vmatprep.subr.bf16.mxu0 %v445
      %509 = vmatpush1.bf16.msra.mxu0 %v444
      %510 = vmatprep.subr.bf16.mxu0 %v447
      %511 = vmatpush1.bf16.msra.mxu0 %v446
      %512 = vmatprep.subr.bf16.mxu0 %v449
      %513 = vmatpush1.bf16.msra.mxu0 %v448
      %514 = vmatprep.subr.bf16.mxu0 %v451
      %515 = vmatpush1.bf16.msra.mxu0 %v450
      %516 = vmatprep.subr.bf16.mxu0 %v453
      %517 = vmatpush1.bf16.msra.mxu0 %v452
      %518 = vmatprep.subr.bf16.mxu0 %v455
      %519 = vmatpush1.bf16.msra.mxu0 %v454
      %520 = vmatprep.subr.bf16.mxu0 %v457
      %521 = vmatpush1.bf16.msra.mxu0 %v456
      %522 = vmatprep.mubr.bf16.mxu0 %v327
      %523 = vmatmul.mubr.bf16.gmra.mrb[0].mxu0 %v326
      %v524 = vpop.f32.mrb[0].mxu0
      %v525 = vadd.f32 %v316, %v524
      %v526 = vpop.f32.mrb[0].mxu0
      %v527 = vadd.f32 %v320, %v526
      %v528 = vpop.f32.mrb[0].mxu0
      %v529 = vpop.f32.mrb[0].mxu0
      %530 = vdwg.mxu0
      %v531 = vadd.f32 %v525, %v527
      %532 = vadd.xlane.f32.xlu0 %v531
      %v533 = vpop.xlane.xlu0 %532
      %v534 = vrcp.pop 256.0
      %v535 = vmul.f32 %v533, %v534
      %v536 = vsub.f32 %v525, %v535
      %v537 = vsub.f32 %v527, %v535
      %v538 = vmul.f32 %v536, %v536
      %v539 = vmul.f32 %v537, %v537
      %v540 = vadd.f32 %v538, %v539
      %541 = vadd.xlane.f32.xlu0 %v540
      %v542 = vpop.xlane.xlu0 %541
      %v543 = vmul.f32 %v542, %v534
      %v544 = vadd.f32 %v543, 1e-05
      %v545 = vrsqrt.pop %v544
      %v546 = vmul.f32 %v536, %v545
      %v547 = vmul.f32 %v537, %v545
      %v548 = vld [vmem:[%s3] sm:$0x3]
      %v550 = vlaneseq
      %v551 = vshrl.u32 %v550, 7
      %v552 = vsub.s32 0, %v551
      %v553 = vrot.slane %v548, %v552
      %v554 = vlaneseq
      %v555 = vshrl.u32 %v554, 7
      %v556 = vsub.s32 1, %v555
      %v557 = vrot.slane %v548, %v556
      %v560 = vmul.f32 %v546, %v553
      %v561 = vmul.f32 %v547, %v557
      %v562 = vld [vmem:[%s4] sm:$0x3]
      %v564 = vlaneseq
      %v565 = vshrl.u32 %v564, 7
      %v566 = vsub.s32 0, %v565
      %v567 = vrot.slane %v562, %v566
      %v568 = vlaneseq
      %v569 = vshrl.u32 %v568, 7
      %v570 = vsub.s32 1, %v569
      %v571 = vrot.slane %v562, %v570
      %v574 = vadd.f32 %v560, %v567
      %v575 = vadd.f32 %v561, %v571
      %v576 = vpack.c.bf16 %v574, %v574
      %v577 = vpack.c.bf16 %v575, %v575
      %v578 = vld [vmem:[%s5] sm:$0xf]
      %v579 = vld [vmem:[%s5 + $0x4] sm:$0xf]
      %v580 = vld [vmem:[%s5 + $0x8] sm:$0xf]
      %v581 = vld [vmem:[%s5 + $0xc] sm:$0xf]
      %v582 = vld [vmem:[%s5 + $0x10] sm:$0xf]
      %v583 = vld [vmem:[%s5 + $0x14] sm:$0xf]
      %v584 = vld [vmem:[%s5 + $0x18] sm:$0xf]
      %v585 = vld [vmem:[%s5 + $0x1c] sm:$0xf]
      %v586 = vld [vmem:[%s5 + $0x20] sm:$0xf]
      %v587 = vld [vmem:[%s5 + $0x24] sm:$0xf]
      %v588 = vld [vmem:[%s5 + $0x28] sm:$0xf]
      %v589 = vld [vmem:[%s5 + $0x2c] sm:$0xf]
      %v590 = vld [vmem:[%s5 + $0x30] sm:$0xf]
      %v591 = vld [vmem:[%s5 + $0x34] sm:$0xf]
      %v592 = vld [vmem:[%s5 + $0x38] sm:$0xf]
      %v593 = vld [vmem:[%s5 + $0x3c] sm:$0xf]
      %v594 = vld [vmem:[%s5 + $0x40] sm:$0xf]
      %v595 = vld [vmem:[%s5 + $0x44] sm:$0xf]
      %v596 = vld [vmem:[%s5 + $0x48] sm:$0xf]
      %v597 = vld [vmem:[%s5 + $0x4c] sm:$0xf]
      %v598 = vld [vmem:[%s5 + $0x50] sm:$0xf]
      %v599 = vld [vmem:[%s5 + $0x54] sm:$0xf]
      %v600 = vld [vmem:[%s5 + $0x58] sm:$0xf]
      %v601 = vld [vmem:[%s5 + $0x5c] sm:$0xf]
      %v602 = vld [vmem:[%s5 + $0x60] sm:$0xf]
      %v603 = vld [vmem:[%s5 + $0x64] sm:$0xf]
      %v604 = vld [vmem:[%s5 + $0x68] sm:$0xf]
      %v605 = vld [vmem:[%s5 + $0x6c] sm:$0xf]
      %v606 = vld [vmem:[%s5 + $0x70] sm:$0xf]
      %v607 = vld [vmem:[%s5 + $0x74] sm:$0xf]
      %v608 = vld [vmem:[%s5 + $0x78] sm:$0xf]
      %v609 = vld [vmem:[%s5 + $0x7c] sm:$0xf]
      %v610 = vld [vmem:[%s6] sm:$0x1]
      %v612 = vlaneseq
      %v613 = vshrl.u32 %v612, 7
      %v614 = vsub.s32 0, %v613
      %v615 = vrot.slane %v610, %v614
      %v649 = vunpack.c.l.b16 %v578
      %v650 = vunpack.c.l.b16 %v579
      %v651 = vunpack.c.l.b16 %v580
      %v652 = vunpack.c.l.b16 %v581
      %v653 = vunpack.c.l.b16 %v582
      %v654 = vunpack.c.l.b16 %v583
      %v655 = vunpack.c.l.b16 %v584
      %v656 = vunpack.c.l.b16 %v585
      %v657 = vunpack.c.l.b16 %v586
      %v658 = vunpack.c.l.b16 %v587
      %v659 = vunpack.c.l.b16 %v588
      %v660 = vunpack.c.l.b16 %v589
      %v661 = vunpack.c.l.b16 %v590
      %v662 = vunpack.c.l.b16 %v591
      %v663 = vunpack.c.l.b16 %v592
      %v664 = vunpack.c.l.b16 %v593
      %v665 = vunpack.c.l.b16 %v594
      %v666 = vunpack.c.l.b16 %v595
      %v667 = vunpack.c.l.b16 %v596
      %v668 = vunpack.c.l.b16 %v597
      %v669 = vunpack.c.l.b16 %v598
      %v670 = vunpack.c.l.b16 %v599
      %v671 = vunpack.c.l.b16 %v600
      %v672 = vunpack.c.l.b16 %v601
      %v673 = vunpack.c.l.b16 %v602
      %v674 = vunpack.c.l.b16 %v603
      %v675 = vunpack.c.l.b16 %v604
      %v676 = vunpack.c.l.b16 %v605
      %v677 = vunpack.c.l.b16 %v606
      %v678 = vunpack.c.l.b16 %v607
      %v679 = vunpack.c.l.b16 %v608
      %v680 = vunpack.c.l.b16 %v609
      %v681 = vpack.c.b16 %v650, %v649
      %v682 = vpack.c.b16 %v652, %v651
      %v683 = vpack.c.b16 %v654, %v653
      %v684 = vpack.c.b16 %v656, %v655
      %v685 = vpack.c.b16 %v658, %v657
      %v686 = vpack.c.b16 %v660, %v659
      %v687 = vpack.c.b16 %v662, %v661
      %v688 = vpack.c.b16 %v664, %v663
      %v689 = vpack.c.b16 %v666, %v665
      %v690 = vpack.c.b16 %v668, %v667
      %v691 = vpack.c.b16 %v670, %v669
      %v692 = vpack.c.b16 %v672, %v671
      %v693 = vpack.c.b16 %v674, %v673
      %v694 = vpack.c.b16 %v676, %v675
      %v695 = vpack.c.b16 %v678, %v677
      %v696 = vpack.c.b16 %v680, %v679
      %713 = vmatprep.subr.bf16.mxu0 0
      %714 = vmatpush1.bf16.msra.mxu0 %v681
      %715 = vmatprep.subr.bf16.mxu0 0
      %716 = vmatpush1.bf16.msra.mxu0 %v682
      %717 = vmatprep.subr.bf16.mxu0 0
      %718 = vmatpush1.bf16.msra.mxu0 %v683
      %719 = vmatprep.subr.bf16.mxu0 0
      %720 = vmatpush1.bf16.msra.mxu0 %v684
      %721 = vmatprep.subr.bf16.mxu0 0
      %722 = vmatpush1.bf16.msra.mxu0 %v685
      %723 = vmatprep.subr.bf16.mxu0 0
      %724 = vmatpush1.bf16.msra.mxu0 %v686
      %725 = vmatprep.subr.bf16.mxu0 0
      %726 = vmatpush1.bf16.msra.mxu0 %v687
      %727 = vmatprep.subr.bf16.mxu0 0
      %728 = vmatpush1.bf16.msra.mxu0 %v688
      %729 = vmatprep.subr.bf16.mxu0 0
      %730 = vmatpush1.bf16.msra.mxu0 %v689
      %731 = vmatprep.subr.bf16.mxu0 0
      %732 = vmatpush1.bf16.msra.mxu0 %v690
      %733 = vmatprep.subr.bf16.mxu0 0
      %734 = vmatpush1.bf16.msra.mxu0 %v691
      %735 = vmatprep.subr.bf16.mxu0 0
      %736 = vmatpush1.bf16.msra.mxu0 %v692
      %737 = vmatprep.subr.bf16.mxu0 0
      %738 = vmatpush1.bf16.msra.mxu0 %v693
      %739 = vmatprep.subr.bf16.mxu0 0
      %740 = vmatpush1.bf16.msra.mxu0 %v694
      %741 = vmatprep.subr.bf16.mxu0 0
      %742 = vmatpush1.bf16.msra.mxu0 %v695
      %743 = vmatprep.subr.bf16.mxu0 0
      %744 = vmatpush1.bf16.msra.mxu0 %v696
      %745 = vmatprep.mubr.bf16.mxu0 %v577
      %746 = vmatmul.mubr.bf16.gmra.mrb[0].mxu0 %v576
      %v747 = vpop.f32.mrb[0].mxu0
      %v748 = vadd.f32 %v615, %v747
      %v749 = vpop.f32.mrb[0].mxu0
      %v750 = vpop.f32.mrb[0].mxu0
      %v751 = vpop.f32.mrb[0].mxu0
      %752 = vdwg.mxu0
      %v753 = vxor.u32 %v748, 2147483648
      %v754 = vmul.f32 %v753, 1.442695
      %v755 = vpow.pop %v754
      %v756 = vadd.f32 %v755, 1.0
      %v757 = vrcp.pop %v756
      %v758 = vmul.f32 1.0, %v757
      %v759 = vmul.f32 %v748, %v758
      %v760 = vpack.c.bf16 %v759, %v759
      %761 = vst [vmem:[%s276] sm:$0xf] %v760
      %p762 = scmp.lt.s32.totalorder %s18, 1
      %s763 = scalar_select %p762, %s18, 1
      %s764 = smul.addr %s763, 4
      %s765 = scalar_lea.vmem %s7, %s764
      // Predicated region
      $region49: #{_lambda_.10} parent=47 // pred_check
        %p766 = pneg %p188
      $region50: #{_lambda_.10} parent=47 // pred_check_branch
        %768 = sbr.rel (%p766) target = $region52
      $region51: #{_lambda_.10} parent=47 // pred_region
        _
      $region52: #{_lambda_.10} parent=47 // pred_fallthru
        _
    $region48: #{_lambda_.10} parent=5 // pred_fallthru
      _
    %p769 = scmp.le.s32.totalorder 2, %s13
    // Predicated region
    $region53: #{_lambda_.10} parent=5 // pred_check
      %p770 = pneg %p769
    $region54: #{_lambda_.10} parent=5 // pred_check_branch
      %772 = sbr.rel (%p770) target = $region56
    $region55: #{_lambda_.10} parent=5 // pred_region
      %s773 = ssub.s32 %s13, 2
      // Predicated region
      $region57: #{_lambda_.10} parent=55 // pred_check
        %p774 = pneg %p194
      $region58: #{_lambda_.10} parent=55 // pred_check_branch
        %776 = sbr.rel (%p774) target = $region60
      $region59: #{_lambda_.10} parent=55 // pred_region
        %p777 = scmp.lt.s32.totalorder %s19, 1
        %s778 = scalar_select %p777, %s19, 1
        %s779 = smul.addr %s778, 4
        %s780 = scalar_lea.vmem %s7, %s779
      $region60: #{_lambda_.10} parent=55 // pred_fallthru
        _
    $region56: #{_lambda_.10} parent=5 // pred_fallthru
      _
  $region6: #{_lambda_.10} parent=0 // loop_footer
    %s17 = sadd.s32 1, %s13
  $region7: #{_lambda_.10} parent=0 // loop_footer_branch
    %12 = sbr.rel target = $region3
  $region8: #{_lambda_.10} parent=0 // loop_exit
    _

// kernel: _lambda_.12
$region0: #{_lambda_.12}
  #allocation0 [shape = 'u32[]', space=smem, size = 0x4, offset = 0x4, fixed_abs, tag = 'smem constant byte address 0x4 - core index']
  #allocation1 [shape = 'u32[144,128]{1,0:T(1,128)}', space=vmem, size = 0x12000, scoped, tag = 'internal scratch']
  %s0 = inlined_call_operand.vmem [shape: bf16[16,256], index: 0, kind: input, shape index: {}]
  %s1 = inlined_call_operand.vmem [shape: bf16[256,128], index: 1, kind: input, shape index: {}]
  %s2 = inlined_call_operand.vmem [shape: f32[1,128], index: 2, kind: input, shape index: {}]
  %s3 = inlined_call_operand.vmem [shape: bf16[16,128], index: 3, kind: output, shape index: {}]
  %s4 = sld [smem:[#allocation0]]
  $region45: #{_lambda_.12} parent=0
    _
  %s6 = ssub.s32 1, %s4
  %s7 = scalar_select 0, %s6, %s4
  loop: start=0, step=1, limit=4
  $region2: #{_lambda_.12} parent=0 // loop_pre_header
    _
  $region3: #{_lambda_.12} parent=0 // loop_header
    %s9 = sphi 0, %s13
    %p10 = scmp.ge.s32.totalorder %s9, 4
    %s19 = sphi 0, %s21
    %s22 = sphi 0, %s19
    %s23 = sphi 0, %s22
    %s39 = sphi 0, %s23
    %s43 = sphi 0, %s43
    %s45 = sphi 0, %s43
    %s46 = sphi 0, %s45
    %s60 = sphi 0, %s46
    %s64 = sphi 0, %s64
    %s66 = sphi 0, %s64
    %s67 = sphi 0, %s66
    %s81 = sphi 0, %s67
    %s87 = sphi 0, %s89
    %s90 = sphi 0, %s87
    %s91 = sphi 0, %s90
    %s107 = sphi 0, %s91
  $region4: #{_lambda_.12} parent=0 // loop_header_branch
    %12 = sbr.rel (%p10) target = $region8
  $region5: #{_lambda_.12} parent=0 // loop_body
    %s14 = ssub.s32 %s9, 1
    %s15 = ssub.s32 %s9, 2
    %s16 = sadd.s32 %s9, 1
    %s17 = ssub.s32 %s9, %s16
    %p18 = scmp.eq.s32.totalorder %s17, 0
    %s20 = sadd.s32 %s19, 1
    %s21 = scalar_select %p18, %s19, %s20
    %p24 = pneg %p18
    %p25 = scmp.eq.s32.totalorder %s9, 1
    %p26 = por %p24, %p25
    %p27 = scmp.ne.s32.totalorder %s19, %s22
    %p28 = scmp.eq.s32.totalorder %s9, 0
    %p29 = por %p27, %p28
    %p30 = scmp.ne.s32.totalorder %s19, %s22
    %p31 = scmp.eq.s32.totalorder %s14, 1
    %p32 = por %p30, %p31
    %p33 = scmp.ne.s32.totalorder %s22, %s23
    %p34 = scmp.eq.s32.totalorder %s14, 0
    %p35 = por %p33, %p34
    %p36 = scmp.ne.s32.totalorder %s22, %s23
    %p37 = scmp.eq.s32.totalorder %s15, 1
    %p38 = por %p36, %p37
    %p40 = scmp.ne.s32.totalorder %s23, %s39
    %p41 = scmp.eq.s32.totalorder %s15, 0
    %p42 = por %p40, %p41
    %s44 = sadd.s32 %s43, 1
    %p47 = scmp.eq.s32.totalorder %s9, 1
    %p48 = scmp.ne.s32.totalorder %s43, %s45
    %p49 = scmp.eq.s32.totalorder %s9, 0
    %p50 = por %p48, %p49
    %p51 = scmp.ne.s32.totalorder %s43, %s45
    %p52 = scmp.eq.s32.totalorder %s14, 1
    %p53 = por %p51, %p52
    %p54 = scmp.ne.s32.totalorder %s45, %s46
    %p55 = scmp.eq.s32.totalorder %s14, 0
    %p56 = por %p54, %p55
    %p57 = scmp.ne.s32.totalorder %s45, %s46
    %p58 = scmp.eq.s32.totalorder %s15, 1
    %p59 = por %p57, %p58
    %p61 = scmp.ne.s32.totalorder %s46, %s60
    %p62 = scmp.eq.s32.totalorder %s15, 0
    %p63 = por %p61, %p62
    %s65 = sadd.s32 %s64, 1
    %p68 = scmp.eq.s32.totalorder %s9, 1
    %p69 = scmp.ne.s32.totalorder %s64, %s66
    %p70 = scmp.eq.s32.totalorder %s9, 0
    %p71 = por %p69, %p70
    %p72 = scmp.ne.s32.totalorder %s64, %s66
    %p73 = scmp.eq.s32.totalorder %s14, 1
    %p74 = por %p72, %p73
    %p75 = scmp.ne.s32.totalorder %s66, %s67
    %p76 = scmp.eq.s32.totalorder %s14, 0
    %p77 = por %p75, %p76
    %p78 = scmp.ne.s32.totalorder %s66, %s67
    %p79 = scmp.eq.s32.totalorder %s15, 1
    %p80 = por %p78, %p79
    %p82 = scmp.ne.s32.totalorder %s67, %s81
    %p83 = scmp.eq.s32.totalorder %s15, 0
    %p84 = por %p82, %p83
    %s85 = ssub.s32 %s9, %s16
    %p86 = scmp.eq.s32.totalorder %s85, 0
    %s88 = sadd.s32 %s87, 1
    %s89 = scalar_select %p86, %s87, %s88
    %p92 = pneg %p86
    %p93 = scmp.eq.s32.totalorder %s9, 1
    %p94 = por %p92, %p93
    %p95 = scmp.ne.s32.totalorder %s87, %s90
    %p96 = scmp.eq.s32.totalorder %s9, 0
    %p97 = por %p95, %p96
    %p98 = scmp.ne.s32.totalorder %s87, %s90
    %p99 = scmp.eq.s32.totalorder %s14, 1
    %p100 = por %p98, %p99
    %p101 = scmp.ne.s32.totalorder %s90, %s91
    %p102 = scmp.eq.s32.totalorder %s14, 0
    %p103 = por %p101, %p102
    %p104 = scmp.ne.s32.totalorder %s90, %s91
    %p105 = scmp.eq.s32.totalorder %s15, 1
    %p106 = por %p104, %p105
    %p108 = scmp.ne.s32.totalorder %s91, %s107
    %p109 = scmp.eq.s32.totalorder %s15, 0
    %p110 = por %p108, %p109
    %p111 = scmp.le.s32.totalorder 1, %s9
    %p112 = scmp.lt.s32.totalorder %s9, 3
    %p113 = pnand %p111, %p112
    %p114 = pneg %p113
    // Predicated region
    $region9: #{_lambda_.12} parent=5 // pred_check
      _
    $region10: #{_lambda_.12} parent=5 // pred_check_branch
      %116 = sbr.rel (%p113) target = $region12
    $region11: #{_lambda_.12} parent=5 // pred_region
      %s117 = ssub.s32 %s9, 1
      // Predicated region
      $region13: #{_lambda_.12} parent=11 // pred_check
        %p118 = pneg %p56
      $region14: #{_lambda_.12} parent=11 // pred_check_branch
        %120 = sbr.rel (%p118) target = $region16
      $region15: #{_lambda_.12} parent=11 // pred_region
        _
      $region16: #{_lambda_.12} parent=11 // pred_fallthru
        _
      // Predicated region
      $region17: #{_lambda_.12} parent=11 // pred_check
        %p121 = pneg %p77
      $region18: #{_lambda_.12} parent=11 // pred_check_branch
        %123 = sbr.rel (%p121) target = $region20
      $region19: #{_lambda_.12} parent=11 // pred_region
        _
      $region20: #{_lambda_.12} parent=11 // pred_fallthru
        _
    $region12: #{_lambda_.12} parent=5 // pred_fallthru
      _
    %p124 = scmp.lt.s32.totalorder %s9, 2
    // Predicated region
    $region21: #{_lambda_.12} parent=5 // pred_check
      %p125 = pneg %p124
    $region22: #{_lambda_.12} parent=5 // pred_check_branch
      %127 = sbr.rel (%p125) target = $region24
    $region23: #{_lambda_.12} parent=5 // pred_region
      // Predicated region
      $region25: #{_lambda_.12} parent=23 // pred_check
        %p128 = pneg %p29
      $region26: #{_lambda_.12} parent=23 // pred_check_branch
        %130 = sbr.rel (%p128) target = $region28
      $region27: #{_lambda_.12} parent=23 // pred_region
        %p131 = scmp.lt.s32.totalorder %s9, 1
        %s132 = scalar_select %p131, %s9, 1
        %s133 = smul.addr %s132, 2
        %s134 = smul.addr %s133, 4
        %s135 = scalar_lea.vmem %s0, %s134
      $region28: #{_lambda_.12} parent=23 // pred_fallthru
        _
    $region24: #{_lambda_.12} parent=5 // pred_fallthru
      _
    %p136 = scmp.le.s32.totalorder 1, %s9
    %p137 = scmp.lt.s32.totalorder %s9, 3
    %p138 = pnand %p136, %p137
    %p139 = pneg %p138
    // Predicated region
    $region29: #{_lambda_.12} parent=5 // pred_check
      _
    $region30: #{_lambda_.12} parent=5 // pred_check_branch
      %141 = sbr.rel (%p138) target = $region32
    $region31: #{_lambda_.12} parent=5 // pred_region
      %s142 = ssub.s32 %s9, 1
      %p143 = scmp.lt.s32.totalorder %s14, 1
      %s144 = scalar_select %p143, %s14, 1
      %s145 = smul.addr %s144, 2
      %s146 = smul.addr %s145, 4
      %s147 = scalar_lea.vmem %s0, %s146
      %p148 = pneg %p35
      %p149 = pneg %p32
      %p150 = pneg %p56
      %p151 = pneg %p53
      %p152 = pneg %p77
      %p153 = pneg %p74
      %p154 = pneg %p103
      %p155 = pneg %p100
      %p156 = scmp.lt.s32.totalorder %s14, 1
      %s157 = scalar_select %p156, %s14, 1
      %s158 = smul.addr %s157, 4
      %s159 = scalar_lea.vmem %s3, %s158
      %p160 = scmp.lt.s32.totalorder %s14, 1
      %s161 = scalar_select %p160, %s14, 1
      %s162 = smul.addr %s161, 2
      %s163 = smul.addr %s162, 4
      %s164 = scalar_lea.vmem %s0, %s163
      %p165 = scmp.lt.s32.totalorder %s14, 1
      %s166 = scalar_select %p165, %s14, 1
      %s167 = smul.addr %s166, 4
      %s168 = scalar_lea.vmem %s3, %s167
      %v170 = vld [vmem:[%s164] sm:$0xff]
      %v171 = vld [vmem:[%s1] sm:$0xf]
      %v172 = vld [vmem:[%s1 + $0x4] sm:$0xf]
      %v173 = vld [vmem:[%s1 + $0x8] sm:$0xf]
      %v174 = vld [vmem:[%s1 + $0xc] sm:$0xf]
      %v175 = vld [vmem:[%s1 + $0x10] sm:$0xf]
      %v176 = vld [vmem:[%s1 + $0x14] sm:$0xf]
      %v177 = vld [vmem:[%s1 + $0x18] sm:$0xf]
      %v178 = vld [vmem:[%s1 + $0x1c] sm:$0xf]
      %v179 = vld [vmem:[%s1 + $0x20] sm:$0xf]
      %v180 = vld [vmem:[%s1 + $0x24] sm:$0xf]
      %v181 = vld [vmem:[%s1 + $0x28] sm:$0xf]
      %v182 = vld [vmem:[%s1 + $0x2c] sm:$0xf]
      %v183 = vld [vmem:[%s1 + $0x30] sm:$0xf]
      %v184 = vld [vmem:[%s1 + $0x34] sm:$0xf]
      %v185 = vld [vmem:[%s1 + $0x38] sm:$0xf]
      %v186 = vld [vmem:[%s1 + $0x3c] sm:$0xf]
      %v187 = vld [vmem:[%s1 + $0x40] sm:$0xf]
      %v188 = vld [vmem:[%s1 + $0x44] sm:$0xf]
      %v189 = vld [vmem:[%s1 + $0x48] sm:$0xf]
      %v190 = vld [vmem:[%s1 + $0x4c] sm:$0xf]
      %v191 = vld [vmem:[%s1 + $0x50] sm:$0xf]
      %v192 = vld [vmem:[%s1 + $0x54] sm:$0xf]
      %v193 = vld [vmem:[%s1 + $0x58] sm:$0xf]
      %v194 = vld [vmem:[%s1 + $0x5c] sm:$0xf]
      %v195 = vld [vmem:[%s1 + $0x60] sm:$0xf]
      %v196 = vld [vmem:[%s1 + $0x64] sm:$0xf]
      %v197 = vld [vmem:[%s1 + $0x68] sm:$0xf]
      %v198 = vld [vmem:[%s1 + $0x6c] sm:$0xf]
      %v199 = vld [vmem:[%s1 + $0x70] sm:$0xf]
      %v200 = vld [vmem:[%s1 + $0x74] sm:$0xf]
      %v201 = vld [vmem:[%s1 + $0x78] sm:$0xf]
      %v202 = vld [vmem:[%s1 + $0x7c] sm:$0xf]
      %v203 = vld [vmem:[%s2] sm:$0x1]
      %v205 = vlaneseq
      %v206 = vshrl.u32 %v205, 7
      %v207 = vsub.s32 0, %v206
      %v208 = vrot.slane %v203, %v207
      %v211 = vunpack.c.l.b16 %v170
      %v212 = vunpack.c.h.b16 %v170
      %v213 = vpack.c.b16 %v211, %v211
      %v214 = vpack.c.b16 %v212, %v212
      %v249 = vunpack.c.l.b16 %v171
      %v250 = vunpack.c.l.b16 %v172
      %v251 = vunpack.c.l.b16 %v173
      %v252 = vunpack.c.l.b16 %v174
      %v253 = vunpack.c.l.b16 %v175
      %v254 = vunpack.c.l.b16 %v176
      %v255 = vunpack.c.l.b16 %v177
      %v256 = vunpack.c.l.b16 %v178
      %v257 = vunpack.c.l.b16 %v179
      %v258 = vunpack.c.l.b16 %v180
      %v259 = vunpack.c.l.b16 %v181
      %v260 = vunpack.c.l.b16 %v182
      %v261 = vunpack.c.l.b16 %v183
      %v262 = vunpack.c.l.b16 %v184
      %v263 = vunpack.c.l.b16 %v185
      %v264 = vunpack.c.l.b16 %v186
      %v265 = vunpack.c.l.b16 %v187
      %v266 = vunpack.c.l.b16 %v188
      %v267 = vunpack.c.l.b16 %v189
      %v268 = vunpack.c.l.b16 %v190
      %v269 = vunpack.c.l.b16 %v191
      %v270 = vunpack.c.l.b16 %v192
      %v271 = vunpack.c.l.b16 %v193
      %v272 = vunpack.c.l.b16 %v194
      %v273 = vunpack.c.l.b16 %v195
      %v274 = vunpack.c.l.b16 %v196
      %v275 = vunpack.c.l.b16 %v197
      %v276 = vunpack.c.l.b16 %v198
      %v277 = vunpack.c.l.b16 %v199
      %v278 = vunpack.c.l.b16 %v200
      %v279 = vunpack.c.l.b16 %v201
      %v280 = vunpack.c.l.b16 %v202
      %v281 = vpack.c.b16 %v250, %v249
      %v282 = vpack.c.b16 %v252, %v251
      %v283 = vpack.c.b16 %v254, %v253
      %v284 = vpack.c.b16 %v256, %v255
      %v285 = vpack.c.b16 %v258, %v257
      %v286 = vpack.c.b16 %v260, %v259
      %v287 = vpack.c.b16 %v262, %v261
      %v288 = vpack.c.b16 %v264, %v263
      %v289 = vpack.c.b16 %v266, %v265
      %v290 = vpack.c.b16 %v268, %v267
      %v291 = vpack.c.b16 %v270, %v269
      %v292 = vpack.c.b16 %v272, %v271
      %v293 = vpack.c.b16 %v274, %v273
      %v294 = vpack.c.b16 %v276, %v275
      %v295 = vpack.c.b16 %v278, %v277
      %v296 = vpack.c.b16 %v280, %v279
      %313 = vmatprep.subr.bf16.mxu0 0
      %314 = vmatpush1.bf16.msra.mxu0 %v281
      %315 = vmatprep.subr.bf16.mxu0 0
      %316 = vmatpush1.bf16.msra.mxu0 %v282
      %317 = vmatprep.subr.bf16.mxu0 0
      %318 = vmatpush1.bf16.msra.mxu0 %v283
      %319 = vmatprep.subr.bf16.mxu0 0
      %320 = vmatpush1.bf16.msra.mxu0 %v284
      %321 = vmatprep.subr.bf16.mxu0 0
      %322 = vmatpush1.bf16.msra.mxu0 %v285
      %323 = vmatprep.subr.bf16.mxu0 0
      %324 = vmatpush1.bf16.msra.mxu0 %v286
      %325 = vmatprep.subr.bf16.mxu0 0
      %326 = vmatpush1.bf16.msra.mxu0 %v287
      %327 = vmatprep.subr.bf16.mxu0 0
      %328 = vmatpush1.bf16.msra.mxu0 %v288
      %329 = vmatprep.subr.bf16.mxu0 0
      %330 = vmatpush1.bf16.msra.mxu0 %v289
      %331 = vmatprep.subr.bf16.mxu0 0
      %332 = vmatpush1.bf16.msra.mxu0 %v290
      %333 = vmatprep.subr.bf16.mxu0 0
      %334 = vmatpush1.bf16.msra.mxu0 %v291
      %335 = vmatprep.subr.bf16.mxu0 0
      %336 = vmatpush1.bf16.msra.mxu0 %v292
      %337 = vmatprep.subr.bf16.mxu0 0
      %338 = vmatpush1.bf16.msra.mxu0 %v293
      %339 = vmatprep.subr.bf16.mxu0 0
      %340 = vmatpush1.bf16.msra.mxu0 %v294
      %341 = vmatprep.subr.bf16.mxu0 0
      %342 = vmatpush1.bf16.msra.mxu0 %v295
      %343 = vmatprep.subr.bf16.mxu0 0
      %344 = vmatpush1.bf16.msra.mxu0 %v296
      %345 = vmatprep.mubr.bf16.mxu0 %v214
      %346 = vmatmul.mubr.bf16.gmra.mrb[0].mxu0 %v213
      %v347 = vpop.f32.mrb[0].mxu0
      %v348 = vadd.f32 %v208, %v347
      %v349 = vpop.f32.mrb[0].mxu0
      %v350 = vpop.f32.mrb[0].mxu0
      %v351 = vpop.f32.mrb[0].mxu0
      %352 = vdwg.mxu0
      %v353 = vpack.c.bf16 %v348, %v348
      %354 = vst [vmem:[%s168] sm:$0xf] %v353
      %p355 = scmp.lt.s32.totalorder %s14, 1
      %s356 = scalar_select %p355, %s14, 1
      %s357 = smul.addr %s356, 4
      %s358 = scalar_lea.vmem %s3, %s357
      // Predicated region
      $region33: #{_lambda_.12} parent=31 // pred_check
        %p359 = pneg %p100
      $region34: #{_lambda_.12} parent=31 // pred_check_branch
        %361 = sbr.rel (%p359) target = $region36
      $region35: #{_lambda_.12} parent=31 // pred_region
        _
      $region36: #{_lambda_.12} parent=31 // pred_fallthru
        _
    $region32: #{_lambda_.12} parent=5 // pred_fallthru
      _
    %p362 = scmp.le.s32.totalorder 2, %s9
    // Predicated region
    $region37: #{_lambda_.12} parent=5 // pred_check
      %p363 = pneg %p362
    $region38: #{_lambda_.12} parent=5 // pred_check_branch
      %365 = sbr.rel (%p363) target = $region40
    $region39: #{_lambda_.12} parent=5 // pred_region
      %s366 = ssub.s32 %s9, 2
      // Predicated region
      $region41: #{_lambda_.12} parent=39 // pred_check
        %p367 = pneg %p106
      $region42: #{_lambda_.12} parent=39 // pred_check_branch
        %369 = sbr.rel (%p367) target = $region44
      $region43: #{_lambda_.12} parent=39 // pred_region
        %p370 = scmp.lt.s32.totalorder %s15, 1
        %s371 = scalar_select %p370, %s15, 1
        %s372 = smul.addr %s371, 4
        %s373 = scalar_lea.vmem %s3, %s372
      $region44: #{_lambda_.12} parent=39 // pred_fallthru
        _
    $region40: #{_lambda_.12} parent=5 // pred_fallthru
      _
  $region6: #{_lambda_.12} parent=0 // loop_footer
    %s13 = sadd.s32 1, %s9
  $region7: #{_lambda_.12} parent=0 // loop_footer_branch
    %8 = sbr.rel target = $region3
  $region8: #{_lambda_.12} parent=0 // loop_exit
    _

// kernel: _lambda_.16
$region0: #{_lambda_.16}
  #allocation0 [shape = 'u32[]', space=smem, size = 0x4, offset = 0x4, fixed_abs, tag = 'smem constant byte address 0x4 - core index']
  #allocation1 [shape = 'u32[144,128]{1,0:T(1,128)}', space=vmem, size = 0x12000, scoped, tag = 'internal scratch']
  %s0 = inlined_call_operand.vmem [shape: bf16[4,8,128], index: 0, kind: input, shape index: {}]
  %s1 = inlined_call_operand.vmem [shape: bf16[128,128], index: 1, kind: input, shape index: {}]
  %s2 = inlined_call_operand.vmem [shape: bf16[128,128], index: 2, kind: input, shape index: {}]
  %s3 = inlined_call_operand.vmem [shape: bf16[128,128], index: 3, kind: input, shape index: {}]
  %s4 = inlined_call_operand.vmem [shape: f32[1,128], index: 4, kind: input, shape index: {}]
  %s5 = inlined_call_operand.vmem [shape: f32[1,128], index: 5, kind: input, shape index: {}]
  %s6 = inlined_call_operand.vmem [shape: f32[1,128], index: 6, kind: input, shape index: {}]
  %s7 = inlined_call_operand.vmem [shape: bf16[128,128], index: 7, kind: input, shape index: {}]
  %s8 = inlined_call_operand.vmem [shape: f32[1,128], index: 8, kind: input, shape index: {}]
  %s9 = inlined_call_operand.vmem [shape: f32[1,128], index: 9, kind: input, shape index: {}]
  %s10 = inlined_call_operand.vmem [shape: f32[1,128], index: 10, kind: input, shape index: {}]
  %s11 = inlined_call_operand.vmem [shape: bf16[128,256], index: 11, kind: input, shape index: {}]
  %s12 = inlined_call_operand.vmem [shape: f32[1,256], index: 12, kind: input, shape index: {}]
  %s13 = inlined_call_operand.vmem [shape: bf16[256,128], index: 13, kind: input, shape index: {}]
  %s14 = inlined_call_operand.vmem [shape: f32[1,128], index: 14, kind: input, shape index: {}]
  %s15 = inlined_call_operand.vmem [shape: f32[1,128], index: 15, kind: input, shape index: {}]
  %s16 = inlined_call_operand.vmem [shape: f32[1,128], index: 16, kind: input, shape index: {}]
  %s17 = inlined_call_operand.vmem [shape: bf16[4,8,128], index: 17, kind: output, shape index: {}]
  %s18 = sld [smem:[#allocation0]]
  $region101: #{_lambda_.16} parent=0
    _
  %s20 = ssub.s32 1, %s18
  %s21 = scalar_select 0, %s20, %s18
  loop: start=0, step=1, limit=6
  $region2: #{_lambda_.16} parent=0 // loop_pre_header
    _
  $region3: #{_lambda_.16} parent=0 // loop_header
    %s23 = sphi 0, %s27
    %p24 = scmp.ge.s32.totalorder %s23, 6
    %s33 = sphi 0, %s35
    %s36 = sphi 0, %s33
    %s37 = sphi 0, %s36
    %s53 = sphi 0, %s37
    %s57 = sphi 0, %s57
    %s59 = sphi 0, %s57
    %s60 = sphi 0, %s59
    %s74 = sphi 0, %s60
    %s78 = sphi 0, %s78
    %s80 = sphi 0, %s78
    %s81 = sphi 0, %s80
    %s95 = sphi 0, %s81
    %s99 = sphi 0, %s99
    %s101 = sphi 0, %s99
    %s102 = sphi 0, %s101
    %s116 = sphi 0, %s102
    %s120 = sphi 0, %s120
    %s122 = sphi 0, %s120
    %s123 = sphi 0, %s122
    %s137 = sphi 0, %s123
    %s141 = sphi 0, %s141
    %s143 = sphi 0, %s141
    %s144 = sphi 0, %s143
    %s158 = sphi 0, %s144
    %s162 = sphi 0, %s162
    %s164 = sphi 0, %s162
    %s165 = sphi 0, %s164
    %s179 = sphi 0, %s165
    %s183 = sphi 0, %s183
    %s185 = sphi 0, %s183
    %s186 = sphi 0, %s185
    %s200 = sphi 0, %s186
    %s204 = sphi 0, %s204
    %s206 = sphi 0, %s204
    %s207 = sphi 0, %s206
    %s221 = sphi 0, %s207
    %s225 = sphi 0, %s225
    %s227 = sphi 0, %s225
    %s228 = sphi 0, %s227
    %s242 = sphi 0, %s228
    %s246 = sphi 0, %s246
    %s248 = sphi 0, %s246
    %s249 = sphi 0, %s248
    %s263 = sphi 0, %s249
    %s267 = sphi 0, %s267
    %s269 = sphi 0, %s267
    %s270 = sphi 0, %s269
    %s284 = sphi 0, %s270
    %s288 = sphi 0, %s288
    %s290 = sphi 0, %s288
    %s291 = sphi 0, %s290
    %s305 = sphi 0, %s291
    %s309 = sphi 0, %s309
    %s311 = sphi 0, %s309
    %s312 = sphi 0, %s311
    %s326 = sphi 0, %s312
    %s330 = sphi 0, %s330
    %s332 = sphi 0, %s330
    %s333 = sphi 0, %s332
    %s347 = sphi 0, %s333
    %s351 = sphi 0, %s351
    %s353 = sphi 0, %s351
    %s354 = sphi 0, %s353
    %s368 = sphi 0, %s354
    %s372 = sphi 0, %s372
    %s374 = sphi 0, %s372
    %s375 = sphi 0, %s374
    %s389 = sphi 0, %s375
    %s395 = sphi 0, %s397
    %s398 = sphi 0, %s395
    %s399 = sphi 0, %s398
    %s415 = sphi 0, %s399
  $region4: #{_lambda_.16} parent=0 // loop_header_branch
    %26 = sbr.rel (%p24) target = $region8
  $region5: #{_lambda_.16} parent=0 // loop_body
    %s28 = ssub.s32 %s23, 1
    %s29 = ssub.s32 %s23, 2
    %s30 = sadd.s32 %s23, 1
    %s31 = ssub.s32 %s23, %s30
    %p32 = scmp.eq.s32.totalorder %s31, 0
    %s34 = sadd.s32 %s33, 1
    %s35 = scalar_select %p32, %s33, %s34
    %p38 = pneg %p32
    %p39 = scmp.eq.s32.totalorder %s23, 3
    %p40 = por %p38, %p39
    %p41 = scmp.ne.s32.totalorder %s33, %s36
    %p42 = scmp.eq.s32.totalorder %s23, 0
    %p43 = por %p41, %p42
    %p44 = scmp.ne.s32.totalorder %s33, %s36
    %p45 = scmp.eq.s32.totalorder %s28, 3
    %p46 = por %p44, %p45
    %p47 = scmp.ne.s32.totalorder %s36, %s37
    %p48 = scmp.eq.s32.totalorder %s28, 0
    %p49 = por %p47, %p48
    %p50 = scmp.ne.s32.totalorder %s36, %s37
    %p51 = scmp.eq.s32.totalorder %s29, 3
    %p52 = por %p50, %p51
    %p54 = scmp.ne.s32.totalorder %s37, %s53
    %p55 = scmp.eq.s32.totalorder %s29, 0
    %p56 = por %p54, %p55
    %s58 = sadd.s32 %s57, 1
    %p61 = scmp.eq.s32.totalorder %s23, 3
    %p62 = scmp.ne.s32.totalorder %s57, %s59
    %p63 = scmp.eq.s32.totalorder %s23, 0
    %p64 = por %p62, %p63
    %p65 = scmp.ne.s32.totalorder %s57, %s59
    %p66 = scmp.eq.s32.totalorder %s28, 3
    %p67 = por %p65, %p66
    %p68 = scmp.ne.s32.totalorder %s59, %s60
    %p69 = scmp.eq.s32.totalorder %s28, 0
    %p70 = por %p68, %p69
    %p71 = scmp.ne.s32.totalorder %s59, %s60
    %p72 = scmp.eq.s32.totalorder %s29, 3
    %p73 = por %p71, %p72
    %p75 = scmp.ne.s32.totalorder %s60, %s74
    %p76 = scmp.eq.s32.totalorder %s29, 0
    %p77 = por %p75, %p76
    %s79 = sadd.s32 %s78, 1
    %p82 = scmp.eq.s32.totalorder %s23, 3
    %p83 = scmp.ne.s32.totalorder %s78, %s80
    %p84 = scmp.eq.s32.totalorder %s23, 0
    %p85 = por %p83, %p84
    %p86 = scmp.ne.s32.totalorder %s78, %s80
    %p87 = scmp.eq.s32.totalorder %s28, 3
    %p88 = por %p86, %p87
    %p89 = scmp.ne.s32.totalorder %s80, %s81
    %p90 = scmp.eq.s32.totalorder %s28, 0
    %p91 = por %p89, %p90
    %p92 = scmp.ne.s32.totalorder %s80, %s81
    %p93 = scmp.eq.s32.totalorder %s29, 3
    %p94 = por %p92, %p93
    %p96 = scmp.ne.s32.totalorder %s81, %s95
    %p97 = scmp.eq.s32.totalorder %s29, 0
    %p98 = por %p96, %p97
    %s100 = sadd.s32 %s99, 1
    %p103 = scmp.eq.s32.totalorder %s23, 3
    %p104 = scmp.ne.s32.totalorder %s99, %s101
    %p105 = scmp.eq.s32.totalorder %s23, 0
    %p106 = por %p104, %p105
    %p107 = scmp.ne.s32.totalorder %s99, %s101
    %p108 = scmp.eq.s32.totalorder %s28, 3
    %p109 = por %p107, %p108
    %p110 = scmp.ne.s32.totalorder %s101, %s102
    %p111 = scmp.eq.s32.totalorder %s28, 0
    %p112 = por %p110, %p111
    %p113 = scmp.ne.s32.totalorder %s101, %s102
    %p114 = scmp.eq.s32.totalorder %s29, 3
    %p115 = por %p113, %p114
    %p117 = scmp.ne.s32.totalorder %s102, %s116
    %p118 = scmp.eq.s32.totalorder %s29, 0
    %p119 = por %p117, %p118
    %s121 = sadd.s32 %s120, 1
    %p124 = scmp.eq.s32.totalorder %s23, 3
    %p125 = scmp.ne.s32.totalorder %s120, %s122
    %p126 = scmp.eq.s32.totalorder %s23, 0
    %p127 = por %p125, %p126
    %p128 = scmp.ne.s32.totalorder %s120, %s122
    %p129 = scmp.eq.s32.totalorder %s28, 3
    %p130 = por %p128, %p129
    %p131 = scmp.ne.s32.totalorder %s122, %s123
    %p132 = scmp.eq.s32.totalorder %s28, 0
    %p133 = por %p131, %p132
    %p134 = scmp.ne.s32.totalorder %s122, %s123
    %p135 = scmp.eq.s32.totalorder %s29, 3
    %p136 = por %p134, %p135
    %p138 = scmp.ne.s32.totalorder %s123, %s137
    %p139 = scmp.eq.s32.totalorder %s29, 0
    %p140 = por %p138, %p139
    %s142 = sadd.s32 %s141, 1
    %p145 = scmp.eq.s32.totalorder %s23, 3
    %p146 = scmp.ne.s32.totalorder %s141, %s143
    %p147 = scmp.eq.s32.totalorder %s23, 0
    %p148 = por %p146, %p147
    %p149 = scmp.ne.s32.totalorder %s141, %s143
    %p150 = scmp.eq.s32.totalorder %s28, 3
    %p151 = por %p149, %p150
    %p152 = scmp.ne.s32.totalorder %s143, %s144
    %p153 = scmp.eq.s32.totalorder %s28, 0
    %p154 = por %p152, %p153
    %p155 = scmp.ne.s32.totalorder %s143, %s144
    %p156 = scmp.eq.s32.totalorder %s29, 3
    %p157 = por %p155, %p156
    %p159 = scmp.ne.s32.totalorder %s144, %s158
    %p160 = scmp.eq.s32.totalorder %s29, 0
    %p161 = por %p159, %p160
    %s163 = sadd.s32 %s162, 1
    %p166 = scmp.eq.s32.totalorder %s23, 3
    %p167 = scmp.ne.s32.totalorder %s162, %s164
    %p168 = scmp.eq.s32.totalorder %s23, 0
    %p169 = por %p167, %p168
    %p170 = scmp.ne.s32.totalorder %s162, %s164
    %p171 = scmp.eq.s32.totalorder %s28, 3
    %p172 = por %p170, %p171
    %p173 = scmp.ne.s32.totalorder %s164, %s165
    %p174 = scmp.eq.s32.totalorder %s28, 0
    %p175 = por %p173, %p174
    %p176 = scmp.ne.s32.totalorder %s164, %s165
    %p177 = scmp.eq.s32.totalorder %s29, 3
    %p178 = por %p176, %p177
    %p180 = scmp.ne.s32.totalorder %s165, %s179
    %p181 = scmp.eq.s32.totalorder %s29, 0
    %p182 = por %p180, %p181
    %s184 = sadd.s32 %s183, 1
    %p187 = scmp.eq.s32.totalorder %s23, 3
    %p188 = scmp.ne.s32.totalorder %s183, %s185
    %p189 = scmp.eq.s32.totalorder %s23, 0
    %p190 = por %p188, %p189
    %p191 = scmp.ne.s32.totalorder %s183, %s185
    %p192 = scmp.eq.s32.totalorder %s28, 3
    %p193 = por %p191, %p192
    %p194 = scmp.ne.s32.totalorder %s185, %s186
    %p195 = scmp.eq.s32.totalorder %s28, 0
    %p196 = por %p194, %p195
    %p197 = scmp.ne.s32.totalorder %s185, %s186
    %p198 = scmp.eq.s32.totalorder %s29, 3
    %p199 = por %p197, %p198
    %p201 = scmp.ne.s32.totalorder %s186, %s200
    %p202 = scmp.eq.s32.totalorder %s29, 0
    %p203 = por %p201, %p202
    %s205 = sadd.s32 %s204, 1
    %p208 = scmp.eq.s32.totalorder %s23, 3
    %p209 = scmp.ne.s32.totalorder %s204, %s206
    %p210 = scmp.eq.s32.totalorder %s23, 0
    %p211 = por %p209, %p210
    %p212 = scmp.ne.s32.totalorder %s204, %s206
    %p213 = scmp.eq.s32.totalorder %s28, 3
    %p214 = por %p212, %p213
    %p215 = scmp.ne.s32.totalorder %s206, %s207
    %p216 = scmp.eq.s32.totalorder %s28, 0
    %p217 = por %p215, %p216
    %p218 = scmp.ne.s32.totalorder %s206, %s207
    %p219 = scmp.eq.s32.totalorder %s29, 3
    %p220 = por %p218, %p219
    %p222 = scmp.ne.s32.totalorder %s207, %s221
    %p223 = scmp.eq.s32.totalorder %s29, 0
    %p224 = por %p222, %p223
    %s226 = sadd.s32 %s225, 1
    %p229 = scmp.eq.s32.totalorder %s23, 3
    %p230 = scmp.ne.s32.totalorder %s225, %s227
    %p231 = scmp.eq.s32.totalorder %s23, 0
    %p232 = por %p230, %p231
    %p233 = scmp.ne.s32.totalorder %s225, %s227
    %p234 = scmp.eq.s32.totalorder %s28, 3
    %p235 = por %p233, %p234
    %p236 = scmp.ne.s32.totalorder %s227, %s228
    %p237 = scmp.eq.s32.totalorder %s28, 0
    %p238 = por %p236, %p237
    %p239 = scmp.ne.s32.totalorder %s227, %s228
    %p240 = scmp.eq.s32.totalorder %s29, 3
    %p241 = por %p239, %p240
    %p243 = scmp.ne.s32.totalorder %s228, %s242
    %p244 = scmp.eq.s32.totalorder %s29, 0
    %p245 = por %p243, %p244
    %s247 = sadd.s32 %s246, 1
    %p250 = scmp.eq.s32.totalorder %s23, 3
    %p251 = scmp.ne.s32.totalorder %s246, %s248
    %p252 = scmp.eq.s32.totalorder %s23, 0
    %p253 = por %p251, %p252
    %p254 = scmp.ne.s32.totalorder %s246, %s248
    %p255 = scmp.eq.s32.totalorder %s28, 3
    %p256 = por %p254, %p255
    %p257 = scmp.ne.s32.totalorder %s248, %s249
    %p258 = scmp.eq.s32.totalorder %s28, 0
    %p259 = por %p257, %p258
    %p260 = scmp.ne.s32.totalorder %s248, %s249
    %p261 = scmp.eq.s32.totalorder %s29, 3
    %p262 = por %p260, %p261
    %p264 = scmp.ne.s32.totalorder %s249, %s263
    %p265 = scmp.eq.s32.totalorder %s29, 0
    %p266 = por %p264, %p265
    %s268 = sadd.s32 %s267, 1
    %p271 = scmp.eq.s32.totalorder %s23, 3
    %p272 = scmp.ne.s32.totalorder %s267, %s269
    %p273 = scmp.eq.s32.totalorder %s23, 0
    %p274 = por %p272, %p273
    %p275 = scmp.ne.s32.totalorder %s267, %s269
    %p276 = scmp.eq.s32.totalorder %s28, 3
    %p277 = por %p275, %p276
    %p278 = scmp.ne.s32.totalorder %s269, %s270
    %p279 = scmp.eq.s32.totalorder %s28, 0
    %p280 = por %p278, %p279
    %p281 = scmp.ne.s32.totalorder %s269, %s270
    %p282 = scmp.eq.s32.totalorder %s29, 3
    %p283 = por %p281, %p282
    %p285 = scmp.ne.s32.totalorder %s270, %s284
    %p286 = scmp.eq.s32.totalorder %s29, 0
    %p287 = por %p285, %p286
    %s289 = sadd.s32 %s288, 1
    %p292 = scmp.eq.s32.totalorder %s23, 3
    %p293 = scmp.ne.s32.totalorder %s288, %s290
    %p294 = scmp.eq.s32.totalorder %s23, 0
    %p295 = por %p293, %p294
    %p296 = scmp.ne.s32.totalorder %s288, %s290
    %p297 = scmp.eq.s32.totalorder %s28, 3
    %p298 = por %p296, %p297
    %p299 = scmp.ne.s32.totalorder %s290, %s291
    %p300 = scmp.eq.s32.totalorder %s28, 0
    %p301 = por %p299, %p300
    %p302 = scmp.ne.s32.totalorder %s290, %s291
    %p303 = scmp.eq.s32.totalorder %s29, 3
    %p304 = por %p302, %p303
    %p306 = scmp.ne.s32.totalorder %s291, %s305
    %p307 = scmp.eq.s32.totalorder %s29, 0
    %p308 = por %p306, %p307
    %s310 = sadd.s32 %s309, 1
    %p313 = scmp.eq.s32.totalorder %s23, 3
    %p314 = scmp.ne.s32.totalorder %s309, %s311
    %p315 = scmp.eq.s32.totalorder %s23, 0
    %p316 = por %p314, %p315
    %p317 = scmp.ne.s32.totalorder %s309, %s311
    %p318 = scmp.eq.s32.totalorder %s28, 3
    %p319 = por %p317, %p318
    %p320 = scmp.ne.s32.totalorder %s311, %s312
    %p321 = scmp.eq.s32.totalorder %s28, 0
    %p322 = por %p320, %p321
    %p323 = scmp.ne.s32.totalorder %s311, %s312
    %p324 = scmp.eq.s32.totalorder %s29, 3
    %p325 = por %p323, %p324
    %p327 = scmp.ne.s32.totalorder %s312, %s326
    %p328 = scmp.eq.s32.totalorder %s29, 0
    %p329 = por %p327, %p328
    %s331 = sadd.s32 %s330, 1
    %p334 = scmp.eq.s32.totalorder %s23, 3
    %p335 = scmp.ne.s32.totalorder %s330, %s332
    %p336 = scmp.eq.s32.totalorder %s23, 0
    %p337 = por %p335, %p336
    %p338 = scmp.ne.s32.totalorder %s330, %s332
    %p339 = scmp.eq.s32.totalorder %s28, 3
    %p340 = por %p338, %p339
    %p341 = scmp.ne.s32.totalorder %s332, %s333
    %p342 = scmp.eq.s32.totalorder %s28, 0
    %p343 = por %p341, %p342
    %p344 = scmp.ne.s32.totalorder %s332, %s333
    %p345 = scmp.eq.s32.totalorder %s29, 3
    %p346 = por %p344, %p345
    %p348 = scmp.ne.s32.totalorder %s333, %s347
    %p349 = scmp.eq.s32.totalorder %s29, 0
    %p350 = por %p348, %p349
    %s352 = sadd.s32 %s351, 1
    %p355 = scmp.eq.s32.totalorder %s23, 3
    %p356 = scmp.ne.s32.totalorder %s351, %s353
    %p357 = scmp.eq.s32.totalorder %s23, 0
    %p358 = por %p356, %p357
    %p359 = scmp.ne.s32.totalorder %s351, %s353
    %p360 = scmp.eq.s32.totalorder %s28, 3
    %p361 = por %p359, %p360
    %p362 = scmp.ne.s32.totalorder %s353, %s354
    %p363 = scmp.eq.s32.totalorder %s28, 0
    %p364 = por %p362, %p363
    %p365 = scmp.ne.s32.totalorder %s353, %s354
    %p366 = scmp.eq.s32.totalorder %s29, 3
    %p367 = por %p365, %p366
    %p369 = scmp.ne.s32.totalorder %s354, %s368
    %p370 = scmp.eq.s32.totalorder %s29, 0
    %p371 = por %p369, %p370
    %s373 = sadd.s32 %s372, 1
    %p376 = scmp.eq.s32.totalorder %s23, 3
    %p377 = scmp.ne.s32.totalorder %s372, %s374
    %p378 = scmp.eq.s32.totalorder %s23, 0
    %p379 = por %p377, %p378
    %p380 = scmp.ne.s32.totalorder %s372, %s374
    %p381 = scmp.eq.s32.totalorder %s28, 3
    %p382 = por %p380, %p381
    %p383 = scmp.ne.s32.totalorder %s374, %s375
    %p384 = scmp.eq.s32.totalorder %s28, 0
    %p385 = por %p383, %p384
    %p386 = scmp.ne.s32.totalorder %s374, %s375
    %p387 = scmp.eq.s32.totalorder %s29, 3
    %p388 = por %p386, %p387
    %p390 = scmp.ne.s32.totalorder %s375, %s389
    %p391 = scmp.eq.s32.totalorder %s29, 0
    %p392 = por %p390, %p391
    %s393 = ssub.s32 %s23, %s30
    %p394 = scmp.eq.s32.totalorder %s393, 0
    %s396 = sadd.s32 %s395, 1
    %s397 = scalar_select %p394, %s395, %s396
    %p400 = pneg %p394
    %p401 = scmp.eq.s32.totalorder %s23, 3
    %p402 = por %p400, %p401
    %p403 = scmp.ne.s32.totalorder %s395, %s398
    %p404 = scmp.eq.s32.totalorder %s23, 0
    %p405 = por %p403, %p404
    %p406 = scmp.ne.s32.totalorder %s395, %s398
    %p407 = scmp.eq.s32.totalorder %s28, 3
    %p408 = por %p406, %p407
    %p409 = scmp.ne.s32.totalorder %s398, %s399
    %p410 = scmp.eq.s32.totalorder %s28, 0
    %p411 = por %p409, %p410
    %p412 = scmp.ne.s32.totalorder %s398, %s399
    %p413 = scmp.eq.s32.totalorder %s29, 3
    %p414 = por %p412, %p413
    %p416 = scmp.ne.s32.totalorder %s399, %s415
    %p417 = scmp.eq.s32.totalorder %s29, 0
    %p418 = por %p416, %p417
    %p419 = scmp.le.s32.totalorder 1, %s23
    %p420 = scmp.lt.s32.totalorder %s23, 5
    %p421 = pnand %p419, %p420
    %p422 = pneg %p421
    // Predicated region
    $region9: #{_lambda_.16} parent=5 // pred_check
      _
    $region10: #{_lambda_.16} parent=5 // pred_check_branch
      %424 = sbr.rel (%p421) target = $region12
    $region11: #{_lambda_.16} parent=5 // pred_region
      %s425 = ssub.s32 %s23, 1
      // Predicated region
      $region13: #{_lambda_.16} parent=11 // pred_check
        %p426 = pneg %p70
      $region14: #{_lambda_.16} parent=11 // pred_check_branch
        %428 = sbr.rel (%p426) target = $region16
      $region15: #{_lambda_.16} parent=11 // pred_region
        _
      $region16: #{_lambda_.16} parent=11 // pred_fallthru
        _
      // Predicated region
      $region17: #{_lambda_.16} parent=11 // pred_check
        %p429 = pneg %p91
      $region18: #{_lambda_.16} parent=11 // pred_check_branch
        %431 = sbr.rel (%p429) target = $region20
      $region19: #{_lambda_.16} parent=11 // pred_region
        _
      $region20: #{_lambda_.16} parent=11 // pred_fallthru
        _
      // Predicated region
      $region21: #{_lambda_.16} parent=11 // pred_check
        %p432 = pneg %p112
      $region22: #{_lambda_.16} parent=11 // pred_check_branch
        %434 = sbr.rel (%p432) target = $region24
      $region23: #{_lambda_.16} parent=11 // pred_region
        _
      $region24: #{_lambda_.16} parent=11 // pred_fallthru
        _
      // Predicated region
      $region25: #{_lambda_.16} parent=11 // pred_check
        %p435 = pneg %p133
      $region26: #{_lambda_.16} parent=11 // pred_check_branch
        %437 = sbr.rel (%p435) target = $region28
      $region27: #{_lambda_.16} parent=11 // pred_region
        _
      $region28: #{_lambda_.16} parent=11 // pred_fallthru
        _
      // Predicated region
      $region29: #{_lambda_.16} parent=11 // pred_check
        %p438 = pneg %p154
      $region30: #{_lambda_.16} parent=11 // pred_check_branch
        %440 = sbr.rel (%p438) target = $region32
      $region31: #{_lambda_.16} parent=11 // pred_region
        _
      $region32: #{_lambda_.16} parent=11 // pred_fallthru
        _
      // Predicated region
      $region33: #{_lambda_.16} parent=11 // pred_check
        %p441 = pneg %p175
      $region34: #{_lambda_.16} parent=11 // pred_check_branch
        %443 = sbr.rel (%p441) target = $region36
      $region35: #{_lambda_.16} parent=11 // pred_region
        _
      $region36: #{_lambda_.16} parent=11 // pred_fallthru
        _
      // Predicated region
      $region37: #{_lambda_.16} parent=11 // pred_check
        %p444 = pneg %p196
      $region38: #{_lambda_.16} parent=11 // pred_check_branch
        %446 = sbr.rel (%p444) target = $region40
      $region39: #{_lambda_.16} parent=11 // pred_region
        _
      $region40: #{_lambda_.16} parent=11 // pred_fallthru
        _
      // Predicated region
      $region41: #{_lambda_.16} parent=11 // pred_check
        %p447 = pneg %p217
      $region42: #{_lambda_.16} parent=11 // pred_check_branch
        %449 = sbr.rel (%p447) target = $region44
      $region43: #{_lambda_.16} parent=11 // pred_region
        _
      $region44: #{_lambda_.16} parent=11 // pred_fallthru
        _
      // Predicated region
      $region45: #{_lambda_.16} parent=11 // pred_check
        %p450 = pneg %p238
      $region46: #{_lambda_.16} parent=11 // pred_check_branch
        %452 = sbr.rel (%p450) target = $region48
      $region47: #{_lambda_.16} parent=11 // pred_region
        _
      $region48: #{_lambda_.16} parent=11 // pred_fallthru
        _
      // Predicated region
      $region49: #{_lambda_.16} parent=11 // pred_check
        %p453 = pneg %p259
      $region50: #{_lambda_.16} parent=11 // pred_check_branch
        %455 = sbr.rel (%p453) target = $region52
      $region51: #{_lambda_.16} parent=11 // pred_region
        _
      $region52: #{_lambda_.16} parent=11 // pred_fallthru
        _
      // Predicated region
      $region53: #{_lambda_.16} parent=11 // pred_check
        %p456 = pneg %p280
      $region54: #{_lambda_.16} parent=11 // pred_check_branch
        %458 = sbr.rel (%p456) target = $region56
      $region55: #{_lambda_.16} parent=11 // pred_region
        _
      $region56: #{_lambda_.16} parent=11 // pred_fallthru
        _
      // Predicated region
      $region57: #{_lambda_.16} parent=11 // pred_check
        %p459 = pneg %p301
      $region58: #{_lambda_.16} parent=11 // pred_check_branch
        %461 = sbr.rel (%p459) target = $region60
      $region59: #{_lambda_.16} parent=11 // pred_region
        _
      $region60: #{_lambda_.16} parent=11 // pred_fallthru
        _
      // Predicated region
      $region61: #{_lambda_.16} parent=11 // pred_check
        %p462 = pneg %p322
      $region62: #{_lambda_.16} parent=11 // pred_check_branch
        %464 = sbr.rel (%p462) target = $region64
      $region63: #{_lambda_.16} parent=11 // pred_region
        _
      $region64: #{_lambda_.16} parent=11 // pred_fallthru
        _
      // Predicated region
      $region65: #{_lambda_.16} parent=11 // pred_check
        %p465 = pneg %p343
      $region66: #{_lambda_.16} parent=11 // pred_check_branch
        %467 = sbr.rel (%p465) target = $region68
      $region67: #{_lambda_.16} parent=11 // pred_region
        _
      $region68: #{_lambda_.16} parent=11 // pred_fallthru
        _
      // Predicated region
      $region69: #{_lambda_.16} parent=11 // pred_check
        %p468 = pneg %p364
      $region70: #{_lambda_.16} parent=11 // pred_check_branch
        %470 = sbr.rel (%p468) target = $region72
      $region71: #{_lambda_.16} parent=11 // pred_region
        _
      $region72: #{_lambda_.16} parent=11 // pred_fallthru
        _
      // Predicated region
      $region73: #{_lambda_.16} parent=11 // pred_check
        %p471 = pneg %p385
      $region74: #{_lambda_.16} parent=11 // pred_check_branch
        %473 = sbr.rel (%p471) target = $region76
      $region75: #{_lambda_.16} parent=11 // pred_region
        _
      $region76: #{_lambda_.16} parent=11 // pred_fallthru
        _
    $region12: #{_lambda_.16} parent=5 // pred_fallthru
      _
    %p474 = scmp.lt.s32.totalorder %s23, 4
    // Predicated region
    $region77: #{_lambda_.16} parent=5 // pred_check
      %p475 = pneg %p474
    $region78: #{_lambda_.16} parent=5 // pred_check_branch
      %477 = sbr.rel (%p475) target = $region80
    $region79: #{_lambda_.16} parent=5 // pred_region
      // Predicated region
      $region81: #{_lambda_.16} parent=79 // pred_check
        %p478 = pneg %p43
      $region82: #{_lambda_.16} parent=79 // pred_check_branch
        %480 = sbr.rel (%p478) target = $region84
      $region83: #{_lambda_.16} parent=79 // pred_region
        %p481 = scmp.lt.s32.totalorder %s23, 3
        %s482 = scalar_select %p481, %s23, 3
        %s483 = smul.addr %s482, 4
        %s484 = scalar_lea.vmem %s0, %s483
      $region84: #{_lambda_.16} parent=79 // pred_fallthru
        _
    $region80: #{_lambda_.16} parent=5 // pred_fallthru
      _
    %p485 = scmp.le.s32.totalorder 1, %s23
    %p486 = scmp.lt.s32.totalorder %s23, 5
    %p487 = pnand %p485, %p486
    %p488 = pneg %p487
    // Predicated region
    $region85: #{_lambda_.16} parent=5 // pred_check
      _
    $region86: #{_lambda_.16} parent=5 // pred_check_branch
      %490 = sbr.rel (%p487) target = $region88
    $region87: #{_lambda_.16} parent=5 // pred_region
      %s491 = ssub.s32 %s23, 1
      %p492 = scmp.lt.s32.totalorder %s28, 3
      %s493 = scalar_select %p492, %s28, 3
      %s494 = smul.addr %s493, 4
      %s495 = scalar_lea.vmem %s0, %s494
      %p496 = pneg %p49
      %p497 = pneg %p46
      %p498 = pneg %p70
      %p499 = pneg %p67
      %p500 = pneg %p91
      %p501 = pneg %p88
      %p502 = pneg %p112
      %p503 = pneg %p109
      %p504 = pneg %p133
      %p505 = pneg %p130
      %p506 = pneg %p154
      %p507 = pneg %p151
      %p508 = pneg %p175
      %p509 = pneg %p172
      %p510 = pneg %p196
      %p511 = pneg %p193
      %p512 = pneg %p217
      %p513 = pneg %p214
      %p514 = pneg %p238
      %p515 = pneg %p235
      %p516 = pneg %p259
      %p517 = pneg %p256
      %p518 = pneg %p280
      %p519 = pneg %p277
      %p520 = pneg %p301
      %p521 = pneg %p298
      %p522 = pneg %p322
      %p523 = pneg %p319
      %p524 = pneg %p343
      %p525 = pneg %p340
      %p526 = pneg %p364
      %p527 = pneg %p361
      %p528 = pneg %p385
      %p529 = pneg %p382
      %p530 = pneg %p411
      %p531 = pneg %p408
      %p532 = scmp.lt.s32.totalorder %s28, 3
      %s533 = scalar_select %p532, %s28, 3
      %s534 = smul.addr %s533, 4
      %s535 = scalar_lea.vmem %s17, %s534
      %p536 = scmp.lt.s32.totalorder %s28, 3
      %s537 = scalar_select %p536, %s28, 3
      %s538 = smul.addr %s537, 4
      %s539 = scalar_lea.vmem %s0, %s538
      %p540 = scmp.lt.s32.totalorder %s28, 3
      %s541 = scalar_select %p540, %s28, 3
      %s542 = smul.addr %s541, 4
      %s543 = scalar_lea.vmem %s17, %s542
      %v545 = vld [vmem:[%s539] sm:$0xf]
      %v546 = vld [vmem:[%s1] sm:$0xf]
      %v547 = vld [vmem:[%s1 + $0x4] sm:$0xf]
      %v548 = vld [vmem:[%s1 + $0x8] sm:$0xf]
      %v549 = vld [vmem:[%s1 + $0xc] sm:$0xf]
      %v550 = vld [vmem:[%s1 + $0x10] sm:$0xf]
      %v551 = vld [vmem:[%s1 + $0x14] sm:$0xf]
      %v552 = vld [vmem:[%s1 + $0x18] sm:$0xf]
      %v553 = vld [vmem:[%s1 + $0x1c] sm:$0xf]
      %v554 = vld [vmem:[%s1 + $0x20] sm:$0xf]
      %v555 = vld [vmem:[%s1 + $0x24] sm:$0xf]
      %v556 = vld [vmem:[%s1 + $0x28] sm:$0xf]
      %v557 = vld [vmem:[%s1 + $0x2c] sm:$0xf]
      %v558 = vld [vmem:[%s1 + $0x30] sm:$0xf]
      %v559 = vld [vmem:[%s1 + $0x34] sm:$0xf]
      %v560 = vld [vmem:[%s1 + $0x38] sm:$0xf]
      %v561 = vld [vmem:[%s1 + $0x3c] sm:$0xf]
      %v562 = vld [vmem:[%s4] sm:$0x1]
      %v564 = vlaneseq
      %v565 = vshrl.u32 %v564, 7
      %v566 = vsub.s32 0, %v565
      %v567 = vrot.slane %v562, %v566
      %v585 = vunpack.c.l.b16 %v546
      %v586 = vunpack.c.l.b16 %v547
      %v587 = vunpack.c.l.b16 %v548
      %v588 = vunpack.c.l.b16 %v549
      %v589 = vunpack.c.l.b16 %v550
      %v590 = vunpack.c.l.b16 %v551
      %v591 = vunpack.c.l.b16 %v552
      %v592 = vunpack.c.l.b16 %v553
      %v593 = vunpack.c.l.b16 %v554
      %v594 = vunpack.c.l.b16 %v555
      %v595 = vunpack.c.l.b16 %v556
      %v596 = vunpack.c.l.b16 %v557
      %v597 = vunpack.c.l.b16 %v558
      %v598 = vunpack.c.l.b16 %v559
      %v599 = vunpack.c.l.b16 %v560
      %v600 = vunpack.c.l.b16 %v561
      %v601 = vpack.c.b16 %v586, %v585
      %v602 = vpack.c.b16 %v588, %v587
      %v603 = vpack.c.b16 %v590, %v589
      %v604 = vpack.c.b16 %v592, %v591
      %v605 = vpack.c.b16 %v594, %v593
      %v606 = vpack.c.b16 %v596, %v595
      %v607 = vpack.c.b16 %v598, %v597
      %v608 = vpack.c.b16 %v600, %v599
      %617 = vmatprep.subr.bf16.mxu0 0
      %618 = vmatpush1.bf16.msra.mxu0 %v601
      %619 = vmatprep.subr.bf16.mxu0 0
      %620 = vmatpush1.bf16.msra.mxu0 %v602
      %621 = vmatprep.subr.bf16.mxu0 0
      %622 = vmatpush1.bf16.msra.mxu0 %v603
      %623 = vmatprep.subr.bf16.mxu0 0
      %624 = vmatpush1.bf16.msra.mxu0 %v604
      %625 = vmatprep.subr.bf16.mxu0 0
      %626 = vmatpush1.bf16.msra.mxu0 %v605
      %627 = vmatprep.subr.bf16.mxu0 0
      %628 = vmatpush1.bf16.msra.mxu0 %v606
      %629 = vmatprep.subr.bf16.mxu0 0
      %630 = vmatpush1.bf16.msra.mxu0 %v607
      %631 = vmatprep.subr.bf16.mxu0 0
      %632 = vmatpush1.bf16.msra.mxu0 %v608
      %633 = vmatprep.subr.bf16.mxu0 0
      %634 = vmatpush1.bf16.msra.mxu0 0
      %635 = vmatprep.subr.bf16.mxu0 0
      %636 = vmatpush1.bf16.msra.mxu0 0
      %637 = vmatprep.subr.bf16.mxu0 0
      %638 = vmatpush1.bf16.msra.mxu0 0
      %639 = vmatprep.subr.bf16.mxu0 0
      %640 = vmatpush1.bf16.msra.mxu0 0
      %641 = vmatprep.subr.bf16.mxu0 0
      %642 = vmatpush1.bf16.msra.mxu0 0
      %643 = vmatprep.subr.bf16.mxu0 0
      %644 = vmatpush1.bf16.msra.mxu0 0
      %645 = vmatprep.subr.bf16.mxu0 0
      %646 = vmatpush1.bf16.msra.mxu0 0
      %647 = vmatprep.subr.bf16.mxu0 0
      %648 = vmatpush1.bf16.msra.mxu0 0
      %649 = vmatprep.mubr.bf16.mxu0 0
      %650 = vmatmul.mubr.bf16.gmra.mrb[0].mxu0 %v545
      %v651 = vpop.f32.mrb[0].mxu0
      %v652 = vadd.f32 %v567, %v651
      %v653 = vpop.f32.mrb[0].mxu0
      %v654 = vpop.f32.mrb[0].mxu0
      %v655 = vpop.f32.mrb[0].mxu0
      %656 = vdwg.mxu0
      %v657 = vpack.c.bf16 %v652, %v652
      %v658 = vld [vmem:[%s2] sm:$0xf]
      %v659 = vld [vmem:[%s2 + $0x4] sm:$0xf]
      %v660 = vld [vmem:[%s2 + $0x8] sm:$0xf]
      %v661 = vld [vmem:[%s2 + $0xc] sm:$0xf]
      %v662 = vld [vmem:[%s2 + $0x10] sm:$0xf]
      %v663 = vld [vmem:[%s2 + $0x14] sm:$0xf]
      %v664 = vld [vmem:[%s2 + $0x18] sm:$0xf]
      %v665 = vld [vmem:[%s2 + $0x1c] sm:$0xf]
      %v666 = vld [vmem:[%s2 + $0x20] sm:$0xf]
      %v667 = vld [vmem:[%s2 + $0x24] sm:$0xf]
      %v668 = vld [vmem:[%s2 + $0x28] sm:$0xf]
      %v669 = vld [vmem:[%s2 + $0x2c] sm:$0xf]
      %v670 = vld [vmem:[%s2 + $0x30] sm:$0xf]
      %v671 = vld [vmem:[%s2 + $0x34] sm:$0xf]
      %v672 = vld [vmem:[%s2 + $0x38] sm:$0xf]
      %v673 = vld [vmem:[%s2 + $0x3c] sm:$0xf]
      %v674 = vld [vmem:[%s5] sm:$0x1]
      %v676 = vlaneseq
      %v677 = vshrl.u32 %v676, 7
      %v678 = vsub.s32 0, %v677
      %v679 = vrot.slane %v674, %v678
      %v697 = vunpack.c.l.b16 %v658
      %v698 = vunpack.c.l.b16 %v659
      %v699 = vunpack.c.l.b16 %v660
      %v700 = vunpack.c.l.b16 %v661
      %v701 = vunpack.c.l.b16 %v662
      %v702 = vunpack.c.l.b16 %v663
      %v703 = vunpack.c.l.b16 %v664
      %v704 = vunpack.c.l.b16 %v665
      %v705 = vunpack.c.l.b16 %v666
      %v706 = vunpack.c.l.b16 %v667
      %v707 = vunpack.c.l.b16 %v668
      %v708 = vunpack.c.l.b16 %v669
      %v709 = vunpack.c.l.b16 %v670
      %v710 = vunpack.c.l.b16 %v671
      %v711 = vunpack.c.l.b16 %v672
      %v712 = vunpack.c.l.b16 %v673
      %v713 = vpack.c.b16 %v698, %v697
      %v714 = vpack.c.b16 %v700, %v699
      %v715 = vpack.c.b16 %v702, %v701
      %v716 = vpack.c.b16 %v704, %v703
      %v717 = vpack.c.b16 %v706, %v705
      %v718 = vpack.c.b16 %v708, %v707
      %v719 = vpack.c.b16 %v710, %v709
      %v720 = vpack.c.b16 %v712, %v711
      %729 = vmatprep.subr.bf16.mxu0 0
      %730 = vmatpush1.bf16.msra.mxu0 %v713
      %731 = vmatprep.subr.bf16.mxu0 0
      %732 = vmatpush1.bf16.msra.mxu0 %v714
      %733 = vmatprep.subr.bf16.mxu0 0
      %734 = vmatpush1.bf16.msra.mxu0 %v715
      %735 = vmatprep.subr.bf16.mxu0 0
      %736 = vmatpush1.bf16.msra.mxu0 %v716
      %737 = vmatprep.subr.bf16.mxu0 0
      %738 = vmatpush1.bf16.msra.mxu0 %v717
      %739 = vmatprep.subr.bf16.mxu0 0
      %740 = vmatpush1.bf16.msra.mxu0 %v718
      %741 = vmatprep.subr.bf16.mxu0 0
      %742 = vmatpush1.bf16.msra.mxu0 %v719
      %743 = vmatprep.subr.bf16.mxu0 0
      %744 = vmatpush1.bf16.msra.mxu0 %v720
      %745 = vmatprep.subr.bf16.mxu0 0
      %746 = vmatpush1.bf16.msra.mxu0 0
      %747 = vmatprep.subr.bf16.mxu0 0
      %748 = vmatpush1.bf16.msra.mxu0 0
      %749 = vmatprep.subr.bf16.mxu0 0
      %750 = vmatpush1.bf16.msra.mxu0 0
      %751 = vmatprep.subr.bf16.mxu0 0
      %752 = vmatpush1.bf16.msra.mxu0 0
      %753 = vmatprep.subr.bf16.mxu0 0
      %754 = vmatpush1.bf16.msra.mxu0 0
      %755 = vmatprep.subr.bf16.mxu0 0
      %756 = vmatpush1.bf16.msra.mxu0 0
      %757 = vmatprep.subr.bf16.mxu0 0
      %758 = vmatpush1.bf16.msra.mxu0 0
      %759 = vmatprep.subr.bf16.mxu0 0
      %760 = vmatpush1.bf16.msra.mxu0 0
      %761 = vmatprep.mubr.bf16.mxu0 0
      %762 = vmatmul.mubr.bf16.gmra.mrb[0].mxu0 %v545
      %v763 = vpop.f32.mrb[0].mxu0
      %v764 = vadd.f32 %v679, %v763
      %v765 = vpop.f32.mrb[0].mxu0
      %v766 = vpop.f32.mrb[0].mxu0
      %v767 = vpop.f32.mrb[0].mxu0
      %768 = vdwg.mxu0
      %v769 = vpack.c.bf16 %v764, %v764
      %v770 = vld [vmem:[%s3] sm:$0xf]
      %v771 = vld [vmem:[%s3 + $0x4] sm:$0xf]
      %v772 = vld [vmem:[%s3 + $0x8] sm:$0xf]
      %v773 = vld [vmem:[%s3 + $0xc] sm:$0xf]
      %v774 = vld [vmem:[%s3 + $0x10] sm:$0xf]
      %v775 = vld [vmem:[%s3 + $0x14] sm:$0xf]
      %v776 = vld [vmem:[%s3 + $0x18] sm:$0xf]
      %v777 = vld [vmem:[%s3 + $0x1c] sm:$0xf]
      %v778 = vld [vmem:[%s3 + $0x20] sm:$0xf]
      %v779 = vld [vmem:[%s3 + $0x24] sm:$0xf]
      %v780 = vld [vmem:[%s3 + $0x28] sm:$0xf]
      %v781 = vld [vmem:[%s3 + $0x2c] sm:$0xf]
      %v782 = vld [vmem:[%s3 + $0x30] sm:$0xf]
      %v783 = vld [vmem:[%s3 + $0x34] sm:$0xf]
      %v784 = vld [vmem:[%s3 + $0x38] sm:$0xf]
      %v785 = vld [vmem:[%s3 + $0x3c] sm:$0xf]
      %v786 = vld [vmem:[%s6] sm:$0x1]
      %v788 = vlaneseq
      %v789 = vshrl.u32 %v788, 7
      %v790 = vsub.s32 0, %v789
      %v791 = vrot.slane %v786, %v790
      %v809 = vunpack.c.l.b16 %v770
      %v810 = vunpack.c.l.b16 %v771
      %v811 = vunpack.c.l.b16 %v772
      %v812 = vunpack.c.l.b16 %v773
      %v813 = vunpack.c.l.b16 %v774
      %v814 = vunpack.c.l.b16 %v775
      %v815 = vunpack.c.l.b16 %v776
      %v816 = vunpack.c.l.b16 %v777
      %v817 = vunpack.c.l.b16 %v778
      %v818 = vunpack.c.l.b16 %v779
      %v819 = vunpack.c.l.b16 %v780
      %v820 = vunpack.c.l.b16 %v781
      %v821 = vunpack.c.l.b16 %v782
      %v822 = vunpack.c.l.b16 %v783
      %v823 = vunpack.c.l.b16 %v784
      %v824 = vunpack.c.l.b16 %v785
      %v825 = vpack.c.b16 %v810, %v809
      %v826 = vpack.c.b16 %v812, %v811
      %v827 = vpack.c.b16 %v814, %v813
      %v828 = vpack.c.b16 %v816, %v815
      %v829 = vpack.c.b16 %v818, %v817
      %v830 = vpack.c.b16 %v820, %v819
      %v831 = vpack.c.b16 %v822, %v821
      %v832 = vpack.c.b16 %v824, %v823
      %841 = vmatprep.subr.bf16.mxu0 0
      %842 = vmatpush1.bf16.msra.mxu0 %v825
      %843 = vmatprep.subr.bf16.mxu0 0
      %844 = vmatpush1.bf16.msra.mxu0 %v826
      %845 = vmatprep.subr.bf16.mxu0 0
      %846 = vmatpush1.bf16.msra.mxu0 %v827
      %847 = vmatprep.subr.bf16.mxu0 0
      %848 = vmatpush1.bf16.msra.mxu0 %v828
      %849 = vmatprep.subr.bf16.mxu0 0
      %850 = vmatpush1.bf16.msra.mxu0 %v829
      %851 = vmatprep.subr.bf16.mxu0 0
      %852 = vmatpush1.bf16.msra.mxu0 %v830
      %853 = vmatprep.subr.bf16.mxu0 0
      %854 = vmatpush1.bf16.msra.mxu0 %v831
      %855 = vmatprep.subr.bf16.mxu0 0
      %856 = vmatpush1.bf16.msra.mxu0 %v832
      %857 = vmatprep.subr.bf16.mxu0 0
      %858 = vmatpush1.bf16.msra.mxu0 0
      %859 = vmatprep.subr.bf16.mxu0 0
      %860 = vmatpush1.bf16.msra.mxu0 0
      %861 = vmatprep.subr.bf16.mxu0 0
      %862 = vmatpush1.bf16.msra.mxu0 0
      %863 = vmatprep.subr.bf16.mxu0 0
      %864 = vmatpush1.bf16.msra.mxu0 0
      %865 = vmatprep.subr.bf16.mxu0 0
      %866 = vmatpush1.bf16.msra.mxu0 0
      %867 = vmatprep.subr.bf16.mxu0 0
      %868 = vmatpush1.bf16.msra.mxu0 0
      %869 = vmatprep.subr.bf16.mxu0 0
      %870 = vmatpush1.bf16.msra.mxu0 0
      %871 = vmatprep.subr.bf16.mxu0 0
      %872 = vmatpush1.bf16.msra.mxu0 0
      %873 = vmatprep.mubr.bf16.mxu0 0
      %874 = vmatmul.mubr.bf16.gmra.mrb[0].mxu0 %v545
      %v875 = vpop.f32.mrb[0].mxu0
      %v876 = vadd.f32 %v791, %v875
      %v877 = vpop.f32.mrb[0].mxu0
      %v878 = vpop.f32.mrb[0].mxu0
      %v879 = vpop.f32.mrb[0].mxu0
      %880 = vdwg.mxu0
      %v881 = vpack.c.bf16 %v876, %v876
      %vm882 = vcmask 261120
      %v884 = vsel %vm882, %v657, 0
      %v887 = vsel %vm882, %v769, 0
      %889 = vmatprep.subr.bf16.mxu0 0
      %890 = vmatpush1.bf16.xpose.msra.mxu0 %v887
      %891 = vmatprep.subr.bf16.mxu0 0
      %892 = vmatpush1.bf16.xpose.msra.mxu0 0
      %893 = vmatprep.subr.bf16.mxu0 0
      %894 = vmatpush1.bf16.xpose.msra.mxu0 0
      %895 = vmatprep.subr.bf16.mxu0 0
      %896 = vmatpush1.bf16.xpose.msra.mxu0 0
      %897 = vmatprep.subr.bf16.mxu0 0
      %898 = vmatpush1.bf16.xpose.msra.mxu0 0
      %899 = vmatprep.subr.bf16.mxu0 0
      %900 = vmatpush1.bf16.xpose.msra.mxu0 0
      %901 = vmatprep.subr.bf16.mxu0 0
      %902 = vmatpush1.bf16.xpose.msra.mxu0 0
      %903 = vmatprep.subr.bf16.mxu0 0
      %904 = vmatpush1.bf16.xpose.msra.mxu0 0
      %905 = vmatprep.subr.bf16.mxu0 0
      %906 = vmatpush1.bf16.xpose.msra.mxu0 0
      %907 = vmatprep.subr.bf16.mxu0 0
      %908 = vmatpush1.bf16.xpose.msra.mxu0 0
      %909 = vmatprep.subr.bf16.mxu0 0
      %910 = vmatpush1.bf16.xpose.msra.mxu0 0
      %911 = vmatprep.subr.bf16.mxu0 0
      %912 = vmatpush1.bf16.xpose.msra.mxu0 0
      %913 = vmatprep.subr.bf16.mxu0 0
      %914 = vmatpush1.bf16.xpose.msra.mxu0 0
      %915 = vmatprep.subr.bf16.mxu0 0
      %916 = vmatpush1.bf16.xpose.msra.mxu0 0
      %917 = vmatprep.subr.bf16.mxu0 0
      %918 = vmatpush1.bf16.xpose.msra.mxu0 0
      %919 = vmatprep.subr.bf16.mxu0 0
      %920 = vmatpush1.bf16.xpose.msra.mxu0 0
      %921 = vmatprep.mubr.bf16.mxu0 0
      %922 = vmatmul.mubr.bf16.gmra.mrb[0].mxu0 %v884
      %v923 = vpop.f32.mrb[0].mxu0
      %v924 = vadd.f32 0.0, %v923
      %v925 = vpop.f32.mrb[0].mxu0
      %v926 = vpop.f32.mrb[0].mxu0
      %v927 = vpop.f32.mrb[0].mxu0
      %928 = vdwg.mxu0
      %v929 = vmul.f32 %v924, 0.17677669
      %vm930 = vcmask 64512
      %v931 = vsel %vm930, %v929, -inf
      %932 = vmax.xlane.f32.xlu0 %v931
      %v933 = vpop.xlane.xlu0 %932
      %v934 = vsub.f32 %v929, %v933
      %v935 = vmul.f32 %v934, 1.442695
      %v936 = vpow.pop %v935
      %v937 = vsel %vm930, %v936, 0.0
      %938 = vadd.xlane.f32.xlu0 %v937
      %v939 = vpop.xlane.xlu0 %938
      %v940 = vrcp.pop %v939
      %v941 = vmul.f32 %v936, %v940
      %v942 = vpack.c.bf16 %v941, %v941
      %v944 = vsel %vm930, %v942, 0
      %vm946 = vcmask 1043456
      %v948 = vsel %vm946, %v881, 0
      %950 = vmatprep.subr.bf16.mxu0 0
      %951 = vmatpush1.bf16.msra.mxu0 %v948
      %952 = vmatprep.subr.bf16.mxu0 0
      %953 = vmatpush1.bf16.msra.mxu0 0
      %954 = vmatprep.subr.bf16.mxu0 0
      %955 = vmatpush1.bf16.msra.mxu0 0
      %956 = vmatprep.subr.bf16.mxu0 0
      %957 = vmatpush1.bf16.msra.mxu0 0
      %958 = vmatprep.subr.bf16.mxu0 0
      %959 = vmatpush1.bf16.msra.mxu0 0
      %960 = vmatprep.subr.bf16.mxu0 0
      %961 = vmatpush1.bf16.msra.mxu0 0
      %962 = vmatprep.subr.bf16.mxu0 0
      %963 = vmatpush1.bf16.msra.mxu0 0
      %964 = vmatprep.subr.bf16.mxu0 0
      %965 = vmatpush1.bf16.msra.mxu0 0
      %966 = vmatprep.subr.bf16.mxu0 0
      %967 = vmatpush1.bf16.msra.mxu0 0
      %968 = vmatprep.subr.bf16.mxu0 0
      %969 = vmatpush1.bf16.msra.mxu0 0
      %970 = vmatprep.subr.bf16.mxu0 0
      %971 = vmatpush1.bf16.msra.mxu0 0
      %972 = vmatprep.subr.bf16.mxu0 0
      %973 = vmatpush1.bf16.msra.mxu0 0
      %974 = vmatprep.subr.bf16.mxu0 0
      %975 = vmatpush1.bf16.msra.mxu0 0
      %976 = vmatprep.subr.bf16.mxu0 0
      %977 = vmatpush1.bf16.msra.mxu0 0
      %978 = vmatprep.subr.bf16.mxu0 0
      %979 = vmatpush1.bf16.msra.mxu0 0
      %980 = vmatprep.subr.bf16.mxu0 0
      %981 = vmatpush1.bf16.msra.mxu0 0
      %982 = vmatprep.mubr.bf16.mxu0 0
      %983 = vmatmul.mubr.bf16.gmra.mrb[0].mxu0 %v944
      %v984 = vpop.f32.mrb[0].mxu0
      %v985 = vadd.f32 0.0, %v984
      %v986 = vpop.f32.mrb[0].mxu0
      %v987 = vpop.f32.mrb[0].mxu0
      %v988 = vpop.f32.mrb[0].mxu0
      %989 = vdwg.mxu0
      %991 = vrot.lane.b32.xlu0 %v657, 96
      %v992 = vpop.permute.xlu0 %991
      %994 = vrot.lane.b32.xlu0 %v769, 96
      %v995 = vpop.permute.xlu0 %994
      %v997 = vsel %vm882, %v992, 0
      %v1000 = vsel %vm882, %v995, 0
      %1002 = vmatprep.subr.bf16.mxu0 0
      %1003 = vmatpush1.bf16.xpose.msra.mxu0 %v1000
      %1004 = vmatprep.subr.bf16.mxu0 0
      %1005 = vmatpush1.bf16.xpose.msra.mxu0 0
      %1006 = vmatprep.subr.bf16.mxu0 0
      %1007 = vmatpush1.bf16.xpose.msra.mxu0 0
      %1008 = vmatprep.subr.bf16.mxu0 0
      %1009 = vmatpush1.bf16.xpose.msra.mxu0 0
      %1010 = vmatprep.subr.bf16.mxu0 0
      %1011 = vmatpush1.bf16.xpose.msra.mxu0 0
      %1012 = vmatprep.subr.bf16.mxu0 0
      %1013 = vmatpush1.bf16.xpose.msra.mxu0 0
      %1014 = vmatprep.subr.bf16.mxu0 0
      %1015 = vmatpush1.bf16.xpose.msra.mxu0 0
      %1016 = vmatprep.subr.bf16.mxu0 0
      %1017 = vmatpush1.bf16.xpose.msra.mxu0 0
      %1018 = vmatprep.subr.bf16.mxu0 0
      %1019 = vmatpush1.bf16.xpose.msra.mxu0 0
      %1020 = vmatprep.subr.bf16.mxu0 0
      %1021 = vmatpush1.bf16.xpose.msra.mxu0 0
      %1022 = vmatprep.subr.bf16.mxu0 0
      %1023 = vmatpush1.bf16.xpose.msra.mxu0 0
      %1024 = vmatprep.subr.bf16.mxu0 0
      %1025 = vmatpush1.bf16.xpose.msra.mxu0 0
      %1026 = vmatprep.subr.bf16.mxu0 0
      %1027 = vmatpush1.bf16.xpose.msra.mxu0 0
      %1028 = vmatprep.subr.bf16.mxu0 0
      %1029 = vmatpush1.bf16.xpose.msra.mxu0 0
      %1030 = vmatprep.subr.bf16.mxu0 0
      %1031 = vmatpush1.bf16.xpose.msra.mxu0 0
      %1032 = vmatprep.subr.bf16.mxu0 0
      %1033 = vmatpush1.bf16.xpose.msra.mxu0 0
      %1034 = vmatprep.mubr.bf16.mxu0 0
      %1035 = vmatmul.mubr.bf16.gmra.mrb[0].mxu0 %v997
      %v1036 = vpop.f32.mrb[0].mxu0
      %v1037 = vadd.f32 0.0, %v1036
      %v1038 = vpop.f32.mrb[0].mxu0
      %v1039 = vpop.f32.mrb[0].mxu0
      %v1040 = vpop.f32.mrb[0].mxu0
      %1041 = vdwg.mxu0
      %v1042 = vmul.f32 %v1037, 0.17677669
      %v1043 = vsel %vm930, %v1042, -inf
      %1044 = vmax.xlane.f32.xlu0 %v1043
      %v1045 = vpop.xlane.xlu0 %1044
      %v1046 = vsub.f32 %v1042, %v1045
      %v1047 = vmul.f32 %v1046, 1.442695
      %v1048 = vpow.pop %v1047
      %v1049 = vsel %vm930, %v1048, 0.0
      %1050 = vadd.xlane.f32.xlu0 %v1049
      %v1051 = vpop.xlane.xlu0 %1050
      %v1052 = vrcp.pop %v1051
      %v1053 = vmul.f32 %v1048, %v1052
      %v1054 = vpack.c.bf16 %v1053, %v1053
      %1056 = vrot.lane.b32.xlu0 %v881, 96
      %v1057 = vpop.permute.xlu0 %1056
      %v1059 = vsel %vm930, %v1054, 0
      %v1062 = vsel %vm946, %v1057, 0
      %1064 = vmatprep.subr.bf16.mxu0 0
      %1065 = vmatpush1.bf16.msra.mxu0 %v1062
      %1066 = vmatprep.subr.bf16.mxu0 0
      %1067 = vmatpush1.bf16.msra.mxu0 0
      %1068 = vmatprep.subr.bf16.mxu0 0
      %1069 = vmatpush1.bf16.msra.mxu0 0
      %1070 = vmatprep.subr.bf16.mxu0 0
      %1071 = vmatpush1.bf16.msra.mxu0 0
      %1072 = vmatprep.subr.bf16.mxu0 0
      %1073 = vmatpush1.bf16.msra.mxu0 0
      %1074 = vmatprep.subr.bf16.mxu0 0
      %1075 = vmatpush1.bf16.msra.mxu0 0
      %1076 = vmatprep.subr.bf16.mxu0 0
      %1077 = vmatpush1.bf16.msra.mxu0 0
      %1078 = vmatprep.subr.bf16.mxu0 0
      %1079 = vmatpush1.bf16.msra.mxu0 0
      %1080 = vmatprep.subr.bf16.mxu0 0
      %1081 = vmatpush1.bf16.msra.mxu0 0
      %1082 = vmatprep.subr.bf16.mxu0 0
      %1083 = vmatpush1.bf16.msra.mxu0 0
      %1084 = vmatprep.subr.bf16.mxu0 0
      %1085 = vmatpush1.bf16.msra.mxu0 0
      %1086 = vmatprep.subr.bf16.mxu0 0
      %1087 = vmatpush1.bf16.msra.mxu0 0
      %1088 = vmatprep.subr.bf16.mxu0 0
      %1089 = vmatpush1.bf16.msra.mxu0 0
      %1090 = vmatprep.subr.bf16.mxu0 0
      %1091 = vmatpush1.bf16.msra.mxu0 0
      %1092 = vmatprep.subr.bf16.mxu0 0
      %1093 = vmatpush1.bf16.msra.mxu0 0
      %1094 = vmatprep.subr.bf16.mxu0 0
      %1095 = vmatpush1.bf16.msra.mxu0 0
      %1096 = vmatprep.mubr.bf16.mxu0 0
      %1097 = vmatmul.mubr.bf16.gmra.mrb[0].mxu0 %v1059
      %v1098 = vpop.f32.mrb[0].mxu0
      %v1099 = vadd.f32 0.0, %v1098
      %v1100 = vpop.f32.mrb[0].mxu0
      %v1101 = vpop.f32.mrb[0].mxu0
      %v1102 = vpop.f32.mrb[0].mxu0
      %1103 = vdwg.mxu0
      %1104 = vrot.lane.b32.xlu0 %v657, 64
      %v1105 = vpop.permute.xlu0 %1104
      %1106 = vrot.lane.b32.xlu0 %v769, 64
      %v1107 = vpop.permute.xlu0 %1106
      %v1109 = vsel %vm882, %v1105, 0
      %v1112 = vsel %vm882, %v1107, 0
      %1114 = vmatprep.subr.bf16.mxu0 0
      %1115 = vmatpush1.bf16.xpose.msra.mxu0 %v1112
      %1116 = vmatprep.subr.bf16.mxu0 0
      %1117 = vmatpush1.bf16.xpose.msra.mxu0 0
      %1118 = vmatprep.subr.bf16.mxu0 0
      %1119 = vmatpush1.bf16.xpose.msra.mxu0 0
      %1120 = vmatprep.subr.bf16.mxu0 0
      %1121 = vmatpush1.bf16.xpose.msra.mxu0 0
      %1122 = vmatprep.subr.bf16.mxu0 0
      %1123 = vmatpush1.bf16.xpose.msra.mxu0 0
      %1124 = vmatprep.subr.bf16.mxu0 0
      %1125 = vmatpush1.bf16.xpose.msra.mxu0 0
      %1126 = vmatprep.subr.bf16.mxu0 0
      %1127 = vmatpush1.bf16.xpose.msra.mxu0 0
      %1128 = vmatprep.subr.bf16.mxu0 0
      %1129 = vmatpush1.bf16.xpose.msra.mxu0 0
      %1130 = vmatprep.subr.bf16.mxu0 0
      %1131 = vmatpush1.bf16.xpose.msra.mxu0 0
      %1132 = vmatprep.subr.bf16.mxu0 0
      %1133 = vmatpush1.bf16.xpose.msra.mxu0 0
      %1134 = vmatprep.subr.bf16.mxu0 0
      %1135 = vmatpush1.bf16.xpose.msra.mxu0 0
      %1136 = vmatprep.subr.bf16.mxu0 0
      %1137 = vmatpush1.bf16.xpose.msra.mxu0 0
      %1138 = vmatprep.subr.bf16.mxu0 0
      %1139 = vmatpush1.bf16.xpose.msra.mxu0 0
      %1140 = vmatprep.subr.bf16.mxu0 0
      %1141 = vmatpush1.bf16.xpose.msra.mxu0 0
      %1142 = vmatprep.subr.bf16.mxu0 0
      %1143 = vmatpush1.bf16.xpose.msra.mxu0 0
      %1144 = vmatprep.subr.bf16.mxu0 0
      %1145 = vmatpush1.bf16.xpose.msra.mxu0 0
      %1146 = vmatprep.mubr.bf16.mxu0 0
      %1147 = vmatmul.mubr.bf16.gmra.mrb[0].mxu0 %v1109
      %v1148 = vpop.f32.mrb[0].mxu0
      %v1149 = vadd.f32 0.0, %v1148
      %v1150 = vpop.f32.mrb[0].mxu0
      %v1151 = vpop.f32.mrb[0].mxu0
      %v1152 = vpop.f32.mrb[0].mxu0
      %1153 = vdwg.mxu0
      %v1154 = vmul.f32 %v1149, 0.17677669
      %v1155 = vsel %vm930, %v1154, -inf
      %1156 = vmax.xlane.f32.xlu0 %v1155
      %v1157 = vpop.xlane.xlu0 %1156
      %v1158 = vsub.f32 %v1154, %v1157
      %v1159 = vmul.f32 %v1158, 1.442695
      %v1160 = vpow.pop %v1159
      %v1161 = vsel %vm930, %v1160, 0.0
      %1162 = vadd.xlane.f32.xlu0 %v1161
      %v1163 = vpop.xlane.xlu0 %1162
      %v1164 = vrcp.pop %v1163
      %v1165 = vmul.f32 %v1160, %v1164
      %v1166 = vpack.c.bf16 %v1165, %v1165
      %1167 = vrot.lane.b32.xlu0 %v881, 64
      %v1168 = vpop.permute.xlu0 %1167
      %v1170 = vsel %vm930, %v1166, 0
      %v1173 = vsel %vm946, %v1168, 0
      %1175 = vmatprep.subr.bf16.mxu0 0
      %1176 = vmatpush1.bf16.msra.mxu0 %v1173
      %1177 = vmatprep.subr.bf16.mxu0 0
      %1178 = vmatpush1.bf16.msra.mxu0 0
      %1179 = vmatprep.subr.bf16.mxu0 0
      %1180 = vmatpush1.bf16.msra.mxu0 0
      %1181 = vmatprep.subr.bf16.mxu0 0
      %1182 = vmatpush1.bf16.msra.mxu0 0
      %1183 = vmatprep.subr.bf16.mxu0 0
      %1184 = vmatpush1.bf16.msra.mxu0 0
      %1185 = vmatprep.subr.bf16.mxu0 0
      %1186 = vmatpush1.bf16.msra.mxu0 0
      %1187 = vmatprep.subr.bf16.mxu0 0
      %1188 = vmatpush1.bf16.msra.mxu0 0
      %1189 = vmatprep.subr.bf16.mxu0 0
      %1190 = vmatpush1.bf16.msra.mxu0 0
      %1191 = vmatprep.subr.bf16.mxu0 0
      %1192 = vmatpush1.bf16.msra.mxu0 0
      %1193 = vmatprep.subr.bf16.mxu0 0
      %1194 = vmatpush1.bf16.msra.mxu0 0
      %1195 = vmatprep.subr.bf16.mxu0 0
      %1196 = vmatpush1.bf16.msra.mxu0 0
      %1197 = vmatprep.subr.bf16.mxu0 0
      %1198 = vmatpush1.bf16.msra.mxu0 0
      %1199 = vmatprep.subr.bf16.mxu0 0
      %1200 = vmatpush1.bf16.msra.mxu0 0
      %1201 = vmatprep.subr.bf16.mxu0 0
      %1202 = vmatpush1.bf16.msra.mxu0 0
      %1203 = vmatprep.subr.bf16.mxu0 0
      %1204 = vmatpush1.bf16.msra.mxu0 0
      %1205 = vmatprep.subr.bf16.mxu0 0
      %1206 = vmatpush1.bf16.msra.mxu0 0
      %1207 = vmatprep.mubr.bf16.mxu0 0
      %1208 = vmatmul.mubr.bf16.gmra.mrb[0].mxu0 %v1170
      %v1209 = vpop.f32.mrb[0].mxu0
      %v1210 = vadd.f32 0.0, %v1209
      %v1211 = vpop.f32.mrb[0].mxu0
      %v1212 = vpop.f32.mrb[0].mxu0
      %v1213 = vpop.f32.mrb[0].mxu0
      %1214 = vdwg.mxu0
      %1215 = vrot.lane.b32.xlu0 %v657, 32
      %v1216 = vpop.permute.xlu0 %1215
      %1217 = vrot.lane.b32.xlu0 %v769, 32
      %v1218 = vpop.permute.xlu0 %1217
      %v1220 = vsel %vm882, %v1216, 0
      %v1223 = vsel %vm882, %v1218, 0
      %1225 = vmatprep.subr.bf16.mxu0 0
      %1226 = vmatpush1.bf16.xpose.msra.mxu0 %v1223
      %1227 = vmatprep.subr.bf16.mxu0 0
      %1228 = vmatpush1.bf16.xpose.msra.mxu0 0
      %1229 = vmatprep.subr.bf16.mxu0 0
      %1230 = vmatpush1.bf16.xpose.msra.mxu0 0
      %1231 = vmatprep.subr.bf16.mxu0 0
      %1232 = vmatpush1.bf16.xpose.msra.mxu0 0
      %1233 = vmatprep.subr.bf16.mxu0 0
      %1234 = vmatpush1.bf16.xpose.msra.mxu0 0
      %1235 = vmatprep.subr.bf16.mxu0 0
      %1236 = vmatpush1.bf16.xpose.msra.mxu0 0
      %1237 = vmatprep.subr.bf16.mxu0 0
      %1238 = vmatpush1.bf16.xpose.msra.mxu0 0
      %1239 = vmatprep.subr.bf16.mxu0 0
      %1240 = vmatpush1.bf16.xpose.msra.mxu0 0
      %1241 = vmatprep.subr.bf16.mxu0 0
      %1242 = vmatpush1.bf16.xpose.msra.mxu0 0
      %1243 = vmatprep.subr.bf16.mxu0 0
      %1244 = vmatpush1.bf16.xpose.msra.mxu0 0
      %1245 = vmatprep.subr.bf16.mxu0 0
      %1246 = vmatpush1.bf16.xpose.msra.mxu0 0
      %1247 = vmatprep.subr.bf16.mxu0 0
      %1248 = vmatpush1.bf16.xpose.msra.mxu0 0
      %1249 = vmatprep.subr.bf16.mxu0 0
      %1250 = vmatpush1.bf16.xpose.msra.mxu0 0
      %1251 = vmatprep.subr.bf16.mxu0 0
      %1252 = vmatpush1.bf16.xpose.msra.mxu0 0
      %1253 = vmatprep.subr.bf16.mxu0 0
      %1254 = vmatpush1.bf16.xpose.msra.mxu0 0
      %1255 = vmatprep.subr.bf16.mxu0 0
      %1256 = vmatpush1.bf16.xpose.msra.mxu0 0
      %1257 = vmatprep.mubr.bf16.mxu0 0
      %1258 = vmatmul.mubr.bf16.gmra.mrb[0].mxu0 %v1220
      %v1259 = vpop.f32.mrb[0].mxu0
      %v1260 = vadd.f32 0.0, %v1259
      %v1261 = vpop.f32.mrb[0].mxu0
      %v1262 = vpop.f32.mrb[0].mxu0
      %v1263 = vpop.f32.mrb[0].mxu0
      %1264 = vdwg.mxu0
      %v1265 = vmul.f32 %v1260, 0.17677669
      %v1266 = vsel %vm930, %v1265, -inf
      %1267 = vmax.xlane.f32.xlu0 %v1266
      %v1268 = vpop.xlane.xlu0 %1267
      %v1269 = vsub.f32 %v1265, %v1268
      %v1270 = vmul.f32 %v1269, 1.442695
      %v1271 = vpow.pop %v1270
      %v1272 = vsel %vm930, %v1271, 0.0
      %1273 = vadd.xlane.f32.xlu0 %v1272
      %v1274 = vpop.xlane.xlu0 %1273
      %v1275 = vrcp.pop %v1274
      %v1276 = vmul.f32 %v1271, %v1275
      %v1277 = vpack.c.bf16 %v1276, %v1276
      %1278 = vrot.lane.b32.xlu0 %v881, 32
      %v1279 = vpop.permute.xlu0 %1278
      %v1281 = vsel %vm930, %v1277, 0
      %v1284 = vsel %vm946, %v1279, 0
      %1286 = vmatprep.subr.bf16.mxu0 0
      %1287 = vmatpush1.bf16.msra.mxu0 %v1284
      %1288 = vmatprep.subr.bf16.mxu0 0
      %1289 = vmatpush1.bf16.msra.mxu0 0
      %1290 = vmatprep.subr.bf16.mxu0 0
      %1291 = vmatpush1.bf16.msra.mxu0 0
      %1292 = vmatprep.subr.bf16.mxu0 0
      %1293 = vmatpush1.bf16.msra.mxu0 0
      %1294 = vmatprep.subr.bf16.mxu0 0
      %1295 = vmatpush1.bf16.msra.mxu0 0
      %1296 = vmatprep.subr.bf16.mxu0 0
      %1297 = vmatpush1.bf16.msra.mxu0 0
      %1298 = vmatprep.subr.bf16.mxu0 0
      %1299 = vmatpush1.bf16.msra.mxu0 0
      %1300 = vmatprep.subr.bf16.mxu0 0
      %1301 = vmatpush1.bf16.msra.mxu0 0
      %1302 = vmatprep.subr.bf16.mxu0 0
      %1303 = vmatpush1.bf16.msra.mxu0 0
      %1304 = vmatprep.subr.bf16.mxu0 0
      %1305 = vmatpush1.bf16.msra.mxu0 0
      %1306 = vmatprep.subr.bf16.mxu0 0
      %1307 = vmatpush1.bf16.msra.mxu0 0
      %1308 = vmatprep.subr.bf16.mxu0 0
      %1309 = vmatpush1.bf16.msra.mxu0 0
      %1310 = vmatprep.subr.bf16.mxu0 0
      %1311 = vmatpush1.bf16.msra.mxu0 0
      %1312 = vmatprep.subr.bf16.mxu0 0
      %1313 = vmatpush1.bf16.msra.mxu0 0
      %1314 = vmatprep.subr.bf16.mxu0 0
      %1315 = vmatpush1.bf16.msra.mxu0 0
      %1316 = vmatprep.subr.bf16.mxu0 0
      %1317 = vmatpush1.bf16.msra.mxu0 0
      %1318 = vmatprep.mubr.bf16.mxu0 0
      %1319 = vmatmul.mubr.bf16.gmra.mrb[0].mxu0 %v1281
      %v1320 = vpop.f32.mrb[0].mxu0
      %v1321 = vadd.f32 0.0, %v1320
      %v1322 = vpop.f32.mrb[0].mxu0
      %v1323 = vpop.f32.mrb[0].mxu0
      %v1324 = vpop.f32.mrb[0].mxu0
      %1325 = vdwg.mxu0
      %1327 = vrot.lane.b32.xlu0 %v1099, 32
      %v1328 = vpop.permute.xlu0 %1327
      %1331 = vrot.lane.b32.xlu0 %v1210, 64
      %v1332 = vpop.permute.xlu0 %1331
      %1335 = vrot.lane.b32.xlu0 %v1321, 96
      %v1336 = vpop.permute.xlu0 %1335
      %v1338 = vsel %vm882, %v985, %v1328
      %vm1339 = vcmask 523264
      %v1340 = vsel %vm1339, %v1338, %v1332
      %vm1341 = vcmask 785408
      %v1342 = vsel %vm1341, %v1340, %v1336
      %v1343 = vpack.c.bf16 %v1342, %v1342
      %v1344 = vld [vmem:[%s7] sm:$0xf]
      %v1345 = vld [vmem:[%s7 + $0x4] sm:$0xf]
      %v1346 = vld [vmem:[%s7 + $0x8] sm:$0xf]
      %v1347 = vld [vmem:[%s7 + $0xc] sm:$0xf]
      %v1348 = vld [vmem:[%s7 + $0x10] sm:$0xf]
      %v1349 = vld [vmem:[%s7 + $0x14] sm:$0xf]
      %v1350 = vld [vmem:[%s7 + $0x18] sm:$0xf]
      %v1351 = vld [vmem:[%s7 + $0x1c] sm:$0xf]
      %v1352 = vld [vmem:[%s7 + $0x20] sm:$0xf]
      %v1353 = vld [vmem:[%s7 + $0x24] sm:$0xf]
      %v1354 = vld [vmem:[%s7 + $0x28] sm:$0xf]
      %v1355 = vld [vmem:[%s7 + $0x2c] sm:$0xf]
      %v1356 = vld [vmem:[%s7 + $0x30] sm:$0xf]
      %v1357 = vld [vmem:[%s7 + $0x34] sm:$0xf]
      %v1358 = vld [vmem:[%s7 + $0x38] sm:$0xf]
      %v1359 = vld [vmem:[%s7 + $0x3c] sm:$0xf]
      %v1360 = vld [vmem:[%s8] sm:$0x1]
      %v1362 = vlaneseq
      %v1363 = vshrl.u32 %v1362, 7
      %v1364 = vsub.s32 0, %v1363
      %v1365 = vrot.slane %v1360, %v1364
      %v1383 = vunpack.c.l.b16 %v1344
      %v1384 = vunpack.c.l.b16 %v1345
      %v1385 = vunpack.c.l.b16 %v1346
      %v1386 = vunpack.c.l.b16 %v1347
      %v1387 = vunpack.c.l.b16 %v1348
      %v1388 = vunpack.c.l.b16 %v1349
      %v1389 = vunpack.c.l.b16 %v1350
      %v1390 = vunpack.c.l.b16 %v1351
      %v1391 = vunpack.c.l.b16 %v1352
      %v1392 = vunpack.c.l.b16 %v1353
      %v1393 = vunpack.c.l.b16 %v1354
      %v1394 = vunpack.c.l.b16 %v1355
      %v1395 = vunpack.c.l.b16 %v1356
      %v1396 = vunpack.c.l.b16 %v1357
      %v1397 = vunpack.c.l.b16 %v1358
      %v1398 = vunpack.c.l.b16 %v1359
      %v1399 = vpack.c.b16 %v1384, %v1383
      %v1400 = vpack.c.b16 %v1386, %v1385
      %v1401 = vpack.c.b16 %v1388, %v1387
      %v1402 = vpack.c.b16 %v1390, %v1389
      %v1403 = vpack.c.b16 %v1392, %v1391
      %v1404 = vpack.c.b16 %v1394, %v1393
      %v1405 = vpack.c.b16 %v1396, %v1395
      %v1406 = vpack.c.b16 %v1398, %v1397
      %1415 = vmatprep.subr.bf16.mxu0 0
      %1416 = vmatpush1.bf16.msra.mxu0 %v1399
      %1417 = vmatprep.subr.bf16.mxu0 0
      %1418 = vmatpush1.bf16.msra.mxu0 %v1400
      %1419 = vmatprep.subr.bf16.mxu0 0
      %1420 = vmatpush1.bf16.msra.mxu0 %v1401
      %1421 = vmatprep.subr.bf16.mxu0 0
      %1422 = vmatpush1.bf16.msra.mxu0 %v1402
      %1423 = vmatprep.subr.bf16.mxu0 0
      %1424 = vmatpush1.bf16.msra.mxu0 %v1403
      %1425 = vmatprep.subr.bf16.mxu0 0
      %1426 = vmatpush1.bf16.msra.mxu0 %v1404
      %1427 = vmatprep.subr.bf16.mxu0 0
      %1428 = vmatpush1.bf16.msra.mxu0 %v1405
      %1429 = vmatprep.subr.bf16.mxu0 0
      %1430 = vmatpush1.bf16.msra.mxu0 %v1406
      %1431 = vmatprep.subr.bf16.mxu0 0
      %1432 = vmatpush1.bf16.msra.mxu0 0
      %1433 = vmatprep.subr.bf16.mxu0 0
      %1434 = vmatpush1.bf16.msra.mxu0 0
      %1435 = vmatprep.subr.bf16.mxu0 0
      %1436 = vmatpush1.bf16.msra.mxu0 0
      %1437 = vmatprep.subr.bf16.mxu0 0
      %1438 = vmatpush1.bf16.msra.mxu0 0
      %1439 = vmatprep.subr.bf16.mxu0 0
      %1440 = vmatpush1.bf16.msra.mxu0 0
      %1441 = vmatprep.subr.bf16.mxu0 0
      %1442 = vmatpush1.bf16.msra.mxu0 0
      %1443 = vmatprep.subr.bf16.mxu0 0
      %1444 = vmatpush1.bf16.msra.mxu0 0
      %1445 = vmatprep.subr.bf16.mxu0 0
      %1446 = vmatpush1.bf16.msra.mxu0 0
      %1447 = vmatprep.mubr.bf16.mxu0 0
      %1448 = vmatmul.mubr.bf16.gmra.mrb[0].mxu0 %v1343
      %v1449 = vpop.f32.mrb[0].mxu0
      %v1450 = vadd.f32 %v1365, %v1449
      %v1451 = vpop.f32.mrb[0].mxu0
      %v1452 = vpop.f32.mrb[0].mxu0
      %v1453 = vpop.f32.mrb[0].mxu0
      %1454 = vdwg.mxu0
      %v1455 = vunpack.c.l.bf16 %v545
      %v1456 = vadd.f32 %v1455, %v1450
      %1457 = vadd.xlane.f32.xlu0 %v1456
      %v1458 = vpop.xlane.xlu0 %1457
      %v1459 = vrcp.pop 128.0
      %v1460 = vmul.f32 %v1458, %v1459
      %v1461 = vsub.f32 %v1456, %v1460
      %v1462 = vmul.f32 %v1461, %v1461
      %1463 = vadd.xlane.f32.xlu0 %v1462
      %v1464 = vpop.xlane.xlu0 %1463
      %v1465 = vmul.f32 %v1464, %v1459
      %v1466 = vadd.f32 %v1465, 1e-05
      %v1467 = vrsqrt.pop %v1466
      %v1468 = vmul.f32 %v1461, %v1467
      %v1469 = vld [vmem:[%s9] sm:$0x1]
      %v1471 = vlaneseq
      %v1472 = vshrl.u32 %v1471, 7
      %v1473 = vsub.s32 0, %v1472
      %v1474 = vrot.slane %v1469, %v1473
      %v1476 = vmul.f32 %v1468, %v1474
      %v1477 = vld [vmem:[%s10] sm:$0x1]
      %v1479 = vlaneseq
      %v1480 = vshrl.u32 %v1479, 7
      %v1481 = vsub.s32 0, %v1480
      %v1482 = vrot.slane %v1477, %v1481
      %v1484 = vadd.f32 %v1476, %v1482
      %v1485 = vpack.c.bf16 %v1484, %v1484
      %v1486 = vld [vmem:[%s11] sm:$0xff]
      %v1487 = vld [vmem:[%s11 + $0x8] sm:$0xff]
      %v1488 = vld [vmem:[%s11 + $0x10] sm:$0xff]
      %v1489 = vld [vmem:[%s11 + $0x18] sm:$0xff]
      %v1490 = vld [vmem:[%s11 + $0x20] sm:$0xff]
      %v1491 = vld [vmem:[%s11 + $0x28] sm:$0xff]
      %v1492 = vld [vmem:[%s11 + $0x30] sm:$0xff]
      %v1493 = vld [vmem:[%s11 + $0x38] sm:$0xff]
      %v1494 = vld [vmem:[%s11 + $0x40] sm:$0xff]
      %v1495 = vld [vmem:[%s11 + $0x48] sm:$0xff]
      %v1496 = vld [vmem:[%s11 + $0x50] sm:$0xff]
      %v1497 = vld [vmem:[%s11 + $0x58] sm:$0xff]
      %v1498 = vld [vmem:[%s11 + $0x60] sm:$0xff]
      %v1499 = vld [vmem:[%s11 + $0x68] sm:$0xff]
      %v1500 = vld [vmem:[%s11 + $0x70] sm:$0xff]
      %v1501 = vld [vmem:[%s11 + $0x78] sm:$0xff]
      %v1502 = vld [vmem:[%s12] sm:$0x3]
      %v1504 = vlaneseq
      %v1505 = vshrl.u32 %v1504, 7
      %v1506 = vsub.s32 0, %v1505
      %v1507 = vrot.slane %v1502, %v1506
      %v1508 = vlaneseq
      %v1509 = vshrl.u32 %v1508, 7
      %v1510 = vsub.s32 1, %v1509
      %v1511 = vrot.slane %v1502, %v1510
      %v1530 = vunpack.c.l.b16 %v1486
      %v1531 = vunpack.c.h.b16 %v1486
      %v1532 = vunpack.c.l.b16 %v1487
      %v1533 = vunpack.c.h.b16 %v1487
      %v1534 = vunpack.c.l.b16 %v1488
      %v1535 = vunpack.c.h.b16 %v1488
      %v1536 = vunpack.c.l.b16 %v1489
      %v1537 = vunpack.c.h.b16 %v1489
      %v1538 = vunpack.c.l.b16 %v1490
      %v1539 = vunpack.c.h.b16 %v1490
      %v1540 = vunpack.c.l.b16 %v1491
      %v1541 = vunpack.c.h.b16 %v1491
      %v1542 = vunpack.c.l.b16 %v1492
      %v1543 = vunpack.c.h.b16 %v1492
      %v1544 = vunpack.c.l.b16 %v1493
      %v1545 = vunpack.c.h.b16 %v1493
      %v1546 = vunpack.c.l.b16 %v1494
      %v1547 = vunpack.c.h.b16 %v1494
      %v1548 = vunpack.c.l.b16 %v1495
      %v1549 = vunpack.c.h.b16 %v1495
      %v1550 = vunpack.c.l.b16 %v1496
      %v1551 = vunpack.c.h.b16 %v1496
      %v1552 = vunpack.c.l.b16 %v1497
      %v1553 = vunpack.c.h.b16 %v1497
      %v1554 = vunpack.c.l.b16 %v1498
      %v1555 = vunpack.c.h.b16 %v1498
      %v1556 = vunpack.c.l.b16 %v1499
      %v1557 = vunpack.c.h.b16 %v1499
      %v1558 = vunpack.c.l.b16 %v1500
      %v1559 = vunpack.c.h.b16 %v1500
      %v1560 = vunpack.c.l.b16 %v1501
      %v1561 = vunpack.c.h.b16 %v1501
      %v1562 = vpack.c.b16 %v1532, %v1530
      %v1563 = vpack.c.b16 %v1533, %v1531
      %v1564 = vpack.c.b16 %v1536, %v1534
      %v1565 = vpack.c.b16 %v1537, %v1535
      %v1566 = vpack.c.b16 %v1540, %v1538
      %v1567 = vpack.c.b16 %v1541, %v1539
      %v1568 = vpack.c.b16 %v1544, %v1542
      %v1569 = vpack.c.b16 %v1545, %v1543
      %v1570 = vpack.c.b16 %v1548, %v1546
      %v1571 = vpack.c.b16 %v1549, %v1547
      %v1572 = vpack.c.b16 %v1552, %v1550
      %v1573 = vpack.c.b16 %v1553, %v1551
      %v1574 = vpack.c.b16 %v1556, %v1554
      %v1575 = vpack.c.b16 %v1557, %v1555
      %v1576 = vpack.c.b16 %v1560, %v1558
      %v1577 = vpack.c.b16 %v1561, %v1559
      %1594 = vmatprep.subr.bf16.mxu0 %v1563
      %1595 = vmatpush1.bf16.msra.mxu0 %v1562
      %1596 = vmatprep.subr.bf16.mxu0 %v1565
      %1597 = vmatpush1.bf16.msra.mxu0 %v1564
      %1598 = vmatprep.subr.bf16.mxu0 %v1567
      %1599 = vmatpush1.bf16.msra.mxu0 %v1566
      %1600 = vmatprep.subr.bf16.mxu0 %v1569
      %1601 = vmatpush1.bf16.msra.mxu0 %v1568
      %1602 = vmatprep.subr.bf16.mxu0 %v1571
      %1603 = vmatpush1.bf16.msra.mxu0 %v1570
      %1604 = vmatprep.subr.bf16.mxu0 %v1573
      %1605 = vmatpush1.bf16.msra.mxu0 %v1572
      %1606 = vmatprep.subr.bf16.mxu0 %v1575
      %1607 = vmatpush1.bf16.msra.mxu0 %v1574
      %1608 = vmatprep.subr.bf16.mxu0 %v1577
      %1609 = vmatpush1.bf16.msra.mxu0 %v1576
      %1610 = vmatprep.subr.bf16.mxu0 0
      %1611 = vmatpush1.bf16.msra.mxu0 0
      %1612 = vmatprep.subr.bf16.mxu0 0
      %1613 = vmatpush1.bf16.msra.mxu0 0
      %1614 = vmatprep.subr.bf16.mxu0 0
      %1615 = vmatpush1.bf16.msra.mxu0 0
      %1616 = vmatprep.subr.bf16.mxu0 0
      %1617 = vmatpush1.bf16.msra.mxu0 0
      %1618 = vmatprep.subr.bf16.mxu0 0
      %1619 = vmatpush1.bf16.msra.mxu0 0
      %1620 = vmatprep.subr.bf16.mxu0 0
      %1621 = vmatpush1.bf16.msra.mxu0 0
      %1622 = vmatprep.subr.bf16.mxu0 0
      %1623 = vmatpush1.bf16.msra.mxu0 0
      %1624 = vmatprep.subr.bf16.mxu0 0
      %1625 = vmatpush1.bf16.msra.mxu0 0
      %1626 = vmatprep.mubr.bf16.mxu0 0
      %1627 = vmatmul.mubr.bf16.gmra.mrb[0].mxu0 %v1485
      %v1628 = vpop.f32.mrb[0].mxu0
      %v1629 = vadd.f32 %v1507, %v1628
      %v1630 = vpop.f32.mrb[0].mxu0
      %v1631 = vadd.f32 %v1511, %v1630
      %v1632 = vpop.f32.mrb[0].mxu0
      %v1633 = vpop.f32.mrb[0].mxu0
      %1634 = vdwg.mxu0
      %v1635 = vmax.f32 %v1629, 0.0
      %v1636 = vmax.f32 %v1631, 0.0
      %v1637 = vpack.c.bf16 %v1635, %v1635
      %v1638 = vpack.c.bf16 %v1636, %v1636
      %v1639 = vld [vmem:[%s13] sm:$0xf]
      %v1640 = vld [vmem:[%s13 + $0x4] sm:$0xf]
      %v1641 = vld [vmem:[%s13 + $0x8] sm:$0xf]
      %v1642 = vld [vmem:[%s13 + $0xc] sm:$0xf]
      %v1643 = vld [vmem:[%s13 + $0x10] sm:$0xf]
      %v1644 = vld [vmem:[%s13 + $0x14] sm:$0xf]
      %v1645 = vld [vmem:[%s13 + $0x18] sm:$0xf]
      %v1646 = vld [vmem:[%s13 + $0x1c] sm:$0xf]
      %v1647 = vld [vmem:[%s13 + $0x20] sm:$0xf]
      %v1648 = vld [vmem:[%s13 + $0x24] sm:$0xf]
      %v1649 = vld [vmem:[%s13 + $0x28] sm:$0xf]
      %v1650 = vld [vmem:[%s13 + $0x2c] sm:$0xf]
      %v1651 = vld [vmem:[%s13 + $0x30] sm:$0xf]
      %v1652 = vld [vmem:[%s13 + $0x34] sm:$0xf]
      %v1653 = vld [vmem:[%s13 + $0x38] sm:$0xf]
      %v1654 = vld [vmem:[%s13 + $0x3c] sm:$0xf]
      %v1655 = vld [vmem:[%s13 + $0x40] sm:$0xf]
      %v1656 = vld [vmem:[%s13 + $0x44] sm:$0xf]
      %v1657 = vld [vmem:[%s13 + $0x48] sm:$0xf]
      %v1658 = vld [vmem:[%s13 + $0x4c] sm:$0xf]
      %v1659 = vld [vmem:[%s13 + $0x50] sm:$0xf]
      %v1660 = vld [vmem:[%s13 + $0x54] sm:$0xf]
      %v1661 = vld [vmem:[%s13 + $0x58] sm:$0xf]
      %v1662 = vld [vmem:[%s13 + $0x5c] sm:$0xf]
      %v1663 = vld [vmem:[%s13 + $0x60] sm:$0xf]
      %v1664 = vld [vmem:[%s13 + $0x64] sm:$0xf]
      %v1665 = vld [vmem:[%s13 + $0x68] sm:$0xf]
      %v1666 = vld [vmem:[%s13 + $0x6c] sm:$0xf]
      %v1667 = vld [vmem:[%s13 + $0x70] sm:$0xf]
      %v1668 = vld [vmem:[%s13 + $0x74] sm:$0xf]
      %v1669 = vld [vmem:[%s13 + $0x78] sm:$0xf]
      %v1670 = vld [vmem:[%s13 + $0x7c] sm:$0xf]
      %v1671 = vld [vmem:[%s14] sm:$0x1]
      %v1673 = vlaneseq
      %v1674 = vshrl.u32 %v1673, 7
      %v1675 = vsub.s32 0, %v1674
      %v1676 = vrot.slane %v1671, %v1675
      %v1710 = vunpack.c.l.b16 %v1639
      %v1711 = vunpack.c.l.b16 %v1640
      %v1712 = vunpack.c.l.b16 %v1641
      %v1713 = vunpack.c.l.b16 %v1642
      %v1714 = vunpack.c.l.b16 %v1643
      %v1715 = vunpack.c.l.b16 %v1644
      %v1716 = vunpack.c.l.b16 %v1645
      %v1717 = vunpack.c.l.b16 %v1646
      %v1718 = vunpack.c.l.b16 %v1647
      %v1719 = vunpack.c.l.b16 %v1648
      %v1720 = vunpack.c.l.b16 %v1649
      %v1721 = vunpack.c.l.b16 %v1650
      %v1722 = vunpack.c.l.b16 %v1651
      %v1723 = vunpack.c.l.b16 %v1652
      %v1724 = vunpack.c.l.b16 %v1653
      %v1725 = vunpack.c.l.b16 %v1654
      %v1726 = vunpack.c.l.b16 %v1655
      %v1727 = vunpack.c.l.b16 %v1656
      %v1728 = vunpack.c.l.b16 %v1657
      %v1729 = vunpack.c.l.b16 %v1658
      %v1730 = vunpack.c.l.b16 %v1659
      %v1731 = vunpack.c.l.b16 %v1660
      %v1732 = vunpack.c.l.b16 %v1661
      %v1733 = vunpack.c.l.b16 %v1662
      %v1734 = vunpack.c.l.b16 %v1663
      %v1735 = vunpack.c.l.b16 %v1664
      %v1736 = vunpack.c.l.b16 %v1665
      %v1737 = vunpack.c.l.b16 %v1666
      %v1738 = vunpack.c.l.b16 %v1667
      %v1739 = vunpack.c.l.b16 %v1668
      %v1740 = vunpack.c.l.b16 %v1669
      %v1741 = vunpack.c.l.b16 %v1670
      %v1742 = vpack.c.b16 %v1711, %v1710
      %v1743 = vpack.c.b16 %v1713, %v1712
      %v1744 = vpack.c.b16 %v1715, %v1714
      %v1745 = vpack.c.b16 %v1717, %v1716
      %v1746 = vpack.c.b16 %v1719, %v1718
      %v1747 = vpack.c.b16 %v1721, %v1720
      %v1748 = vpack.c.b16 %v1723, %v1722
      %v1749 = vpack.c.b16 %v1725, %v1724
      %v1750 = vpack.c.b16 %v1727, %v1726
      %v1751 = vpack.c.b16 %v1729, %v1728
      %v1752 = vpack.c.b16 %v1731, %v1730
      %v1753 = vpack.c.b16 %v1733, %v1732
      %v1754 = vpack.c.b16 %v1735, %v1734
      %v1755 = vpack.c.b16 %v1737, %v1736
      %v1756 = vpack.c.b16 %v1739, %v1738
      %v1757 = vpack.c.b16 %v1741, %v1740
      %1774 = vmatprep.subr.bf16.mxu0 0
      %1775 = vmatpush1.bf16.msra.mxu0 %v1742
      %1776 = vmatprep.subr.bf16.mxu0 0
      %1777 = vmatpush1.bf16.msra.mxu0 %v1743
      %1778 = vmatprep.subr.bf16.mxu0 0
      %1779 = vmatpush1.bf16.msra.mxu0 %v1744
      %1780 = vmatprep.subr.bf16.mxu0 0
      %1781 = vmatpush1.bf16.msra.mxu0 %v1745
      %1782 = vmatprep.subr.bf16.mxu0 0
      %1783 = vmatpush1.bf16.msra.mxu0 %v1746
      %1784 = vmatprep.subr.bf16.mxu0 0
      %1785 = vmatpush1.bf16.msra.mxu0 %v1747
      %1786 = vmatprep.subr.bf16.mxu0 0
      %1787 = vmatpush1.bf16.msra.mxu0 %v1748
      %1788 = vmatprep.subr.bf16.mxu0 0
      %1789 = vmatpush1.bf16.msra.mxu0 %v1749
      %1790 = vmatprep.subr.bf16.mxu0 0
      %1791 = vmatpush1.bf16.msra.mxu0 %v1750
      %1792 = vmatprep.subr.bf16.mxu0 0
      %1793 = vmatpush1.bf16.msra.mxu0 %v1751
      %1794 = vmatprep.subr.bf16.mxu0 0
      %1795 = vmatpush1.bf16.msra.mxu0 %v1752
      %1796 = vmatprep.subr.bf16.mxu0 0
      %1797 = vmatpush1.bf16.msra.mxu0 %v1753
      %1798 = vmatprep.subr.bf16.mxu0 0
      %1799 = vmatpush1.bf16.msra.mxu0 %v1754
      %1800 = vmatprep.subr.bf16.mxu0 0
      %1801 = vmatpush1.bf16.msra.mxu0 %v1755
      %1802 = vmatprep.subr.bf16.mxu0 0
      %1803 = vmatpush1.bf16.msra.mxu0 %v1756
      %1804 = vmatprep.subr.bf16.mxu0 0
      %1805 = vmatpush1.bf16.msra.mxu0 %v1757
      %1806 = vmatprep.mubr.bf16.mxu0 %v1638
      %1807 = vmatmul.mubr.bf16.gmra.mrb[0].mxu0 %v1637
      %v1808 = vpop.f32.mrb[0].mxu0
      %v1809 = vadd.f32 %v1676, %v1808
      %v1810 = vpop.f32.mrb[0].mxu0
      %v1811 = vpop.f32.mrb[0].mxu0
      %v1812 = vpop.f32.mrb[0].mxu0
      %1813 = vdwg.mxu0
      %v1814 = vadd.f32 %v1484, %v1809
      %1815 = vadd.xlane.f32.xlu0 %v1814
      %v1816 = vpop.xlane.xlu0 %1815
      %v1817 = vmul.f32 %v1816, %v1459
      %v1818 = vsub.f32 %v1814, %v1817
      %v1819 = vmul.f32 %v1818, %v1818
      %1820 = vadd.xlane.f32.xlu0 %v1819
      %v1821 = vpop.xlane.xlu0 %1820
      %v1822 = vmul.f32 %v1821, %v1459
      %v1823 = vadd.f32 %v1822, 1e-05
      %v1824 = vrsqrt.pop %v1823
      %v1825 = vmul.f32 %v1818, %v1824
      %v1826 = vld [vmem:[%s15] sm:$0x1]
      %v1828 = vlaneseq
      %v1829 = vshrl.u32 %v1828, 7
      %v1830 = vsub.s32 0, %v1829
      %v1831 = vrot.slane %v1826, %v1830
      %v1833 = vmul.f32 %v1825, %v1831
      %v1834 = vld [vmem:[%s16] sm:$0x1]
      %v1836 = vlaneseq
      %v1837 = vshrl.u32 %v1836, 7
      %v1838 = vsub.s32 0, %v1837
      %v1839 = vrot.slane %v1834, %v1838
      %v1841 = vadd.f32 %v1833, %v1839
      %v1842 = vpack.c.bf16 %v1841, %v1841
      %1843 = vst [vmem:[%s543] sm:$0xf] %v1842
      %p1844 = scmp.lt.s32.totalorder %s28, 3
      %s1845 = scalar_select %p1844, %s28, 3
      %s1846 = smul.addr %s1845, 4
      %s1847 = scalar_lea.vmem %s17, %s1846
      // Predicated region
      $region89: #{_lambda_.16} parent=87 // pred_check
        %p1848 = pneg %p408
      $region90: #{_lambda_.16} parent=87 // pred_check_branch
        %1850 = sbr.rel (%p1848) target = $region92
      $region91: #{_lambda_.16} parent=87 // pred_region
        _
      $region92: #{_lambda_.16} parent=87 // pred_fallthru
        _
    $region88: #{_lambda_.16} parent=5 // pred_fallthru
      _
    %p1851 = scmp.le.s32.totalorder 2, %s23
    // Predicated region
    $region93: #{_lambda_.16} parent=5 // pred_check
      %p1852 = pneg %p1851
    $region94: #{_lambda_.16} parent=5 // pred_check_branch
      %1854 = sbr.rel (%p1852) target = $region96
    $region95: #{_lambda_.16} parent=5 // pred_region
      %s1855 = ssub.s32 %s23, 2
      // Predicated region
      $region97: #{_lambda_.16} parent=95 // pred_check
        %p1856 = pneg %p414
      $region98: #{_lambda_.16} parent=95 // pred_check_branch
        %1858 = sbr.rel (%p1856) target = $region100
      $region99: #{_lambda_.16} parent=95 // pred_region
        %p1859 = scmp.lt.s32.totalorder %s29, 3
        %s1860 = scalar_select %p1859, %s29, 3
        %s1861 = smul.addr %s1860, 4
        %s1862 = scalar_lea.vmem %s17, %s1861
      $region100: #{_lambda_.16} parent=95 // pred_fallthru
        _
    $region96: #{_lambda_.16} parent=5 // pred_fallthru
      _
  $region6: #{_lambda_.16} parent=0 // loop_footer
    %s27 = sadd.s32 1, %s23
  $region7: #{_lambda_.16} parent=0 // loop_footer_branch
    %22 = sbr.rel target = $region3
  $region8: #{_lambda_.16} parent=0 // loop_exit
    _

// kernel: _lambda_.18
$region0: #{_lambda_.18}
  #allocation0 [shape = 'u32[]', space=smem, size = 0x4, offset = 0x4, fixed_abs, tag = 'smem constant byte address 0x4 - core index']
  #allocation1 [shape = 'u32[144,128]{1,0:T(1,128)}', space=vmem, size = 0x12000, scoped, tag = 'internal scratch']
  %s0 = inlined_call_operand.vmem [shape: bf16[2,8,128], index: 0, kind: input, shape index: {}]
  %s1 = inlined_call_operand.vmem [shape: bf16[2,8,128], index: 1, kind: input, shape index: {}]
  %s2 = inlined_call_operand.vmem [shape: bf16[2,8,128], index: 2, kind: input, shape index: {}]
  %s3 = inlined_call_operand.vmem [shape: bf16[128,128], index: 3, kind: input, shape index: {}]
  %s4 = inlined_call_operand.vmem [shape: bf16[128,128], index: 4, kind: input, shape index: {}]
  %s5 = inlined_call_operand.vmem [shape: bf16[128,128], index: 5, kind: input, shape index: {}]
  %s6 = inlined_call_operand.vmem [shape: f32[1,128], index: 6, kind: input, shape index: {}]
  %s7 = inlined_call_operand.vmem [shape: f32[1,128], index: 7, kind: input, shape index: {}]
  %s8 = inlined_call_operand.vmem [shape: f32[1,128], index: 8, kind: input, shape index: {}]
  %s9 = inlined_call_operand.vmem [shape: bf16[128,128], index: 9, kind: input, shape index: {}]
  %s10 = inlined_call_operand.vmem [shape: f32[1,128], index: 10, kind: input, shape index: {}]
  %s11 = inlined_call_operand.hbm [shape: f32[1,128], index: 11, kind: input, shape index: {}]
  %s12 = inlined_call_operand.hbm [shape: f32[1,128], index: 12, kind: input, shape index: {}]
  %s13 = inlined_call_operand.vmem [shape: bf16[2,8,128], index: 13, kind: output, shape index: {}]
  %s14 = sld [smem:[#allocation0]]
  $region93: #{_lambda_.18} parent=0
    _
  %s16 = ssub.s32 1, %s14
  %s17 = scalar_select 0, %s16, %s14
  $region1: #{_lambda_.18} parent=0
    #allocation2 [shape = 'u8[512]{0}', space=vmem, size = 0x400, scoped, tag = 'input window, operand 11, single buffered']
    #allocation3 [shape = 's32[2]{0}', space=sflag, size = 0x8, scoped, tag = 'scoped memory for _lambda_.18']
    #allocation4 [shape = 'u8[512]{0}', space=vmem, size = 0x400, scoped, tag = 'input window, operand 12, single buffered']
    #allocation5 [shape = 's32[1]{0}', space=sflag, size = 0x4, scoped, tag = 'scoped memory for _lambda_.18']
    %18 = vsyncpa [#allocation3], 0
    %19 = vsyncpa [#allocation5], 0
    loop: start=0, step=1, limit=4
    $region2: #{_lambda_.18} parent=1 // loop_pre_header
      _
    $region3: #{_lambda_.18} parent=1 // loop_header
      %s21 = sphi 0, %s25
      %p22 = scmp.ge.s32.totalorder %s21, 4
      %s31 = sphi 0, %s33
      %s34 = sphi 0, %s31
      %s35 = sphi 0, %s34
      %s51 = sphi 0, %s35
      %s57 = sphi 0, %s59
      %s60 = sphi 0, %s57
      %s61 = sphi 0, %s60
      %s77 = sphi 0, %s61
      %s83 = sphi 0, %s85
      %s86 = sphi 0, %s83
      %s87 = sphi 0, %s86
      %s103 = sphi 0, %s87
      %s107 = sphi 0, %s107
      %s109 = sphi 0, %s107
      %s110 = sphi 0, %s109
      %s124 = sphi 0, %s110
      %s128 = sphi 0, %s128
      %s130 = sphi 0, %s128
      %s131 = sphi 0, %s130
      %s145 = sphi 0, %s131
      %s149 = sphi 0, %s149
      %s151 = sphi 0, %s149
      %s152 = sphi 0, %s151
      %s166 = sphi 0, %s152
      %s170 = sphi 0, %s170
      %s172 = sphi 0, %s170
      %s173 = sphi 0, %s172
      %s187 = sphi 0, %s173
      %s191 = sphi 0, %s191
      %s193 = sphi 0, %s191
      %s194 = sphi 0, %s193
      %s208 = sphi 0, %s194
      %s212 = sphi 0, %s212
      %s214 = sphi 0, %s212
      %s215 = sphi 0, %s214
      %s229 = sphi 0, %s215
      %s233 = sphi 0, %s233
      %s235 = sphi 0, %s233
      %s236 = sphi 0, %s235
      %s250 = sphi 0, %s236
      %s254 = sphi 0, %s254
      %s256 = sphi 0, %s254
      %s257 = sphi 0, %s256
      %s271 = sphi 0, %s257
      %s275 = sphi 0, %s275
      %s277 = sphi 0, %s275
      %s278 = sphi 0, %s277
      %s292 = sphi 0, %s278
      %s296 = sphi 0, %s296
      %s298 = sphi 0, %s296
      %s299 = sphi 0, %s298
      %s313 = sphi 0, %s299
      %s319 = sphi 0, %s321
      %s322 = sphi 0, %s319
      %s323 = sphi 0, %s322
      %s339 = sphi 0, %s323
    $region4: #{_lambda_.18} parent=1 // loop_header_branch
      %24 = sbr.rel (%p22) target = $region8
    $region5: #{_lambda_.18} parent=1 // loop_body
      %s26 = ssub.s32 %s21, 1
      %s27 = ssub.s32 %s21, 2
      %s28 = sadd.s32 %s21, 1
      %s29 = ssub.s32 %s21, %s28
      %p30 = scmp.eq.s32.totalorder %s29, 0
      %s32 = sadd.s32 %s31, 1
      %s33 = scalar_select %p30, %s31, %s32
      %p36 = pneg %p30
      %p37 = scmp.eq.s32.totalorder %s21, 1
      %p38 = por %p36, %p37
      %p39 = scmp.ne.s32.totalorder %s31, %s34
      %p40 = scmp.eq.s32.totalorder %s21, 0
      %p41 = por %p39, %p40
      %p42 = scmp.ne.s32.totalorder %s31, %s34
      %p43 = scmp.eq.s32.totalorder %s26, 1
      %p44 = por %p42, %p43
      %p45 = scmp.ne.s32.totalorder %s34, %s35
      %p46 = scmp.eq.s32.totalorder %s26, 0
      %p47 = por %p45, %p46
      %p48 = scmp.ne.s32.totalorder %s34, %s35
      %p49 = scmp.eq.s32.totalorder %s27, 1
      %p50 = por %p48, %p49
      %p52 = scmp.ne.s32.totalorder %s35, %s51
      %p53 = scmp.eq.s32.totalorder %s27, 0
      %p54 = por %p52, %p53
      %s55 = ssub.s32 %s21, %s28
      %p56 = scmp.eq.s32.totalorder %s55, 0
      %s58 = sadd.s32 %s57, 1
      %s59 = scalar_select %p56, %s57, %s58
      %p62 = pneg %p56
      %p63 = scmp.eq.s32.totalorder %s21, 1
      %p64 = por %p62, %p63
      %p65 = scmp.ne.s32.totalorder %s57, %s60
      %p66 = scmp.eq.s32.totalorder %s21, 0
      %p67 = por %p65, %p66
      %p68 = scmp.ne.s32.totalorder %s57, %s60
      %p69 = scmp.eq.s32.totalorder %s26, 1
      %p70 = por %p68, %p69
      %p71 = scmp.ne.s32.totalorder %s60, %s61
      %p72 = scmp.eq.s32.totalorder %s26, 0
      %p73 = por %p71, %p72
      %p74 = scmp.ne.s32.totalorder %s60, %s61
      %p75 = scmp.eq.s32.totalorder %s27, 1
      %p76 = por %p74, %p75
      %p78 = scmp.ne.s32.totalorder %s61, %s77
      %p79 = scmp.eq.s32.totalorder %s27, 0
      %p80 = por %p78, %p79
      %s81 = ssub.s32 %s21, %s28
      %p82 = scmp.eq.s32.totalorder %s81, 0
      %s84 = sadd.s32 %s83, 1
      %s85 = scalar_select %p82, %s83, %s84
      %p88 = pneg %p82
      %p89 = scmp.eq.s32.totalorder %s21, 1
      %p90 = por %p88, %p89
      %p91 = scmp.ne.s32.totalorder %s83, %s86
      %p92 = scmp.eq.s32.totalorder %s21, 0
      %p93 = por %p91, %p92
      %p94 = scmp.ne.s32.totalorder %s83, %s86
      %p95 = scmp.eq.s32.totalorder %s26, 1
      %p96 = por %p94, %p95
      %p97 = scmp.ne.s32.totalorder %s86, %s87
      %p98 = scmp.eq.s32.totalorder %s26, 0
      %p99 = por %p97, %p98
      %p100 = scmp.ne.s32.totalorder %s86, %s87
      %p101 = scmp.eq.s32.totalorder %s27, 1
      %p102 = por %p100, %p101
      %p104 = scmp.ne.s32.totalorder %s87, %s103
      %p105 = scmp.eq.s32.totalorder %s27, 0
      %p106 = por %p104, %p105
      %s108 = sadd.s32 %s107, 1
      %p111 = scmp.eq.s32.totalorder %s21, 1
      %p112 = scmp.ne.s32.totalorder %s107, %s109
      %p113 = scmp.eq.s32.totalorder %s21, 0
      %p114 = por %p112, %p113
      %p115 = scmp.ne.s32.totalorder %s107, %s109
      %p116 = scmp.eq.s32.totalorder %s26, 1
      %p117 = por %p115, %p116
      %p118 = scmp.ne.s32.totalorder %s109, %s110
      %p119 = scmp.eq.s32.totalorder %s26, 0
      %p120 = por %p118, %p119
      %p121 = scmp.ne.s32.totalorder %s109, %s110
      %p122 = scmp.eq.s32.totalorder %s27, 1
      %p123 = por %p121, %p122
      %p125 = scmp.ne.s32.totalorder %s110, %s124
      %p126 = scmp.eq.s32.totalorder %s27, 0
      %p127 = por %p125, %p126
      %s129 = sadd.s32 %s128, 1
      %p132 = scmp.eq.s32.totalorder %s21, 1
      %p133 = scmp.ne.s32.totalorder %s128, %s130
      %p134 = scmp.eq.s32.totalorder %s21, 0
      %p135 = por %p133, %p134
      %p136 = scmp.ne.s32.totalorder %s128, %s130
      %p137 = scmp.eq.s32.totalorder %s26, 1
      %p138 = por %p136, %p137
      %p139 = scmp.ne.s32.totalorder %s130, %s131
      %p140 = scmp.eq.s32.totalorder %s26, 0
      %p141 = por %p139, %p140
      %p142 = scmp.ne.s32.totalorder %s130, %s131
      %p143 = scmp.eq.s32.totalorder %s27, 1
      %p144 = por %p142, %p143
      %p146 = scmp.ne.s32.totalorder %s131, %s145
      %p147 = scmp.eq.s32.totalorder %s27, 0
      %p148 = por %p146, %p147
      %s150 = sadd.s32 %s149, 1
      %p153 = scmp.eq.s32.totalorder %s21, 1
      %p154 = scmp.ne.s32.totalorder %s149, %s151
      %p155 = scmp.eq.s32.totalorder %s21, 0
      %p156 = por %p154, %p155
      %p157 = scmp.ne.s32.totalorder %s149, %s151
      %p158 = scmp.eq.s32.totalorder %s26, 1
      %p159 = por %p157, %p158
      %p160 = scmp.ne.s32.totalorder %s151, %s152
      %p161 = scmp.eq.s32.totalorder %s26, 0
      %p162 = por %p160, %p161
      %p163 = scmp.ne.s32.totalorder %s151, %s152
      %p164 = scmp.eq.s32.totalorder %s27, 1
      %p165 = por %p163, %p164
      %p167 = scmp.ne.s32.totalorder %s152, %s166
      %p168 = scmp.eq.s32.totalorder %s27, 0
      %p169 = por %p167, %p168
      %s171 = sadd.s32 %s170, 1
      %p174 = scmp.eq.s32.totalorder %s21, 1
      %p175 = scmp.ne.s32.totalorder %s170, %s172
      %p176 = scmp.eq.s32.totalorder %s21, 0
      %p177 = por %p175, %p176
      %p178 = scmp.ne.s32.totalorder %s170, %s172
      %p179 = scmp.eq.s32.totalorder %s26, 1
      %p180 = por %p178, %p179
      %p181 = scmp.ne.s32.totalorder %s172, %s173
      %p182 = scmp.eq.s32.totalorder %s26, 0
      %p183 = por %p181, %p182
      %p184 = scmp.ne.s32.totalorder %s172, %s173
      %p185 = scmp.eq.s32.totalorder %s27, 1
      %p186 = por %p184, %p185
      %p188 = scmp.ne.s32.totalorder %s173, %s187
      %p189 = scmp.eq.s32.totalorder %s27, 0
      %p190 = por %p188, %p189
      %s192 = sadd.s32 %s191, 1
      %p195 = scmp.eq.s32.totalorder %s21, 1
      %p196 = scmp.ne.s32.totalorder %s191, %s193
      %p197 = scmp.eq.s32.totalorder %s21, 0
      %p198 = por %p196, %p197
      %p199 = scmp.ne.s32.totalorder %s191, %s193
      %p200 = scmp.eq.s32.totalorder %s26, 1
      %p201 = por %p199, %p200
      %p202 = scmp.ne.s32.totalorder %s193, %s194
      %p203 = scmp.eq.s32.totalorder %s26, 0
      %p204 = por %p202, %p203
      %p205 = scmp.ne.s32.totalorder %s193, %s194
      %p206 = scmp.eq.s32.totalorder %s27, 1
      %p207 = por %p205, %p206
      %p209 = scmp.ne.s32.totalorder %s194, %s208
      %p210 = scmp.eq.s32.totalorder %s27, 0
      %p211 = por %p209, %p210
      %s213 = sadd.s32 %s212, 1
      %p216 = scmp.eq.s32.totalorder %s21, 1
      %p217 = scmp.ne.s32.totalorder %s212, %s214
      %p218 = scmp.eq.s32.totalorder %s21, 0
      %p219 = por %p217, %p218
      %p220 = scmp.ne.s32.totalorder %s212, %s214
      %p221 = scmp.eq.s32.totalorder %s26, 1
      %p222 = por %p220, %p221
      %p223 = scmp.ne.s32.totalorder %s214, %s215
      %p224 = scmp.eq.s32.totalorder %s26, 0
      %p225 = por %p223, %p224
      %p226 = scmp.ne.s32.totalorder %s214, %s215
      %p227 = scmp.eq.s32.totalorder %s27, 1
      %p228 = por %p226, %p227
      %p230 = scmp.ne.s32.totalorder %s215, %s229
      %p231 = scmp.eq.s32.totalorder %s27, 0
      %p232 = por %p230, %p231
      %s234 = sadd.s32 %s233, 1
      %p237 = scmp.eq.s32.totalorder %s21, 1
      %p238 = scmp.ne.s32.totalorder %s233, %s235
      %p239 = scmp.eq.s32.totalorder %s21, 0
      %p240 = por %p238, %p239
      %p241 = scmp.ne.s32.totalorder %s233, %s235
      %p242 = scmp.eq.s32.totalorder %s26, 1
      %p243 = por %p241, %p242
      %p244 = scmp.ne.s32.totalorder %s235, %s236
      %p245 = scmp.eq.s32.totalorder %s26, 0
      %p246 = por %p244, %p245
      %p247 = scmp.ne.s32.totalorder %s235, %s236
      %p248 = scmp.eq.s32.totalorder %s27, 1
      %p249 = por %p247, %p248
      %p251 = scmp.ne.s32.totalorder %s236, %s250
      %p252 = scmp.eq.s32.totalorder %s27, 0
      %p253 = por %p251, %p252
      %s255 = sadd.s32 %s254, 1
      %p258 = scmp.eq.s32.totalorder %s21, 1
      %p259 = scmp.ne.s32.totalorder %s254, %s256
      %p260 = scmp.eq.s32.totalorder %s21, 0
      %p261 = por %p259, %p260
      %p262 = scmp.ne.s32.totalorder %s254, %s256
      %p263 = scmp.eq.s32.totalorder %s26, 1
      %p264 = por %p262, %p263
      %p265 = scmp.ne.s32.totalorder %s256, %s257
      %p266 = scmp.eq.s32.totalorder %s26, 0
      %p267 = por %p265, %p266
      %p268 = scmp.ne.s32.totalorder %s256, %s257
      %p269 = scmp.eq.s32.totalorder %s27, 1
      %p270 = por %p268, %p269
      %p272 = scmp.ne.s32.totalorder %s257, %s271
      %p273 = scmp.eq.s32.totalorder %s27, 0
      %p274 = por %p272, %p273
      %s276 = sadd.s32 %s275, 1
      %p279 = scmp.eq.s32.totalorder %s21, 1
      %p280 = scmp.ne.s32.totalorder %s275, %s277
      %p281 = scmp.eq.s32.totalorder %s21, 0
      %p282 = por %p280, %p281
      %p283 = scmp.ne.s32.totalorder %s275, %s277
      %p284 = scmp.eq.s32.totalorder %s26, 1
      %p285 = por %p283, %p284
      %p286 = scmp.ne.s32.totalorder %s277, %s278
      %p287 = scmp.eq.s32.totalorder %s26, 0
      %p288 = por %p286, %p287
      %p289 = scmp.ne.s32.totalorder %s277, %s278
      %p290 = scmp.eq.s32.totalorder %s27, 1
      %p291 = por %p289, %p290
      %p293 = scmp.ne.s32.totalorder %s278, %s292
      %p294 = scmp.eq.s32.totalorder %s27, 0
      %p295 = por %p293, %p294
      %s297 = sadd.s32 %s296, 1
      %p300 = scmp.eq.s32.totalorder %s21, 1
      %p301 = scmp.ne.s32.totalorder %s296, %s298
      %p302 = scmp.eq.s32.totalorder %s21, 0
      %p303 = por %p301, %p302
      %p304 = scmp.ne.s32.totalorder %s296, %s298
      %p305 = scmp.eq.s32.totalorder %s26, 1
      %p306 = por %p304, %p305
      %p307 = scmp.ne.s32.totalorder %s298, %s299
      %p308 = scmp.eq.s32.totalorder %s26, 0
      %p309 = por %p307, %p308
      %p310 = scmp.ne.s32.totalorder %s298, %s299
      %p311 = scmp.eq.s32.totalorder %s27, 1
      %p312 = por %p310, %p311
      %p314 = scmp.ne.s32.totalorder %s299, %s313
      %p315 = scmp.eq.s32.totalorder %s27, 0
      %p316 = por %p314, %p315
      %s317 = ssub.s32 %s21, %s28
      %p318 = scmp.eq.s32.totalorder %s317, 0
      %s320 = sadd.s32 %s319, 1
      %s321 = scalar_select %p318, %s319, %s320
      %p324 = pneg %p318
      %p325 = scmp.eq.s32.totalorder %s21, 1
      %p326 = por %p324, %p325
      %p327 = scmp.ne.s32.totalorder %s319, %s322
      %p328 = scmp.eq.s32.totalorder %s21, 0
      %p329 = por %p327, %p328
      %p330 = scmp.ne.s32.totalorder %s319, %s322
      %p331 = scmp.eq.s32.totalorder %s26, 1
      %p332 = por %p330, %p331
      %p333 = scmp.ne.s32.totalorder %s322, %s323
      %p334 = scmp.eq.s32.totalorder %s26, 0
      %p335 = por %p333, %p334
      %p336 = scmp.ne.s32.totalorder %s322, %s323
      %p337 = scmp.eq.s32.totalorder %s27, 1
      %p338 = por %p336, %p337
      %p340 = scmp.ne.s32.totalorder %s323, %s339
      %p341 = scmp.eq.s32.totalorder %s27, 0
      %p342 = por %p340, %p341
      %p343 = scmp.le.s32.totalorder 1, %s21
      %p344 = scmp.lt.s32.totalorder %s21, 3
      %p345 = pnand %p343, %p344
      %p346 = pneg %p345
      // Predicated region
      $region9: #{_lambda_.18} parent=5 // pred_check
        _
      $region10: #{_lambda_.18} parent=5 // pred_check_branch
        %348 = sbr.rel (%p345) target = $region12
      $region11: #{_lambda_.18} parent=5 // pred_region
        %s349 = ssub.s32 %s21, 1
        // Predicated region
        $region13: #{_lambda_.18} parent=11 // pred_check
          %p350 = pneg %p120
        $region14: #{_lambda_.18} parent=11 // pred_check_branch
          %352 = sbr.rel (%p350) target = $region16
        $region15: #{_lambda_.18} parent=11 // pred_region
          _
        $region16: #{_lambda_.18} parent=11 // pred_fallthru
          _
        // Predicated region
        $region17: #{_lambda_.18} parent=11 // pred_check
          %p353 = pneg %p141
        $region18: #{_lambda_.18} parent=11 // pred_check_branch
          %355 = sbr.rel (%p353) target = $region20
        $region19: #{_lambda_.18} parent=11 // pred_region
          _
        $region20: #{_lambda_.18} parent=11 // pred_fallthru
          _
        // Predicated region
        $region21: #{_lambda_.18} parent=11 // pred_check
          %p356 = pneg %p162
        $region22: #{_lambda_.18} parent=11 // pred_check_branch
          %358 = sbr.rel (%p356) target = $region24
        $region23: #{_lambda_.18} parent=11 // pred_region
          _
        $region24: #{_lambda_.18} parent=11 // pred_fallthru
          _
        // Predicated region
        $region25: #{_lambda_.18} parent=11 // pred_check
          %p359 = pneg %p183
        $region26: #{_lambda_.18} parent=11 // pred_check_branch
          %361 = sbr.rel (%p359) target = $region28
        $region27: #{_lambda_.18} parent=11 // pred_region
          _
        $region28: #{_lambda_.18} parent=11 // pred_fallthru
          _
        // Predicated region
        $region29: #{_lambda_.18} parent=11 // pred_check
          %p362 = pneg %p204
        $region30: #{_lambda_.18} parent=11 // pred_check_branch
          %364 = sbr.rel (%p362) target = $region32
        $region31: #{_lambda_.18} parent=11 // pred_region
          _
        $region32: #{_lambda_.18} parent=11 // pred_fallthru
          _
        // Predicated region
        $region33: #{_lambda_.18} parent=11 // pred_check
          %p365 = pneg %p225
        $region34: #{_lambda_.18} parent=11 // pred_check_branch
          %367 = sbr.rel (%p365) target = $region36
        $region35: #{_lambda_.18} parent=11 // pred_region
          _
        $region36: #{_lambda_.18} parent=11 // pred_fallthru
          _
        // Predicated region
        $region37: #{_lambda_.18} parent=11 // pred_check
          %p368 = pneg %p246
        $region38: #{_lambda_.18} parent=11 // pred_check_branch
          %370 = sbr.rel (%p368) target = $region40
        $region39: #{_lambda_.18} parent=11 // pred_region
          _
        $region40: #{_lambda_.18} parent=11 // pred_fallthru
          _
        // Predicated region
        $region41: #{_lambda_.18} parent=11 // pred_check
          %p371 = pneg %p267
        $region42: #{_lambda_.18} parent=11 // pred_check_branch
          %373 = sbr.rel (%p371) target = $region44
        $region43: #{_lambda_.18} parent=11 // pred_region
          _
        $region44: #{_lambda_.18} parent=11 // pred_fallthru
          _
        // Predicated region
        $region45: #{_lambda_.18} parent=11 // pred_check
          %p374 = pneg %p288
        $region46: #{_lambda_.18} parent=11 // pred_check_branch
          %376 = sbr.rel (%p374) target = $region48
        $region47: #{_lambda_.18} parent=11 // pred_region
          %s378 = ssub.s32 16, 16
          %379 = vsyncadd [#allocation3], %s378
          %s381 = sshll.u32 [#allocation2], 4
          %s382 = int_to_ptr.vmem [resolvable:$true] %s381
          %384 = dma.hbm_to_vmem [thread:$0]  %s11, 16, %s382, [#allocation3]
        $region48: #{_lambda_.18} parent=11 // pred_fallthru
          _
        // Predicated region
        $region49: #{_lambda_.18} parent=11 // pred_check
          %p385 = pneg %p309
        $region50: #{_lambda_.18} parent=11 // pred_check_branch
          %387 = sbr.rel (%p385) target = $region52
        $region51: #{_lambda_.18} parent=11 // pred_region
          %s389 = ssub.s32 16, 16
          %390 = vsyncadd [#allocation5], %s389
          %s392 = sshll.u32 [#allocation4], 4
          %s393 = int_to_ptr.vmem [resolvable:$true] %s392
          %395 = dma.hbm_to_vmem [thread:$0]  %s12, 16, %s393, [#allocation5]
        $region52: #{_lambda_.18} parent=11 // pred_fallthru
          _
      $region12: #{_lambda_.18} parent=5 // pred_fallthru
        _
      %p396 = scmp.lt.s32.totalorder %s21, 2
      // Predicated region
      $region53: #{_lambda_.18} parent=5 // pred_check
        %p397 = pneg %p396
      $region54: #{_lambda_.18} parent=5 // pred_check_branch
        %399 = sbr.rel (%p397) target = $region56
      $region55: #{_lambda_.18} parent=5 // pred_region
        // Predicated region
        $region57: #{_lambda_.18} parent=55 // pred_check
          %p400 = pneg %p41
        $region58: #{_lambda_.18} parent=55 // pred_check_branch
          %402 = sbr.rel (%p400) target = $region60
        $region59: #{_lambda_.18} parent=55 // pred_region
          %p403 = scmp.lt.s32.totalorder %s21, 1
          %s404 = scalar_select %p403, %s21, 1
          %s405 = smul.addr %s404, 4
          %s406 = scalar_lea.vmem %s0, %s405
        $region60: #{_lambda_.18} parent=55 // pred_fallthru
          _
        // Predicated region
        $region61: #{_lambda_.18} parent=55 // pred_check
          %p407 = pneg %p67
        $region62: #{_lambda_.18} parent=55 // pred_check_branch
          %409 = sbr.rel (%p407) target = $region64
        $region63: #{_lambda_.18} parent=55 // pred_region
          %p410 = scmp.lt.s32.totalorder %s21, 1
          %s411 = scalar_select %p410, %s21, 1
          %s412 = smul.addr %s411, 4
          %s413 = scalar_lea.vmem %s1, %s412
        $region64: #{_lambda_.18} parent=55 // pred_fallthru
          _
        // Predicated region
        $region65: #{_lambda_.18} parent=55 // pred_check
          %p414 = pneg %p93
        $region66: #{_lambda_.18} parent=55 // pred_check_branch
          %416 = sbr.rel (%p414) target = $region68
        $region67: #{_lambda_.18} parent=55 // pred_region
          %p417 = scmp.lt.s32.totalorder %s21, 1
          %s418 = scalar_select %p417, %s21, 1
          %s419 = smul.addr %s418, 4
          %s420 = scalar_lea.vmem %s2, %s419
        $region68: #{_lambda_.18} parent=55 // pred_fallthru
          _
      $region56: #{_lambda_.18} parent=5 // pred_fallthru
        _
      %p421 = scmp.le.s32.totalorder 1, %s21
      %p422 = scmp.lt.s32.totalorder %s21, 3
      %p423 = pnand %p421, %p422
      %p424 = pneg %p423
      // Predicated region
      $region69: #{_lambda_.18} parent=5 // pred_check
        _
      $region70: #{_lambda_.18} parent=5 // pred_check_branch
        %426 = sbr.rel (%p423) target = $region72
      $region71: #{_lambda_.18} parent=5 // pred_region
        %s427 = ssub.s32 %s21, 1
        // Predicated region
        $region73: #{_lambda_.18} parent=71 // pred_check
          %p428 = pneg %p288
        $region74: #{_lambda_.18} parent=71 // pred_check_branch
          %430 = sbr.rel (%p428) target = $region76
        $region75: #{_lambda_.18} parent=71 // pred_region
          %431 = dma.done [#allocation3], 16
        $region76: #{_lambda_.18} parent=71 // pred_fallthru
          _
        // Predicated region
        $region77: #{_lambda_.18} parent=71 // pred_check
          %p432 = pneg %p309
        $region78: #{_lambda_.18} parent=71 // pred_check_branch
          %434 = sbr.rel (%p432) target = $region80
        $region79: #{_lambda_.18} parent=71 // pred_region
          %435 = dma.done [#allocation5], 16
        $region80: #{_lambda_.18} parent=71 // pred_fallthru
          _
        %p436 = scmp.lt.s32.totalorder %s26, 1
        %s437 = scalar_select %p436, %s26, 1
        %s438 = smul.addr %s437, 4
        %s439 = scalar_lea.vmem %s0, %s438
        %p440 = pneg %p47
        %p441 = pneg %p44
        %p442 = scmp.lt.s32.totalorder %s26, 1
        %s443 = scalar_select %p442, %s26, 1
        %s444 = smul.addr %s443, 4
        %s445 = scalar_lea.vmem %s1, %s444
        %p446 = pneg %p73
        %p447 = pneg %p70
        %p448 = scmp.lt.s32.totalorder %s26, 1
        %s449 = scalar_select %p448, %s26, 1
        %s450 = smul.addr %s449, 4
        %s451 = scalar_lea.vmem %s2, %s450
        %p452 = pneg %p99
        %p453 = pneg %p96
        %p454 = pneg %p120
        %p455 = pneg %p117
        %p456 = pneg %p141
        %p457 = pneg %p138
        %p458 = pneg %p162
        %p459 = pneg %p159
        %p460 = pneg %p183
        %p461 = pneg %p180
        %p462 = pneg %p204
        %p463 = pneg %p201
        %p464 = pneg %p225
        %p465 = pneg %p222
        %p466 = pneg %p246
        %p467 = pneg %p243
        %p468 = pneg %p267
        %p469 = pneg %p264
        %p470 = pneg %p288
        %p471 = pneg %p285
        %p472 = pneg %p309
        %p473 = pneg %p306
        %p474 = pneg %p335
        %p475 = pneg %p332
        %p476 = scmp.lt.s32.totalorder %s26, 1
        %s477 = scalar_select %p476, %s26, 1
        %s478 = smul.addr %s477, 4
        %s479 = scalar_lea.vmem %s13, %s478
        %p480 = scmp.lt.s32.totalorder %s26, 1
        %s481 = scalar_select %p480, %s26, 1
        %s482 = smul.addr %s481, 4
        %s483 = scalar_lea.vmem %s0, %s482
        %p484 = scmp.lt.s32.totalorder %s26, 1
        %s485 = scalar_select %p484, %s26, 1
        %s486 = smul.addr %s485, 4
        %s487 = scalar_lea.vmem %s1, %s486
        %p488 = scmp.lt.s32.totalorder %s26, 1
        %s489 = scalar_select %p488, %s26, 1
        %s490 = smul.addr %s489, 4
        %s491 = scalar_lea.vmem %s2, %s490
        %p492 = scmp.lt.s32.totalorder %s26, 1
        %s493 = scalar_select %p492, %s26, 1
        %s494 = smul.addr %s493, 4
        %s495 = scalar_lea.vmem %s13, %s494
        %v497 = vld [vmem:[%s483] sm:$0xf]
        %v498 = vld [vmem:[%s487] sm:$0xf]
        %v499 = vld [vmem:[%s491] sm:$0xf]
        %v500 = vld [vmem:[%s3] sm:$0xf]
        %v501 = vld [vmem:[%s3 + $0x4] sm:$0xf]
        %v502 = vld [vmem:[%s3 + $0x8] sm:$0xf]
        %v503 = vld [vmem:[%s3 + $0xc] sm:$0xf]
        %v504 = vld [vmem:[%s3 + $0x10] sm:$0xf]
        %v505 = vld [vmem:[%s3 + $0x14] sm:$0xf]
        %v506 = vld [vmem:[%s3 + $0x18] sm:$0xf]
        %v507 = vld [vmem:[%s3 + $0x1c] sm:$0xf]
        %v508 = vld [vmem:[%s3 + $0x20] sm:$0xf]
        %v509 = vld [vmem:[%s3 + $0x24] sm:$0xf]
        %v510 = vld [vmem:[%s3 + $0x28] sm:$0xf]
        %v511 = vld [vmem:[%s3 + $0x2c] sm:$0xf]
        %v512 = vld [vmem:[%s3 + $0x30] sm:$0xf]
        %v513 = vld [vmem:[%s3 + $0x34] sm:$0xf]
        %v514 = vld [vmem:[%s3 + $0x38] sm:$0xf]
        %v515 = vld [vmem:[%s3 + $0x3c] sm:$0xf]
        %v516 = vld [vmem:[%s6] sm:$0x1]
        %v518 = vlaneseq
        %v519 = vshrl.u32 %v518, 7
        %v520 = vsub.s32 0, %v519
        %v521 = vrot.slane %v516, %v520
        %v539 = vunpack.c.l.b16 %v500
        %v540 = vunpack.c.l.b16 %v501
        %v541 = vunpack.c.l.b16 %v502
        %v542 = vunpack.c.l.b16 %v503
        %v543 = vunpack.c.l.b16 %v504
        %v544 = vunpack.c.l.b16 %v505
        %v545 = vunpack.c.l.b16 %v506
        %v546 = vunpack.c.l.b16 %v507
        %v547 = vunpack.c.l.b16 %v508
        %v548 = vunpack.c.l.b16 %v509
        %v549 = vunpack.c.l.b16 %v510
        %v550 = vunpack.c.l.b16 %v511
        %v551 = vunpack.c.l.b16 %v512
        %v552 = vunpack.c.l.b16 %v513
        %v553 = vunpack.c.l.b16 %v514
        %v554 = vunpack.c.l.b16 %v515
        %v555 = vpack.c.b16 %v540, %v539
        %v556 = vpack.c.b16 %v542, %v541
        %v557 = vpack.c.b16 %v544, %v543
        %v558 = vpack.c.b16 %v546, %v545
        %v559 = vpack.c.b16 %v548, %v547
        %v560 = vpack.c.b16 %v550, %v549
        %v561 = vpack.c.b16 %v552, %v551
        %v562 = vpack.c.b16 %v554, %v553
        %571 = vmatprep.subr.bf16.mxu0 0
        %572 = vmatpush1.bf16.msra.mxu0 %v555
        %573 = vmatprep.subr.bf16.mxu0 0
        %574 = vmatpush1.bf16.msra.mxu0 %v556
        %575 = vmatprep.subr.bf16.mxu0 0
        %576 = vmatpush1.bf16.msra.mxu0 %v557
        %577 = vmatprep.subr.bf16.mxu0 0
        %578 = vmatpush1.bf16.msra.mxu0 %v558
        %579 = vmatprep.subr.bf16.mxu0 0
        %580 = vmatpush1.bf16.msra.mxu0 %v559
        %581 = vmatprep.subr.bf16.mxu0 0
        %582 = vmatpush1.bf16.msra.mxu0 %v560
        %583 = vmatprep.subr.bf16.mxu0 0
        %584 = vmatpush1.bf16.msra.mxu0 %v561
        %585 = vmatprep.subr.bf16.mxu0 0
        %586 = vmatpush1.bf16.msra.mxu0 %v562
        %587 = vmatprep.subr.bf16.mxu0 0
        %588 = vmatpush1.bf16.msra.mxu0 0
        %589 = vmatprep.subr.bf16.mxu0 0
        %590 = vmatpush1.bf16.msra.mxu0 0
        %591 = vmatprep.subr.bf16.mxu0 0
        %592 = vmatpush1.bf16.msra.mxu0 0
        %593 = vmatprep.subr.bf16.mxu0 0
        %594 = vmatpush1.bf16.msra.mxu0 0
        %595 = vmatprep.subr.bf16.mxu0 0
        %596 = vmatpush1.bf16.msra.mxu0 0
        %597 = vmatprep.subr.bf16.mxu0 0
        %598 = vmatpush1.bf16.msra.mxu0 0
        %599 = vmatprep.subr.bf16.mxu0 0
        %600 = vmatpush1.bf16.msra.mxu0 0
        %601 = vmatprep.subr.bf16.mxu0 0
        %602 = vmatpush1.bf16.msra.mxu0 0
        %603 = vmatprep.mubr.bf16.mxu0 0
        %604 = vmatmul.mubr.bf16.gmra.mrb[0].mxu0 %v497
        %v605 = vpop.f32.mrb[0].mxu0
        %v606 = vadd.f32 %v521, %v605
        %v607 = vpop.f32.mrb[0].mxu0
        %v608 = vpop.f32.mrb[0].mxu0
        %v609 = vpop.f32.mrb[0].mxu0
        %610 = vdwg.mxu0
        %v611 = vpack.c.bf16 %v606, %v606
        %v612 = vld [vmem:[%s4] sm:$0xf]
        %v613 = vld [vmem:[%s4 + $0x4] sm:$0xf]
        %v614 = vld [vmem:[%s4 + $0x8] sm:$0xf]
        %v615 = vld [vmem:[%s4 + $0xc] sm:$0xf]
        %v616 = vld [vmem:[%s4 + $0x10] sm:$0xf]
        %v617 = vld [vmem:[%s4 + $0x14] sm:$0xf]
        %v618 = vld [vmem:[%s4 + $0x18] sm:$0xf]
        %v619 = vld [vmem:[%s4 + $0x1c] sm:$0xf]
        %v620 = vld [vmem:[%s4 + $0x20] sm:$0xf]
        %v621 = vld [vmem:[%s4 + $0x24] sm:$0xf]
        %v622 = vld [vmem:[%s4 + $0x28] sm:$0xf]
        %v623 = vld [vmem:[%s4 + $0x2c] sm:$0xf]
        %v624 = vld [vmem:[%s4 + $0x30] sm:$0xf]
        %v625 = vld [vmem:[%s4 + $0x34] sm:$0xf]
        %v626 = vld [vmem:[%s4 + $0x38] sm:$0xf]
        %v627 = vld [vmem:[%s4 + $0x3c] sm:$0xf]
        %v628 = vld [vmem:[%s7] sm:$0x1]
        %v630 = vlaneseq
        %v631 = vshrl.u32 %v630, 7
        %v632 = vsub.s32 0, %v631
        %v633 = vrot.slane %v628, %v632
        %v651 = vunpack.c.l.b16 %v612
        %v652 = vunpack.c.l.b16 %v613
        %v653 = vunpack.c.l.b16 %v614
        %v654 = vunpack.c.l.b16 %v615
        %v655 = vunpack.c.l.b16 %v616
        %v656 = vunpack.c.l.b16 %v617
        %v657 = vunpack.c.l.b16 %v618
        %v658 = vunpack.c.l.b16 %v619
        %v659 = vunpack.c.l.b16 %v620
        %v660 = vunpack.c.l.b16 %v621
        %v661 = vunpack.c.l.b16 %v622
        %v662 = vunpack.c.l.b16 %v623
        %v663 = vunpack.c.l.b16 %v624
        %v664 = vunpack.c.l.b16 %v625
        %v665 = vunpack.c.l.b16 %v626
        %v666 = vunpack.c.l.b16 %v627
        %v667 = vpack.c.b16 %v652, %v651
        %v668 = vpack.c.b16 %v654, %v653
        %v669 = vpack.c.b16 %v656, %v655
        %v670 = vpack.c.b16 %v658, %v657
        %v671 = vpack.c.b16 %v660, %v659
        %v672 = vpack.c.b16 %v662, %v661
        %v673 = vpack.c.b16 %v664, %v663
        %v674 = vpack.c.b16 %v666, %v665
        %683 = vmatprep.subr.bf16.mxu0 0
        %684 = vmatpush1.bf16.msra.mxu0 %v667
        %685 = vmatprep.subr.bf16.mxu0 0
        %686 = vmatpush1.bf16.msra.mxu0 %v668
        %687 = vmatprep.subr.bf16.mxu0 0
        %688 = vmatpush1.bf16.msra.mxu0 %v669
        %689 = vmatprep.subr.bf16.mxu0 0
        %690 = vmatpush1.bf16.msra.mxu0 %v670
        %691 = vmatprep.subr.bf16.mxu0 0
        %692 = vmatpush1.bf16.msra.mxu0 %v671
        %693 = vmatprep.subr.bf16.mxu0 0
        %694 = vmatpush1.bf16.msra.mxu0 %v672
        %695 = vmatprep.subr.bf16.mxu0 0
        %696 = vmatpush1.bf16.msra.mxu0 %v673
        %697 = vmatprep.subr.bf16.mxu0 0
        %698 = vmatpush1.bf16.msra.mxu0 %v674
        %699 = vmatprep.subr.bf16.mxu0 0
        %700 = vmatpush1.bf16.msra.mxu0 0
        %701 = vmatprep.subr.bf16.mxu0 0
        %702 = vmatpush1.bf16.msra.mxu0 0
        %703 = vmatprep.subr.bf16.mxu0 0
        %704 = vmatpush1.bf16.msra.mxu0 0
        %705 = vmatprep.subr.bf16.mxu0 0
        %706 = vmatpush1.bf16.msra.mxu0 0
        %707 = vmatprep.subr.bf16.mxu0 0
        %708 = vmatpush1.bf16.msra.mxu0 0
        %709 = vmatprep.subr.bf16.mxu0 0
        %710 = vmatpush1.bf16.msra.mxu0 0
        %711 = vmatprep.subr.bf16.mxu0 0
        %712 = vmatpush1.bf16.msra.mxu0 0
        %713 = vmatprep.subr.bf16.mxu0 0
        %714 = vmatpush1.bf16.msra.mxu0 0
        %715 = vmatprep.mubr.bf16.mxu0 0
        %716 = vmatmul.mubr.bf16.gmra.mrb[0].mxu0 %v498
        %v717 = vpop.f32.mrb[0].mxu0
        %v718 = vadd.f32 %v633, %v717
        %v719 = vpop.f32.mrb[0].mxu0
        %v720 = vpop.f32.mrb[0].mxu0
        %v721 = vpop.f32.mrb[0].mxu0
        %722 = vdwg.mxu0
        %v723 = vpack.c.bf16 %v718, %v718
        %v724 = vld [vmem:[%s5] sm:$0xf]
        %v725 = vld [vmem:[%s5 + $0x4] sm:$0xf]
        %v726 = vld [vmem:[%s5 + $0x8] sm:$0xf]
        %v727 = vld [vmem:[%s5 + $0xc] sm:$0xf]
        %v728 = vld [vmem:[%s5 + $0x10] sm:$0xf]
        %v729 = vld [vmem:[%s5 + $0x14] sm:$0xf]
        %v730 = vld [vmem:[%s5 + $0x18] sm:$0xf]
        %v731 = vld [vmem:[%s5 + $0x1c] sm:$0xf]
        %v732 = vld [vmem:[%s5 + $0x20] sm:$0xf]
        %v733 = vld [vmem:[%s5 + $0x24] sm:$0xf]
        %v734 = vld [vmem:[%s5 + $0x28] sm:$0xf]
        %v735 = vld [vmem:[%s5 + $0x2c] sm:$0xf]
        %v736 = vld [vmem:[%s5 + $0x30] sm:$0xf]
        %v737 = vld [vmem:[%s5 + $0x34] sm:$0xf]
        %v738 = vld [vmem:[%s5 + $0x38] sm:$0xf]
        %v739 = vld [vmem:[%s5 + $0x3c] sm:$0xf]
        %v740 = vld [vmem:[%s8] sm:$0x1]
        %v742 = vlaneseq
        %v743 = vshrl.u32 %v742, 7
        %v744 = vsub.s32 0, %v743
        %v745 = vrot.slane %v740, %v744
        %v763 = vunpack.c.l.b16 %v724
        %v764 = vunpack.c.l.b16 %v725
        %v765 = vunpack.c.l.b16 %v726
        %v766 = vunpack.c.l.b16 %v727
        %v767 = vunpack.c.l.b16 %v728
        %v768 = vunpack.c.l.b16 %v729
        %v769 = vunpack.c.l.b16 %v730
        %v770 = vunpack.c.l.b16 %v731
        %v771 = vunpack.c.l.b16 %v732
        %v772 = vunpack.c.l.b16 %v733
        %v773 = vunpack.c.l.b16 %v734
        %v774 = vunpack.c.l.b16 %v735
        %v775 = vunpack.c.l.b16 %v736
        %v776 = vunpack.c.l.b16 %v737
        %v777 = vunpack.c.l.b16 %v738
        %v778 = vunpack.c.l.b16 %v739
        %v779 = vpack.c.b16 %v764, %v763
        %v780 = vpack.c.b16 %v766, %v765
        %v781 = vpack.c.b16 %v768, %v767
        %v782 = vpack.c.b16 %v770, %v769
        %v783 = vpack.c.b16 %v772, %v771
        %v784 = vpack.c.b16 %v774, %v773
        %v785 = vpack.c.b16 %v776, %v775
        %v786 = vpack.c.b16 %v778, %v777
        %795 = vmatprep.subr.bf16.mxu0 0
        %796 = vmatpush1.bf16.msra.mxu0 %v779
        %797 = vmatprep.subr.bf16.mxu0 0
        %798 = vmatpush1.bf16.msra.mxu0 %v780
        %799 = vmatprep.subr.bf16.mxu0 0
        %800 = vmatpush1.bf16.msra.mxu0 %v781
        %801 = vmatprep.subr.bf16.mxu0 0
        %802 = vmatpush1.bf16.msra.mxu0 %v782
        %803 = vmatprep.subr.bf16.mxu0 0
        %804 = vmatpush1.bf16.msra.mxu0 %v783
        %805 = vmatprep.subr.bf16.mxu0 0
        %806 = vmatpush1.bf16.msra.mxu0 %v784
        %807 = vmatprep.subr.bf16.mxu0 0
        %808 = vmatpush1.bf16.msra.mxu0 %v785
        %809 = vmatprep.subr.bf16.mxu0 0
        %810 = vmatpush1.bf16.msra.mxu0 %v786
        %811 = vmatprep.subr.bf16.mxu0 0
        %812 = vmatpush1.bf16.msra.mxu0 0
        %813 = vmatprep.subr.bf16.mxu0 0
        %814 = vmatpush1.bf16.msra.mxu0 0
        %815 = vmatprep.subr.bf16.mxu0 0
        %816 = vmatpush1.bf16.msra.mxu0 0
        %817 = vmatprep.subr.bf16.mxu0 0
        %818 = vmatpush1.bf16.msra.mxu0 0
        %819 = vmatprep.subr.bf16.mxu0 0
        %820 = vmatpush1.bf16.msra.mxu0 0
        %821 = vmatprep.subr.bf16.mxu0 0
        %822 = vmatpush1.bf16.msra.mxu0 0
        %823 = vmatprep.subr.bf16.mxu0 0
        %824 = vmatpush1.bf16.msra.mxu0 0
        %825 = vmatprep.subr.bf16.mxu0 0
        %826 = vmatpush1.bf16.msra.mxu0 0
        %827 = vmatprep.mubr.bf16.mxu0 0
        %828 = vmatmul.mubr.bf16.gmra.mrb[0].mxu0 %v499
        %v829 = vpop.f32.mrb[0].mxu0
        %v830 = vadd.f32 %v745, %v829
        %v831 = vpop.f32.mrb[0].mxu0
        %v832 = vpop.f32.mrb[0].mxu0
        %v833 = vpop.f32.mrb[0].mxu0
        %834 = vdwg.mxu0
        %v835 = vpack.c.bf16 %v830, %v830
        %vm836 = vcmask 261120
        %v838 = vsel %vm836, %v611, 0
        %v841 = vsel %vm836, %v723, 0
        %843 = vmatprep.subr.bf16.mxu0 0
        %844 = vmatpush1.bf16.xpose.msra.mxu0 %v841
        %845 = vmatprep.subr.bf16.mxu0 0
        %846 = vmatpush1.bf16.xpose.msra.mxu0 0
        %847 = vmatprep.subr.bf16.mxu0 0
        %848 = vmatpush1.bf16.xpose.msra.mxu0 0
        %849 = vmatprep.subr.bf16.mxu0 0
        %850 = vmatpush1.bf16.xpose.msra.mxu0 0
        %851 = vmatprep.subr.bf16.mxu0 0
        %852 = vmatpush1.bf16.xpose.msra.mxu0 0
        %853 = vmatprep.subr.bf16.mxu0 0
        %854 = vmatpush1.bf16.xpose.msra.mxu0 0
        %855 = vmatprep.subr.bf16.mxu0 0
        %856 = vmatpush1.bf16.xpose.msra.mxu0 0
        %857 = vmatprep.subr.bf16.mxu0 0
        %858 = vmatpush1.bf16.xpose.msra.mxu0 0
        %859 = vmatprep.subr.bf16.mxu0 0
        %860 = vmatpush1.bf16.xpose.msra.mxu0 0
        %861 = vmatprep.subr.bf16.mxu0 0
        %862 = vmatpush1.bf16.xpose.msra.mxu0 0
        %863 = vmatprep.subr.bf16.mxu0 0
        %864 = vmatpush1.bf16.xpose.msra.mxu0 0
        %865 = vmatprep.subr.bf16.mxu0 0
        %866 = vmatpush1.bf16.xpose.msra.mxu0 0
        %867 = vmatprep.subr.bf16.mxu0 0
        %868 = vmatpush1.bf16.xpose.msra.mxu0 0
        %869 = vmatprep.subr.bf16.mxu0 0
        %870 = vmatpush1.bf16.xpose.msra.mxu0 0
        %871 = vmatprep.subr.bf16.mxu0 0
        %872 = vmatpush1.bf16.xpose.msra.mxu0 0
        %873 = vmatprep.subr.bf16.mxu0 0
        %874 = vmatpush1.bf16.xpose.msra.mxu0 0
        %875 = vmatprep.mubr.bf16.mxu0 0
        %876 = vmatmul.mubr.bf16.gmra.mrb[0].mxu0 %v838
        %v877 = vpop.f32.mrb[0].mxu0
        %v878 = vadd.f32 0.0, %v877
        %v879 = vpop.f32.mrb[0].mxu0
        %v880 = vpop.f32.mrb[0].mxu0
        %v881 = vpop.f32.mrb[0].mxu0
        %882 = vdwg.mxu0
        %v883 = vmul.f32 %v878, 0.17677669
        %vm884 = vcmask 64512
        %v885 = vsel %vm884, %v883, -inf
        %886 = vmax.xlane.f32.xlu0 %v885
        %v887 = vpop.xlane.xlu0 %886
        %v888 = vsub.f32 %v883, %v887
        %v889 = vmul.f32 %v888, 1.442695
        %v890 = vpow.pop %v889
        %v891 = vsel %vm884, %v890, 0.0
        %892 = vadd.xlane.f32.xlu0 %v891
        %v893 = vpop.xlane.xlu0 %892
        %v894 = vrcp.pop %v893
        %v895 = vmul.f32 %v890, %v894
        %v896 = vpack.c.bf16 %v895, %v895
        %v898 = vsel %vm884, %v896, 0
        %vm900 = vcmask 1043456
        %v902 = vsel %vm900, %v835, 0
        %904 = vmatprep.subr.bf16.mxu0 0
        %905 = vmatpush1.bf16.msra.mxu0 %v902
        %906 = vmatprep.subr.bf16.mxu0 0
        %907 = vmatpush1.bf16.msra.mxu0 0
        %908 = vmatprep.subr.bf16.mxu0 0
        %909 = vmatpush1.bf16.msra.mxu0 0
        %910 = vmatprep.subr.bf16.mxu0 0
        %911 = vmatpush1.bf16.msra.mxu0 0
        %912 = vmatprep.subr.bf16.mxu0 0
        %913 = vmatpush1.bf16.msra.mxu0 0
        %914 = vmatprep.subr.bf16.mxu0 0
        %915 = vmatpush1.bf16.msra.mxu0 0
        %916 = vmatprep.subr.bf16.mxu0 0
        %917 = vmatpush1.bf16.msra.mxu0 0
        %918 = vmatprep.subr.bf16.mxu0 0
        %919 = vmatpush1.bf16.msra.mxu0 0
        %920 = vmatprep.subr.bf16.mxu0 0
        %921 = vmatpush1.bf16.msra.mxu0 0
        %922 = vmatprep.subr.bf16.mxu0 0
        %923 = vmatpush1.bf16.msra.mxu0 0
        %924 = vmatprep.subr.bf16.mxu0 0
        %925 = vmatpush1.bf16.msra.mxu0 0
        %926 = vmatprep.subr.bf16.mxu0 0
        %927 = vmatpush1.bf16.msra.mxu0 0
        %928 = vmatprep.subr.bf16.mxu0 0
        %929 = vmatpush1.bf16.msra.mxu0 0
        %930 = vmatprep.subr.bf16.mxu0 0
        %931 = vmatpush1.bf16.msra.mxu0 0
        %932 = vmatprep.subr.bf16.mxu0 0
        %933 = vmatpush1.bf16.msra.mxu0 0
        %934 = vmatprep.subr.bf16.mxu0 0
        %935 = vmatpush1.bf16.msra.mxu0 0
        %936 = vmatprep.mubr.bf16.mxu0 0
        %937 = vmatmul.mubr.bf16.gmra.mrb[0].mxu0 %v898
        %v938 = vpop.f32.mrb[0].mxu0
        %v939 = vadd.f32 0.0, %v938
        %v940 = vpop.f32.mrb[0].mxu0
        %v941 = vpop.f32.mrb[0].mxu0
        %v942 = vpop.f32.mrb[0].mxu0
        %943 = vdwg.mxu0
        %945 = vrot.lane.b32.xlu0 %v611, 96
        %v946 = vpop.permute.xlu0 %945
        %948 = vrot.lane.b32.xlu0 %v723, 96
        %v949 = vpop.permute.xlu0 %948
        %v951 = vsel %vm836, %v946, 0
        %v954 = vsel %vm836, %v949, 0
        %956 = vmatprep.subr.bf16.mxu0 0
        %957 = vmatpush1.bf16.xpose.msra.mxu0 %v954
        %958 = vmatprep.subr.bf16.mxu0 0
        %959 = vmatpush1.bf16.xpose.msra.mxu0 0
        %960 = vmatprep.subr.bf16.mxu0 0
        %961 = vmatpush1.bf16.xpose.msra.mxu0 0
        %962 = vmatprep.subr.bf16.mxu0 0
        %963 = vmatpush1.bf16.xpose.msra.mxu0 0
        %964 = vmatprep.subr.bf16.mxu0 0
        %965 = vmatpush1.bf16.xpose.msra.mxu0 0
        %966 = vmatprep.subr.bf16.mxu0 0
        %967 = vmatpush1.bf16.xpose.msra.mxu0 0
        %968 = vmatprep.subr.bf16.mxu0 0
        %969 = vmatpush1.bf16.xpose.msra.mxu0 0
        %970 = vmatprep.subr.bf16.mxu0 0
        %971 = vmatpush1.bf16.xpose.msra.mxu0 0
        %972 = vmatprep.subr.bf16.mxu0 0
        %973 = vmatpush1.bf16.xpose.msra.mxu0 0
        %974 = vmatprep.subr.bf16.mxu0 0
        %975 = vmatpush1.bf16.xpose.msra.mxu0 0
        %976 = vmatprep.subr.bf16.mxu0 0
        %977 = vmatpush1.bf16.xpose.msra.mxu0 0
        %978 = vmatprep.subr.bf16.mxu0 0
        %979 = vmatpush1.bf16.xpose.msra.mxu0 0
        %980 = vmatprep.subr.bf16.mxu0 0
        %981 = vmatpush1.bf16.xpose.msra.mxu0 0
        %982 = vmatprep.subr.bf16.mxu0 0
        %983 = vmatpush1.bf16.xpose.msra.mxu0 0
        %984 = vmatprep.subr.bf16.mxu0 0
        %985 = vmatpush1.bf16.xpose.msra.mxu0 0
        %986 = vmatprep.subr.bf16.mxu0 0
        %987 = vmatpush1.bf16.xpose.msra.mxu0 0
        %988 = vmatprep.mubr.bf16.mxu0 0
        %989 = vmatmul.mubr.bf16.gmra.mrb[0].mxu0 %v951
        %v990 = vpop.f32.mrb[0].mxu0
        %v991 = vadd.f32 0.0, %v990
        %v992 = vpop.f32.mrb[0].mxu0
        %v993 = vpop.f32.mrb[0].mxu0
        %v994 = vpop.f32.mrb[0].mxu0
        %995 = vdwg.mxu0
        %v996 = vmul.f32 %v991, 0.17677669
        %v997 = vsel %vm884, %v996, -inf
        %998 = vmax.xlane.f32.xlu0 %v997
        %v999 = vpop.xlane.xlu0 %998
        %v1000 = vsub.f32 %v996, %v999
        %v1001 = vmul.f32 %v1000, 1.442695
        %v1002 = vpow.pop %v1001
        %v1003 = vsel %vm884, %v1002, 0.0
        %1004 = vadd.xlane.f32.xlu0 %v1003
        %v1005 = vpop.xlane.xlu0 %1004
        %v1006 = vrcp.pop %v1005
        %v1007 = vmul.f32 %v1002, %v1006
        %v1008 = vpack.c.bf16 %v1007, %v1007
        %1010 = vrot.lane.b32.xlu0 %v835, 96
        %v1011 = vpop.permute.xlu0 %1010
        %v1013 = vsel %vm884, %v1008, 0
        %v1016 = vsel %vm900, %v1011, 0
        %1018 = vmatprep.subr.bf16.mxu0 0
        %1019 = vmatpush1.bf16.msra.mxu0 %v1016
        %1020 = vmatprep.subr.bf16.mxu0 0
        %1021 = vmatpush1.bf16.msra.mxu0 0
        %1022 = vmatprep.subr.bf16.mxu0 0
        %1023 = vmatpush1.bf16.msra.mxu0 0
        %1024 = vmatprep.subr.bf16.mxu0 0
        %1025 = vmatpush1.bf16.msra.mxu0 0
        %1026 = vmatprep.subr.bf16.mxu0 0
        %1027 = vmatpush1.bf16.msra.mxu0 0
        %1028 = vmatprep.subr.bf16.mxu0 0
        %1029 = vmatpush1.bf16.msra.mxu0 0
        %1030 = vmatprep.subr.bf16.mxu0 0
        %1031 = vmatpush1.bf16.msra.mxu0 0
        %1032 = vmatprep.subr.bf16.mxu0 0
        %1033 = vmatpush1.bf16.msra.mxu0 0
        %1034 = vmatprep.subr.bf16.mxu0 0
        %1035 = vmatpush1.bf16.msra.mxu0 0
        %1036 = vmatprep.subr.bf16.mxu0 0
        %1037 = vmatpush1.bf16.msra.mxu0 0
        %1038 = vmatprep.subr.bf16.mxu0 0
        %1039 = vmatpush1.bf16.msra.mxu0 0
        %1040 = vmatprep.subr.bf16.mxu0 0
        %1041 = vmatpush1.bf16.msra.mxu0 0
        %1042 = vmatprep.subr.bf16.mxu0 0
        %1043 = vmatpush1.bf16.msra.mxu0 0
        %1044 = vmatprep.subr.bf16.mxu0 0
        %1045 = vmatpush1.bf16.msra.mxu0 0
        %1046 = vmatprep.subr.bf16.mxu0 0
        %1047 = vmatpush1.bf16.msra.mxu0 0
        %1048 = vmatprep.subr.bf16.mxu0 0
        %1049 = vmatpush1.bf16.msra.mxu0 0
        %1050 = vmatprep.mubr.bf16.mxu0 0
        %1051 = vmatmul.mubr.bf16.gmra.mrb[0].mxu0 %v1013
        %v1052 = vpop.f32.mrb[0].mxu0
        %v1053 = vadd.f32 0.0, %v1052
        %v1054 = vpop.f32.mrb[0].mxu0
        %v1055 = vpop.f32.mrb[0].mxu0
        %v1056 = vpop.f32.mrb[0].mxu0
        %1057 = vdwg.mxu0
        %1058 = vrot.lane.b32.xlu0 %v611, 64
        %v1059 = vpop.permute.xlu0 %1058
        %1060 = vrot.lane.b32.xlu0 %v723, 64
        %v1061 = vpop.permute.xlu0 %1060
        %v1063 = vsel %vm836, %v1059, 0
        %v1066 = vsel %vm836, %v1061, 0
        %1068 = vmatprep.subr.bf16.mxu0 0
        %1069 = vmatpush1.bf16.xpose.msra.mxu0 %v1066
        %1070 = vmatprep.subr.bf16.mxu0 0
        %1071 = vmatpush1.bf16.xpose.msra.mxu0 0
        %1072 = vmatprep.subr.bf16.mxu0 0
        %1073 = vmatpush1.bf16.xpose.msra.mxu0 0
        %1074 = vmatprep.subr.bf16.mxu0 0
        %1075 = vmatpush1.bf16.xpose.msra.mxu0 0
        %1076 = vmatprep.subr.bf16.mxu0 0
        %1077 = vmatpush1.bf16.xpose.msra.mxu0 0
        %1078 = vmatprep.subr.bf16.mxu0 0
        %1079 = vmatpush1.bf16.xpose.msra.mxu0 0
        %1080 = vmatprep.subr.bf16.mxu0 0
        %1081 = vmatpush1.bf16.xpose.msra.mxu0 0
        %1082 = vmatprep.subr.bf16.mxu0 0
        %1083 = vmatpush1.bf16.xpose.msra.mxu0 0
        %1084 = vmatprep.subr.bf16.mxu0 0
        %1085 = vmatpush1.bf16.xpose.msra.mxu0 0
        %1086 = vmatprep.subr.bf16.mxu0 0
        %1087 = vmatpush1.bf16.xpose.msra.mxu0 0
        %1088 = vmatprep.subr.bf16.mxu0 0
        %1089 = vmatpush1.bf16.xpose.msra.mxu0 0
        %1090 = vmatprep.subr.bf16.mxu0 0
        %1091 = vmatpush1.bf16.xpose.msra.mxu0 0
        %1092 = vmatprep.subr.bf16.mxu0 0
        %1093 = vmatpush1.bf16.xpose.msra.mxu0 0
        %1094 = vmatprep.subr.bf16.mxu0 0
        %1095 = vmatpush1.bf16.xpose.msra.mxu0 0
        %1096 = vmatprep.subr.bf16.mxu0 0
        %1097 = vmatpush1.bf16.xpose.msra.mxu0 0
        %1098 = vmatprep.subr.bf16.mxu0 0
        %1099 = vmatpush1.bf16.xpose.msra.mxu0 0
        %1100 = vmatprep.mubr.bf16.mxu0 0
        %1101 = vmatmul.mubr.bf16.gmra.mrb[0].mxu0 %v1063
        %v1102 = vpop.f32.mrb[0].mxu0
        %v1103 = vadd.f32 0.0, %v1102
        %v1104 = vpop.f32.mrb[0].mxu0
        %v1105 = vpop.f32.mrb[0].mxu0
        %v1106 = vpop.f32.mrb[0].mxu0
        %1107 = vdwg.mxu0
        %v1108 = vmul.f32 %v1103, 0.17677669
        %v1109 = vsel %vm884, %v1108, -inf
        %1110 = vmax.xlane.f32.xlu0 %v1109
        %v1111 = vpop.xlane.xlu0 %1110
        %v1112 = vsub.f32 %v1108, %v1111
        %v1113 = vmul.f32 %v1112, 1.442695
        %v1114 = vpow.pop %v1113
        %v1115 = vsel %vm884, %v1114, 0.0
        %1116 = vadd.xlane.f32.xlu0 %v1115
        %v1117 = vpop.xlane.xlu0 %1116
        %v1118 = vrcp.pop %v1117
        %v1119 = vmul.f32 %v1114, %v1118
        %v1120 = vpack.c.bf16 %v1119, %v1119
        %1121 = vrot.lane.b32.xlu0 %v835, 64
        %v1122 = vpop.permute.xlu0 %1121
        %v1124 = vsel %vm884, %v1120, 0
        %v1127 = vsel %vm900, %v1122, 0
        %1129 = vmatprep.subr.bf16.mxu0 0
        %1130 = vmatpush1.bf16.msra.mxu0 %v1127
        %1131 = vmatprep.subr.bf16.mxu0 0
        %1132 = vmatpush1.bf16.msra.mxu0 0
        %1133 = vmatprep.subr.bf16.mxu0 0
        %1134 = vmatpush1.bf16.msra.mxu0 0
        %1135 = vmatprep.subr.bf16.mxu0 0
        %1136 = vmatpush1.bf16.msra.mxu0 0
        %1137 = vmatprep.subr.bf16.mxu0 0
        %1138 = vmatpush1.bf16.msra.mxu0 0
        %1139 = vmatprep.subr.bf16.mxu0 0
        %1140 = vmatpush1.bf16.msra.mxu0 0
        %1141 = vmatprep.subr.bf16.mxu0 0
        %1142 = vmatpush1.bf16.msra.mxu0 0
        %1143 = vmatprep.subr.bf16.mxu0 0
        %1144 = vmatpush1.bf16.msra.mxu0 0
        %1145 = vmatprep.subr.bf16.mxu0 0
        %1146 = vmatpush1.bf16.msra.mxu0 0
        %1147 = vmatprep.subr.bf16.mxu0 0
        %1148 = vmatpush1.bf16.msra.mxu0 0
        %1149 = vmatprep.subr.bf16.mxu0 0
        %1150 = vmatpush1.bf16.msra.mxu0 0
        %1151 = vmatprep.subr.bf16.mxu0 0
        %1152 = vmatpush1.bf16.msra.mxu0 0
        %1153 = vmatprep.subr.bf16.mxu0 0
        %1154 = vmatpush1.bf16.msra.mxu0 0
        %1155 = vmatprep.subr.bf16.mxu0 0
        %1156 = vmatpush1.bf16.msra.mxu0 0
        %1157 = vmatprep.subr.bf16.mxu0 0
        %1158 = vmatpush1.bf16.msra.mxu0 0
        %1159 = vmatprep.subr.bf16.mxu0 0
        %1160 = vmatpush1.bf16.msra.mxu0 0
        %1161 = vmatprep.mubr.bf16.mxu0 0
        %1162 = vmatmul.mubr.bf16.gmra.mrb[0].mxu0 %v1124
        %v1163 = vpop.f32.mrb[0].mxu0
        %v1164 = vadd.f32 0.0, %v1163
        %v1165 = vpop.f32.mrb[0].mxu0
        %v1166 = vpop.f32.mrb[0].mxu0
        %v1167 = vpop.f32.mrb[0].mxu0
        %1168 = vdwg.mxu0
        %1169 = vrot.lane.b32.xlu0 %v611, 32
        %v1170 = vpop.permute.xlu0 %1169
        %1171 = vrot.lane.b32.xlu0 %v723, 32
        %v1172 = vpop.permute.xlu0 %1171
        %v1174 = vsel %vm836, %v1170, 0
        %v1177 = vsel %vm836, %v1172, 0
        %1179 = vmatprep.subr.bf16.mxu0 0
        %1180 = vmatpush1.bf16.xpose.msra.mxu0 %v1177
        %1181 = vmatprep.subr.bf16.mxu0 0
        %1182 = vmatpush1.bf16.xpose.msra.mxu0 0
        %1183 = vmatprep.subr.bf16.mxu0 0
        %1184 = vmatpush1.bf16.xpose.msra.mxu0 0
        %1185 = vmatprep.subr.bf16.mxu0 0
        %1186 = vmatpush1.bf16.xpose.msra.mxu0 0
        %1187 = vmatprep.subr.bf16.mxu0 0
        %1188 = vmatpush1.bf16.xpose.msra.mxu0 0
        %1189 = vmatprep.subr.bf16.mxu0 0
        %1190 = vmatpush1.bf16.xpose.msra.mxu0 0
        %1191 = vmatprep.subr.bf16.mxu0 0
        %1192 = vmatpush1.bf16.xpose.msra.mxu0 0
        %1193 = vmatprep.subr.bf16.mxu0 0
        %1194 = vmatpush1.bf16.xpose.msra.mxu0 0
        %1195 = vmatprep.subr.bf16.mxu0 0
        %1196 = vmatpush1.bf16.xpose.msra.mxu0 0
        %1197 = vmatprep.subr.bf16.mxu0 0
        %1198 = vmatpush1.bf16.xpose.msra.mxu0 0
        %1199 = vmatprep.subr.bf16.mxu0 0
        %1200 = vmatpush1.bf16.xpose.msra.mxu0 0
        %1201 = vmatprep.subr.bf16.mxu0 0
        %1202 = vmatpush1.bf16.xpose.msra.mxu0 0
        %1203 = vmatprep.subr.bf16.mxu0 0
        %1204 = vmatpush1.bf16.xpose.msra.mxu0 0
        %1205 = vmatprep.subr.bf16.mxu0 0
        %1206 = vmatpush1.bf16.xpose.msra.mxu0 0
        %1207 = vmatprep.subr.bf16.mxu0 0
        %1208 = vmatpush1.bf16.xpose.msra.mxu0 0
        %1209 = vmatprep.subr.bf16.mxu0 0
        %1210 = vmatpush1.bf16.xpose.msra.mxu0 0
        %1211 = vmatprep.mubr.bf16.mxu0 0
        %1212 = vmatmul.mubr.bf16.gmra.mrb[0].mxu0 %v1174
        %v1213 = vpop.f32.mrb[0].mxu0
        %v1214 = vadd.f32 0.0, %v1213
        %v1215 = vpop.f32.mrb[0].mxu0
        %v1216 = vpop.f32.mrb[0].mxu0
        %v1217 = vpop.f32.mrb[0].mxu0
        %1218 = vdwg.mxu0
        %v1219 = vmul.f32 %v1214, 0.17677669
        %v1220 = vsel %vm884, %v1219, -inf
        %1221 = vmax.xlane.f32.xlu0 %v1220
        %v1222 = vpop.xlane.xlu0 %1221
        %v1223 = vsub.f32 %v1219, %v1222
        %v1224 = vmul.f32 %v1223, 1.442695
        %v1225 = vpow.pop %v1224
        %v1226 = vsel %vm884, %v1225, 0.0
        %1227 = vadd.xlane.f32.xlu0 %v1226
        %v1228 = vpop.xlane.xlu0 %1227
        %v1229 = vrcp.pop %v1228
        %v1230 = vmul.f32 %v1225, %v1229
        %v1231 = vpack.c.bf16 %v1230, %v1230
        %1232 = vrot.lane.b32.xlu0 %v835, 32
        %v1233 = vpop.permute.xlu0 %1232
        %v1235 = vsel %vm884, %v1231, 0
        %v1238 = vsel %vm900, %v1233, 0
        %1240 = vmatprep.subr.bf16.mxu0 0
        %1241 = vmatpush1.bf16.msra.mxu0 %v1238
        %1242 = vmatprep.subr.bf16.mxu0 0
        %1243 = vmatpush1.bf16.msra.mxu0 0
        %1244 = vmatprep.subr.bf16.mxu0 0
        %1245 = vmatpush1.bf16.msra.mxu0 0
        %1246 = vmatprep.subr.bf16.mxu0 0
        %1247 = vmatpush1.bf16.msra.mxu0 0
        %1248 = vmatprep.subr.bf16.mxu0 0
        %1249 = vmatpush1.bf16.msra.mxu0 0
        %1250 = vmatprep.subr.bf16.mxu0 0
        %1251 = vmatpush1.bf16.msra.mxu0 0
        %1252 = vmatprep.subr.bf16.mxu0 0
        %1253 = vmatpush1.bf16.msra.mxu0 0
        %1254 = vmatprep.subr.bf16.mxu0 0
        %1255 = vmatpush1.bf16.msra.mxu0 0
        %1256 = vmatprep.subr.bf16.mxu0 0
        %1257 = vmatpush1.bf16.msra.mxu0 0
        %1258 = vmatprep.subr.bf16.mxu0 0
        %1259 = vmatpush1.bf16.msra.mxu0 0
        %1260 = vmatprep.subr.bf16.mxu0 0
        %1261 = vmatpush1.bf16.msra.mxu0 0
        %1262 = vmatprep.subr.bf16.mxu0 0
        %1263 = vmatpush1.bf16.msra.mxu0 0
        %1264 = vmatprep.subr.bf16.mxu0 0
        %1265 = vmatpush1.bf16.msra.mxu0 0
        %1266 = vmatprep.subr.bf16.mxu0 0
        %1267 = vmatpush1.bf16.msra.mxu0 0
        %1268 = vmatprep.subr.bf16.mxu0 0
        %1269 = vmatpush1.bf16.msra.mxu0 0
        %1270 = vmatprep.subr.bf16.mxu0 0
        %1271 = vmatpush1.bf16.msra.mxu0 0
        %1272 = vmatprep.mubr.bf16.mxu0 0
        %1273 = vmatmul.mubr.bf16.gmra.mrb[0].mxu0 %v1235
        %v1274 = vpop.f32.mrb[0].mxu0
        %v1275 = vadd.f32 0.0, %v1274
        %v1276 = vpop.f32.mrb[0].mxu0
        %v1277 = vpop.f32.mrb[0].mxu0
        %v1278 = vpop.f32.mrb[0].mxu0
        %1279 = vdwg.mxu0
        %1281 = vrot.lane.b32.xlu0 %v1053, 32
        %v1282 = vpop.permute.xlu0 %1281
        %1285 = vrot.lane.b32.xlu0 %v1164, 64
        %v1286 = vpop.permute.xlu0 %1285
        %1289 = vrot.lane.b32.xlu0 %v1275, 96
        %v1290 = vpop.permute.xlu0 %1289
        %v1292 = vsel %vm836, %v939, %v1282
        %vm1293 = vcmask 523264
        %v1294 = vsel %vm1293, %v1292, %v1286
        %vm1295 = vcmask 785408
        %v1296 = vsel %vm1295, %v1294, %v1290
        %v1297 = vpack.c.bf16 %v1296, %v1296
        %v1298 = vld [vmem:[%s9] sm:$0xf]
        %v1299 = vld [vmem:[%s9 + $0x4] sm:$0xf]
        %v1300 = vld [vmem:[%s9 + $0x8] sm:$0xf]
        %v1301 = vld [vmem:[%s9 + $0xc] sm:$0xf]
        %v1302 = vld [vmem:[%s9 + $0x10] sm:$0xf]
        %v1303 = vld [vmem:[%s9 + $0x14] sm:$0xf]
        %v1304 = vld [vmem:[%s9 + $0x18] sm:$0xf]
        %v1305 = vld [vmem:[%s9 + $0x1c] sm:$0xf]
        %v1306 = vld [vmem:[%s9 + $0x20] sm:$0xf]
        %v1307 = vld [vmem:[%s9 + $0x24] sm:$0xf]
        %v1308 = vld [vmem:[%s9 + $0x28] sm:$0xf]
        %v1309 = vld [vmem:[%s9 + $0x2c] sm:$0xf]
        %v1310 = vld [vmem:[%s9 + $0x30] sm:$0xf]
        %v1311 = vld [vmem:[%s9 + $0x34] sm:$0xf]
        %v1312 = vld [vmem:[%s9 + $0x38] sm:$0xf]
        %v1313 = vld [vmem:[%s9 + $0x3c] sm:$0xf]
        %v1314 = vld [vmem:[%s10] sm:$0x1]
        %v1316 = vlaneseq
        %v1317 = vshrl.u32 %v1316, 7
        %v1318 = vsub.s32 0, %v1317
        %v1319 = vrot.slane %v1314, %v1318
        %v1337 = vunpack.c.l.b16 %v1298
        %v1338 = vunpack.c.l.b16 %v1299
        %v1339 = vunpack.c.l.b16 %v1300
        %v1340 = vunpack.c.l.b16 %v1301
        %v1341 = vunpack.c.l.b16 %v1302
        %v1342 = vunpack.c.l.b16 %v1303
        %v1343 = vunpack.c.l.b16 %v1304
        %v1344 = vunpack.c.l.b16 %v1305
        %v1345 = vunpack.c.l.b16 %v1306
        %v1346 = vunpack.c.l.b16 %v1307
        %v1347 = vunpack.c.l.b16 %v1308
        %v1348 = vunpack.c.l.b16 %v1309
        %v1349 = vunpack.c.l.b16 %v1310
        %v1350 = vunpack.c.l.b16 %v1311
        %v1351 = vunpack.c.l.b16 %v1312
        %v1352 = vunpack.c.l.b16 %v1313
        %v1353 = vpack.c.b16 %v1338, %v1337
        %v1354 = vpack.c.b16 %v1340, %v1339
        %v1355 = vpack.c.b16 %v1342, %v1341
        %v1356 = vpack.c.b16 %v1344, %v1343
        %v1357 = vpack.c.b16 %v1346, %v1345
        %v1358 = vpack.c.b16 %v1348, %v1347
        %v1359 = vpack.c.b16 %v1350, %v1349
        %v1360 = vpack.c.b16 %v1352, %v1351
        %1369 = vmatprep.subr.bf16.mxu0 0
        %1370 = vmatpush1.bf16.msra.mxu0 %v1353
        %1371 = vmatprep.subr.bf16.mxu0 0
        %1372 = vmatpush1.bf16.msra.mxu0 %v1354
        %1373 = vmatprep.subr.bf16.mxu0 0
        %1374 = vmatpush1.bf16.msra.mxu0 %v1355
        %1375 = vmatprep.subr.bf16.mxu0 0
        %1376 = vmatpush1.bf16.msra.mxu0 %v1356
        %1377 = vmatprep.subr.bf16.mxu0 0
        %1378 = vmatpush1.bf16.msra.mxu0 %v1357
        %1379 = vmatprep.subr.bf16.mxu0 0
        %1380 = vmatpush1.bf16.msra.mxu0 %v1358
        %1381 = vmatprep.subr.bf16.mxu0 0
        %1382 = vmatpush1.bf16.msra.mxu0 %v1359
        %1383 = vmatprep.subr.bf16.mxu0 0
        %1384 = vmatpush1.bf16.msra.mxu0 %v1360
        %1385 = vmatprep.subr.bf16.mxu0 0
        %1386 = vmatpush1.bf16.msra.mxu0 0
        %1387 = vmatprep.subr.bf16.mxu0 0
        %1388 = vmatpush1.bf16.msra.mxu0 0
        %1389 = vmatprep.subr.bf16.mxu0 0
        %1390 = vmatpush1.bf16.msra.mxu0 0
        %1391 = vmatprep.subr.bf16.mxu0 0
        %1392 = vmatpush1.bf16.msra.mxu0 0
        %1393 = vmatprep.subr.bf16.mxu0 0
        %1394 = vmatpush1.bf16.msra.mxu0 0
        %1395 = vmatprep.subr.bf16.mxu0 0
        %1396 = vmatpush1.bf16.msra.mxu0 0
        %1397 = vmatprep.subr.bf16.mxu0 0
        %1398 = vmatpush1.bf16.msra.mxu0 0
        %1399 = vmatprep.subr.bf16.mxu0 0
        %1400 = vmatpush1.bf16.msra.mxu0 0
        %1401 = vmatprep.mubr.bf16.mxu0 0
        %1402 = vmatmul.mubr.bf16.gmra.mrb[0].mxu0 %v1297
        %v1403 = vpop.f32.mrb[0].mxu0
        %v1404 = vadd.f32 %v1319, %v1403
        %v1405 = vpop.f32.mrb[0].mxu0
        %v1406 = vpop.f32.mrb[0].mxu0
        %v1407 = vpop.f32.mrb[0].mxu0
        %1408 = vdwg.mxu0
        %v1409 = vunpack.c.l.bf16 %v497
        %v1410 = vadd.f32 %v1409, %v1404
        %1411 = vadd.xlane.f32.xlu0 %v1410
        %v1412 = vpop.xlane.xlu0 %1411
        %v1413 = vrcp.pop 128.0
        %v1414 = vmul.f32 %v1412, %v1413
        %v1415 = vsub.f32 %v1410, %v1414
        %v1416 = vmul.f32 %v1415, %v1415
        %1417 = vadd.xlane.f32.xlu0 %v1416
        %v1418 = vpop.xlane.xlu0 %1417
        %v1419 = vmul.f32 %v1418, %v1413
        %v1420 = vadd.f32 %v1419, 1e-05
        %v1421 = vrsqrt.pop %v1420
        %v1422 = vmul.f32 %v1415, %v1421
        %v1423 = vld [vmem:[#allocation2] sm:$0x1]
        %v1425 = vlaneseq
        %v1426 = vshrl.u32 %v1425, 7
        %v1427 = vsub.s32 0, %v1426
        %v1428 = vrot.slane %v1423, %v1427
        %v1430 = vmul.f32 %v1422, %v1428
        %v1431 = vld [vmem:[#allocation4] sm:$0x1]
        %v1433 = vlaneseq
        %v1434 = vshrl.u32 %v1433, 7
        %v1435 = vsub.s32 0, %v1434
        %v1436 = vrot.slane %v1431, %v1435
        %v1438 = vadd.f32 %v1430, %v1436
        %v1439 = vpack.c.bf16 %v1438, %v1438
        %1440 = vst [vmem:[%s495] sm:$0xf] %v1439
        %p1441 = scmp.lt.s32.totalorder %s26, 1
        %s1442 = scalar_select %p1441, %s26, 1
        %s1443 = smul.addr %s1442, 4
        %s1444 = scalar_lea.vmem %s13, %s1443
        // Predicated region
        $region81: #{_lambda_.18} parent=71 // pred_check
          %p1445 = pneg %p332
        $region82: #{_lambda_.18} parent=71 // pred_check_branch
          %1447 = sbr.rel (%p1445) target = $region84
        $region83: #{_lambda_.18} parent=71 // pred_region
          _
        $region84: #{_lambda_.18} parent=71 // pred_fallthru
          _
      $region72: #{_lambda_.18} parent=5 // pred_fallthru
        _
      %p1448 = scmp.le.s32.totalorder 2, %s21
      // Predicated region
      $region85: #{_lambda_.18} parent=5 // pred_check
        %p1449 = pneg %p1448
      $region86: #{_lambda_.18} parent=5 // pred_check_branch
        %1451 = sbr.rel (%p1449) target = $region88
      $region87: #{_lambda_.18} parent=5 // pred_region
        %s1452 = ssub.s32 %s21, 2
        // Predicated region
        $region89: #{_lambda_.18} parent=87 // pred_check
          %p1453 = pneg %p338
        $region90: #{_lambda_.18} parent=87 // pred_check_branch
          %1455 = sbr.rel (%p1453) target = $region92
        $region91: #{_lambda_.18} parent=87 // pred_region
          %p1456 = scmp.lt.s32.totalorder %s27, 1
          %s1457 = scalar_select %p1456, %s27, 1
          %s1458 = smul.addr %s1457, 4
          %s1459 = scalar_lea.vmem %s13, %s1458
        $region92: #{_lambda_.18} parent=87 // pred_fallthru
          _
      $region88: #{_lambda_.18} parent=5 // pred_fallthru
        _
    $region6: #{_lambda_.18} parent=1 // loop_footer
      %s25 = sadd.s32 1, %s21
    $region7: #{_lambda_.18} parent=1 // loop_footer_branch
      %20 = sbr.rel target = $region3
    $region8: #{_lambda_.18} parent=1 // loop_exit
      _
    %1460 = vsyncpa [#allocation3], 1
    %s1461 = scalar_lea.sflag [#allocation3], 1
    %1462 = vsyncpa %s1461, 1
    %1463 = vsyncpa [#allocation5], 1

// kernel: _lambda_.13
$region0: #{_lambda_.13}
  #allocation0 [shape = 'u32[]', space=smem, size = 0x4, offset = 0x4, fixed_abs, tag = 'smem constant byte address 0x4 - core index']
  #allocation1 [shape = 'u32[144,128]{1,0:T(1,128)}', space=vmem, size = 0x12000, scoped, tag = 'internal scratch']
  %s0 = inlined_call_operand.vmem [shape: bf16[2,8,128], index: 0, kind: input, shape index: {}]
  %s1 = inlined_call_operand.vmem [shape: bf16[128,128], index: 1, kind: input, shape index: {}]
  %s2 = inlined_call_operand.vmem [shape: bf16[128,128], index: 2, kind: input, shape index: {}]
  %s3 = inlined_call_operand.vmem [shape: bf16[128,128], index: 3, kind: input, shape index: {}]
  %s4 = inlined_call_operand.vmem [shape: f32[1,128], index: 4, kind: input, shape index: {}]
  %s5 = inlined_call_operand.vmem [shape: f32[1,128], index: 5, kind: input, shape index: {}]
  %s6 = inlined_call_operand.vmem [shape: f32[1,128], index: 6, kind: input, shape index: {}]
  %s7 = inlined_call_operand.vmem [shape: bf16[128,128], index: 7, kind: input, shape index: {}]
  %s8 = inlined_call_operand.vmem [shape: f32[1,128], index: 8, kind: input, shape index: {}]
  %s9 = inlined_call_operand.vmem [shape: f32[1,128], index: 9, kind: input, shape index: {}]
  %s10 = inlined_call_operand.vmem [shape: f32[1,128], index: 10, kind: input, shape index: {}]
  %s11 = inlined_call_operand.vmem [shape: bf16[128,256], index: 11, kind: input, shape index: {}]
  %s12 = inlined_call_operand.vmem [shape: f32[1,256], index: 12, kind: input, shape index: {}]
  %s13 = inlined_call_operand.vmem [shape: bf16[256,128], index: 13, kind: input, shape index: {}]
  %s14 = inlined_call_operand.vmem [shape: f32[1,128], index: 14, kind: input, shape index: {}]
  %s15 = inlined_call_operand.vmem [shape: f32[1,128], index: 15, kind: input, shape index: {}]
  %s16 = inlined_call_operand.vmem [shape: f32[1,128], index: 16, kind: input, shape index: {}]
  %s17 = inlined_call_operand.vmem [shape: bf16[2,8,128], index: 17, kind: output, shape index: {}]
  %s18 = sld [smem:[#allocation0]]
  $region101: #{_lambda_.13} parent=0
    _
  %s20 = ssub.s32 1, %s18
  %s21 = scalar_select 0, %s20, %s18
  loop: start=0, step=1, limit=4
  $region2: #{_lambda_.13} parent=0 // loop_pre_header
    _
  $region3: #{_lambda_.13} parent=0 // loop_header
    %s23 = sphi 0, %s27
    %p24 = scmp.ge.s32.totalorder %s23, 4
    %s33 = sphi 0, %s35
    %s36 = sphi 0, %s33
    %s37 = sphi 0, %s36
    %s53 = sphi 0, %s37
    %s57 = sphi 0, %s57
    %s59 = sphi 0, %s57
    %s60 = sphi 0, %s59
    %s74 = sphi 0, %s60
    %s78 = sphi 0, %s78
    %s80 = sphi 0, %s78
    %s81 = sphi 0, %s80
    %s95 = sphi 0, %s81
    %s99 = sphi 0, %s99
    %s101 = sphi 0, %s99
    %s102 = sphi 0, %s101
    %s116 = sphi 0, %s102
    %s120 = sphi 0, %s120
    %s122 = sphi 0, %s120
    %s123 = sphi 0, %s122
    %s137 = sphi 0, %s123
    %s141 = sphi 0, %s141
    %s143 = sphi 0, %s141
    %s144 = sphi 0, %s143
    %s158 = sphi 0, %s144
    %s162 = sphi 0, %s162
    %s164 = sphi 0, %s162
    %s165 = sphi 0, %s164
    %s179 = sphi 0, %s165
    %s183 = sphi 0, %s183
    %s185 = sphi 0, %s183
    %s186 = sphi 0, %s185
    %s200 = sphi 0, %s186
    %s204 = sphi 0, %s204
    %s206 = sphi 0, %s204
    %s207 = sphi 0, %s206
    %s221 = sphi 0, %s207
    %s225 = sphi 0, %s225
    %s227 = sphi 0, %s225
    %s228 = sphi 0, %s227
    %s242 = sphi 0, %s228
    %s246 = sphi 0, %s246
    %s248 = sphi 0, %s246
    %s249 = sphi 0, %s248
    %s263 = sphi 0, %s249
    %s267 = sphi 0, %s267
    %s269 = sphi 0, %s267
    %s270 = sphi 0, %s269
    %s284 = sphi 0, %s270
    %s288 = sphi 0, %s288
    %s290 = sphi 0, %s288
    %s291 = sphi 0, %s290
    %s305 = sphi 0, %s291
    %s309 = sphi 0, %s309
    %s311 = sphi 0, %s309
    %s312 = sphi 0, %s311
    %s326 = sphi 0, %s312
    %s330 = sphi 0, %s330
    %s332 = sphi 0, %s330
    %s333 = sphi 0, %s332
    %s347 = sphi 0, %s333
    %s351 = sphi 0, %s351
    %s353 = sphi 0, %s351
    %s354 = sphi 0, %s353
    %s368 = sphi 0, %s354
    %s372 = sphi 0, %s372
    %s374 = sphi 0, %s372
    %s375 = sphi 0, %s374
    %s389 = sphi 0, %s375
    %s395 = sphi 0, %s397
    %s398 = sphi 0, %s395
    %s399 = sphi 0, %s398
    %s415 = sphi 0, %s399
  $region4: #{_lambda_.13} parent=0 // loop_header_branch
    %26 = sbr.rel (%p24) target = $region8
  $region5: #{_lambda_.13} parent=0 // loop_body
    %s28 = ssub.s32 %s23, 1
    %s29 = ssub.s32 %s23, 2
    %s30 = sadd.s32 %s23, 1
    %s31 = ssub.s32 %s23, %s30
    %p32 = scmp.eq.s32.totalorder %s31, 0
    %s34 = sadd.s32 %s33, 1
    %s35 = scalar_select %p32, %s33, %s34
    %p38 = pneg %p32
    %p39 = scmp.eq.s32.totalorder %s23, 1
    %p40 = por %p38, %p39
    %p41 = scmp.ne.s32.totalorder %s33, %s36
    %p42 = scmp.eq.s32.totalorder %s23, 0
    %p43 = por %p41, %p42
    %p44 = scmp.ne.s32.totalorder %s33, %s36
    %p45 = scmp.eq.s32.totalorder %s28, 1
    %p46 = por %p44, %p45
    %p47 = scmp.ne.s32.totalorder %s36, %s37
    %p48 = scmp.eq.s32.totalorder %s28, 0
    %p49 = por %p47, %p48
    %p50 = scmp.ne.s32.totalorder %s36, %s37
    %p51 = scmp.eq.s32.totalorder %s29, 1
    %p52 = por %p50, %p51
    %p54 = scmp.ne.s32.totalorder %s37, %s53
    %p55 = scmp.eq.s32.totalorder %s29, 0
    %p56 = por %p54, %p55
    %s58 = sadd.s32 %s57, 1
    %p61 = scmp.eq.s32.totalorder %s23, 1
    %p62 = scmp.ne.s32.totalorder %s57, %s59
    %p63 = scmp.eq.s32.totalorder %s23, 0
    %p64 = por %p62, %p63
    %p65 = scmp.ne.s32.totalorder %s57, %s59
    %p66 = scmp.eq.s32.totalorder %s28, 1
    %p67 = por %p65, %p66
    %p68 = scmp.ne.s32.totalorder %s59, %s60
    %p69 = scmp.eq.s32.totalorder %s28, 0
    %p70 = por %p68, %p69
    %p71 = scmp.ne.s32.totalorder %s59, %s60
    %p72 = scmp.eq.s32.totalorder %s29, 1
    %p73 = por %p71, %p72
    %p75 = scmp.ne.s32.totalorder %s60, %s74
    %p76 = scmp.eq.s32.totalorder %s29, 0
    %p77 = por %p75, %p76
    %s79 = sadd.s32 %s78, 1
    %p82 = scmp.eq.s32.totalorder %s23, 1
    %p83 = scmp.ne.s32.totalorder %s78, %s80
    %p84 = scmp.eq.s32.totalorder %s23, 0
    %p85 = por %p83, %p84
    %p86 = scmp.ne.s32.totalorder %s78, %s80
    %p87 = scmp.eq.s32.totalorder %s28, 1
    %p88 = por %p86, %p87
    %p89 = scmp.ne.s32.totalorder %s80, %s81
    %p90 = scmp.eq.s32.totalorder %s28, 0
    %p91 = por %p89, %p90
    %p92 = scmp.ne.s32.totalorder %s80, %s81
    %p93 = scmp.eq.s32.totalorder %s29, 1
    %p94 = por %p92, %p93
    %p96 = scmp.ne.s32.totalorder %s81, %s95
    %p97 = scmp.eq.s32.totalorder %s29, 0
    %p98 = por %p96, %p97
    %s100 = sadd.s32 %s99, 1
    %p103 = scmp.eq.s32.totalorder %s23, 1
    %p104 = scmp.ne.s32.totalorder %s99, %s101
    %p105 = scmp.eq.s32.totalorder %s23, 0
    %p106 = por %p104, %p105
    %p107 = scmp.ne.s32.totalorder %s99, %s101
    %p108 = scmp.eq.s32.totalorder %s28, 1
    %p109 = por %p107, %p108
    %p110 = scmp.ne.s32.totalorder %s101, %s102
    %p111 = scmp.eq.s32.totalorder %s28, 0
    %p112 = por %p110, %p111
    %p113 = scmp.ne.s32.totalorder %s101, %s102
    %p114 = scmp.eq.s32.totalorder %s29, 1
    %p115 = por %p113, %p114
    %p117 = scmp.ne.s32.totalorder %s102, %s116
    %p118 = scmp.eq.s32.totalorder %s29, 0
    %p119 = por %p117, %p118
    %s121 = sadd.s32 %s120, 1
    %p124 = scmp.eq.s32.totalorder %s23, 1
    %p125 = scmp.ne.s32.totalorder %s120, %s122
    %p126 = scmp.eq.s32.totalorder %s23, 0
    %p127 = por %p125, %p126
    %p128 = scmp.ne.s32.totalorder %s120, %s122
    %p129 = scmp.eq.s32.totalorder %s28, 1
    %p130 = por %p128, %p129
    %p131 = scmp.ne.s32.totalorder %s122, %s123
    %p132 = scmp.eq.s32.totalorder %s28, 0
    %p133 = por %p131, %p132
    %p134 = scmp.ne.s32.totalorder %s122, %s123
    %p135 = scmp.eq.s32.totalorder %s29, 1
    %p136 = por %p134, %p135
    %p138 = scmp.ne.s32.totalorder %s123, %s137
    %p139 = scmp.eq.s32.totalorder %s29, 0
    %p140 = por %p138, %p139
    %s142 = sadd.s32 %s141, 1
    %p145 = scmp.eq.s32.totalorder %s23, 1
    %p146 = scmp.ne.s32.totalorder %s141, %s143
    %p147 = scmp.eq.s32.totalorder %s23, 0
    %p148 = por %p146, %p147
    %p149 = scmp.ne.s32.totalorder %s141, %s143
    %p150 = scmp.eq.s32.totalorder %s28, 1
    %p151 = por %p149, %p150
    %p152 = scmp.ne.s32.totalorder %s143, %s144
    %p153 = scmp.eq.s32.totalorder %s28, 0
    %p154 = por %p152, %p153
    %p155 = scmp.ne.s32.totalorder %s143, %s144
    %p156 = scmp.eq.s32.totalorder %s29, 1
    %p157 = por %p155, %p156
    %p159 = scmp.ne.s32.totalorder %s144, %s158
    %p160 = scmp.eq.s32.totalorder %s29, 0
    %p161 = por %p159, %p160
    %s163 = sadd.s32 %s162, 1
    %p166 = scmp.eq.s32.totalorder %s23, 1
    %p167 = scmp.ne.s32.totalorder %s162, %s164
    %p168 = scmp.eq.s32.totalorder %s23, 0
    %p169 = por %p167, %p168
    %p170 = scmp.ne.s32.totalorder %s162, %s164
    %p171 = scmp.eq.s32.totalorder %s28, 1
    %p172 = por %p170, %p171
    %p173 = scmp.ne.s32.totalorder %s164, %s165
    %p174 = scmp.eq.s32.totalorder %s28, 0
    %p175 = por %p173, %p174
    %p176 = scmp.ne.s32.totalorder %s164, %s165
    %p177 = scmp.eq.s32.totalorder %s29, 1
    %p178 = por %p176, %p177
    %p180 = scmp.ne.s32.totalorder %s165, %s179
    %p181 = scmp.eq.s32.totalorder %s29, 0
    %p182 = por %p180, %p181
    %s184 = sadd.s32 %s183, 1
    %p187 = scmp.eq.s32.totalorder %s23, 1
    %p188 = scmp.ne.s32.totalorder %s183, %s185
    %p189 = scmp.eq.s32.totalorder %s23, 0
    %p190 = por %p188, %p189
    %p191 = scmp.ne.s32.totalorder %s183, %s185
    %p192 = scmp.eq.s32.totalorder %s28, 1
    %p193 = por %p191, %p192
    %p194 = scmp.ne.s32.totalorder %s185, %s186
    %p195 = scmp.eq.s32.totalorder %s28, 0
    %p196 = por %p194, %p195
    %p197 = scmp.ne.s32.totalorder %s185, %s186
    %p198 = scmp.eq.s32.totalorder %s29, 1
    %p199 = por %p197, %p198
    %p201 = scmp.ne.s32.totalorder %s186, %s200
    %p202 = scmp.eq.s32.totalorder %s29, 0
    %p203 = por %p201, %p202
    %s205 = sadd.s32 %s204, 1
    %p208 = scmp.eq.s32.totalorder %s23, 1
    %p209 = scmp.ne.s32.totalorder %s204, %s206
    %p210 = scmp.eq.s32.totalorder %s23, 0
    %p211 = por %p209, %p210
    %p212 = scmp.ne.s32.totalorder %s204, %s206
    %p213 = scmp.eq.s32.totalorder %s28, 1
    %p214 = por %p212, %p213
    %p215 = scmp.ne.s32.totalorder %s206, %s207
    %p216 = scmp.eq.s32.totalorder %s28, 0
    %p217 = por %p215, %p216
    %p218 = scmp.ne.s32.totalorder %s206, %s207
    %p219 = scmp.eq.s32.totalorder %s29, 1
    %p220 = por %p218, %p219
    %p222 = scmp.ne.s32.totalorder %s207, %s221
    %p223 = scmp.eq.s32.totalorder %s29, 0
    %p224 = por %p222, %p223
    %s226 = sadd.s32 %s225, 1
    %p229 = scmp.eq.s32.totalorder %s23, 1
    %p230 = scmp.ne.s32.totalorder %s225, %s227
    %p231 = scmp.eq.s32.totalorder %s23, 0
    %p232 = por %p230, %p231
    %p233 = scmp.ne.s32.totalorder %s225, %s227
    %p234 = scmp.eq.s32.totalorder %s28, 1
    %p235 = por %p233, %p234
    %p236 = scmp.ne.s32.totalorder %s227, %s228
    %p237 = scmp.eq.s32.totalorder %s28, 0
    %p238 = por %p236, %p237
    %p239 = scmp.ne.s32.totalorder %s227, %s228
    %p240 = scmp.eq.s32.totalorder %s29, 1
    %p241 = por %p239, %p240
    %p243 = scmp.ne.s32.totalorder %s228, %s242
    %p244 = scmp.eq.s32.totalorder %s29, 0
    %p245 = por %p243, %p244
    %s247 = sadd.s32 %s246, 1
    %p250 = scmp.eq.s32.totalorder %s23, 1
    %p251 = scmp.ne.s32.totalorder %s246, %s248
    %p252 = scmp.eq.s32.totalorder %s23, 0
    %p253 = por %p251, %p252
    %p254 = scmp.ne.s32.totalorder %s246, %s248
    %p255 = scmp.eq.s32.totalorder %s28, 1
    %p256 = por %p254, %p255
    %p257 = scmp.ne.s32.totalorder %s248, %s249
    %p258 = scmp.eq.s32.totalorder %s28, 0
    %p259 = por %p257, %p258
    %p260 = scmp.ne.s32.totalorder %s248, %s249
    %p261 = scmp.eq.s32.totalorder %s29, 1
    %p262 = por %p260, %p261
    %p264 = scmp.ne.s32.totalorder %s249, %s263
    %p265 = scmp.eq.s32.totalorder %s29, 0
    %p266 = por %p264, %p265
    %s268 = sadd.s32 %s267, 1
    %p271 = scmp.eq.s32.totalorder %s23, 1
    %p272 = scmp.ne.s32.totalorder %s267, %s269
    %p273 = scmp.eq.s32.totalorder %s23, 0
    %p274 = por %p272, %p273
    %p275 = scmp.ne.s32.totalorder %s267, %s269
    %p276 = scmp.eq.s32.totalorder %s28, 1
    %p277 = por %p275, %p276
    %p278 = scmp.ne.s32.totalorder %s269, %s270
    %p279 = scmp.eq.s32.totalorder %s28, 0
    %p280 = por %p278, %p279
    %p281 = scmp.ne.s32.totalorder %s269, %s270
    %p282 = scmp.eq.s32.totalorder %s29, 1
    %p283 = por %p281, %p282
    %p285 = scmp.ne.s32.totalorder %s270, %s284
    %p286 = scmp.eq.s32.totalorder %s29, 0
    %p287 = por %p285, %p286
    %s289 = sadd.s32 %s288, 1
    %p292 = scmp.eq.s32.totalorder %s23, 1
    %p293 = scmp.ne.s32.totalorder %s288, %s290
    %p294 = scmp.eq.s32.totalorder %s23, 0
    %p295 = por %p293, %p294
    %p296 = scmp.ne.s32.totalorder %s288, %s290
    %p297 = scmp.eq.s32.totalorder %s28, 1
    %p298 = por %p296, %p297
    %p299 = scmp.ne.s32.totalorder %s290, %s291
    %p300 = scmp.eq.s32.totalorder %s28, 0
    %p301 = por %p299, %p300
    %p302 = scmp.ne.s32.totalorder %s290, %s291
    %p303 = scmp.eq.s32.totalorder %s29, 1
    %p304 = por %p302, %p303
    %p306 = scmp.ne.s32.totalorder %s291, %s305
    %p307 = scmp.eq.s32.totalorder %s29, 0
    %p308 = por %p306, %p307
    %s310 = sadd.s32 %s309, 1
    %p313 = scmp.eq.s32.totalorder %s23, 1
    %p314 = scmp.ne.s32.totalorder %s309, %s311
    %p315 = scmp.eq.s32.totalorder %s23, 0
    %p316 = por %p314, %p315
    %p317 = scmp.ne.s32.totalorder %s309, %s311
    %p318 = scmp.eq.s32.totalorder %s28, 1
    %p319 = por %p317, %p318
    %p320 = scmp.ne.s32.totalorder %s311, %s312
    %p321 = scmp.eq.s32.totalorder %s28, 0
    %p322 = por %p320, %p321
    %p323 = scmp.ne.s32.totalorder %s311, %s312
    %p324 = scmp.eq.s32.totalorder %s29, 1
    %p325 = por %p323, %p324
    %p327 = scmp.ne.s32.totalorder %s312, %s326
    %p328 = scmp.eq.s32.totalorder %s29, 0
    %p329 = por %p327, %p328
    %s331 = sadd.s32 %s330, 1
    %p334 = scmp.eq.s32.totalorder %s23, 1
    %p335 = scmp.ne.s32.totalorder %s330, %s332
    %p336 = scmp.eq.s32.totalorder %s23, 0
    %p337 = por %p335, %p336
    %p338 = scmp.ne.s32.totalorder %s330, %s332
    %p339 = scmp.eq.s32.totalorder %s28, 1
    %p340 = por %p338, %p339
    %p341 = scmp.ne.s32.totalorder %s332, %s333
    %p342 = scmp.eq.s32.totalorder %s28, 0
    %p343 = por %p341, %p342
    %p344 = scmp.ne.s32.totalorder %s332, %s333
    %p345 = scmp.eq.s32.totalorder %s29, 1
    %p346 = por %p344, %p345
    %p348 = scmp.ne.s32.totalorder %s333, %s347
    %p349 = scmp.eq.s32.totalorder %s29, 0
    %p350 = por %p348, %p349
    %s352 = sadd.s32 %s351, 1
    %p355 = scmp.eq.s32.totalorder %s23, 1
    %p356 = scmp.ne.s32.totalorder %s351, %s353
    %p357 = scmp.eq.s32.totalorder %s23, 0
    %p358 = por %p356, %p357
    %p359 = scmp.ne.s32.totalorder %s351, %s353
    %p360 = scmp.eq.s32.totalorder %s28, 1
    %p361 = por %p359, %p360
    %p362 = scmp.ne.s32.totalorder %s353, %s354
    %p363 = scmp.eq.s32.totalorder %s28, 0
    %p364 = por %p362, %p363
    %p365 = scmp.ne.s32.totalorder %s353, %s354
    %p366 = scmp.eq.s32.totalorder %s29, 1
    %p367 = por %p365, %p366
    %p369 = scmp.ne.s32.totalorder %s354, %s368
    %p370 = scmp.eq.s32.totalorder %s29, 0
    %p371 = por %p369, %p370
    %s373 = sadd.s32 %s372, 1
    %p376 = scmp.eq.s32.totalorder %s23, 1
    %p377 = scmp.ne.s32.totalorder %s372, %s374
    %p378 = scmp.eq.s32.totalorder %s23, 0
    %p379 = por %p377, %p378
    %p380 = scmp.ne.s32.totalorder %s372, %s374
    %p381 = scmp.eq.s32.totalorder %s28, 1
    %p382 = por %p380, %p381
    %p383 = scmp.ne.s32.totalorder %s374, %s375
    %p384 = scmp.eq.s32.totalorder %s28, 0
    %p385 = por %p383, %p384
    %p386 = scmp.ne.s32.totalorder %s374, %s375
    %p387 = scmp.eq.s32.totalorder %s29, 1
    %p388 = por %p386, %p387
    %p390 = scmp.ne.s32.totalorder %s375, %s389
    %p391 = scmp.eq.s32.totalorder %s29, 0
    %p392 = por %p390, %p391
    %s393 = ssub.s32 %s23, %s30
    %p394 = scmp.eq.s32.totalorder %s393, 0
    %s396 = sadd.s32 %s395, 1
    %s397 = scalar_select %p394, %s395, %s396
    %p400 = pneg %p394
    %p401 = scmp.eq.s32.totalorder %s23, 1
    %p402 = por %p400, %p401
    %p403 = scmp.ne.s32.totalorder %s395, %s398
    %p404 = scmp.eq.s32.totalorder %s23, 0
    %p405 = por %p403, %p404
    %p406 = scmp.ne.s32.totalorder %s395, %s398
    %p407 = scmp.eq.s32.totalorder %s28, 1
    %p408 = por %p406, %p407
    %p409 = scmp.ne.s32.totalorder %s398, %s399
    %p410 = scmp.eq.s32.totalorder %s28, 0
    %p411 = por %p409, %p410
    %p412 = scmp.ne.s32.totalorder %s398, %s399
    %p413 = scmp.eq.s32.totalorder %s29, 1
    %p414 = por %p412, %p413
    %p416 = scmp.ne.s32.totalorder %s399, %s415
    %p417 = scmp.eq.s32.totalorder %s29, 0
    %p418 = por %p416, %p417
    %p419 = scmp.le.s32.totalorder 1, %s23
    %p420 = scmp.lt.s32.totalorder %s23, 3
    %p421 = pnand %p419, %p420
    %p422 = pneg %p421
    // Predicated region
    $region9: #{_lambda_.13} parent=5 // pred_check
      _
    $region10: #{_lambda_.13} parent=5 // pred_check_branch
      %424 = sbr.rel (%p421) target = $region12
    $region11: #{_lambda_.13} parent=5 // pred_region
      %s425 = ssub.s32 %s23, 1
      // Predicated region
      $region13: #{_lambda_.13} parent=11 // pred_check
        %p426 = pneg %p70
      $region14: #{_lambda_.13} parent=11 // pred_check_branch
        %428 = sbr.rel (%p426) target = $region16
      $region15: #{_lambda_.13} parent=11 // pred_region
        _
      $region16: #{_lambda_.13} parent=11 // pred_fallthru
        _
      // Predicated region
      $region17: #{_lambda_.13} parent=11 // pred_check
        %p429 = pneg %p91
      $region18: #{_lambda_.13} parent=11 // pred_check_branch
        %431 = sbr.rel (%p429) target = $region20
      $region19: #{_lambda_.13} parent=11 // pred_region
        _
      $region20: #{_lambda_.13} parent=11 // pred_fallthru
        _
      // Predicated region
      $region21: #{_lambda_.13} parent=11 // pred_check
        %p432 = pneg %p112
      $region22: #{_lambda_.13} parent=11 // pred_check_branch
        %434 = sbr.rel (%p432) target = $region24
      $region23: #{_lambda_.13} parent=11 // pred_region
        _
      $region24: #{_lambda_.13} parent=11 // pred_fallthru
        _
      // Predicated region
      $region25: #{_lambda_.13} parent=11 // pred_check
        %p435 = pneg %p133
      $region26: #{_lambda_.13} parent=11 // pred_check_branch
        %437 = sbr.rel (%p435) target = $region28
      $region27: #{_lambda_.13} parent=11 // pred_region
        _
      $region28: #{_lambda_.13} parent=11 // pred_fallthru
        _
      // Predicated region
      $region29: #{_lambda_.13} parent=11 // pred_check
        %p438 = pneg %p154
      $region30: #{_lambda_.13} parent=11 // pred_check_branch
        %440 = sbr.rel (%p438) target = $region32
      $region31: #{_lambda_.13} parent=11 // pred_region
        _
      $region32: #{_lambda_.13} parent=11 // pred_fallthru
        _
      // Predicated region
      $region33: #{_lambda_.13} parent=11 // pred_check
        %p441 = pneg %p175
      $region34: #{_lambda_.13} parent=11 // pred_check_branch
        %443 = sbr.rel (%p441) target = $region36
      $region35: #{_lambda_.13} parent=11 // pred_region
        _
      $region36: #{_lambda_.13} parent=11 // pred_fallthru
        _
      // Predicated region
      $region37: #{_lambda_.13} parent=11 // pred_check
        %p444 = pneg %p196
      $region38: #{_lambda_.13} parent=11 // pred_check_branch
        %446 = sbr.rel (%p444) target = $region40
      $region39: #{_lambda_.13} parent=11 // pred_region
        _
      $region40: #{_lambda_.13} parent=11 // pred_fallthru
        _
      // Predicated region
      $region41: #{_lambda_.13} parent=11 // pred_check
        %p447 = pneg %p217
      $region42: #{_lambda_.13} parent=11 // pred_check_branch
        %449 = sbr.rel (%p447) target = $region44
      $region43: #{_lambda_.13} parent=11 // pred_region
        _
      $region44: #{_lambda_.13} parent=11 // pred_fallthru
        _
      // Predicated region
      $region45: #{_lambda_.13} parent=11 // pred_check
        %p450 = pneg %p238
      $region46: #{_lambda_.13} parent=11 // pred_check_branch
        %452 = sbr.rel (%p450) target = $region48
      $region47: #{_lambda_.13} parent=11 // pred_region
        _
      $region48: #{_lambda_.13} parent=11 // pred_fallthru
        _
      // Predicated region
      $region49: #{_lambda_.13} parent=11 // pred_check
        %p453 = pneg %p259
      $region50: #{_lambda_.13} parent=11 // pred_check_branch
        %455 = sbr.rel (%p453) target = $region52
      $region51: #{_lambda_.13} parent=11 // pred_region
        _
      $region52: #{_lambda_.13} parent=11 // pred_fallthru
        _
      // Predicated region
      $region53: #{_lambda_.13} parent=11 // pred_check
        %p456 = pneg %p280
      $region54: #{_lambda_.13} parent=11 // pred_check_branch
        %458 = sbr.rel (%p456) target = $region56
      $region55: #{_lambda_.13} parent=11 // pred_region
        _
      $region56: #{_lambda_.13} parent=11 // pred_fallthru
        _
      // Predicated region
      $region57: #{_lambda_.13} parent=11 // pred_check
        %p459 = pneg %p301
      $region58: #{_lambda_.13} parent=11 // pred_check_branch
        %461 = sbr.rel (%p459) target = $region60
      $region59: #{_lambda_.13} parent=11 // pred_region
        _
      $region60: #{_lambda_.13} parent=11 // pred_fallthru
        _
      // Predicated region
      $region61: #{_lambda_.13} parent=11 // pred_check
        %p462 = pneg %p322
      $region62: #{_lambda_.13} parent=11 // pred_check_branch
        %464 = sbr.rel (%p462) target = $region64
      $region63: #{_lambda_.13} parent=11 // pred_region
        _
      $region64: #{_lambda_.13} parent=11 // pred_fallthru
        _
      // Predicated region
      $region65: #{_lambda_.13} parent=11 // pred_check
        %p465 = pneg %p343
      $region66: #{_lambda_.13} parent=11 // pred_check_branch
        %467 = sbr.rel (%p465) target = $region68
      $region67: #{_lambda_.13} parent=11 // pred_region
        _
      $region68: #{_lambda_.13} parent=11 // pred_fallthru
        _
      // Predicated region
      $region69: #{_lambda_.13} parent=11 // pred_check
        %p468 = pneg %p364
      $region70: #{_lambda_.13} parent=11 // pred_check_branch
        %470 = sbr.rel (%p468) target = $region72
      $region71: #{_lambda_.13} parent=11 // pred_region
        _
      $region72: #{_lambda_.13} parent=11 // pred_fallthru
        _
      // Predicated region
      $region73: #{_lambda_.13} parent=11 // pred_check
        %p471 = pneg %p385
      $region74: #{_lambda_.13} parent=11 // pred_check_branch
        %473 = sbr.rel (%p471) target = $region76
      $region75: #{_lambda_.13} parent=11 // pred_region
        _
      $region76: #{_lambda_.13} parent=11 // pred_fallthru
        _
    $region12: #{_lambda_.13} parent=5 // pred_fallthru
      _
    %p474 = scmp.lt.s32.totalorder %s23, 2
    // Predicated region
    $region77: #{_lambda_.13} parent=5 // pred_check
      %p475 = pneg %p474
    $region78: #{_lambda_.13} parent=5 // pred_check_branch
      %477 = sbr.rel (%p475) target = $region80
    $region79: #{_lambda_.13} parent=5 // pred_region
      // Predicated region
      $region81: #{_lambda_.13} parent=79 // pred_check
        %p478 = pneg %p43
      $region82: #{_lambda_.13} parent=79 // pred_check_branch
        %480 = sbr.rel (%p478) target = $region84
      $region83: #{_lambda_.13} parent=79 // pred_region
        %p481 = scmp.lt.s32.totalorder %s23, 1
        %s482 = scalar_select %p481, %s23, 1
        %s483 = smul.addr %s482, 4
        %s484 = scalar_lea.vmem %s0, %s483
      $region84: #{_lambda_.13} parent=79 // pred_fallthru
        _
    $region80: #{_lambda_.13} parent=5 // pred_fallthru
      _
    %p485 = scmp.le.s32.totalorder 1, %s23
    %p486 = scmp.lt.s32.totalorder %s23, 3
    %p487 = pnand %p485, %p486
    %p488 = pneg %p487
    // Predicated region
    $region85: #{_lambda_.13} parent=5 // pred_check
      _
    $region86: #{_lambda_.13} parent=5 // pred_check_branch
      %490 = sbr.rel (%p487) target = $region88
    $region87: #{_lambda_.13} parent=5 // pred_region
      %s491 = ssub.s32 %s23, 1
      %p492 = scmp.lt.s32.totalorder %s28, 1
      %s493 = scalar_select %p492, %s28, 1
      %s494 = smul.addr %s493, 4
      %s495 = scalar_lea.vmem %s0, %s494
      %p496 = pneg %p49
      %p497 = pneg %p46
      %p498 = pneg %p70
      %p499 = pneg %p67
      %p500 = pneg %p91
      %p501 = pneg %p88
      %p502 = pneg %p112
      %p503 = pneg %p109
      %p504 = pneg %p133
      %p505 = pneg %p130
      %p506 = pneg %p154
      %p507 = pneg %p151
      %p508 = pneg %p175
      %p509 = pneg %p172
      %p510 = pneg %p196
      %p511 = pneg %p193
      %p512 = pneg %p217
      %p513 = pneg %p214
      %p514 = pneg %p238
      %p515 = pneg %p235
      %p516 = pneg %p259
      %p517 = pneg %p256
      %p518 = pneg %p280
      %p519 = pneg %p277
      %p520 = pneg %p301
      %p521 = pneg %p298
      %p522 = pneg %p322
      %p523 = pneg %p319
      %p524 = pneg %p343
      %p525 = pneg %p340
      %p526 = pneg %p364
      %p527 = pneg %p361
      %p528 = pneg %p385
      %p529 = pneg %p382
      %p530 = pneg %p411
      %p531 = pneg %p408
      %p532 = scmp.lt.s32.totalorder %s28, 1
      %s533 = scalar_select %p532, %s28, 1
      %s534 = smul.addr %s533, 4
      %s535 = scalar_lea.vmem %s17, %s534
      %p536 = scmp.lt.s32.totalorder %s28, 1
      %s537 = scalar_select %p536, %s28, 1
      %s538 = smul.addr %s537, 4
      %s539 = scalar_lea.vmem %s0, %s538
      %p540 = scmp.lt.s32.totalorder %s28, 1
      %s541 = scalar_select %p540, %s28, 1
      %s542 = smul.addr %s541, 4
      %s543 = scalar_lea.vmem %s17, %s542
      %v545 = vld [vmem:[%s539] sm:$0xf]
      %v546 = vld [vmem:[%s1] sm:$0xf]
      %v547 = vld [vmem:[%s1 + $0x4] sm:$0xf]
      %v548 = vld [vmem:[%s1 + $0x8] sm:$0xf]
      %v549 = vld [vmem:[%s1 + $0xc] sm:$0xf]
      %v550 = vld [vmem:[%s1 + $0x10] sm:$0xf]
      %v551 = vld [vmem:[%s1 + $0x14] sm:$0xf]
      %v552 = vld [vmem:[%s1 + $0x18] sm:$0xf]
      %v553 = vld [vmem:[%s1 + $0x1c] sm:$0xf]
      %v554 = vld [vmem:[%s1 + $0x20] sm:$0xf]
      %v555 = vld [vmem:[%s1 + $0x24] sm:$0xf]
      %v556 = vld [vmem:[%s1 + $0x28] sm:$0xf]
      %v557 = vld [vmem:[%s1 + $0x2c] sm:$0xf]
      %v558 = vld [vmem:[%s1 + $0x30] sm:$0xf]
      %v559 = vld [vmem:[%s1 + $0x34] sm:$0xf]
      %v560 = vld [vmem:[%s1 + $0x38] sm:$0xf]
      %v561 = vld [vmem:[%s1 + $0x3c] sm:$0xf]
      %v562 = vld [vmem:[%s4] sm:$0x1]
      %v564 = vlaneseq
      %v565 = vshrl.u32 %v564, 7
      %v566 = vsub.s32 0, %v565
      %v567 = vrot.slane %v562, %v566
      %v585 = vunpack.c.l.b16 %v546
      %v586 = vunpack.c.l.b16 %v547
      %v587 = vunpack.c.l.b16 %v548
      %v588 = vunpack.c.l.b16 %v549
      %v589 = vunpack.c.l.b16 %v550
      %v590 = vunpack.c.l.b16 %v551
      %v591 = vunpack.c.l.b16 %v552
      %v592 = vunpack.c.l.b16 %v553
      %v593 = vunpack.c.l.b16 %v554
      %v594 = vunpack.c.l.b16 %v555
      %v595 = vunpack.c.l.b16 %v556
      %v596 = vunpack.c.l.b16 %v557
      %v597 = vunpack.c.l.b16 %v558
      %v598 = vunpack.c.l.b16 %v559
      %v599 = vunpack.c.l.b16 %v560
      %v600 = vunpack.c.l.b16 %v561
      %v601 = vpack.c.b16 %v586, %v585
      %v602 = vpack.c.b16 %v588, %v587
      %v603 = vpack.c.b16 %v590, %v589
      %v604 = vpack.c.b16 %v592, %v591
      %v605 = vpack.c.b16 %v594, %v593
      %v606 = vpack.c.b16 %v596, %v595
      %v607 = vpack.c.b16 %v598, %v597
      %v608 = vpack.c.b16 %v600, %v599
      %617 = vmatprep.subr.bf16.mxu0 0
      %618 = vmatpush1.bf16.msra.mxu0 %v601
      %619 = vmatprep.subr.bf16.mxu0 0
      %620 = vmatpush1.bf16.msra.mxu0 %v602
      %621 = vmatprep.subr.bf16.mxu0 0
      %622 = vmatpush1.bf16.msra.mxu0 %v603
      %623 = vmatprep.subr.bf16.mxu0 0
      %624 = vmatpush1.bf16.msra.mxu0 %v604
      %625 = vmatprep.subr.bf16.mxu0 0
      %626 = vmatpush1.bf16.msra.mxu0 %v605
      %627 = vmatprep.subr.bf16.mxu0 0
      %628 = vmatpush1.bf16.msra.mxu0 %v606
      %629 = vmatprep.subr.bf16.mxu0 0
      %630 = vmatpush1.bf16.msra.mxu0 %v607
      %631 = vmatprep.subr.bf16.mxu0 0
      %632 = vmatpush1.bf16.msra.mxu0 %v608
      %633 = vmatprep.subr.bf16.mxu0 0
      %634 = vmatpush1.bf16.msra.mxu0 0
      %635 = vmatprep.subr.bf16.mxu0 0
      %636 = vmatpush1.bf16.msra.mxu0 0
      %637 = vmatprep.subr.bf16.mxu0 0
      %638 = vmatpush1.bf16.msra.mxu0 0
      %639 = vmatprep.subr.bf16.mxu0 0
      %640 = vmatpush1.bf16.msra.mxu0 0
      %641 = vmatprep.subr.bf16.mxu0 0
      %642 = vmatpush1.bf16.msra.mxu0 0
      %643 = vmatprep.subr.bf16.mxu0 0
      %644 = vmatpush1.bf16.msra.mxu0 0
      %645 = vmatprep.subr.bf16.mxu0 0
      %646 = vmatpush1.bf16.msra.mxu0 0
      %647 = vmatprep.subr.bf16.mxu0 0
      %648 = vmatpush1.bf16.msra.mxu0 0
      %649 = vmatprep.mubr.bf16.mxu0 0
      %650 = vmatmul.mubr.bf16.gmra.mrb[0].mxu0 %v545
      %v651 = vpop.f32.mrb[0].mxu0
      %v652 = vadd.f32 %v567, %v651
      %v653 = vpop.f32.mrb[0].mxu0
      %v654 = vpop.f32.mrb[0].mxu0
      %v655 = vpop.f32.mrb[0].mxu0
      %656 = vdwg.mxu0
      %v657 = vpack.c.bf16 %v652, %v652
      %v658 = vld [vmem:[%s2] sm:$0xf]
      %v659 = vld [vmem:[%s2 + $0x4] sm:$0xf]
      %v660 = vld [vmem:[%s2 + $0x8] sm:$0xf]
      %v661 = vld [vmem:[%s2 + $0xc] sm:$0xf]
      %v662 = vld [vmem:[%s2 + $0x10] sm:$0xf]
      %v663 = vld [vmem:[%s2 + $0x14] sm:$0xf]
      %v664 = vld [vmem:[%s2 + $0x18] sm:$0xf]
      %v665 = vld [vmem:[%s2 + $0x1c] sm:$0xf]
      %v666 = vld [vmem:[%s2 + $0x20] sm:$0xf]
      %v667 = vld [vmem:[%s2 + $0x24] sm:$0xf]
      %v668 = vld [vmem:[%s2 + $0x28] sm:$0xf]
      %v669 = vld [vmem:[%s2 + $0x2c] sm:$0xf]
      %v670 = vld [vmem:[%s2 + $0x30] sm:$0xf]
      %v671 = vld [vmem:[%s2 + $0x34] sm:$0xf]
      %v672 = vld [vmem:[%s2 + $0x38] sm:$0xf]
      %v673 = vld [vmem:[%s2 + $0x3c] sm:$0xf]
      %v674 = vld [vmem:[%s5] sm:$0x1]
      %v676 = vlaneseq
      %v677 = vshrl.u32 %v676, 7
      %v678 = vsub.s32 0, %v677
      %v679 = vrot.slane %v674, %v678
      %v697 = vunpack.c.l.b16 %v658
      %v698 = vunpack.c.l.b16 %v659
      %v699 = vunpack.c.l.b16 %v660
      %v700 = vunpack.c.l.b16 %v661
      %v701 = vunpack.c.l.b16 %v662
      %v702 = vunpack.c.l.b16 %v663
      %v703 = vunpack.c.l.b16 %v664
      %v704 = vunpack.c.l.b16 %v665
      %v705 = vunpack.c.l.b16 %v666
      %v706 = vunpack.c.l.b16 %v667
      %v707 = vunpack.c.l.b16 %v668
      %v708 = vunpack.c.l.b16 %v669
      %v709 = vunpack.c.l.b16 %v670
      %v710 = vunpack.c.l.b16 %v671
      %v711 = vunpack.c.l.b16 %v672
      %v712 = vunpack.c.l.b16 %v673
      %v713 = vpack.c.b16 %v698, %v697
      %v714 = vpack.c.b16 %v700, %v699
      %v715 = vpack.c.b16 %v702, %v701
      %v716 = vpack.c.b16 %v704, %v703
      %v717 = vpack.c.b16 %v706, %v705
      %v718 = vpack.c.b16 %v708, %v707
      %v719 = vpack.c.b16 %v710, %v709
      %v720 = vpack.c.b16 %v712, %v711
      %729 = vmatprep.subr.bf16.mxu0 0
      %730 = vmatpush1.bf16.msra.mxu0 %v713
      %731 = vmatprep.subr.bf16.mxu0 0
      %732 = vmatpush1.bf16.msra.mxu0 %v714
      %733 = vmatprep.subr.bf16.mxu0 0
      %734 = vmatpush1.bf16.msra.mxu0 %v715
      %735 = vmatprep.subr.bf16.mxu0 0
      %736 = vmatpush1.bf16.msra.mxu0 %v716
      %737 = vmatprep.subr.bf16.mxu0 0
      %738 = vmatpush1.bf16.msra.mxu0 %v717
      %739 = vmatprep.subr.bf16.mxu0 0
      %740 = vmatpush1.bf16.msra.mxu0 %v718
      %741 = vmatprep.subr.bf16.mxu0 0
      %742 = vmatpush1.bf16.msra.mxu0 %v719
      %743 = vmatprep.subr.bf16.mxu0 0
      %744 = vmatpush1.bf16.msra.mxu0 %v720
      %745 = vmatprep.subr.bf16.mxu0 0
      %746 = vmatpush1.bf16.msra.mxu0 0
      %747 = vmatprep.subr.bf16.mxu0 0
      %748 = vmatpush1.bf16.msra.mxu0 0
      %749 = vmatprep.subr.bf16.mxu0 0
      %750 = vmatpush1.bf16.msra.mxu0 0
      %751 = vmatprep.subr.bf16.mxu0 0
      %752 = vmatpush1.bf16.msra.mxu0 0
      %753 = vmatprep.subr.bf16.mxu0 0
      %754 = vmatpush1.bf16.msra.mxu0 0
      %755 = vmatprep.subr.bf16.mxu0 0
      %756 = vmatpush1.bf16.msra.mxu0 0
      %757 = vmatprep.subr.bf16.mxu0 0
      %758 = vmatpush1.bf16.msra.mxu0 0
      %759 = vmatprep.subr.bf16.mxu0 0
      %760 = vmatpush1.bf16.msra.mxu0 0
      %761 = vmatprep.mubr.bf16.mxu0 0
      %762 = vmatmul.mubr.bf16.gmra.mrb[0].mxu0 %v545
      %v763 = vpop.f32.mrb[0].mxu0
      %v764 = vadd.f32 %v679, %v763
      %v765 = vpop.f32.mrb[0].mxu0
      %v766 = vpop.f32.mrb[0].mxu0
      %v767 = vpop.f32.mrb[0].mxu0
      %768 = vdwg.mxu0
      %v769 = vpack.c.bf16 %v764, %v764
      %v770 = vld [vmem:[%s3] sm:$0xf]
      %v771 = vld [vmem:[%s3 + $0x4] sm:$0xf]
      %v772 = vld [vmem:[%s3 + $0x8] sm:$0xf]
      %v773 = vld [vmem:[%s3 + $0xc] sm:$0xf]
      %v774 = vld [vmem:[%s3 + $0x10] sm:$0xf]
      %v775 = vld [vmem:[%s3 + $0x14] sm:$0xf]
      %v776 = vld [vmem:[%s3 + $0x18] sm:$0xf]
      %v777 = vld [vmem:[%s3 + $0x1c] sm:$0xf]
      %v778 = vld [vmem:[%s3 + $0x20] sm:$0xf]
      %v779 = vld [vmem:[%s3 + $0x24] sm:$0xf]
      %v780 = vld [vmem:[%s3 + $0x28] sm:$0xf]
      %v781 = vld [vmem:[%s3 + $0x2c] sm:$0xf]
      %v782 = vld [vmem:[%s3 + $0x30] sm:$0xf]
      %v783 = vld [vmem:[%s3 + $0x34] sm:$0xf]
      %v784 = vld [vmem:[%s3 + $0x38] sm:$0xf]
      %v785 = vld [vmem:[%s3 + $0x3c] sm:$0xf]
      %v786 = vld [vmem:[%s6] sm:$0x1]
      %v788 = vlaneseq
      %v789 = vshrl.u32 %v788, 7
      %v790 = vsub.s32 0, %v789
      %v791 = vrot.slane %v786, %v790
      %v809 = vunpack.c.l.b16 %v770
      %v810 = vunpack.c.l.b16 %v771
      %v811 = vunpack.c.l.b16 %v772
      %v812 = vunpack.c.l.b16 %v773
      %v813 = vunpack.c.l.b16 %v774
      %v814 = vunpack.c.l.b16 %v775
      %v815 = vunpack.c.l.b16 %v776
      %v816 = vunpack.c.l.b16 %v777
      %v817 = vunpack.c.l.b16 %v778
      %v818 = vunpack.c.l.b16 %v779
      %v819 = vunpack.c.l.b16 %v780
      %v820 = vunpack.c.l.b16 %v781
      %v821 = vunpack.c.l.b16 %v782
      %v822 = vunpack.c.l.b16 %v783
      %v823 = vunpack.c.l.b16 %v784
      %v824 = vunpack.c.l.b16 %v785
      %v825 = vpack.c.b16 %v810, %v809
      %v826 = vpack.c.b16 %v812, %v811
      %v827 = vpack.c.b16 %v814, %v813
      %v828 = vpack.c.b16 %v816, %v815
      %v829 = vpack.c.b16 %v818, %v817
      %v830 = vpack.c.b16 %v820, %v819
      %v831 = vpack.c.b16 %v822, %v821
      %v832 = vpack.c.b16 %v824, %v823
      %841 = vmatprep.subr.bf16.mxu0 0
      %842 = vmatpush1.bf16.msra.mxu0 %v825
      %843 = vmatprep.subr.bf16.mxu0 0
      %844 = vmatpush1.bf16.msra.mxu0 %v826
      %845 = vmatprep.subr.bf16.mxu0 0
      %846 = vmatpush1.bf16.msra.mxu0 %v827
      %847 = vmatprep.subr.bf16.mxu0 0
      %848 = vmatpush1.bf16.msra.mxu0 %v828
      %849 = vmatprep.subr.bf16.mxu0 0
      %850 = vmatpush1.bf16.msra.mxu0 %v829
      %851 = vmatprep.subr.bf16.mxu0 0
      %852 = vmatpush1.bf16.msra.mxu0 %v830
      %853 = vmatprep.subr.bf16.mxu0 0
      %854 = vmatpush1.bf16.msra.mxu0 %v831
      %855 = vmatprep.subr.bf16.mxu0 0
      %856 = vmatpush1.bf16.msra.mxu0 %v832
      %857 = vmatprep.subr.bf16.mxu0 0
      %858 = vmatpush1.bf16.msra.mxu0 0
      %859 = vmatprep.subr.bf16.mxu0 0
      %860 = vmatpush1.bf16.msra.mxu0 0
      %861 = vmatprep.subr.bf16.mxu0 0
      %862 = vmatpush1.bf16.msra.mxu0 0
      %863 = vmatprep.subr.bf16.mxu0 0
      %864 = vmatpush1.bf16.msra.mxu0 0
      %865 = vmatprep.subr.bf16.mxu0 0
      %866 = vmatpush1.bf16.msra.mxu0 0
      %867 = vmatprep.subr.bf16.mxu0 0
      %868 = vmatpush1.bf16.msra.mxu0 0
      %869 = vmatprep.subr.bf16.mxu0 0
      %870 = vmatpush1.bf16.msra.mxu0 0
      %871 = vmatprep.subr.bf16.mxu0 0
      %872 = vmatpush1.bf16.msra.mxu0 0
      %873 = vmatprep.mubr.bf16.mxu0 0
      %874 = vmatmul.mubr.bf16.gmra.mrb[0].mxu0 %v545
      %v875 = vpop.f32.mrb[0].mxu0
      %v876 = vadd.f32 %v791, %v875
      %v877 = vpop.f32.mrb[0].mxu0
      %v878 = vpop.f32.mrb[0].mxu0
      %v879 = vpop.f32.mrb[0].mxu0
      %880 = vdwg.mxu0
      %v881 = vpack.c.bf16 %v876, %v876
      %vm882 = vcmask 261120
      %v884 = vsel %vm882, %v657, 0
      %v887 = vsel %vm882, %v769, 0
      %889 = vmatprep.subr.bf16.mxu0 0
      %890 = vmatpush1.bf16.xpose.msra.mxu0 %v887
      %891 = vmatprep.subr.bf16.mxu0 0
      %892 = vmatpush1.bf16.xpose.msra.mxu0 0
      %893 = vmatprep.subr.bf16.mxu0 0
      %894 = vmatpush1.bf16.xpose.msra.mxu0 0
      %895 = vmatprep.subr.bf16.mxu0 0
      %896 = vmatpush1.bf16.xpose.msra.mxu0 0
      %897 = vmatprep.subr.bf16.mxu0 0
      %898 = vmatpush1.bf16.xpose.msra.mxu0 0
      %899 = vmatprep.subr.bf16.mxu0 0
      %900 = vmatpush1.bf16.xpose.msra.mxu0 0
      %901 = vmatprep.subr.bf16.mxu0 0
      %902 = vmatpush1.bf16.xpose.msra.mxu0 0
      %903 = vmatprep.subr.bf16.mxu0 0
      %904 = vmatpush1.bf16.xpose.msra.mxu0 0
      %905 = vmatprep.subr.bf16.mxu0 0
      %906 = vmatpush1.bf16.xpose.msra.mxu0 0
      %907 = vmatprep.subr.bf16.mxu0 0
      %908 = vmatpush1.bf16.xpose.msra.mxu0 0
      %909 = vmatprep.subr.bf16.mxu0 0
      %910 = vmatpush1.bf16.xpose.msra.mxu0 0
      %911 = vmatprep.subr.bf16.mxu0 0
      %912 = vmatpush1.bf16.xpose.msra.mxu0 0
      %913 = vmatprep.subr.bf16.mxu0 0
      %914 = vmatpush1.bf16.xpose.msra.mxu0 0
      %915 = vmatprep.subr.bf16.mxu0 0
      %916 = vmatpush1.bf16.xpose.msra.mxu0 0
      %917 = vmatprep.subr.bf16.mxu0 0
      %918 = vmatpush1.bf16.xpose.msra.mxu0 0
      %919 = vmatprep.subr.bf16.mxu0 0
      %920 = vmatpush1.bf16.xpose.msra.mxu0 0
      %921 = vmatprep.mubr.bf16.mxu0 0
      %922 = vmatmul.mubr.bf16.gmra.mrb[0].mxu0 %v884
      %v923 = vpop.f32.mrb[0].mxu0
      %v924 = vadd.f32 0.0, %v923
      %v925 = vpop.f32.mrb[0].mxu0
      %v926 = vpop.f32.mrb[0].mxu0
      %v927 = vpop.f32.mrb[0].mxu0
      %928 = vdwg.mxu0
      %v929 = vmul.f32 %v924, 0.17677669
      %vm930 = vcmask 64512
      %v931 = vsel %vm930, %v929, -inf
      %932 = vmax.xlane.f32.xlu0 %v931
      %v933 = vpop.xlane.xlu0 %932
      %v934 = vsub.f32 %v929, %v933
      %v935 = vmul.f32 %v934, 1.442695
      %v936 = vpow.pop %v935
      %v937 = vsel %vm930, %v936, 0.0
      %938 = vadd.xlane.f32.xlu0 %v937
      %v939 = vpop.xlane.xlu0 %938
      %v940 = vrcp.pop %v939
      %v941 = vmul.f32 %v936, %v940
      %v942 = vpack.c.bf16 %v941, %v941
      %v944 = vsel %vm930, %v942, 0
      %vm946 = vcmask 1043456
      %v948 = vsel %vm946, %v881, 0
      %950 = vmatprep.subr.bf16.mxu0 0
      %951 = vmatpush1.bf16.msra.mxu0 %v948
      %952 = vmatprep.subr.bf16.mxu0 0
      %953 = vmatpush1.bf16.msra.mxu0 0
      %954 = vmatprep.subr.bf16.mxu0 0
      %955 = vmatpush1.bf16.msra.mxu0 0
      %956 = vmatprep.subr.bf16.mxu0 0
      %957 = vmatpush1.bf16.msra.mxu0 0
      %958 = vmatprep.subr.bf16.mxu0 0
      %959 = vmatpush1.bf16.msra.mxu0 0
      %960 = vmatprep.subr.bf16.mxu0 0
      %961 = vmatpush1.bf16.msra.mxu0 0
      %962 = vmatprep.subr.bf16.mxu0 0
      %963 = vmatpush1.bf16.msra.mxu0 0
      %964 = vmatprep.subr.bf16.mxu0 0
      %965 = vmatpush1.bf16.msra.mxu0 0
      %966 = vmatprep.subr.bf16.mxu0 0
      %967 = vmatpush1.bf16.msra.mxu0 0
      %968 = vmatprep.subr.bf16.mxu0 0
      %969 = vmatpush1.bf16.msra.mxu0 0
      %970 = vmatprep.subr.bf16.mxu0 0
      %971 = vmatpush1.bf16.msra.mxu0 0
      %972 = vmatprep.subr.bf16.mxu0 0
      %973 = vmatpush1.bf16.msra.mxu0 0
      %974 = vmatprep.subr.bf16.mxu0 0
      %975 = vmatpush1.bf16.msra.mxu0 0
      %976 = vmatprep.subr.bf16.mxu0 0
      %977 = vmatpush1.bf16.msra.mxu0 0
      %978 = vmatprep.subr.bf16.mxu0 0
      %979 = vmatpush1.bf16.msra.mxu0 0
      %980 = vmatprep.subr.bf16.mxu0 0
      %981 = vmatpush1.bf16.msra.mxu0 0
      %982 = vmatprep.mubr.bf16.mxu0 0
      %983 = vmatmul.mubr.bf16.gmra.mrb[0].mxu0 %v944
      %v984 = vpop.f32.mrb[0].mxu0
      %v985 = vadd.f32 0.0, %v984
      %v986 = vpop.f32.mrb[0].mxu0
      %v987 = vpop.f32.mrb[0].mxu0
      %v988 = vpop.f32.mrb[0].mxu0
      %989 = vdwg.mxu0
      %991 = vrot.lane.b32.xlu0 %v657, 96
      %v992 = vpop.permute.xlu0 %991
      %994 = vrot.lane.b32.xlu0 %v769, 96
      %v995 = vpop.permute.xlu0 %994
      %v997 = vsel %vm882, %v992, 0
      %v1000 = vsel %vm882, %v995, 0
      %1002 = vmatprep.subr.bf16.mxu0 0
      %1003 = vmatpush1.bf16.xpose.msra.mxu0 %v1000
      %1004 = vmatprep.subr.bf16.mxu0 0
      %1005 = vmatpush1.bf16.xpose.msra.mxu0 0
      %1006 = vmatprep.subr.bf16.mxu0 0
      %1007 = vmatpush1.bf16.xpose.msra.mxu0 0
      %1008 = vmatprep.subr.bf16.mxu0 0
      %1009 = vmatpush1.bf16.xpose.msra.mxu0 0
      %1010 = vmatprep.subr.bf16.mxu0 0
      %1011 = vmatpush1.bf16.xpose.msra.mxu0 0
      %1012 = vmatprep.subr.bf16.mxu0 0
      %1013 = vmatpush1.bf16.xpose.msra.mxu0 0
      %1014 = vmatprep.subr.bf16.mxu0 0
      %1015 = vmatpush1.bf16.xpose.msra.mxu0 0
      %1016 = vmatprep.subr.bf16.mxu0 0
      %1017 = vmatpush1.bf16.xpose.msra.mxu0 0
      %1018 = vmatprep.subr.bf16.mxu0 0
      %1019 = vmatpush1.bf16.xpose.msra.mxu0 0
      %1020 = vmatprep.subr.bf16.mxu0 0
      %1021 = vmatpush1.bf16.xpose.msra.mxu0 0
      %1022 = vmatprep.subr.bf16.mxu0 0
      %1023 = vmatpush1.bf16.xpose.msra.mxu0 0
      %1024 = vmatprep.subr.bf16.mxu0 0
      %1025 = vmatpush1.bf16.xpose.msra.mxu0 0
      %1026 = vmatprep.subr.bf16.mxu0 0
      %1027 = vmatpush1.bf16.xpose.msra.mxu0 0
      %1028 = vmatprep.subr.bf16.mxu0 0
      %1029 = vmatpush1.bf16.xpose.msra.mxu0 0
      %1030 = vmatprep.subr.bf16.mxu0 0
      %1031 = vmatpush1.bf16.xpose.msra.mxu0 0
      %1032 = vmatprep.subr.bf16.mxu0 0
      %1033 = vmatpush1.bf16.xpose.msra.mxu0 0
      %1034 = vmatprep.mubr.bf16.mxu0 0
      %1035 = vmatmul.mubr.bf16.gmra.mrb[0].mxu0 %v997
      %v1036 = vpop.f32.mrb[0].mxu0
      %v1037 = vadd.f32 0.0, %v1036
      %v1038 = vpop.f32.mrb[0].mxu0
      %v1039 = vpop.f32.mrb[0].mxu0
      %v1040 = vpop.f32.mrb[0].mxu0
      %1041 = vdwg.mxu0
      %v1042 = vmul.f32 %v1037, 0.17677669
      %v1043 = vsel %vm930, %v1042, -inf
      %1044 = vmax.xlane.f32.xlu0 %v1043
      %v1045 = vpop.xlane.xlu0 %1044
      %v1046 = vsub.f32 %v1042, %v1045
      %v1047 = vmul.f32 %v1046, 1.442695
      %v1048 = vpow.pop %v1047
      %v1049 = vsel %vm930, %v1048, 0.0
      %1050 = vadd.xlane.f32.xlu0 %v1049
      %v1051 = vpop.xlane.xlu0 %1050
      %v1052 = vrcp.pop %v1051
      %v1053 = vmul.f32 %v1048, %v1052
      %v1054 = vpack.c.bf16 %v1053, %v1053
      %1056 = vrot.lane.b32.xlu0 %v881, 96
      %v1057 = vpop.permute.xlu0 %1056
      %v1059 = vsel %vm930, %v1054, 0
      %v1062 = vsel %vm946, %v1057, 0
      %1064 = vmatprep.subr.bf16.mxu0 0
      %1065 = vmatpush1.bf16.msra.mxu0 %v1062
      %1066 = vmatprep.subr.bf16.mxu0 0
      %1067 = vmatpush1.bf16.msra.mxu0 0
      %1068 = vmatprep.subr.bf16.mxu0 0
      %1069 = vmatpush1.bf16.msra.mxu0 0
      %1070 = vmatprep.subr.bf16.mxu0 0
      %1071 = vmatpush1.bf16.msra.mxu0 0
      %1072 = vmatprep.subr.bf16.mxu0 0
      %1073 = vmatpush1.bf16.msra.mxu0 0
      %1074 = vmatprep.subr.bf16.mxu0 0
      %1075 = vmatpush1.bf16.msra.mxu0 0
      %1076 = vmatprep.subr.bf16.mxu0 0
      %1077 = vmatpush1.bf16.msra.mxu0 0
      %1078 = vmatprep.subr.bf16.mxu0 0
      %1079 = vmatpush1.bf16.msra.mxu0 0
      %1080 = vmatprep.subr.bf16.mxu0 0
      %1081 = vmatpush1.bf16.msra.mxu0 0
      %1082 = vmatprep.subr.bf16.mxu0 0
      %1083 = vmatpush1.bf16.msra.mxu0 0
      %1084 = vmatprep.subr.bf16.mxu0 0
      %1085 = vmatpush1.bf16.msra.mxu0 0
      %1086 = vmatprep.subr.bf16.mxu0 0
      %1087 = vmatpush1.bf16.msra.mxu0 0
      %1088 = vmatprep.subr.bf16.mxu0 0
      %1089 = vmatpush1.bf16.msra.mxu0 0
      %1090 = vmatprep.subr.bf16.mxu0 0
      %1091 = vmatpush1.bf16.msra.mxu0 0
      %1092 = vmatprep.subr.bf16.mxu0 0
      %1093 = vmatpush1.bf16.msra.mxu0 0
      %1094 = vmatprep.subr.bf16.mxu0 0
      %1095 = vmatpush1.bf16.msra.mxu0 0
      %1096 = vmatprep.mubr.bf16.mxu0 0
      %1097 = vmatmul.mubr.bf16.gmra.mrb[0].mxu0 %v1059
      %v1098 = vpop.f32.mrb[0].mxu0
      %v1099 = vadd.f32 0.0, %v1098
      %v1100 = vpop.f32.mrb[0].mxu0
      %v1101 = vpop.f32.mrb[0].mxu0
      %v1102 = vpop.f32.mrb[0].mxu0
      %1103 = vdwg.mxu0
      %1104 = vrot.lane.b32.xlu0 %v657, 64
      %v1105 = vpop.permute.xlu0 %1104
      %1106 = vrot.lane.b32.xlu0 %v769, 64
      %v1107 = vpop.permute.xlu0 %1106
      %v1109 = vsel %vm882, %v1105, 0
      %v1112 = vsel %vm882, %v1107, 0
      %1114 = vmatprep.subr.bf16.mxu0 0
      %1115 = vmatpush1.bf16.xpose.msra.mxu0 %v1112
      %1116 = vmatprep.subr.bf16.mxu0 0
      %1117 = vmatpush1.bf16.xpose.msra.mxu0 0
      %1118 = vmatprep.subr.bf16.mxu0 0
      %1119 = vmatpush1.bf16.xpose.msra.mxu0 0
      %1120 = vmatprep.subr.bf16.mxu0 0
      %1121 = vmatpush1.bf16.xpose.msra.mxu0 0
      %1122 = vmatprep.subr.bf16.mxu0 0
      %1123 = vmatpush1.bf16.xpose.msra.mxu0 0
      %1124 = vmatprep.subr.bf16.mxu0 0
      %1125 = vmatpush1.bf16.xpose.msra.mxu0 0
      %1126 = vmatprep.subr.bf16.mxu0 0
      %1127 = vmatpush1.bf16.xpose.msra.mxu0 0
      %1128 = vmatprep.subr.bf16.mxu0 0
      %1129 = vmatpush1.bf16.xpose.msra.mxu0 0
      %1130 = vmatprep.subr.bf16.mxu0 0
      %1131 = vmatpush1.bf16.xpose.msra.mxu0 0
      %1132 = vmatprep.subr.bf16.mxu0 0
      %1133 = vmatpush1.bf16.xpose.msra.mxu0 0
      %1134 = vmatprep.subr.bf16.mxu0 0
      %1135 = vmatpush1.bf16.xpose.msra.mxu0 0
      %1136 = vmatprep.subr.bf16.mxu0 0
      %1137 = vmatpush1.bf16.xpose.msra.mxu0 0
      %1138 = vmatprep.subr.bf16.mxu0 0
      %1139 = vmatpush1.bf16.xpose.msra.mxu0 0
      %1140 = vmatprep.subr.bf16.mxu0 0
      %1141 = vmatpush1.bf16.xpose.msra.mxu0 0
      %1142 = vmatprep.subr.bf16.mxu0 0
      %1143 = vmatpush1.bf16.xpose.msra.mxu0 0
      %1144 = vmatprep.subr.bf16.mxu0 0
      %1145 = vmatpush1.bf16.xpose.msra.mxu0 0
      %1146 = vmatprep.mubr.bf16.mxu0 0
      %1147 = vmatmul.mubr.bf16.gmra.mrb[0].mxu0 %v1109
      %v1148 = vpop.f32.mrb[0].mxu0
      %v1149 = vadd.f32 0.0, %v1148
      %v1150 = vpop.f32.mrb[0].mxu0
      %v1151 = vpop.f32.mrb[0].mxu0
      %v1152 = vpop.f32.mrb[0].mxu0
      %1153 = vdwg.mxu0
      %v1154 = vmul.f32 %v1149, 0.17677669
      %v1155 = vsel %vm930, %v1154, -inf
      %1156 = vmax.xlane.f32.xlu0 %v1155
      %v1157 = vpop.xlane.xlu0 %1156
      %v1158 = vsub.f32 %v1154, %v1157
      %v1159 = vmul.f32 %v1158, 1.442695
      %v1160 = vpow.pop %v1159
      %v1161 = vsel %vm930, %v1160, 0.0
      %1162 = vadd.xlane.f32.xlu0 %v1161
      %v1163 = vpop.xlane.xlu0 %1162
      %v1164 = vrcp.pop %v1163
      %v1165 = vmul.f32 %v1160, %v1164
      %v1166 = vpack.c.bf16 %v1165, %v1165
      %1167 = vrot.lane.b32.xlu0 %v881, 64
      %v1168 = vpop.permute.xlu0 %1167
      %v1170 = vsel %vm930, %v1166, 0
      %v1173 = vsel %vm946, %v1168, 0
      %1175 = vmatprep.subr.bf16.mxu0 0
      %1176 = vmatpush1.bf16.msra.mxu0 %v1173
      %1177 = vmatprep.subr.bf16.mxu0 0
      %1178 = vmatpush1.bf16.msra.mxu0 0
      %1179 = vmatprep.subr.bf16.mxu0 0
      %1180 = vmatpush1.bf16.msra.mxu0 0
      %1181 = vmatprep.subr.bf16.mxu0 0
      %1182 = vmatpush1.bf16.msra.mxu0 0
      %1183 = vmatprep.subr.bf16.mxu0 0
      %1184 = vmatpush1.bf16.msra.mxu0 0
      %1185 = vmatprep.subr.bf16.mxu0 0
      %1186 = vmatpush1.bf16.msra.mxu0 0
      %1187 = vmatprep.subr.bf16.mxu0 0
      %1188 = vmatpush1.bf16.msra.mxu0 0
      %1189 = vmatprep.subr.bf16.mxu0 0
      %1190 = vmatpush1.bf16.msra.mxu0 0
      %1191 = vmatprep.subr.bf16.mxu0 0
      %1192 = vmatpush1.bf16.msra.mxu0 0
      %1193 = vmatprep.subr.bf16.mxu0 0
      %1194 = vmatpush1.bf16.msra.mxu0 0
      %1195 = vmatprep.subr.bf16.mxu0 0
      %1196 = vmatpush1.bf16.msra.mxu0 0
      %1197 = vmatprep.subr.bf16.mxu0 0
      %1198 = vmatpush1.bf16.msra.mxu0 0
      %1199 = vmatprep.subr.bf16.mxu0 0
      %1200 = vmatpush1.bf16.msra.mxu0 0
      %1201 = vmatprep.subr.bf16.mxu0 0
      %1202 = vmatpush1.bf16.msra.mxu0 0
      %1203 = vmatprep.subr.bf16.mxu0 0
      %1204 = vmatpush1.bf16.msra.mxu0 0
      %1205 = vmatprep.subr.bf16.mxu0 0
      %1206 = vmatpush1.bf16.msra.mxu0 0
      %1207 = vmatprep.mubr.bf16.mxu0 0
      %1208 = vmatmul.mubr.bf16.gmra.mrb[0].mxu0 %v1170
      %v1209 = vpop.f32.mrb[0].mxu0
      %v1210 = vadd.f32 0.0, %v1209
      %v1211 = vpop.f32.mrb[0].mxu0
      %v1212 = vpop.f32.mrb[0].mxu0
      %v1213 = vpop.f32.mrb[0].mxu0
      %1214 = vdwg.mxu0
      %1215 = vrot.lane.b32.xlu0 %v657, 32
      %v1216 = vpop.permute.xlu0 %1215
      %1217 = vrot.lane.b32.xlu0 %v769, 32
      %v1218 = vpop.permute.xlu0 %1217
      %v1220 = vsel %vm882, %v1216, 0
      %v1223 = vsel %vm882, %v1218, 0
      %1225 = vmatprep.subr.bf16.mxu0 0
      %1226 = vmatpush1.bf16.xpose.msra.mxu0 %v1223
      %1227 = vmatprep.subr.bf16.mxu0 0
      %1228 = vmatpush1.bf16.xpose.msra.mxu0 0
      %1229 = vmatprep.subr.bf16.mxu0 0
      %1230 = vmatpush1.bf16.xpose.msra.mxu0 0
      %1231 = vmatprep.subr.bf16.mxu0 0
      %1232 = vmatpush1.bf16.xpose.msra.mxu0 0
      %1233 = vmatprep.subr.bf16.mxu0 0
      %1234 = vmatpush1.bf16.xpose.msra.mxu0 0
      %1235 = vmatprep.subr.bf16.mxu0 0
      %1236 = vmatpush1.bf16.xpose.msra.mxu0 0
      %1237 = vmatprep.subr.bf16.mxu0 0
      %1238 = vmatpush1.bf16.xpose.msra.mxu0 0
      %1239 = vmatprep.subr.bf16.mxu0 0
      %1240 = vmatpush1.bf16.xpose.msra.mxu0 0
      %1241 = vmatprep.subr.bf16.mxu0 0
      %1242 = vmatpush1.bf16.xpose.msra.mxu0 0
      %1243 = vmatprep.subr.bf16.mxu0 0
      %1244 = vmatpush1.bf16.xpose.msra.mxu0 0
      %1245 = vmatprep.subr.bf16.mxu0 0
      %1246 = vmatpush1.bf16.xpose.msra.mxu0 0
      %1247 = vmatprep.subr.bf16.mxu0 0
      %1248 = vmatpush1.bf16.xpose.msra.mxu0 0
      %1249 = vmatprep.subr.bf16.mxu0 0
      %1250 = vmatpush1.bf16.xpose.msra.mxu0 0
      %1251 = vmatprep.subr.bf16.mxu0 0
      %1252 = vmatpush1.bf16.xpose.msra.mxu0 0
      %1253 = vmatprep.subr.bf16.mxu0 0
      %1254 = vmatpush1.bf16.xpose.msra.mxu0 0
      %1255 = vmatprep.subr.bf16.mxu0 0
      %1256 = vmatpush1.bf16.xpose.msra.mxu0 0
      %1257 = vmatprep.mubr.bf16.mxu0 0
      %1258 = vmatmul.mubr.bf16.gmra.mrb[0].mxu0 %v1220
      %v1259 = vpop.f32.mrb[0].mxu0
      %v1260 = vadd.f32 0.0, %v1259
      %v1261 = vpop.f32.mrb[0].mxu0
      %v1262 = vpop.f32.mrb[0].mxu0
      %v1263 = vpop.f32.mrb[0].mxu0
      %1264 = vdwg.mxu0
      %v1265 = vmul.f32 %v1260, 0.17677669
      %v1266 = vsel %vm930, %v1265, -inf
      %1267 = vmax.xlane.f32.xlu0 %v1266
      %v1268 = vpop.xlane.xlu0 %1267
      %v1269 = vsub.f32 %v1265, %v1268
      %v1270 = vmul.f32 %v1269, 1.442695
      %v1271 = vpow.pop %v1270
      %v1272 = vsel %vm930, %v1271, 0.0
      %1273 = vadd.xlane.f32.xlu0 %v1272
      %v1274 = vpop.xlane.xlu0 %1273
      %v1275 = vrcp.pop %v1274
      %v1276 = vmul.f32 %v1271, %v1275
      %v1277 = vpack.c.bf16 %v1276, %v1276
      %1278 = vrot.lane.b32.xlu0 %v881, 32
      %v1279 = vpop.permute.xlu0 %1278
      %v1281 = vsel %vm930, %v1277, 0
      %v1284 = vsel %vm946, %v1279, 0
      %1286 = vmatprep.subr.bf16.mxu0 0
      %1287 = vmatpush1.bf16.msra.mxu0 %v1284
      %1288 = vmatprep.subr.bf16.mxu0 0
      %1289 = vmatpush1.bf16.msra.mxu0 0
      %1290 = vmatprep.subr.bf16.mxu0 0
      %1291 = vmatpush1.bf16.msra.mxu0 0
      %1292 = vmatprep.subr.bf16.mxu0 0
      %1293 = vmatpush1.bf16.msra.mxu0 0
      %1294 = vmatprep.subr.bf16.mxu0 0
      %1295 = vmatpush1.bf16.msra.mxu0 0
      %1296 = vmatprep.subr.bf16.mxu0 0
      %1297 = vmatpush1.bf16.msra.mxu0 0
      %1298 = vmatprep.subr.bf16.mxu0 0
      %1299 = vmatpush1.bf16.msra.mxu0 0
      %1300 = vmatprep.subr.bf16.mxu0 0
      %1301 = vmatpush1.bf16.msra.mxu0 0
      %1302 = vmatprep.subr.bf16.mxu0 0
      %1303 = vmatpush1.bf16.msra.mxu0 0
      %1304 = vmatprep.subr.bf16.mxu0 0
      %1305 = vmatpush1.bf16.msra.mxu0 0
      %1306 = vmatprep.subr.bf16.mxu0 0
      %1307 = vmatpush1.bf16.msra.mxu0 0
      %1308 = vmatprep.subr.bf16.mxu0 0
      %1309 = vmatpush1.bf16.msra.mxu0 0
      %1310 = vmatprep.subr.bf16.mxu0 0
      %1311 = vmatpush1.bf16.msra.mxu0 0
      %1312 = vmatprep.subr.bf16.mxu0 0
      %1313 = vmatpush1.bf16.msra.mxu0 0
      %1314 = vmatprep.subr.bf16.mxu0 0
      %1315 = vmatpush1.bf16.msra.mxu0 0
      %1316 = vmatprep.subr.bf16.mxu0 0
      %1317 = vmatpush1.bf16.msra.mxu0 0
      %1318 = vmatprep.mubr.bf16.mxu0 0
      %1319 = vmatmul.mubr.bf16.gmra.mrb[0].mxu0 %v1281
      %v1320 = vpop.f32.mrb[0].mxu0
      %v1321 = vadd.f32 0.0, %v1320
      %v1322 = vpop.f32.mrb[0].mxu0
      %v1323 = vpop.f32.mrb[0].mxu0
      %v1324 = vpop.f32.mrb[0].mxu0
      %1325 = vdwg.mxu0
      %1327 = vrot.lane.b32.xlu0 %v1099, 32
      %v1328 = vpop.permute.xlu0 %1327
      %1331 = vrot.lane.b32.xlu0 %v1210, 64
      %v1332 = vpop.permute.xlu0 %1331
      %1335 = vrot.lane.b32.xlu0 %v1321, 96
      %v1336 = vpop.permute.xlu0 %1335
      %v1338 = vsel %vm882, %v985, %v1328
      %vm1339 = vcmask 523264
      %v1340 = vsel %vm1339, %v1338, %v1332
      %vm1341 = vcmask 785408
      %v1342 = vsel %vm1341, %v1340, %v1336
      %v1343 = vpack.c.bf16 %v1342, %v1342
      %v1344 = vld [vmem:[%s7] sm:$0xf]
      %v1345 = vld [vmem:[%s7 + $0x4] sm:$0xf]
      %v1346 = vld [vmem:[%s7 + $0x8] sm:$0xf]
      %v1347 = vld [vmem:[%s7 + $0xc] sm:$0xf]
      %v1348 = vld [vmem:[%s7 + $0x10] sm:$0xf]
      %v1349 = vld [vmem:[%s7 + $0x14] sm:$0xf]
      %v1350 = vld [vmem:[%s7 + $0x18] sm:$0xf]
      %v1351 = vld [vmem:[%s7 + $0x1c] sm:$0xf]
      %v1352 = vld [vmem:[%s7 + $0x20] sm:$0xf]
      %v1353 = vld [vmem:[%s7 + $0x24] sm:$0xf]
      %v1354 = vld [vmem:[%s7 + $0x28] sm:$0xf]
      %v1355 = vld [vmem:[%s7 + $0x2c] sm:$0xf]
      %v1356 = vld [vmem:[%s7 + $0x30] sm:$0xf]
      %v1357 = vld [vmem:[%s7 + $0x34] sm:$0xf]
      %v1358 = vld [vmem:[%s7 + $0x38] sm:$0xf]
      %v1359 = vld [vmem:[%s7 + $0x3c] sm:$0xf]
      %v1360 = vld [vmem:[%s8] sm:$0x1]
      %v1362 = vlaneseq
      %v1363 = vshrl.u32 %v1362, 7
      %v1364 = vsub.s32 0, %v1363
      %v1365 = vrot.slane %v1360, %v1364
      %v1383 = vunpack.c.l.b16 %v1344
      %v1384 = vunpack.c.l.b16 %v1345
      %v1385 = vunpack.c.l.b16 %v1346
      %v1386 = vunpack.c.l.b16 %v1347
      %v1387 = vunpack.c.l.b16 %v1348
      %v1388 = vunpack.c.l.b16 %v1349
      %v1389 = vunpack.c.l.b16 %v1350
      %v1390 = vunpack.c.l.b16 %v1351
      %v1391 = vunpack.c.l.b16 %v1352
      %v1392 = vunpack.c.l.b16 %v1353
      %v1393 = vunpack.c.l.b16 %v1354
      %v1394 = vunpack.c.l.b16 %v1355
      %v1395 = vunpack.c.l.b16 %v1356
      %v1396 = vunpack.c.l.b16 %v1357
      %v1397 = vunpack.c.l.b16 %v1358
      %v1398 = vunpack.c.l.b16 %v1359
      %v1399 = vpack.c.b16 %v1384, %v1383
      %v1400 = vpack.c.b16 %v1386, %v1385
      %v1401 = vpack.c.b16 %v1388, %v1387
      %v1402 = vpack.c.b16 %v1390, %v1389
      %v1403 = vpack.c.b16 %v1392, %v1391
      %v1404 = vpack.c.b16 %v1394, %v1393
      %v1405 = vpack.c.b16 %v1396, %v1395
      %v1406 = vpack.c.b16 %v1398, %v1397
      %1415 = vmatprep.subr.bf16.mxu0 0
      %1416 = vmatpush1.bf16.msra.mxu0 %v1399
      %1417 = vmatprep.subr.bf16.mxu0 0
      %1418 = vmatpush1.bf16.msra.mxu0 %v1400
      %1419 = vmatprep.subr.bf16.mxu0 0
      %1420 = vmatpush1.bf16.msra.mxu0 %v1401
      %1421 = vmatprep.subr.bf16.mxu0 0
      %1422 = vmatpush1.bf16.msra.mxu0 %v1402
      %1423 = vmatprep.subr.bf16.mxu0 0
      %1424 = vmatpush1.bf16.msra.mxu0 %v1403
      %1425 = vmatprep.subr.bf16.mxu0 0
      %1426 = vmatpush1.bf16.msra.mxu0 %v1404
      %1427 = vmatprep.subr.bf16.mxu0 0
      %1428 = vmatpush1.bf16.msra.mxu0 %v1405
      %1429 = vmatprep.subr.bf16.mxu0 0
      %1430 = vmatpush1.bf16.msra.mxu0 %v1406
      %1431 = vmatprep.subr.bf16.mxu0 0
      %1432 = vmatpush1.bf16.msra.mxu0 0
      %1433 = vmatprep.subr.bf16.mxu0 0
      %1434 = vmatpush1.bf16.msra.mxu0 0
      %1435 = vmatprep.subr.bf16.mxu0 0
      %1436 = vmatpush1.bf16.msra.mxu0 0
      %1437 = vmatprep.subr.bf16.mxu0 0
      %1438 = vmatpush1.bf16.msra.mxu0 0
      %1439 = vmatprep.subr.bf16.mxu0 0
      %1440 = vmatpush1.bf16.msra.mxu0 0
      %1441 = vmatprep.subr.bf16.mxu0 0
      %1442 = vmatpush1.bf16.msra.mxu0 0
      %1443 = vmatprep.subr.bf16.mxu0 0
      %1444 = vmatpush1.bf16.msra.mxu0 0
      %1445 = vmatprep.subr.bf16.mxu0 0
      %1446 = vmatpush1.bf16.msra.mxu0 0
      %1447 = vmatprep.mubr.bf16.mxu0 0
      %1448 = vmatmul.mubr.bf16.gmra.mrb[0].mxu0 %v1343
      %v1449 = vpop.f32.mrb[0].mxu0
      %v1450 = vadd.f32 %v1365, %v1449
      %v1451 = vpop.f32.mrb[0].mxu0
      %v1452 = vpop.f32.mrb[0].mxu0
      %v1453 = vpop.f32.mrb[0].mxu0
      %1454 = vdwg.mxu0
      %v1455 = vunpack.c.l.bf16 %v545
      %v1456 = vadd.f32 %v1455, %v1450
      %1457 = vadd.xlane.f32.xlu0 %v1456
      %v1458 = vpop.xlane.xlu0 %1457
      %v1459 = vrcp.pop 128.0
      %v1460 = vmul.f32 %v1458, %v1459
      %v1461 = vsub.f32 %v1456, %v1460
      %v1462 = vmul.f32 %v1461, %v1461
      %1463 = vadd.xlane.f32.xlu0 %v1462
      %v1464 = vpop.xlane.xlu0 %1463
      %v1465 = vmul.f32 %v1464, %v1459
      %v1466 = vadd.f32 %v1465, 1e-05
      %v1467 = vrsqrt.pop %v1466
      %v1468 = vmul.f32 %v1461, %v1467
      %v1469 = vld [vmem:[%s9] sm:$0x1]
      %v1471 = vlaneseq
      %v1472 = vshrl.u32 %v1471, 7
      %v1473 = vsub.s32 0, %v1472
      %v1474 = vrot.slane %v1469, %v1473
      %v1476 = vmul.f32 %v1468, %v1474
      %v1477 = vld [vmem:[%s10] sm:$0x1]
      %v1479 = vlaneseq
      %v1480 = vshrl.u32 %v1479, 7
      %v1481 = vsub.s32 0, %v1480
      %v1482 = vrot.slane %v1477, %v1481
      %v1484 = vadd.f32 %v1476, %v1482
      %v1485 = vpack.c.bf16 %v1484, %v1484
      %v1486 = vld [vmem:[%s11] sm:$0xff]
      %v1487 = vld [vmem:[%s11 + $0x8] sm:$0xff]
      %v1488 = vld [vmem:[%s11 + $0x10] sm:$0xff]
      %v1489 = vld [vmem:[%s11 + $0x18] sm:$0xff]
      %v1490 = vld [vmem:[%s11 + $0x20] sm:$0xff]
      %v1491 = vld [vmem:[%s11 + $0x28] sm:$0xff]
      %v1492 = vld [vmem:[%s11 + $0x30] sm:$0xff]
      %v1493 = vld [vmem:[%s11 + $0x38] sm:$0xff]
      %v1494 = vld [vmem:[%s11 + $0x40] sm:$0xff]
      %v1495 = vld [vmem:[%s11 + $0x48] sm:$0xff]
      %v1496 = vld [vmem:[%s11 + $0x50] sm:$0xff]
      %v1497 = vld [vmem:[%s11 + $0x58] sm:$0xff]
      %v1498 = vld [vmem:[%s11 + $0x60] sm:$0xff]
      %v1499 = vld [vmem:[%s11 + $0x68] sm:$0xff]
      %v1500 = vld [vmem:[%s11 + $0x70] sm:$0xff]
      %v1501 = vld [vmem:[%s11 + $0x78] sm:$0xff]
      %v1502 = vld [vmem:[%s12] sm:$0x3]
      %v1504 = vlaneseq
      %v1505 = vshrl.u32 %v1504, 7
      %v1506 = vsub.s32 0, %v1505
      %v1507 = vrot.slane %v1502, %v1506
      %v1508 = vlaneseq
      %v1509 = vshrl.u32 %v1508, 7
      %v1510 = vsub.s32 1, %v1509
      %v1511 = vrot.slane %v1502, %v1510
      %v1530 = vunpack.c.l.b16 %v1486
      %v1531 = vunpack.c.h.b16 %v1486
      %v1532 = vunpack.c.l.b16 %v1487
      %v1533 = vunpack.c.h.b16 %v1487
      %v1534 = vunpack.c.l.b16 %v1488
      %v1535 = vunpack.c.h.b16 %v1488
      %v1536 = vunpack.c.l.b16 %v1489
      %v1537 = vunpack.c.h.b16 %v1489
      %v1538 = vunpack.c.l.b16 %v1490
      %v1539 = vunpack.c.h.b16 %v1490
      %v1540 = vunpack.c.l.b16 %v1491
      %v1541 = vunpack.c.h.b16 %v1491
      %v1542 = vunpack.c.l.b16 %v1492
      %v1543 = vunpack.c.h.b16 %v1492
      %v1544 = vunpack.c.l.b16 %v1493
      %v1545 = vunpack.c.h.b16 %v1493
      %v1546 = vunpack.c.l.b16 %v1494
      %v1547 = vunpack.c.h.b16 %v1494
      %v1548 = vunpack.c.l.b16 %v1495
      %v1549 = vunpack.c.h.b16 %v1495
      %v1550 = vunpack.c.l.b16 %v1496
      %v1551 = vunpack.c.h.b16 %v1496
      %v1552 = vunpack.c.l.b16 %v1497
      %v1553 = vunpack.c.h.b16 %v1497
      %v1554 = vunpack.c.l.b16 %v1498
      %v1555 = vunpack.c.h.b16 %v1498
      %v1556 = vunpack.c.l.b16 %v1499
      %v1557 = vunpack.c.h.b16 %v1499
      %v1558 = vunpack.c.l.b16 %v1500
      %v1559 = vunpack.c.h.b16 %v1500
      %v1560 = vunpack.c.l.b16 %v1501
      %v1561 = vunpack.c.h.b16 %v1501
      %v1562 = vpack.c.b16 %v1532, %v1530
      %v1563 = vpack.c.b16 %v1533, %v1531
      %v1564 = vpack.c.b16 %v1536, %v1534
      %v1565 = vpack.c.b16 %v1537, %v1535
      %v1566 = vpack.c.b16 %v1540, %v1538
      %v1567 = vpack.c.b16 %v1541, %v1539
      %v1568 = vpack.c.b16 %v1544, %v1542
      %v1569 = vpack.c.b16 %v1545, %v1543
      %v1570 = vpack.c.b16 %v1548, %v1546
      %v1571 = vpack.c.b16 %v1549, %v1547
      %v1572 = vpack.c.b16 %v1552, %v1550
      %v1573 = vpack.c.b16 %v1553, %v1551
      %v1574 = vpack.c.b16 %v1556, %v1554
      %v1575 = vpack.c.b16 %v1557, %v1555
      %v1576 = vpack.c.b16 %v1560, %v1558
      %v1577 = vpack.c.b16 %v1561, %v1559
      %1594 = vmatprep.subr.bf16.mxu0 %v1563
      %1595 = vmatpush1.bf16.msra.mxu0 %v1562
      %1596 = vmatprep.subr.bf16.mxu0 %v1565
      %1597 = vmatpush1.bf16.msra.mxu0 %v1564
      %1598 = vmatprep.subr.bf16.mxu0 %v1567
      %1599 = vmatpush1.bf16.msra.mxu0 %v1566
      %1600 = vmatprep.subr.bf16.mxu0 %v1569
      %1601 = vmatpush1.bf16.msra.mxu0 %v1568
      %1602 = vmatprep.subr.bf16.mxu0 %v1571
      %1603 = vmatpush1.bf16.msra.mxu0 %v1570
      %1604 = vmatprep.subr.bf16.mxu0 %v1573
      %1605 = vmatpush1.bf16.msra.mxu0 %v1572
      %1606 = vmatprep.subr.bf16.mxu0 %v1575
      %1607 = vmatpush1.bf16.msra.mxu0 %v1574
      %1608 = vmatprep.subr.bf16.mxu0 %v1577
      %1609 = vmatpush1.bf16.msra.mxu0 %v1576
      %1610 = vmatprep.subr.bf16.mxu0 0
      %1611 = vmatpush1.bf16.msra.mxu0 0
      %1612 = vmatprep.subr.bf16.mxu0 0
      %1613 = vmatpush1.bf16.msra.mxu0 0
      %1614 = vmatprep.subr.bf16.mxu0 0
      %1615 = vmatpush1.bf16.msra.mxu0 0
      %1616 = vmatprep.subr.bf16.mxu0 0
      %1617 = vmatpush1.bf16.msra.mxu0 0
      %1618 = vmatprep.subr.bf16.mxu0 0
      %1619 = vmatpush1.bf16.msra.mxu0 0
      %1620 = vmatprep.subr.bf16.mxu0 0
      %1621 = vmatpush1.bf16.msra.mxu0 0
      %1622 = vmatprep.subr.bf16.mxu0 0
      %1623 = vmatpush1.bf16.msra.mxu0 0
      %1624 = vmatprep.subr.bf16.mxu0 0
      %1625 = vmatpush1.bf16.msra.mxu0 0
      %1626 = vmatprep.mubr.bf16.mxu0 0
      %1627 = vmatmul.mubr.bf16.gmra.mrb[0].mxu0 %v1485
      %v1628 = vpop.f32.mrb[0].mxu0
      %v1629 = vadd.f32 %v1507, %v1628
      %v1630 = vpop.f32.mrb[0].mxu0
      %v1631 = vadd.f32 %v1511, %v1630
      %v1632 = vpop.f32.mrb[0].mxu0
      %v1633 = vpop.f32.mrb[0].mxu0
      %1634 = vdwg.mxu0
      %v1635 = vmax.f32 %v1629, 0.0
      %v1636 = vmax.f32 %v1631, 0.0
      %v1637 = vpack.c.bf16 %v1635, %v1635
      %v1638 = vpack.c.bf16 %v1636, %v1636
      %v1639 = vld [vmem:[%s13] sm:$0xf]
      %v1640 = vld [vmem:[%s13 + $0x4] sm:$0xf]
      %v1641 = vld [vmem:[%s13 + $0x8] sm:$0xf]
      %v1642 = vld [vmem:[%s13 + $0xc] sm:$0xf]
      %v1643 = vld [vmem:[%s13 + $0x10] sm:$0xf]
      %v1644 = vld [vmem:[%s13 + $0x14] sm:$0xf]
      %v1645 = vld [vmem:[%s13 + $0x18] sm:$0xf]
      %v1646 = vld [vmem:[%s13 + $0x1c] sm:$0xf]
      %v1647 = vld [vmem:[%s13 + $0x20] sm:$0xf]
      %v1648 = vld [vmem:[%s13 + $0x24] sm:$0xf]
      %v1649 = vld [vmem:[%s13 + $0x28] sm:$0xf]
      %v1650 = vld [vmem:[%s13 + $0x2c] sm:$0xf]
      %v1651 = vld [vmem:[%s13 + $0x30] sm:$0xf]
      %v1652 = vld [vmem:[%s13 + $0x34] sm:$0xf]
      %v1653 = vld [vmem:[%s13 + $0x38] sm:$0xf]
      %v1654 = vld [vmem:[%s13 + $0x3c] sm:$0xf]
      %v1655 = vld [vmem:[%s13 + $0x40] sm:$0xf]
      %v1656 = vld [vmem:[%s13 + $0x44] sm:$0xf]
      %v1657 = vld [vmem:[%s13 + $0x48] sm:$0xf]
      %v1658 = vld [vmem:[%s13 + $0x4c] sm:$0xf]
      %v1659 = vld [vmem:[%s13 + $0x50] sm:$0xf]
      %v1660 = vld [vmem:[%s13 + $0x54] sm:$0xf]
      %v1661 = vld [vmem:[%s13 + $0x58] sm:$0xf]
      %v1662 = vld [vmem:[%s13 + $0x5c] sm:$0xf]
      %v1663 = vld [vmem:[%s13 + $0x60] sm:$0xf]
      %v1664 = vld [vmem:[%s13 + $0x64] sm:$0xf]
      %v1665 = vld [vmem:[%s13 + $0x68] sm:$0xf]
      %v1666 = vld [vmem:[%s13 + $0x6c] sm:$0xf]
      %v1667 = vld [vmem:[%s13 + $0x70] sm:$0xf]
      %v1668 = vld [vmem:[%s13 + $0x74] sm:$0xf]
      %v1669 = vld [vmem:[%s13 + $0x78] sm:$0xf]
      %v1670 = vld [vmem:[%s13 + $0x7c] sm:$0xf]
      %v1671 = vld [vmem:[%s14] sm:$0x1]
      %v1673 = vlaneseq
      %v1674 = vshrl.u32 %v1673, 7
      %v1675 = vsub.s32 0, %v1674
      %v1676 = vrot.slane %v1671, %v1675
      %v1710 = vunpack.c.l.b16 %v1639
      %v1711 = vunpack.c.l.b16 %v1640
      %v1712 = vunpack.c.l.b16 %v1641
      %v1713 = vunpack.c.l.b16 %v1642
      %v1714 = vunpack.c.l.b16 %v1643
      %v1715 = vunpack.c.l.b16 %v1644
      %v1716 = vunpack.c.l.b16 %v1645
      %v1717 = vunpack.c.l.b16 %v1646
      %v1718 = vunpack.c.l.b16 %v1647
      %v1719 = vunpack.c.l.b16 %v1648
      %v1720 = vunpack.c.l.b16 %v1649
      %v1721 = vunpack.c.l.b16 %v1650
      %v1722 = vunpack.c.l.b16 %v1651
      %v1723 = vunpack.c.l.b16 %v1652
      %v1724 = vunpack.c.l.b16 %v1653
      %v1725 = vunpack.c.l.b16 %v1654
      %v1726 = vunpack.c.l.b16 %v1655
      %v1727 = vunpack.c.l.b16 %v1656
      %v1728 = vunpack.c.l.b16 %v1657
      %v1729 = vunpack.c.l.b16 %v1658
      %v1730 = vunpack.c.l.b16 %v1659
      %v1731 = vunpack.c.l.b16 %v1660
      %v1732 = vunpack.c.l.b16 %v1661
      %v1733 = vunpack.c.l.b16 %v1662
      %v1734 = vunpack.c.l.b16 %v1663
      %v1735 = vunpack.c.l.b16 %v1664
      %v1736 = vunpack.c.l.b16 %v1665
      %v1737 = vunpack.c.l.b16 %v1666
      %v1738 = vunpack.c.l.b16 %v1667
      %v1739 = vunpack.c.l.b16 %v1668
      %v1740 = vunpack.c.l.b16 %v1669
      %v1741 = vunpack.c.l.b16 %v1670
      %v1742 = vpack.c.b16 %v1711, %v1710
      %v1743 = vpack.c.b16 %v1713, %v1712
      %v1744 = vpack.c.b16 %v1715, %v1714
      %v1745 = vpack.c.b16 %v1717, %v1716
      %v1746 = vpack.c.b16 %v1719, %v1718
      %v1747 = vpack.c.b16 %v1721, %v1720
      %v1748 = vpack.c.b16 %v1723, %v1722
      %v1749 = vpack.c.b16 %v1725, %v1724
      %v1750 = vpack.c.b16 %v1727, %v1726
      %v1751 = vpack.c.b16 %v1729, %v1728
      %v1752 = vpack.c.b16 %v1731, %v1730
      %v1753 = vpack.c.b16 %v1733, %v1732
      %v1754 = vpack.c.b16 %v1735, %v1734
      %v1755 = vpack.c.b16 %v1737, %v1736
      %v1756 = vpack.c.b16 %v1739, %v1738
      %v1757 = vpack.c.b16 %v1741, %v1740
      %1774 = vmatprep.subr.bf16.mxu0 0
      %1775 = vmatpush1.bf16.msra.mxu0 %v1742
      %1776 = vmatprep.subr.bf16.mxu0 0
      %1777 = vmatpush1.bf16.msra.mxu0 %v1743
      %1778 = vmatprep.subr.bf16.mxu0 0
      %1779 = vmatpush1.bf16.msra.mxu0 %v1744
      %1780 = vmatprep.subr.bf16.mxu0 0
      %1781 = vmatpush1.bf16.msra.mxu0 %v1745
      %1782 = vmatprep.subr.bf16.mxu0 0
      %1783 = vmatpush1.bf16.msra.mxu0 %v1746
      %1784 = vmatprep.subr.bf16.mxu0 0
      %1785 = vmatpush1.bf16.msra.mxu0 %v1747
      %1786 = vmatprep.subr.bf16.mxu0 0
      %1787 = vmatpush1.bf16.msra.mxu0 %v1748
      %1788 = vmatprep.subr.bf16.mxu0 0
      %1789 = vmatpush1.bf16.msra.mxu0 %v1749
      %1790 = vmatprep.subr.bf16.mxu0 0
      %1791 = vmatpush1.bf16.msra.mxu0 %v1750
      %1792 = vmatprep.subr.bf16.mxu0 0
      %1793 = vmatpush1.bf16.msra.mxu0 %v1751
      %1794 = vmatprep.subr.bf16.mxu0 0
      %1795 = vmatpush1.bf16.msra.mxu0 %v1752
      %1796 = vmatprep.subr.bf16.mxu0 0
      %1797 = vmatpush1.bf16.msra.mxu0 %v1753
      %1798 = vmatprep.subr.bf16.mxu0 0
      %1799 = vmatpush1.bf16.msra.mxu0 %v1754
      %1800 = vmatprep.subr.bf16.mxu0 0
      %1801 = vmatpush1.bf16.msra.mxu0 %v1755
      %1802 = vmatprep.subr.bf16.mxu0 0
      %1803 = vmatpush1.bf16.msra.mxu0 %v1756
      %1804 = vmatprep.subr.bf16.mxu0 0
      %1805 = vmatpush1.bf16.msra.mxu0 %v1757
      %1806 = vmatprep.mubr.bf16.mxu0 %v1638
      %1807 = vmatmul.mubr.bf16.gmra.mrb[0].mxu0 %v1637
      %v1808 = vpop.f32.mrb[0].mxu0
      %v1809 = vadd.f32 %v1676, %v1808
      %v1810 = vpop.f32.mrb[0].mxu0
      %v1811 = vpop.f32.mrb[0].mxu0
      %v1812 = vpop.f32.mrb[0].mxu0
      %1813 = vdwg.mxu0
      %v1814 = vadd.f32 %v1484, %v1809
      %1815 = vadd.xlane.f32.xlu0 %v1814
      %v1816 = vpop.xlane.xlu0 %1815
      %v1817 = vmul.f32 %v1816, %v1459
      %v1818 = vsub.f32 %v1814, %v1817
      %v1819 = vmul.f32 %v1818, %v1818
      %1820 = vadd.xlane.f32.xlu0 %v1819
      %v1821 = vpop.xlane.xlu0 %1820
      %v1822 = vmul.f32 %v1821, %v1459
      %v1823 = vadd.f32 %v1822, 1e-05
      %v1824 = vrsqrt.pop %v1823
      %v1825 = vmul.f32 %v1818, %v1824
      %v1826 = vld [vmem:[%s15] sm:$0x1]
      %v1828 = vlaneseq
      %v1829 = vshrl.u32 %v1828, 7
      %v1830 = vsub.s32 0, %v1829
      %v1831 = vrot.slane %v1826, %v1830
      %v1833 = vmul.f32 %v1825, %v1831
      %v1834 = vld [vmem:[%s16] sm:$0x1]
      %v1836 = vlaneseq
      %v1837 = vshrl.u32 %v1836, 7
      %v1838 = vsub.s32 0, %v1837
      %v1839 = vrot.slane %v1834, %v1838
      %v1841 = vadd.f32 %v1833, %v1839
      %v1842 = vpack.c.bf16 %v1841, %v1841
      %1843 = vst [vmem:[%s543] sm:$0xf] %v1842
      %p1844 = scmp.lt.s32.totalorder %s28, 1
      %s1845 = scalar_select %p1844, %s28, 1
      %s1846 = smul.addr %s1845, 4
      %s1847 = scalar_lea.vmem %s17, %s1846
      // Predicated region
      $region89: #{_lambda_.13} parent=87 // pred_check
        %p1848 = pneg %p408
      $region90: #{_lambda_.13} parent=87 // pred_check_branch
        %1850 = sbr.rel (%p1848) target = $region92
      $region91: #{_lambda_.13} parent=87 // pred_region
        _
      $region92: #{_lambda_.13} parent=87 // pred_fallthru
        _
    $region88: #{_lambda_.13} parent=5 // pred_fallthru
      _
    %p1851 = scmp.le.s32.totalorder 2, %s23
    // Predicated region
    $region93: #{_lambda_.13} parent=5 // pred_check
      %p1852 = pneg %p1851
    $region94: #{_lambda_.13} parent=5 // pred_check_branch
      %1854 = sbr.rel (%p1852) target = $region96
    $region95: #{_lambda_.13} parent=5 // pred_region
      %s1855 = ssub.s32 %s23, 2
      // Predicated region
      $region97: #{_lambda_.13} parent=95 // pred_check
        %p1856 = pneg %p414
      $region98: #{_lambda_.13} parent=95 // pred_check_branch
        %1858 = sbr.rel (%p1856) target = $region100
      $region99: #{_lambda_.13} parent=95 // pred_region
        %p1859 = scmp.lt.s32.totalorder %s29, 1
        %s1860 = scalar_select %p1859, %s29, 1
        %s1861 = smul.addr %s1860, 4
        %s1862 = scalar_lea.vmem %s17, %s1861
      $region100: #{_lambda_.13} parent=95 // pred_fallthru
        _
    $region96: #{_lambda_.13} parent=5 // pred_fallthru
      _
  $region6: #{_lambda_.13} parent=0 // loop_footer
    %s27 = sadd.s32 1, %s23
  $region7: #{_lambda_.13} parent=0 // loop_footer_branch
    %22 = sbr.rel target = $region3
  $region8: #{_lambda_.13} parent=0 // loop_exit
    _

// kernel: _lambda_.19
$region0: #{_lambda_.19}
  #allocation0 [shape = 'u32[]', space=smem, size = 0x4, offset = 0x4, fixed_abs, tag = 'smem constant byte address 0x4 - core index']
  #allocation1 [shape = 'u32[144,128]{1,0:T(1,128)}', space=vmem, size = 0x12000, scoped, tag = 'internal scratch']
  %s0 = inlined_call_operand.vmem [shape: bf16[2,1024], index: 0, kind: input, shape index: {}]
  %s1 = inlined_call_operand.vmem [shape: bf16[2,1024], index: 1, kind: input, shape index: {}]
  %s2 = inlined_call_operand.vmem [shape: bf16[2,1024], index: 2, kind: input, shape index: {}]
  %s3 = inlined_call_operand.vmem [shape: bf16[2,1024], index: 3, kind: input, shape index: {}]
  %s4 = inlined_call_operand.vmem [shape: bf16[1024,2], index: 4, kind: input, shape index: {}]
  %s5 = inlined_call_operand.vmem [shape: f32[1,2], index: 5, kind: input, shape index: {}]
  %s6 = inlined_call_operand.vmem [shape: bf16[1024,2], index: 6, kind: input, shape index: {}]
  %s7 = inlined_call_operand.vmem [shape: f32[1,2], index: 7, kind: input, shape index: {}]
  %s8 = inlined_call_operand.hbm [shape: f32[2,2], index: 8, kind: output, shape index: {}]
  %s9 = sld [smem:[#allocation0]]
  $region42: #{_lambda_.19} parent=0
    _
  %s11 = ssub.s32 1, %s9
  %s12 = scalar_select 0, %s11, %s9
  $region1: #{_lambda_.19} parent=0
    #allocation2 [shape = 'u8[1024]{0}', space=vmem, size = 0x400, scoped, tag = 'output window, operand 0, single buffered']
    #allocation3 [shape = 's32[1]{0}', space=sflag, size = 0x4, scoped, tag = 'scoped memory for _lambda_.19']
    %13 = vsyncpa [#allocation3], 0
    // Predicated region
    $region2: #{_lambda_.19} parent=1 // pred_check
      _
    $region3: #{_lambda_.19} parent=1 // pred_check_branch
      %15 = sbr.rel (0) target = $region5
    $region4: #{_lambda_.19} parent=1 // pred_region
      _
    $region5: #{_lambda_.19} parent=1 // pred_fallthru
      _
    // Predicated region
    $region6: #{_lambda_.19} parent=1 // pred_check
      _
    $region7: #{_lambda_.19} parent=1 // pred_check_branch
      %17 = sbr.rel (0) target = $region9
    $region8: #{_lambda_.19} parent=1 // pred_region
      _
    $region9: #{_lambda_.19} parent=1 // pred_fallthru
      _
    // Predicated region
    $region10: #{_lambda_.19} parent=1 // pred_check
      _
    $region11: #{_lambda_.19} parent=1 // pred_check_branch
      %19 = sbr.rel (0) target = $region13
    $region12: #{_lambda_.19} parent=1 // pred_region
      _
    $region13: #{_lambda_.19} parent=1 // pred_fallthru
      _
    // Predicated region
    $region14: #{_lambda_.19} parent=1 // pred_check
      _
    $region15: #{_lambda_.19} parent=1 // pred_check_branch
      %21 = sbr.rel (0) target = $region17
    $region16: #{_lambda_.19} parent=1 // pred_region
      _
    $region17: #{_lambda_.19} parent=1 // pred_fallthru
      _
    // Predicated region
    $region18: #{_lambda_.19} parent=1 // pred_check
      _
    $region19: #{_lambda_.19} parent=1 // pred_check_branch
      %23 = sbr.rel (0) target = $region21
    $region20: #{_lambda_.19} parent=1 // pred_region
      _
    $region21: #{_lambda_.19} parent=1 // pred_fallthru
      _
    // Predicated region
    $region22: #{_lambda_.19} parent=1 // pred_check
      _
    $region23: #{_lambda_.19} parent=1 // pred_check_branch
      %25 = sbr.rel (0) target = $region25
    $region24: #{_lambda_.19} parent=1 // pred_region
      _
    $region25: #{_lambda_.19} parent=1 // pred_fallthru
      _
    // Predicated region
    $region26: #{_lambda_.19} parent=1 // pred_check
      _
    $region27: #{_lambda_.19} parent=1 // pred_check_branch
      %27 = sbr.rel (0) target = $region29
    $region28: #{_lambda_.19} parent=1 // pred_region
      _
    $region29: #{_lambda_.19} parent=1 // pred_fallthru
      _
    // Predicated region
    $region30: #{_lambda_.19} parent=1 // pred_check
      _
    $region31: #{_lambda_.19} parent=1 // pred_check_branch
      %29 = sbr.rel (0) target = $region33
    $region32: #{_lambda_.19} parent=1 // pred_region
      _
    $region33: #{_lambda_.19} parent=1 // pred_fallthru
      _
    %v31 = vld [vmem:[%s0] sm:$0xff]
    %v32 = vld [vmem:[%s1] sm:$0xff]
    %v33 = vunpack.c.l.bf16 %v32
    %v34 = vunpack.c.h.bf16 %v32
    %v35 = vld [vmem:[%s2] sm:$0xff]
    %v36 = vunpack.c.l.bf16 %v35
    %v37 = vunpack.c.h.bf16 %v35
    %v38 = vadd.f32 %v33, %v36
    %v39 = vadd.f32 %v34, %v37
    %v40 = vld [vmem:[%s3] sm:$0xff]
    %v41 = vunpack.c.l.bf16 %v40
    %v42 = vunpack.c.h.bf16 %v40
    %v43 = vadd.f32 %v38, %v41
    %v44 = vadd.f32 %v39, %v42
    %v47 = vcombine.high %v43, %v43
    %v49 = vunpack.c.l.s4 1983009808
    %v50 = vunpack.c.0.s8 %v49
    %v51 = vlaneseq
    %v52 = vshrl.u32 %v51, 7
    %v53 = vsub.s32 %v50, %v52
    %v54 = vrot.slane %v43, %v53
    %v56 = vunpack.c.l.s4 1983009808
    %v57 = vunpack.c.0.s8 %v56
    %v58 = vlaneseq
    %v59 = vshrl.u32 %v58, 7
    %v60 = vsub.s32 %v57, %v59
    %v61 = vrot.slane %v47, %v60
    %v62 = vcombine.high %v54, %v54
    %v63 = vcombine.high %v61, %v61
    %v64 = vcombine.high %v44, %v44
    %v66 = vunpack.c.l.s4 1983009808
    %v67 = vunpack.c.0.s8 %v66
    %v68 = vlaneseq
    %v69 = vshrl.u32 %v68, 7
    %v70 = vsub.s32 %v67, %v69
    %v71 = vrot.slane %v44, %v70
    %v73 = vunpack.c.l.s4 1983009808
    %v74 = vunpack.c.0.s8 %v73
    %v75 = vlaneseq
    %v76 = vshrl.u32 %v75, 7
    %v77 = vsub.s32 %v74, %v76
    %v78 = vrot.slane %v64, %v77
    %v79 = vcombine.high %v71, %v71
    %v80 = vcombine.high %v78, %v78
    %v89 = vpack.c.bf16 %v54, %v54
    %v90 = vpack.c.bf16 %v62, %v62
    %v91 = vpack.c.bf16 %v61, %v61
    %v92 = vpack.c.bf16 %v63, %v63
    %v93 = vpack.c.bf16 %v71, %v71
    %v94 = vpack.c.bf16 %v79, %v79
    %v95 = vpack.c.bf16 %v78, %v78
    %v96 = vpack.c.bf16 %v80, %v80
    %v97 = vld [vmem:[%s4] sm:$0xf]
    %v98 = vld [vmem:[%s4 + $0x4] sm:$0xf]
    %v99 = vld [vmem:[%s4 + $0x8] sm:$0xf]
    %v100 = vld [vmem:[%s4 + $0xc] sm:$0xf]
    %v101 = vld [vmem:[%s4 + $0x10] sm:$0xf]
    %v102 = vld [vmem:[%s4 + $0x14] sm:$0xf]
    %v103 = vld [vmem:[%s4 + $0x18] sm:$0xf]
    %v104 = vld [vmem:[%s4 + $0x1c] sm:$0xf]
    %v105 = vld [vmem:[%s4 + $0x20] sm:$0xf]
    %v106 = vld [vmem:[%s4 + $0x24] sm:$0xf]
    %v107 = vld [vmem:[%s4 + $0x28] sm:$0xf]
    %v108 = vld [vmem:[%s4 + $0x2c] sm:$0xf]
    %v109 = vld [vmem:[%s4 + $0x30] sm:$0xf]
    %v110 = vld [vmem:[%s4 + $0x34] sm:$0xf]
    %v111 = vld [vmem:[%s4 + $0x38] sm:$0xf]
    %v112 = vld [vmem:[%s4 + $0x3c] sm:$0xf]
    %v113 = vld [vmem:[%s4 + $0x40] sm:$0xf]
    %v114 = vld [vmem:[%s4 + $0x44] sm:$0xf]
    %v115 = vld [vmem:[%s4 + $0x48] sm:$0xf]
    %v116 = vld [vmem:[%s4 + $0x4c] sm:$0xf]
    %v117 = vld [vmem:[%s4 + $0x50] sm:$0xf]
    %v118 = vld [vmem:[%s4 + $0x54] sm:$0xf]
    %v119 = vld [vmem:[%s4 + $0x58] sm:$0xf]
    %v120 = vld [vmem:[%s4 + $0x5c] sm:$0xf]
    %v121 = vld [vmem:[%s4 + $0x60] sm:$0xf]
    %v122 = vld [vmem:[%s4 + $0x64] sm:$0xf]
    %v123 = vld [vmem:[%s4 + $0x68] sm:$0xf]
    %v124 = vld [vmem:[%s4 + $0x6c] sm:$0xf]
    %v125 = vld [vmem:[%s4 + $0x70] sm:$0xf]
    %v126 = vld [vmem:[%s4 + $0x74] sm:$0xf]
    %v127 = vld [vmem:[%s4 + $0x78] sm:$0xf]
    %v128 = vld [vmem:[%s4 + $0x7c] sm:$0xf]
    %v129 = vld [vmem:[%s4 + $0x80] sm:$0xf]
    %v130 = vld [vmem:[%s4 + $0x84] sm:$0xf]
    %v131 = vld [vmem:[%s4 + $0x88] sm:$0xf]
    %v132 = vld [vmem:[%s4 + $0x8c] sm:$0xf]
    %v133 = vld [vmem:[%s4 + $0x90] sm:$0xf]
    %v134 = vld [vmem:[%s4 + $0x94] sm:$0xf]
    %v135 = vld [vmem:[%s4 + $0x98] sm:$0xf]
    %v136 = vld [vmem:[%s4 + $0x9c] sm:$0xf]
    %v137 = vld [vmem:[%s4 + $0xa0] sm:$0xf]
    %v138 = vld [vmem:[%s4 + $0xa4] sm:$0xf]
    %v139 = vld [vmem:[%s4 + $0xa8] sm:$0xf]
    %v140 = vld [vmem:[%s4 + $0xac] sm:$0xf]
    %v141 = vld [vmem:[%s4 + $0xb0] sm:$0xf]
    %v142 = vld [vmem:[%s4 + $0xb4] sm:$0xf]
    %v143 = vld [vmem:[%s4 + $0xb8] sm:$0xf]
    %v144 = vld [vmem:[%s4 + $0xbc] sm:$0xf]
    %v145 = vld [vmem:[%s4 + $0xc0] sm:$0xf]
    %v146 = vld [vmem:[%s4 + $0xc4] sm:$0xf]
    %v147 = vld [vmem:[%s4 + $0xc8] sm:$0xf]
    %v148 = vld [vmem:[%s4 + $0xcc] sm:$0xf]
    %v149 = vld [vmem:[%s4 + $0xd0] sm:$0xf]
    %v150 = vld [vmem:[%s4 + $0xd4] sm:$0xf]
    %v151 = vld [vmem:[%s4 + $0xd8] sm:$0xf]
    %v152 = vld [vmem:[%s4 + $0xdc] sm:$0xf]
    %v153 = vld [vmem:[%s4 + $0xe0] sm:$0xf]
    %v154 = vld [vmem:[%s4 + $0xe4] sm:$0xf]
    %v155 = vld [vmem:[%s4 + $0xe8] sm:$0xf]
    %v156 = vld [vmem:[%s4 + $0xec] sm:$0xf]
    %v157 = vld [vmem:[%s4 + $0xf0] sm:$0xf]
    %v158 = vld [vmem:[%s4 + $0xf4] sm:$0xf]
    %v159 = vld [vmem:[%s4 + $0xf8] sm:$0xf]
    %v160 = vld [vmem:[%s4 + $0xfc] sm:$0xf]
    %v161 = vld [vmem:[%s4 + $0x100] sm:$0xf]
    %v162 = vld [vmem:[%s4 + $0x104] sm:$0xf]
    %v163 = vld [vmem:[%s4 + $0x108] sm:$0xf]
    %v164 = vld [vmem:[%s4 + $0x10c] sm:$0xf]
    %v165 = vld [vmem:[%s4 + $0x110] sm:$0xf]
    %v166 = vld [vmem:[%s4 + $0x114] sm:$0xf]
    %v167 = vld [vmem:[%s4 + $0x118] sm:$0xf]
    %v168 = vld [vmem:[%s4 + $0x11c] sm:$0xf]
    %v169 = vld [vmem:[%s4 + $0x120] sm:$0xf]
    %v170 = vld [vmem:[%s4 + $0x124] sm:$0xf]
    %v171 = vld [vmem:[%s4 + $0x128] sm:$0xf]
    %v172 = vld [vmem:[%s4 + $0x12c] sm:$0xf]
    %v173 = vld [vmem:[%s4 + $0x130] sm:$0xf]
    %v174 = vld [vmem:[%s4 + $0x134] sm:$0xf]
    %v175 = vld [vmem:[%s4 + $0x138] sm:$0xf]
    %v176 = vld [vmem:[%s4 + $0x13c] sm:$0xf]
    %v177 = vld [vmem:[%s4 + $0x140] sm:$0xf]
    %v178 = vld [vmem:[%s4 + $0x144] sm:$0xf]
    %v179 = vld [vmem:[%s4 + $0x148] sm:$0xf]
    %v180 = vld [vmem:[%s4 + $0x14c] sm:$0xf]
    %v181 = vld [vmem:[%s4 + $0x150] sm:$0xf]
    %v182 = vld [vmem:[%s4 + $0x154] sm:$0xf]
    %v183 = vld [vmem:[%s4 + $0x158] sm:$0xf]
    %v184 = vld [vmem:[%s4 + $0x15c] sm:$0xf]
    %v185 = vld [vmem:[%s4 + $0x160] sm:$0xf]
    %v186 = vld [vmem:[%s4 + $0x164] sm:$0xf]
    %v187 = vld [vmem:[%s4 + $0x168] sm:$0xf]
    %v188 = vld [vmem:[%s4 + $0x16c] sm:$0xf]
    %v189 = vld [vmem:[%s4 + $0x170] sm:$0xf]
    %v190 = vld [vmem:[%s4 + $0x174] sm:$0xf]
    %v191 = vld [vmem:[%s4 + $0x178] sm:$0xf]
    %v192 = vld [vmem:[%s4 + $0x17c] sm:$0xf]
    %v193 = vld [vmem:[%s4 + $0x180] sm:$0xf]
    %v194 = vld [vmem:[%s4 + $0x184] sm:$0xf]
    %v195 = vld [vmem:[%s4 + $0x188] sm:$0xf]
    %v196 = vld [vmem:[%s4 + $0x18c] sm:$0xf]
    %v197 = vld [vmem:[%s4 + $0x190] sm:$0xf]
    %v198 = vld [vmem:[%s4 + $0x194] sm:$0xf]
    %v199 = vld [vmem:[%s4 + $0x198] sm:$0xf]
    %v200 = vld [vmem:[%s4 + $0x19c] sm:$0xf]
    %v201 = vld [vmem:[%s4 + $0x1a0] sm:$0xf]
    %v202 = vld [vmem:[%s4 + $0x1a4] sm:$0xf]
    %v203 = vld [vmem:[%s4 + $0x1a8] sm:$0xf]
    %v204 = vld [vmem:[%s4 + $0x1ac] sm:$0xf]
    %v205 = vld [vmem:[%s4 + $0x1b0] sm:$0xf]
    %v206 = vld [vmem:[%s4 + $0x1b4] sm:$0xf]
    %v207 = vld [vmem:[%s4 + $0x1b8] sm:$0xf]
    %v208 = vld [vmem:[%s4 + $0x1bc] sm:$0xf]
    %v209 = vld [vmem:[%s4 + $0x1c0] sm:$0xf]
    %v210 = vld [vmem:[%s4 + $0x1c4] sm:$0xf]
    %v211 = vld [vmem:[%s4 + $0x1c8] sm:$0xf]
    %v212 = vld [vmem:[%s4 + $0x1cc] sm:$0xf]
    %v213 = vld [vmem:[%s4 + $0x1d0] sm:$0xf]
    %v214 = vld [vmem:[%s4 + $0x1d4] sm:$0xf]
    %v215 = vld [vmem:[%s4 + $0x1d8] sm:$0xf]
    %v216 = vld [vmem:[%s4 + $0x1dc] sm:$0xf]
    %v217 = vld [vmem:[%s4 + $0x1e0] sm:$0xf]
    %v218 = vld [vmem:[%s4 + $0x1e4] sm:$0xf]
    %v219 = vld [vmem:[%s4 + $0x1e8] sm:$0xf]
    %v220 = vld [vmem:[%s4 + $0x1ec] sm:$0xf]
    %v221 = vld [vmem:[%s4 + $0x1f0] sm:$0xf]
    %v222 = vld [vmem:[%s4 + $0x1f4] sm:$0xf]
    %v223 = vld [vmem:[%s4 + $0x1f8] sm:$0xf]
    %v224 = vld [vmem:[%s4 + $0x1fc] sm:$0xf]
    %v225 = vld [vmem:[%s5] sm:$0x1]
    %v227 = vlaneseq
    %v228 = vshrl.u32 %v227, 7
    %v229 = vsub.s32 0, %v228
    %v230 = vrot.slane %v225, %v229
    %v233 = vcombine.high %v31, %v31
    %v235 = vunpack.c.l.s4 1966171168
    %v236 = vunpack.c.0.s8 %v235
    %v237 = vlaneseq
    %v238 = vshrl.u32 %v237, 7
    %v239 = vsub.s32 %v236, %v238
    %v240 = vrot.slane %v31, %v239
    %v242 = vunpack.c.l.s4 1966171168
    %v243 = vunpack.c.0.s8 %v242
    %v244 = vlaneseq
    %v245 = vshrl.u32 %v244, 7
    %v246 = vsub.s32 %v243, %v245
    %v247 = vrot.slane %v233, %v246
    %v248 = vcombine.high %v240, %v240
    %v249 = vcombine.high %v247, %v247
    %v251 = vunpack.c.l.s4 1966171168
    %v252 = vunpack.c.0.s8 %v251
    %v253 = vlaneseq
    %v254 = vshrl.u32 %v253, 7
    %v255 = vsub.s32 %v252, %v254
    %v256 = vrot.slane %v240, %v255
    %v258 = vunpack.c.l.s4 1966171168
    %v259 = vunpack.c.0.s8 %v258
    %v260 = vlaneseq
    %v261 = vshrl.u32 %v260, 7
    %v262 = vsub.s32 %v259, %v261
    %v263 = vrot.slane %v247, %v262
    %v265 = vunpack.c.l.s4 1966171168
    %v266 = vunpack.c.0.s8 %v265
    %v267 = vlaneseq
    %v268 = vshrl.u32 %v267, 7
    %v269 = vsub.s32 %v266, %v268
    %v270 = vrot.slane %v248, %v269
    %v272 = vunpack.c.l.s4 1966171168
    %v273 = vunpack.c.0.s8 %v272
    %v274 = vlaneseq
    %v275 = vshrl.u32 %v274, 7
    %v276 = vsub.s32 %v273, %v275
    %v277 = vrot.slane %v249, %v276
    %v278 = vcombine.high %v256, %v256
    %v279 = vcombine.high %v263, %v263
    %v280 = vcombine.high %v270, %v270
    %v281 = vcombine.high %v277, %v277
    %v418 = vunpack.c.l.b16 %v97
    %v419 = vunpack.c.l.b16 %v98
    %v420 = vunpack.c.l.b16 %v99
    %v421 = vunpack.c.l.b16 %v100
    %v422 = vunpack.c.l.b16 %v101
    %v423 = vunpack.c.l.b16 %v102
    %v424 = vunpack.c.l.b16 %v103
    %v425 = vunpack.c.l.b16 %v104
    %v426 = vunpack.c.l.b16 %v105
    %v427 = vunpack.c.l.b16 %v106
    %v428 = vunpack.c.l.b16 %v107
    %v429 = vunpack.c.l.b16 %v108
    %v430 = vunpack.c.l.b16 %v109
    %v431 = vunpack.c.l.b16 %v110
    %v432 = vunpack.c.l.b16 %v111
    %v433 = vunpack.c.l.b16 %v112
    %v434 = vunpack.c.l.b16 %v113
    %v435 = vunpack.c.l.b16 %v114
    %v436 = vunpack.c.l.b16 %v115
    %v437 = vunpack.c.l.b16 %v116
    %v438 = vunpack.c.l.b16 %v117
    %v439 = vunpack.c.l.b16 %v118
    %v440 = vunpack.c.l.b16 %v119
    %v441 = vunpack.c.l.b16 %v120
    %v442 = vunpack.c.l.b16 %v121
    %v443 = vunpack.c.l.b16 %v122
    %v444 = vunpack.c.l.b16 %v123
    %v445 = vunpack.c.l.b16 %v124
    %v446 = vunpack.c.l.b16 %v125
    %v447 = vunpack.c.l.b16 %v126
    %v448 = vunpack.c.l.b16 %v127
    %v449 = vunpack.c.l.b16 %v128
    %v450 = vunpack.c.l.b16 %v129
    %v451 = vunpack.c.l.b16 %v130
    %v452 = vunpack.c.l.b16 %v131
    %v453 = vunpack.c.l.b16 %v132
    %v454 = vunpack.c.l.b16 %v133
    %v455 = vunpack.c.l.b16 %v134
    %v456 = vunpack.c.l.b16 %v135
    %v457 = vunpack.c.l.b16 %v136
    %v458 = vunpack.c.l.b16 %v137
    %v459 = vunpack.c.l.b16 %v138
    %v460 = vunpack.c.l.b16 %v139
    %v461 = vunpack.c.l.b16 %v140
    %v462 = vunpack.c.l.b16 %v141
    %v463 = vunpack.c.l.b16 %v142
    %v464 = vunpack.c.l.b16 %v143
    %v465 = vunpack.c.l.b16 %v144
    %v466 = vunpack.c.l.b16 %v145
    %v467 = vunpack.c.l.b16 %v146
    %v468 = vunpack.c.l.b16 %v147
    %v469 = vunpack.c.l.b16 %v148
    %v470 = vunpack.c.l.b16 %v149
    %v471 = vunpack.c.l.b16 %v150
    %v472 = vunpack.c.l.b16 %v151
    %v473 = vunpack.c.l.b16 %v152
    %v474 = vunpack.c.l.b16 %v153
    %v475 = vunpack.c.l.b16 %v154
    %v476 = vunpack.c.l.b16 %v155
    %v477 = vunpack.c.l.b16 %v156
    %v478 = vunpack.c.l.b16 %v157
    %v479 = vunpack.c.l.b16 %v158
    %v480 = vunpack.c.l.b16 %v159
    %v481 = vunpack.c.l.b16 %v160
    %v482 = vunpack.c.l.b16 %v161
    %v483 = vunpack.c.l.b16 %v162
    %v484 = vunpack.c.l.b16 %v163
    %v485 = vunpack.c.l.b16 %v164
    %v486 = vunpack.c.l.b16 %v165
    %v487 = vunpack.c.l.b16 %v166
    %v488 = vunpack.c.l.b16 %v167
    %v489 = vunpack.c.l.b16 %v168
    %v490 = vunpack.c.l.b16 %v169
    %v491 = vunpack.c.l.b16 %v170
    %v492 = vunpack.c.l.b16 %v171
    %v493 = vunpack.c.l.b16 %v172
    %v494 = vunpack.c.l.b16 %v173
    %v495 = vunpack.c.l.b16 %v174
    %v496 = vunpack.c.l.b16 %v175
    %v497 = vunpack.c.l.b16 %v176
    %v498 = vunpack.c.l.b16 %v177
    %v499 = vunpack.c.l.b16 %v178
    %v500 = vunpack.c.l.b16 %v179
    %v501 = vunpack.c.l.b16 %v180
    %v502 = vunpack.c.l.b16 %v181
    %v503 = vunpack.c.l.b16 %v182
    %v504 = vunpack.c.l.b16 %v183
    %v505 = vunpack.c.l.b16 %v184
    %v506 = vunpack.c.l.b16 %v185
    %v507 = vunpack.c.l.b16 %v186
    %v508 = vunpack.c.l.b16 %v187
    %v509 = vunpack.c.l.b16 %v188
    %v510 = vunpack.c.l.b16 %v189
    %v511 = vunpack.c.l.b16 %v190
    %v512 = vunpack.c.l.b16 %v191
    %v513 = vunpack.c.l.b16 %v192
    %v514 = vunpack.c.l.b16 %v193
    %v515 = vunpack.c.l.b16 %v194
    %v516 = vunpack.c.l.b16 %v195
    %v517 = vunpack.c.l.b16 %v196
    %v518 = vunpack.c.l.b16 %v197
    %v519 = vunpack.c.l.b16 %v198
    %v520 = vunpack.c.l.b16 %v199
    %v521 = vunpack.c.l.b16 %v200
    %v522 = vunpack.c.l.b16 %v201
    %v523 = vunpack.c.l.b16 %v202
    %v524 = vunpack.c.l.b16 %v203
    %v525 = vunpack.c.l.b16 %v204
    %v526 = vunpack.c.l.b16 %v205
    %v527 = vunpack.c.l.b16 %v206
    %v528 = vunpack.c.l.b16 %v207
    %v529 = vunpack.c.l.b16 %v208
    %v530 = vunpack.c.l.b16 %v209
    %v531 = vunpack.c.l.b16 %v210
    %v532 = vunpack.c.l.b16 %v211
    %v533 = vunpack.c.l.b16 %v212
    %v534 = vunpack.c.l.b16 %v213
    %v535 = vunpack.c.l.b16 %v214
    %v536 = vunpack.c.l.b16 %v215
    %v537 = vunpack.c.l.b16 %v216
    %v538 = vunpack.c.l.b16 %v217
    %v539 = vunpack.c.l.b16 %v218
    %v540 = vunpack.c.l.b16 %v219
    %v541 = vunpack.c.l.b16 %v220
    %v542 = vunpack.c.l.b16 %v221
    %v543 = vunpack.c.l.b16 %v222
    %v544 = vunpack.c.l.b16 %v223
    %v545 = vunpack.c.l.b16 %v224
    %v546 = vpack.c.b16 %v419, %v418
    %v547 = vpack.c.b16 %v421, %v420
    %v548 = vpack.c.b16 %v423, %v422
    %v549 = vpack.c.b16 %v425, %v424
    %v550 = vpack.c.b16 %v427, %v426
    %v551 = vpack.c.b16 %v429, %v428
    %v552 = vpack.c.b16 %v431, %v430
    %v553 = vpack.c.b16 %v433, %v432
    %v554 = vpack.c.b16 %v435, %v434
    %v555 = vpack.c.b16 %v437, %v436
    %v556 = vpack.c.b16 %v439, %v438
    %v557 = vpack.c.b16 %v441, %v440
    %v558 = vpack.c.b16 %v443, %v442
    %v559 = vpack.c.b16 %v445, %v444
    %v560 = vpack.c.b16 %v447, %v446
    %v561 = vpack.c.b16 %v449, %v448
    %v562 = vpack.c.b16 %v451, %v450
    %v563 = vpack.c.b16 %v453, %v452
    %v564 = vpack.c.b16 %v455, %v454
    %v565 = vpack.c.b16 %v457, %v456
    %v566 = vpack.c.b16 %v459, %v458
    %v567 = vpack.c.b16 %v461, %v460
    %v568 = vpack.c.b16 %v463, %v462
    %v569 = vpack.c.b16 %v465, %v464
    %v570 = vpack.c.b16 %v467, %v466
    %v571 = vpack.c.b16 %v469, %v468
    %v572 = vpack.c.b16 %v471, %v470
    %v573 = vpack.c.b16 %v473, %v472
    %v574 = vpack.c.b16 %v475, %v474
    %v575 = vpack.c.b16 %v477, %v476
    %v576 = vpack.c.b16 %v479, %v478
    %v577 = vpack.c.b16 %v481, %v480
    %v578 = vpack.c.b16 %v483, %v482
    %v579 = vpack.c.b16 %v485, %v484
    %v580 = vpack.c.b16 %v487, %v486
    %v581 = vpack.c.b16 %v489, %v488
    %v582 = vpack.c.b16 %v491, %v490
    %v583 = vpack.c.b16 %v493, %v492
    %v584 = vpack.c.b16 %v495, %v494
    %v585 = vpack.c.b16 %v497, %v496
    %v586 = vpack.c.b16 %v499, %v498
    %v587 = vpack.c.b16 %v501, %v500
    %v588 = vpack.c.b16 %v503, %v502
    %v589 = vpack.c.b16 %v505, %v504
    %v590 = vpack.c.b16 %v507, %v506
    %v591 = vpack.c.b16 %v509, %v508
    %v592 = vpack.c.b16 %v511, %v510
    %v593 = vpack.c.b16 %v513, %v512
    %v594 = vpack.c.b16 %v515, %v514
    %v595 = vpack.c.b16 %v517, %v516
    %v596 = vpack.c.b16 %v519, %v518
    %v597 = vpack.c.b16 %v521, %v520
    %v598 = vpack.c.b16 %v523, %v522
    %v599 = vpack.c.b16 %v525, %v524
    %v600 = vpack.c.b16 %v527, %v526
    %v601 = vpack.c.b16 %v529, %v528
    %v602 = vpack.c.b16 %v531, %v530
    %v603 = vpack.c.b16 %v533, %v532
    %v604 = vpack.c.b16 %v535, %v534
    %v605 = vpack.c.b16 %v537, %v536
    %v606 = vpack.c.b16 %v539, %v538
    %v607 = vpack.c.b16 %v541, %v540
    %v608 = vpack.c.b16 %v543, %v542
    %v609 = vpack.c.b16 %v545, %v544
    %674 = vmatprep.subr.bf16.mxu0 0
    %675 = vmatpush1.bf16.msra.mxu0 %v546
    %676 = vmatprep.subr.bf16.mxu0 0
    %677 = vmatpush1.bf16.msra.mxu0 %v547
    %678 = vmatprep.subr.bf16.mxu0 0
    %679 = vmatpush1.bf16.msra.mxu0 %v548
    %680 = vmatprep.subr.bf16.mxu0 0
    %681 = vmatpush1.bf16.msra.mxu0 %v549
    %682 = vmatprep.subr.bf16.mxu0 0
    %683 = vmatpush1.bf16.msra.mxu0 %v550
    %684 = vmatprep.subr.bf16.mxu0 0
    %685 = vmatpush1.bf16.msra.mxu0 %v551
    %686 = vmatprep.subr.bf16.mxu0 0
    %687 = vmatpush1.bf16.msra.mxu0 %v552
    %688 = vmatprep.subr.bf16.mxu0 0
    %689 = vmatpush1.bf16.msra.mxu0 %v553
    %690 = vmatprep.subr.bf16.mxu0 0
    %691 = vmatpush1.bf16.msra.mxu0 %v554
    %692 = vmatprep.subr.bf16.mxu0 0
    %693 = vmatpush1.bf16.msra.mxu0 %v555
    %694 = vmatprep.subr.bf16.mxu0 0
    %695 = vmatpush1.bf16.msra.mxu0 %v556
    %696 = vmatprep.subr.bf16.mxu0 0
    %697 = vmatpush1.bf16.msra.mxu0 %v557
    %698 = vmatprep.subr.bf16.mxu0 0
    %699 = vmatpush1.bf16.msra.mxu0 %v558
    %700 = vmatprep.subr.bf16.mxu0 0
    %701 = vmatpush1.bf16.msra.mxu0 %v559
    %702 = vmatprep.subr.bf16.mxu0 0
    %703 = vmatpush1.bf16.msra.mxu0 %v560
    %704 = vmatprep.subr.bf16.mxu0 0
    %705 = vmatpush1.bf16.msra.mxu0 %v561
    %706 = vmatprep.mubr.bf16.mxu0 %v270
    %707 = vmatmul.mubr.bf16.gmra.mrb[0].mxu0 %v256
    %v708 = vpop.f32.mrb[0].mxu0
    %v709 = vadd.f32 %v230, %v708
    %v710 = vpop.f32.mrb[0].mxu0
    %v711 = vpop.f32.mrb[0].mxu0
    %v712 = vpop.f32.mrb[0].mxu0
    %713 = vdwg.mxu0
    %714 = vmatprep.subr.bf16.mxu0 0
    %715 = vmatpush1.bf16.msra.mxu0 %v562
    %716 = vmatprep.subr.bf16.mxu0 0
    %717 = vmatpush1.bf16.msra.mxu0 %v563
    %718 = vmatprep.subr.bf16.mxu0 0
    %719 = vmatpush1.bf16.msra.mxu0 %v564
    %720 = vmatprep.subr.bf16.mxu0 0
    %721 = vmatpush1.bf16.msra.mxu0 %v565
    %722 = vmatprep.subr.bf16.mxu0 0
    %723 = vmatpush1.bf16.msra.mxu0 %v566
    %724 = vmatprep.subr.bf16.mxu0 0
    %725 = vmatpush1.bf16.msra.mxu0 %v567
    %726 = vmatprep.subr.bf16.mxu0 0
    %727 = vmatpush1.bf16.msra.mxu0 %v568
    %728 = vmatprep.subr.bf16.mxu0 0
    %729 = vmatpush1.bf16.msra.mxu0 %v569
    %730 = vmatprep.subr.bf16.mxu0 0
    %731 = vmatpush1.bf16.msra.mxu0 %v570
    %732 = vmatprep.subr.bf16.mxu0 0
    %733 = vmatpush1.bf16.msra.mxu0 %v571
    %734 = vmatprep.subr.bf16.mxu0 0
    %735 = vmatpush1.bf16.msra.mxu0 %v572
    %736 = vmatprep.subr.bf16.mxu0 0
    %737 = vmatpush1.bf16.msra.mxu0 %v573
    %738 = vmatprep.subr.bf16.mxu0 0
    %739 = vmatpush1.bf16.msra.mxu0 %v574
    %740 = vmatprep.subr.bf16.mxu0 0
    %741 = vmatpush1.bf16.msra.mxu0 %v575
    %742 = vmatprep.subr.bf16.mxu0 0
    %743 = vmatpush1.bf16.msra.mxu0 %v576
    %744 = vmatprep.subr.bf16.mxu0 0
    %745 = vmatpush1.bf16.msra.mxu0 %v577
    %746 = vmatprep.mubr.bf16.mxu0 %v280
    %747 = vmatmul.mubr.bf16.gmra.mrb[0].mxu0 %v278
    %v748 = vpop.f32.mrb[0].mxu0
    %v749 = vadd.f32 %v709, %v748
    %v750 = vpop.f32.mrb[0].mxu0
    %v751 = vpop.f32.mrb[0].mxu0
    %v752 = vpop.f32.mrb[0].mxu0
    %753 = vdwg.mxu0
    %754 = vmatprep.subr.bf16.mxu0 0
    %755 = vmatpush1.bf16.msra.mxu0 %v578
    %756 = vmatprep.subr.bf16.mxu0 0
    %757 = vmatpush1.bf16.msra.mxu0 %v579
    %758 = vmatprep.subr.bf16.mxu0 0
    %759 = vmatpush1.bf16.msra.mxu0 %v580
    %760 = vmatprep.subr.bf16.mxu0 0
    %761 = vmatpush1.bf16.msra.mxu0 %v581
    %762 = vmatprep.subr.bf16.mxu0 0
    %763 = vmatpush1.bf16.msra.mxu0 %v582
    %764 = vmatprep.subr.bf16.mxu0 0
    %765 = vmatpush1.bf16.msra.mxu0 %v583
    %766 = vmatprep.subr.bf16.mxu0 0
    %767 = vmatpush1.bf16.msra.mxu0 %v584
    %768 = vmatprep.subr.bf16.mxu0 0
    %769 = vmatpush1.bf16.msra.mxu0 %v585
    %770 = vmatprep.subr.bf16.mxu0 0
    %771 = vmatpush1.bf16.msra.mxu0 %v586
    %772 = vmatprep.subr.bf16.mxu0 0
    %773 = vmatpush1.bf16.msra.mxu0 %v587
    %774 = vmatprep.subr.bf16.mxu0 0
    %775 = vmatpush1.bf16.msra.mxu0 %v588
    %776 = vmatprep.subr.bf16.mxu0 0
    %777 = vmatpush1.bf16.msra.mxu0 %v589
    %778 = vmatprep.subr.bf16.mxu0 0
    %779 = vmatpush1.bf16.msra.mxu0 %v590
    %780 = vmatprep.subr.bf16.mxu0 0
    %781 = vmatpush1.bf16.msra.mxu0 %v591
    %782 = vmatprep.subr.bf16.mxu0 0
    %783 = vmatpush1.bf16.msra.mxu0 %v592
    %784 = vmatprep.subr.bf16.mxu0 0
    %785 = vmatpush1.bf16.msra.mxu0 %v593
    %786 = vmatprep.mubr.bf16.mxu0 %v277
    %787 = vmatmul.mubr.bf16.gmra.mrb[0].mxu0 %v263
    %v788 = vpop.f32.mrb[0].mxu0
    %v789 = vadd.f32 %v749, %v788
    %v790 = vpop.f32.mrb[0].mxu0
    %v791 = vpop.f32.mrb[0].mxu0
    %v792 = vpop.f32.mrb[0].mxu0
    %793 = vdwg.mxu0
    %794 = vmatprep.subr.bf16.mxu0 0
    %795 = vmatpush1.bf16.msra.mxu0 %v594
    %796 = vmatprep.subr.bf16.mxu0 0
    %797 = vmatpush1.bf16.msra.mxu0 %v595
    %798 = vmatprep.subr.bf16.mxu0 0
    %799 = vmatpush1.bf16.msra.mxu0 %v596
    %800 = vmatprep.subr.bf16.mxu0 0
    %801 = vmatpush1.bf16.msra.mxu0 %v597
    %802 = vmatprep.subr.bf16.mxu0 0
    %803 = vmatpush1.bf16.msra.mxu0 %v598
    %804 = vmatprep.subr.bf16.mxu0 0
    %805 = vmatpush1.bf16.msra.mxu0 %v599
    %806 = vmatprep.subr.bf16.mxu0 0
    %807 = vmatpush1.bf16.msra.mxu0 %v600
    %808 = vmatprep.subr.bf16.mxu0 0
    %809 = vmatpush1.bf16.msra.mxu0 %v601
    %810 = vmatprep.subr.bf16.mxu0 0
    %811 = vmatpush1.bf16.msra.mxu0 %v602
    %812 = vmatprep.subr.bf16.mxu0 0
    %813 = vmatpush1.bf16.msra.mxu0 %v603
    %814 = vmatprep.subr.bf16.mxu0 0
    %815 = vmatpush1.bf16.msra.mxu0 %v604
    %816 = vmatprep.subr.bf16.mxu0 0
    %817 = vmatpush1.bf16.msra.mxu0 %v605
    %818 = vmatprep.subr.bf16.mxu0 0
    %819 = vmatpush1.bf16.msra.mxu0 %v606
    %820 = vmatprep.subr.bf16.mxu0 0
    %821 = vmatpush1.bf16.msra.mxu0 %v607
    %822 = vmatprep.subr.bf16.mxu0 0
    %823 = vmatpush1.bf16.msra.mxu0 %v608
    %824 = vmatprep.subr.bf16.mxu0 0
    %825 = vmatpush1.bf16.msra.mxu0 %v609
    %826 = vmatprep.mubr.bf16.mxu0 %v281
    %827 = vmatmul.mubr.bf16.gmra.mrb[0].mxu0 %v279
    %v828 = vpop.f32.mrb[0].mxu0
    %v829 = vadd.f32 %v789, %v828
    %v830 = vpop.f32.mrb[0].mxu0
    %v831 = vpop.f32.mrb[0].mxu0
    %v832 = vpop.f32.mrb[0].mxu0
    %833 = vdwg.mxu0
    %v834 = vld [vmem:[%s6] sm:$0xf]
    %v835 = vld [vmem:[%s6 + $0x4] sm:$0xf]
    %v836 = vld [vmem:[%s6 + $0x8] sm:$0xf]
    %v837 = vld [vmem:[%s6 + $0xc] sm:$0xf]
    %v838 = vld [vmem:[%s6 + $0x10] sm:$0xf]
    %v839 = vld [vmem:[%s6 + $0x14] sm:$0xf]
    %v840 = vld [vmem:[%s6 + $0x18] sm:$0xf]
    %v841 = vld [vmem:[%s6 + $0x1c] sm:$0xf]
    %v842 = vld [vmem:[%s6 + $0x20] sm:$0xf]
    %v843 = vld [vmem:[%s6 + $0x24] sm:$0xf]
    %v844 = vld [vmem:[%s6 + $0x28] sm:$0xf]
    %v845 = vld [vmem:[%s6 + $0x2c] sm:$0xf]
    %v846 = vld [vmem:[%s6 + $0x30] sm:$0xf]
    %v847 = vld [vmem:[%s6 + $0x34] sm:$0xf]
    %v848 = vld [vmem:[%s6 + $0x38] sm:$0xf]
    %v849 = vld [vmem:[%s6 + $0x3c] sm:$0xf]
    %v850 = vld [vmem:[%s6 + $0x40] sm:$0xf]
    %v851 = vld [vmem:[%s6 + $0x44] sm:$0xf]
    %v852 = vld [vmem:[%s6 + $0x48] sm:$0xf]
    %v853 = vld [vmem:[%s6 + $0x4c] sm:$0xf]
    %v854 = vld [vmem:[%s6 + $0x50] sm:$0xf]
    %v855 = vld [vmem:[%s6 + $0x54] sm:$0xf]
    %v856 = vld [vmem:[%s6 + $0x58] sm:$0xf]
    %v857 = vld [vmem:[%s6 + $0x5c] sm:$0xf]
    %v858 = vld [vmem:[%s6 + $0x60] sm:$0xf]
    %v859 = vld [vmem:[%s6 + $0x64] sm:$0xf]
    %v860 = vld [vmem:[%s6 + $0x68] sm:$0xf]
    %v861 = vld [vmem:[%s6 + $0x6c] sm:$0xf]
    %v862 = vld [vmem:[%s6 + $0x70] sm:$0xf]
    %v863 = vld [vmem:[%s6 + $0x74] sm:$0xf]
    %v864 = vld [vmem:[%s6 + $0x78] sm:$0xf]
    %v865 = vld [vmem:[%s6 + $0x7c] sm:$0xf]
    %v866 = vld [vmem:[%s6 + $0x80] sm:$0xf]
    %v867 = vld [vmem:[%s6 + $0x84] sm:$0xf]
    %v868 = vld [vmem:[%s6 + $0x88] sm:$0xf]
    %v869 = vld [vmem:[%s6 + $0x8c] sm:$0xf]
    %v870 = vld [vmem:[%s6 + $0x90] sm:$0xf]
    %v871 = vld [vmem:[%s6 + $0x94] sm:$0xf]
    %v872 = vld [vmem:[%s6 + $0x98] sm:$0xf]
    %v873 = vld [vmem:[%s6 + $0x9c] sm:$0xf]
    %v874 = vld [vmem:[%s6 + $0xa0] sm:$0xf]
    %v875 = vld [vmem:[%s6 + $0xa4] sm:$0xf]
    %v876 = vld [vmem:[%s6 + $0xa8] sm:$0xf]
    %v877 = vld [vmem:[%s6 + $0xac] sm:$0xf]
    %v878 = vld [vmem:[%s6 + $0xb0] sm:$0xf]
    %v879 = vld [vmem:[%s6 + $0xb4] sm:$0xf]
    %v880 = vld [vmem:[%s6 + $0xb8] sm:$0xf]
    %v881 = vld [vmem:[%s6 + $0xbc] sm:$0xf]
    %v882 = vld [vmem:[%s6 + $0xc0] sm:$0xf]
    %v883 = vld [vmem:[%s6 + $0xc4] sm:$0xf]
    %v884 = vld [vmem:[%s6 + $0xc8] sm:$0xf]
    %v885 = vld [vmem:[%s6 + $0xcc] sm:$0xf]
    %v886 = vld [vmem:[%s6 + $0xd0] sm:$0xf]
    %v887 = vld [vmem:[%s6 + $0xd4] sm:$0xf]
    %v888 = vld [vmem:[%s6 + $0xd8] sm:$0xf]
    %v889 = vld [vmem:[%s6 + $0xdc] sm:$0xf]
    %v890 = vld [vmem:[%s6 + $0xe0] sm:$0xf]
    %v891 = vld [vmem:[%s6 + $0xe4] sm:$0xf]
    %v892 = vld [vmem:[%s6 + $0xe8] sm:$0xf]
    %v893 = vld [vmem:[%s6 + $0xec] sm:$0xf]
    %v894 = vld [vmem:[%s6 + $0xf0] sm:$0xf]
    %v895 = vld [vmem:[%s6 + $0xf4] sm:$0xf]
    %v896 = vld [vmem:[%s6 + $0xf8] sm:$0xf]
    %v897 = vld [vmem:[%s6 + $0xfc] sm:$0xf]
    %v898 = vld [vmem:[%s6 + $0x100] sm:$0xf]
    %v899 = vld [vmem:[%s6 + $0x104] sm:$0xf]
    %v900 = vld [vmem:[%s6 + $0x108] sm:$0xf]
    %v901 = vld [vmem:[%s6 + $0x10c] sm:$0xf]
    %v902 = vld [vmem:[%s6 + $0x110] sm:$0xf]
    %v903 = vld [vmem:[%s6 + $0x114] sm:$0xf]
    %v904 = vld [vmem:[%s6 + $0x118] sm:$0xf]
    %v905 = vld [vmem:[%s6 + $0x11c] sm:$0xf]
    %v906 = vld [vmem:[%s6 + $0x120] sm:$0xf]
    %v907 = vld [vmem:[%s6 + $0x124] sm:$0xf]
    %v908 = vld [vmem:[%s6 + $0x128] sm:$0xf]
    %v909 = vld [vmem:[%s6 + $0x12c] sm:$0xf]
    %v910 = vld [vmem:[%s6 + $0x130] sm:$0xf]
    %v911 = vld [vmem:[%s6 + $0x134] sm:$0xf]
    %v912 = vld [vmem:[%s6 + $0x138] sm:$0xf]
    %v913 = vld [vmem:[%s6 + $0x13c] sm:$0xf]
    %v914 = vld [vmem:[%s6 + $0x140] sm:$0xf]
    %v915 = vld [vmem:[%s6 + $0x144] sm:$0xf]
    %v916 = vld [vmem:[%s6 + $0x148] sm:$0xf]
    %v917 = vld [vmem:[%s6 + $0x14c] sm:$0xf]
    %v918 = vld [vmem:[%s6 + $0x150] sm:$0xf]
    %v919 = vld [vmem:[%s6 + $0x154] sm:$0xf]
    %v920 = vld [vmem:[%s6 + $0x158] sm:$0xf]
    %v921 = vld [vmem:[%s6 + $0x15c] sm:$0xf]
    %v922 = vld [vmem:[%s6 + $0x160] sm:$0xf]
    %v923 = vld [vmem:[%s6 + $0x164] sm:$0xf]
    %v924 = vld [vmem:[%s6 + $0x168] sm:$0xf]
    %v925 = vld [vmem:[%s6 + $0x16c] sm:$0xf]
    %v926 = vld [vmem:[%s6 + $0x170] sm:$0xf]
    %v927 = vld [vmem:[%s6 + $0x174] sm:$0xf]
    %v928 = vld [vmem:[%s6 + $0x178] sm:$0xf]
    %v929 = vld [vmem:[%s6 + $0x17c] sm:$0xf]
    %v930 = vld [vmem:[%s6 + $0x180] sm:$0xf]
    %v931 = vld [vmem:[%s6 + $0x184] sm:$0xf]
    %v932 = vld [vmem:[%s6 + $0x188] sm:$0xf]
    %v933 = vld [vmem:[%s6 + $0x18c] sm:$0xf]
    %v934 = vld [vmem:[%s6 + $0x190] sm:$0xf]
    %v935 = vld [vmem:[%s6 + $0x194] sm:$0xf]
    %v936 = vld [vmem:[%s6 + $0x198] sm:$0xf]
    %v937 = vld [vmem:[%s6 + $0x19c] sm:$0xf]
    %v938 = vld [vmem:[%s6 + $0x1a0] sm:$0xf]
    %v939 = vld [vmem:[%s6 + $0x1a4] sm:$0xf]
    %v940 = vld [vmem:[%s6 + $0x1a8] sm:$0xf]
    %v941 = vld [vmem:[%s6 + $0x1ac] sm:$0xf]
    %v942 = vld [vmem:[%s6 + $0x1b0] sm:$0xf]
    %v943 = vld [vmem:[%s6 + $0x1b4] sm:$0xf]
    %v944 = vld [vmem:[%s6 + $0x1b8] sm:$0xf]
    %v945 = vld [vmem:[%s6 + $0x1bc] sm:$0xf]
    %v946 = vld [vmem:[%s6 + $0x1c0] sm:$0xf]
    %v947 = vld [vmem:[%s6 + $0x1c4] sm:$0xf]
    %v948 = vld [vmem:[%s6 + $0x1c8] sm:$0xf]
    %v949 = vld [vmem:[%s6 + $0x1cc] sm:$0xf]
    %v950 = vld [vmem:[%s6 + $0x1d0] sm:$0xf]
    %v951 = vld [vmem:[%s6 + $0x1d4] sm:$0xf]
    %v952 = vld [vmem:[%s6 + $0x1d8] sm:$0xf]
    %v953 = vld [vmem:[%s6 + $0x1dc] sm:$0xf]
    %v954 = vld [vmem:[%s6 + $0x1e0] sm:$0xf]
    %v955 = vld [vmem:[%s6 + $0x1e4] sm:$0xf]
    %v956 = vld [vmem:[%s6 + $0x1e8] sm:$0xf]
    %v957 = vld [vmem:[%s6 + $0x1ec] sm:$0xf]
    %v958 = vld [vmem:[%s6 + $0x1f0] sm:$0xf]
    %v959 = vld [vmem:[%s6 + $0x1f4] sm:$0xf]
    %v960 = vld [vmem:[%s6 + $0x1f8] sm:$0xf]
    %v961 = vld [vmem:[%s6 + $0x1fc] sm:$0xf]
    %v962 = vld [vmem:[%s7] sm:$0x1]
    %v963 = vmul.f32 %v962, 3.0
    %v965 = vlaneseq
    %v966 = vshrl.u32 %v965, 7
    %v967 = vsub.s32 0, %v966
    %v968 = vrot.slane %v963, %v967
    %v1098 = vunpack.c.l.b16 %v834
    %v1099 = vunpack.c.l.b16 %v835
    %v1100 = vunpack.c.l.b16 %v836
    %v1101 = vunpack.c.l.b16 %v837
    %v1102 = vunpack.c.l.b16 %v838
    %v1103 = vunpack.c.l.b16 %v839
    %v1104 = vunpack.c.l.b16 %v840
    %v1105 = vunpack.c.l.b16 %v841
    %v1106 = vunpack.c.l.b16 %v842
    %v1107 = vunpack.c.l.b16 %v843
    %v1108 = vunpack.c.l.b16 %v844
    %v1109 = vunpack.c.l.b16 %v845
    %v1110 = vunpack.c.l.b16 %v846
    %v1111 = vunpack.c.l.b16 %v847
    %v1112 = vunpack.c.l.b16 %v848
    %v1113 = vunpack.c.l.b16 %v849
    %v1114 = vunpack.c.l.b16 %v850
    %v1115 = vunpack.c.l.b16 %v851
    %v1116 = vunpack.c.l.b16 %v852
    %v1117 = vunpack.c.l.b16 %v853
    %v1118 = vunpack.c.l.b16 %v854
    %v1119 = vunpack.c.l.b16 %v855
    %v1120 = vunpack.c.l.b16 %v856
    %v1121 = vunpack.c.l.b16 %v857
    %v1122 = vunpack.c.l.b16 %v858
    %v1123 = vunpack.c.l.b16 %v859
    %v1124 = vunpack.c.l.b16 %v860
    %v1125 = vunpack.c.l.b16 %v861
    %v1126 = vunpack.c.l.b16 %v862
    %v1127 = vunpack.c.l.b16 %v863
    %v1128 = vunpack.c.l.b16 %v864
    %v1129 = vunpack.c.l.b16 %v865
    %v1130 = vunpack.c.l.b16 %v866
    %v1131 = vunpack.c.l.b16 %v867
    %v1132 = vunpack.c.l.b16 %v868
    %v1133 = vunpack.c.l.b16 %v869
    %v1134 = vunpack.c.l.b16 %v870
    %v1135 = vunpack.c.l.b16 %v871
    %v1136 = vunpack.c.l.b16 %v872
    %v1137 = vunpack.c.l.b16 %v873
    %v1138 = vunpack.c.l.b16 %v874
    %v1139 = vunpack.c.l.b16 %v875
    %v1140 = vunpack.c.l.b16 %v876
    %v1141 = vunpack.c.l.b16 %v877
    %v1142 = vunpack.c.l.b16 %v878
    %v1143 = vunpack.c.l.b16 %v879
    %v1144 = vunpack.c.l.b16 %v880
    %v1145 = vunpack.c.l.b16 %v881
    %v1146 = vunpack.c.l.b16 %v882
    %v1147 = vunpack.c.l.b16 %v883
    %v1148 = vunpack.c.l.b16 %v884
    %v1149 = vunpack.c.l.b16 %v885
    %v1150 = vunpack.c.l.b16 %v886
    %v1151 = vunpack.c.l.b16 %v887
    %v1152 = vunpack.c.l.b16 %v888
    %v1153 = vunpack.c.l.b16 %v889
    %v1154 = vunpack.c.l.b16 %v890
    %v1155 = vunpack.c.l.b16 %v891
    %v1156 = vunpack.c.l.b16 %v892
    %v1157 = vunpack.c.l.b16 %v893
    %v1158 = vunpack.c.l.b16 %v894
    %v1159 = vunpack.c.l.b16 %v895
    %v1160 = vunpack.c.l.b16 %v896
    %v1161 = vunpack.c.l.b16 %v897
    %v1162 = vunpack.c.l.b16 %v898
    %v1163 = vunpack.c.l.b16 %v899
    %v1164 = vunpack.c.l.b16 %v900
    %v1165 = vunpack.c.l.b16 %v901
    %v1166 = vunpack.c.l.b16 %v902
    %v1167 = vunpack.c.l.b16 %v903
    %v1168 = vunpack.c.l.b16 %v904
    %v1169 = vunpack.c.l.b16 %v905
    %v1170 = vunpack.c.l.b16 %v906
    %v1171 = vunpack.c.l.b16 %v907
    %v1172 = vunpack.c.l.b16 %v908
    %v1173 = vunpack.c.l.b16 %v909
    %v1174 = vunpack.c.l.b16 %v910
    %v1175 = vunpack.c.l.b16 %v911
    %v1176 = vunpack.c.l.b16 %v912
    %v1177 = vunpack.c.l.b16 %v913
    %v1178 = vunpack.c.l.b16 %v914
    %v1179 = vunpack.c.l.b16 %v915
    %v1180 = vunpack.c.l.b16 %v916
    %v1181 = vunpack.c.l.b16 %v917
    %v1182 = vunpack.c.l.b16 %v918
    %v1183 = vunpack.c.l.b16 %v919
    %v1184 = vunpack.c.l.b16 %v920
    %v1185 = vunpack.c.l.b16 %v921
    %v1186 = vunpack.c.l.b16 %v922
    %v1187 = vunpack.c.l.b16 %v923
    %v1188 = vunpack.c.l.b16 %v924
    %v1189 = vunpack.c.l.b16 %v925
    %v1190 = vunpack.c.l.b16 %v926
    %v1191 = vunpack.c.l.b16 %v927
    %v1192 = vunpack.c.l.b16 %v928
    %v1193 = vunpack.c.l.b16 %v929
    %v1194 = vunpack.c.l.b16 %v930
    %v1195 = vunpack.c.l.b16 %v931
    %v1196 = vunpack.c.l.b16 %v932
    %v1197 = vunpack.c.l.b16 %v933
    %v1198 = vunpack.c.l.b16 %v934
    %v1199 = vunpack.c.l.b16 %v935
    %v1200 = vunpack.c.l.b16 %v936
    %v1201 = vunpack.c.l.b16 %v937
    %v1202 = vunpack.c.l.b16 %v938
    %v1203 = vunpack.c.l.b16 %v939
    %v1204 = vunpack.c.l.b16 %v940
    %v1205 = vunpack.c.l.b16 %v941
    %v1206 = vunpack.c.l.b16 %v942
    %v1207 = vunpack.c.l.b16 %v943
    %v1208 = vunpack.c.l.b16 %v944
    %v1209 = vunpack.c.l.b16 %v945
    %v1210 = vunpack.c.l.b16 %v946
    %v1211 = vunpack.c.l.b16 %v947
    %v1212 = vunpack.c.l.b16 %v948
    %v1213 = vunpack.c.l.b16 %v949
    %v1214 = vunpack.c.l.b16 %v950
    %v1215 = vunpack.c.l.b16 %v951
    %v1216 = vunpack.c.l.b16 %v952
    %v1217 = vunpack.c.l.b16 %v953
    %v1218 = vunpack.c.l.b16 %v954
    %v1219 = vunpack.c.l.b16 %v955
    %v1220 = vunpack.c.l.b16 %v956
    %v1221 = vunpack.c.l.b16 %v957
    %v1222 = vunpack.c.l.b16 %v958
    %v1223 = vunpack.c.l.b16 %v959
    %v1224 = vunpack.c.l.b16 %v960
    %v1225 = vunpack.c.l.b16 %v961
    %v1226 = vpack.c.b16 %v1099, %v1098
    %v1227 = vpack.c.b16 %v1101, %v1100
    %v1228 = vpack.c.b16 %v1103, %v1102
    %v1229 = vpack.c.b16 %v1105, %v1104
    %v1230 = vpack.c.b16 %v1107, %v1106
    %v1231 = vpack.c.b16 %v1109, %v1108
    %v1232 = vpack.c.b16 %v1111, %v1110
    %v1233 = vpack.c.b16 %v1113, %v1112
    %v1234 = vpack.c.b16 %v1115, %v1114
    %v1235 = vpack.c.b16 %v1117, %v1116
    %v1236 = vpack.c.b16 %v1119, %v1118
    %v1237 = vpack.c.b16 %v1121, %v1120
    %v1238 = vpack.c.b16 %v1123, %v1122
    %v1239 = vpack.c.b16 %v1125, %v1124
    %v1240 = vpack.c.b16 %v1127, %v1126
    %v1241 = vpack.c.b16 %v1129, %v1128
    %v1242 = vpack.c.b16 %v1131, %v1130
    %v1243 = vpack.c.b16 %v1133, %v1132
    %v1244 = vpack.c.b16 %v1135, %v1134
    %v1245 = vpack.c.b16 %v1137, %v1136
    %v1246 = vpack.c.b16 %v1139, %v1138
    %v1247 = vpack.c.b16 %v1141, %v1140
    %v1248 = vpack.c.b16 %v1143, %v1142
    %v1249 = vpack.c.b16 %v1145, %v1144
    %v1250 = vpack.c.b16 %v1147, %v1146
    %v1251 = vpack.c.b16 %v1149, %v1148
    %v1252 = vpack.c.b16 %v1151, %v1150
    %v1253 = vpack.c.b16 %v1153, %v1152
    %v1254 = vpack.c.b16 %v1155, %v1154
    %v1255 = vpack.c.b16 %v1157, %v1156
    %v1256 = vpack.c.b16 %v1159, %v1158
    %v1257 = vpack.c.b16 %v1161, %v1160
    %v1258 = vpack.c.b16 %v1163, %v1162
    %v1259 = vpack.c.b16 %v1165, %v1164
    %v1260 = vpack.c.b16 %v1167, %v1166
    %v1261 = vpack.c.b16 %v1169, %v1168
    %v1262 = vpack.c.b16 %v1171, %v1170
    %v1263 = vpack.c.b16 %v1173, %v1172
    %v1264 = vpack.c.b16 %v1175, %v1174
    %v1265 = vpack.c.b16 %v1177, %v1176
    %v1266 = vpack.c.b16 %v1179, %v1178
    %v1267 = vpack.c.b16 %v1181, %v1180
    %v1268 = vpack.c.b16 %v1183, %v1182
    %v1269 = vpack.c.b16 %v1185, %v1184
    %v1270 = vpack.c.b16 %v1187, %v1186
    %v1271 = vpack.c.b16 %v1189, %v1188
    %v1272 = vpack.c.b16 %v1191, %v1190
    %v1273 = vpack.c.b16 %v1193, %v1192
    %v1274 = vpack.c.b16 %v1195, %v1194
    %v1275 = vpack.c.b16 %v1197, %v1196
    %v1276 = vpack.c.b16 %v1199, %v1198
    %v1277 = vpack.c.b16 %v1201, %v1200
    %v1278 = vpack.c.b16 %v1203, %v1202
    %v1279 = vpack.c.b16 %v1205, %v1204
    %v1280 = vpack.c.b16 %v1207, %v1206
    %v1281 = vpack.c.b16 %v1209, %v1208
    %v1282 = vpack.c.b16 %v1211, %v1210
    %v1283 = vpack.c.b16 %v1213, %v1212
    %v1284 = vpack.c.b16 %v1215, %v1214
    %v1285 = vpack.c.b16 %v1217, %v1216
    %v1286 = vpack.c.b16 %v1219, %v1218
    %v1287 = vpack.c.b16 %v1221, %v1220
    %v1288 = vpack.c.b16 %v1223, %v1222
    %v1289 = vpack.c.b16 %v1225, %v1224
    %1354 = vmatprep.subr.bf16.mxu0 0
    %1355 = vmatpush1.bf16.msra.mxu0 %v1226
    %1356 = vmatprep.subr.bf16.mxu0 0
    %1357 = vmatpush1.bf16.msra.mxu0 %v1227
    %1358 = vmatprep.subr.bf16.mxu0 0
    %1359 = vmatpush1.bf16.msra.mxu0 %v1228
    %1360 = vmatprep.subr.bf16.mxu0 0
    %1361 = vmatpush1.bf16.msra.mxu0 %v1229
    %1362 = vmatprep.subr.bf16.mxu0 0
    %1363 = vmatpush1.bf16.msra.mxu0 %v1230
    %1364 = vmatprep.subr.bf16.mxu0 0
    %1365 = vmatpush1.bf16.msra.mxu0 %v1231
    %1366 = vmatprep.subr.bf16.mxu0 0
    %1367 = vmatpush1.bf16.msra.mxu0 %v1232
    %1368 = vmatprep.subr.bf16.mxu0 0
    %1369 = vmatpush1.bf16.msra.mxu0 %v1233
    %1370 = vmatprep.subr.bf16.mxu0 0
    %1371 = vmatpush1.bf16.msra.mxu0 %v1234
    %1372 = vmatprep.subr.bf16.mxu0 0
    %1373 = vmatpush1.bf16.msra.mxu0 %v1235
    %1374 = vmatprep.subr.bf16.mxu0 0
    %1375 = vmatpush1.bf16.msra.mxu0 %v1236
    %1376 = vmatprep.subr.bf16.mxu0 0
    %1377 = vmatpush1.bf16.msra.mxu0 %v1237
    %1378 = vmatprep.subr.bf16.mxu0 0
    %1379 = vmatpush1.bf16.msra.mxu0 %v1238
    %1380 = vmatprep.subr.bf16.mxu0 0
    %1381 = vmatpush1.bf16.msra.mxu0 %v1239
    %1382 = vmatprep.subr.bf16.mxu0 0
    %1383 = vmatpush1.bf16.msra.mxu0 %v1240
    %1384 = vmatprep.subr.bf16.mxu0 0
    %1385 = vmatpush1.bf16.msra.mxu0 %v1241
    %1386 = vmatprep.mubr.bf16.mxu0 %v90
    %1387 = vmatmul.mubr.bf16.gmra.mrb[0].mxu0 %v89
    %v1388 = vpop.f32.mrb[0].mxu0
    %v1389 = vadd.f32 %v968, %v1388
    %v1390 = vpop.f32.mrb[0].mxu0
    %v1391 = vpop.f32.mrb[0].mxu0
    %v1392 = vpop.f32.mrb[0].mxu0
    %1393 = vdwg.mxu0
    %1394 = vmatprep.subr.bf16.mxu0 0
    %1395 = vmatpush1.bf16.msra.mxu0 %v1242
    %1396 = vmatprep.subr.bf16.mxu0 0
    %1397 = vmatpush1.bf16.msra.mxu0 %v1243
    %1398 = vmatprep.subr.bf16.mxu0 0
    %1399 = vmatpush1.bf16.msra.mxu0 %v1244
    %1400 = vmatprep.subr.bf16.mxu0 0
    %1401 = vmatpush1.bf16.msra.mxu0 %v1245
    %1402 = vmatprep.subr.bf16.mxu0 0
    %1403 = vmatpush1.bf16.msra.mxu0 %v1246
    %1404 = vmatprep.subr.bf16.mxu0 0
    %1405 = vmatpush1.bf16.msra.mxu0 %v1247
    %1406 = vmatprep.subr.bf16.mxu0 0
    %1407 = vmatpush1.bf16.msra.mxu0 %v1248
    %1408 = vmatprep.subr.bf16.mxu0 0
    %1409 = vmatpush1.bf16.msra.mxu0 %v1249
    %1410 = vmatprep.subr.bf16.mxu0 0
    %1411 = vmatpush1.bf16.msra.mxu0 %v1250
    %1412 = vmatprep.subr.bf16.mxu0 0
    %1413 = vmatpush1.bf16.msra.mxu0 %v1251
    %1414 = vmatprep.subr.bf16.mxu0 0
    %1415 = vmatpush1.bf16.msra.mxu0 %v1252
    %1416 = vmatprep.subr.bf16.mxu0 0
    %1417 = vmatpush1.bf16.msra.mxu0 %v1253
    %1418 = vmatprep.subr.bf16.mxu0 0
    %1419 = vmatpush1.bf16.msra.mxu0 %v1254
    %1420 = vmatprep.subr.bf16.mxu0 0
    %1421 = vmatpush1.bf16.msra.mxu0 %v1255
    %1422 = vmatprep.subr.bf16.mxu0 0
    %1423 = vmatpush1.bf16.msra.mxu0 %v1256
    %1424 = vmatprep.subr.bf16.mxu0 0
    %1425 = vmatpush1.bf16.msra.mxu0 %v1257
    %1426 = vmatprep.mubr.bf16.mxu0 %v92
    %1427 = vmatmul.mubr.bf16.gmra.mrb[0].mxu0 %v91
    %v1428 = vpop.f32.mrb[0].mxu0
    %v1429 = vadd.f32 %v1389, %v1428
    %v1430 = vpop.f32.mrb[0].mxu0
    %v1431 = vpop.f32.mrb[0].mxu0
    %v1432 = vpop.f32.mrb[0].mxu0
    %1433 = vdwg.mxu0
    %1434 = vmatprep.subr.bf16.mxu0 0
    %1435 = vmatpush1.bf16.msra.mxu0 %v1258
    %1436 = vmatprep.subr.bf16.mxu0 0
    %1437 = vmatpush1.bf16.msra.mxu0 %v1259
    %1438 = vmatprep.subr.bf16.mxu0 0
    %1439 = vmatpush1.bf16.msra.mxu0 %v1260
    %1440 = vmatprep.subr.bf16.mxu0 0
    %1441 = vmatpush1.bf16.msra.mxu0 %v1261
    %1442 = vmatprep.subr.bf16.mxu0 0
    %1443 = vmatpush1.bf16.msra.mxu0 %v1262
    %1444 = vmatprep.subr.bf16.mxu0 0
    %1445 = vmatpush1.bf16.msra.mxu0 %v1263
    %1446 = vmatprep.subr.bf16.mxu0 0
    %1447 = vmatpush1.bf16.msra.mxu0 %v1264
    %1448 = vmatprep.subr.bf16.mxu0 0
    %1449 = vmatpush1.bf16.msra.mxu0 %v1265
    %1450 = vmatprep.subr.bf16.mxu0 0
    %1451 = vmatpush1.bf16.msra.mxu0 %v1266
    %1452 = vmatprep.subr.bf16.mxu0 0
    %1453 = vmatpush1.bf16.msra.mxu0 %v1267
    %1454 = vmatprep.subr.bf16.mxu0 0
    %1455 = vmatpush1.bf16.msra.mxu0 %v1268
    %1456 = vmatprep.subr.bf16.mxu0 0
    %1457 = vmatpush1.bf16.msra.mxu0 %v1269
    %1458 = vmatprep.subr.bf16.mxu0 0
    %1459 = vmatpush1.bf16.msra.mxu0 %v1270
    %1460 = vmatprep.subr.bf16.mxu0 0
    %1461 = vmatpush1.bf16.msra.mxu0 %v1271
    %1462 = vmatprep.subr.bf16.mxu0 0
    %1463 = vmatpush1.bf16.msra.mxu0 %v1272
    %1464 = vmatprep.subr.bf16.mxu0 0
    %1465 = vmatpush1.bf16.msra.mxu0 %v1273
    %1466 = vmatprep.mubr.bf16.mxu0 %v94
    %1467 = vmatmul.mubr.bf16.gmra.mrb[0].mxu0 %v93
    %v1468 = vpop.f32.mrb[0].mxu0
    %v1469 = vadd.f32 %v1429, %v1468
    %v1470 = vpop.f32.mrb[0].mxu0
    %v1471 = vpop.f32.mrb[0].mxu0
    %v1472 = vpop.f32.mrb[0].mxu0
    %1473 = vdwg.mxu0
    %1474 = vmatprep.subr.bf16.mxu0 0
    %1475 = vmatpush1.bf16.msra.mxu0 %v1274
    %1476 = vmatprep.subr.bf16.mxu0 0
    %1477 = vmatpush1.bf16.msra.mxu0 %v1275
    %1478 = vmatprep.subr.bf16.mxu0 0
    %1479 = vmatpush1.bf16.msra.mxu0 %v1276
    %1480 = vmatprep.subr.bf16.mxu0 0
    %1481 = vmatpush1.bf16.msra.mxu0 %v1277
    %1482 = vmatprep.subr.bf16.mxu0 0
    %1483 = vmatpush1.bf16.msra.mxu0 %v1278
    %1484 = vmatprep.subr.bf16.mxu0 0
    %1485 = vmatpush1.bf16.msra.mxu0 %v1279
    %1486 = vmatprep.subr.bf16.mxu0 0
    %1487 = vmatpush1.bf16.msra.mxu0 %v1280
    %1488 = vmatprep.subr.bf16.mxu0 0
    %1489 = vmatpush1.bf16.msra.mxu0 %v1281
    %1490 = vmatprep.subr.bf16.mxu0 0
    %1491 = vmatpush1.bf16.msra.mxu0 %v1282
    %1492 = vmatprep.subr.bf16.mxu0 0
    %1493 = vmatpush1.bf16.msra.mxu0 %v1283
    %1494 = vmatprep.subr.bf16.mxu0 0
    %1495 = vmatpush1.bf16.msra.mxu0 %v1284
    %1496 = vmatprep.subr.bf16.mxu0 0
    %1497 = vmatpush1.bf16.msra.mxu0 %v1285
    %1498 = vmatprep.subr.bf16.mxu0 0
    %1499 = vmatpush1.bf16.msra.mxu0 %v1286
    %1500 = vmatprep.subr.bf16.mxu0 0
    %1501 = vmatpush1.bf16.msra.mxu0 %v1287
    %1502 = vmatprep.subr.bf16.mxu0 0
    %1503 = vmatpush1.bf16.msra.mxu0 %v1288
    %1504 = vmatprep.subr.bf16.mxu0 0
    %1505 = vmatpush1.bf16.msra.mxu0 %v1289
    %1506 = vmatprep.mubr.bf16.mxu0 %v96
    %1507 = vmatmul.mubr.bf16.gmra.mrb[0].mxu0 %v95
    %v1508 = vpop.f32.mrb[0].mxu0
    %v1509 = vadd.f32 %v1469, %v1508
    %v1510 = vpop.f32.mrb[0].mxu0
    %v1511 = vpop.f32.mrb[0].mxu0
    %v1512 = vpop.f32.mrb[0].mxu0
    %1513 = vdwg.mxu0
    %v1514 = vmul.f32 %v1509, 0.1
    %v1515 = vadd.f32 %v829, %v1514
    %vm1516 = vcmask 9216
    %1517 = vst.msk [vmem:[#allocation2] sm:$0x3] %vm1516, %v1515
    // Predicated region
    $region34: #{_lambda_.19} parent=1 // pred_check
      _
    $region35: #{_lambda_.19} parent=1 // pred_check_branch
      %1519 = sbr.rel (0) target = $region37
    $region36: #{_lambda_.19} parent=1 // pred_region
      %s1521 = ssub.s32 32, 32
      %1522 = vsyncadd [#allocation3], %s1521
      %s1524 = sshll.u32 [#allocation2], 4
      %s1525 = int_to_ptr.vmem [resolvable:$true] %s1524
      %1527 = dma.vmem_to_hbm [thread:$0]  %s1525, 32, %s8, [#allocation3]
    $region37: #{_lambda_.19} parent=1 // pred_fallthru
      _
    // Predicated region
    $region38: #{_lambda_.19} parent=1 // pred_check
      _
    $region39: #{_lambda_.19} parent=1 // pred_check_branch
      %1529 = sbr.rel (0) target = $region41
    $region40: #{_lambda_.19} parent=1 // pred_region
      %1530 = dma.done [#allocation3], 32
    $region41: #{_lambda_.19} parent=1 // pred_fallthru
      _
    %1531 = vsyncpa [#allocation3], 1

</llo_original>
